<compile_context>
chip_gen: v7x
topology: tpu7x:2x2x1
jax: 0.10.0
libtpu: 0.0.40
codegen_flags: <defaults>
</compile_context>

<pallas_src>
import math

import jax
import jax.numpy as jnp
from jax import lax
from jax.experimental import pallas as pl
from jax.experimental.pallas import tpu as pltpu

D_MODEL = 64          # d_model of nn.Transformer
DIM_FF = 64           # dim_feedforward = d_model
N_HEAD = 4
N_ENC = 3
N_DEC = 3
EPS = 1e-5            # LayerNorm eps (torch default)

# MXU operands only; all elementwise math / accumulation stays f32 (v5e-safe).
MATMUL_DTYPE = jnp.bfloat16


# --------------------------------- the kernel --------------------------------

def make_kernel(s_ex, widx, vidx, n_head=N_HEAD):
    d = D_MODEL
    hd = d // n_head

    def kernel(ex_ref, st_ref, w_ref, vec_ref, out_ref):
        # ---- parameter accessors (static indices into the packed stacks) ----
        def W(name):                           # (d, d) weight, pre-transposed (in, out)
            return w_ref[widx[name]].astype(MATMUL_DTYPE)

        def V(name):                           # (1, d) bias / norm vector, f32
            return vec_ref[pl.ds(vidx[name], 1), :]

        def dot(a, b):
            return jnp.dot(a.astype(MATMUL_DTYPE), b.astype(MATMUL_DTYPE),
                           preferred_element_type=jnp.float32)

        def linear(x, wname, bname):
            return dot(x, W(wname)) + V(bname)

        def layer_norm(x, prefix):
            mu = jnp.mean(x, axis=-1, keepdims=True)
            var = jnp.mean(jnp.square(x - mu), axis=-1, keepdims=True)
            return (x - mu) * lax.rsqrt(var + EPS) * V(prefix + "_g") + V(prefix + "_b")

        def mha(q_in, kv_in, prefix):
            """torch.nn.MultiheadAttention (batch_first, no mask, dropout=0).
            The 1/sqrt(head_dim) scale is folded into Wq/bq at pack time."""
            q = linear(q_in, prefix + "_wq", prefix + "_bq")     # (s_q,  d)
            k = linear(kv_in, prefix + "_wk", prefix + "_bk")    # (s_kv, d)
            v = linear(kv_in, prefix + "_wv", prefix + "_bv")    # (s_kv, d)
            wo = W(prefix + "_wo")                               # (d, d)
            acc = jnp.zeros((q_in.shape[0], d), jnp.float32)
            for h in range(n_head):                              # static 4-way loop
                sl = slice(h * hd, (h + 1) * hd)
                s = lax.dot_general(q[:, sl].astype(MATMUL_DTYPE),
                                    k[:, sl].astype(MATMUL_DTYPE),
                                    (((1,), (1,)), ((), ())),
                                    preferred_element_type=jnp.float32)  # (s_q, s_kv)
                s = s - jnp.max(s, axis=-1, keepdims=True)
                e = jnp.exp(s)
                p = e * pl.reciprocal(jnp.sum(e, axis=-1, keepdims=True), approx=True)
                oh = dot(p, v[:, sl])                            # (s_q, hd)
                # fold the head-concat into the output projection
                acc = acc + dot(oh, wo[sl, :])
            return acc + V(prefix + "_bo")

        ex = ex_ref[...]                                         # (s_ex, d) zero-padded feats
        st = st_ref[...]                                         # (1, d)   zero-padded feats

        # --- encoder_examples / encoder_states: Linear -> ReLU -> Linear ---
        mem = linear(jnp.maximum(linear(ex, "exenc_w1", "exenc_b1"), 0.0),
                     "exenc_w2", "exenc_b2")                     # (s_ex, d)
        tgt = linear(jnp.maximum(linear(st, "stenc_w1", "stenc_b1"), 0.0),
                     "stenc_w2", "stenc_b2")                     # (1, d)

        # --- nn.Transformer encoder (post-LN, relu, dropout=0) ---
        x = mem
        for l in range(N_ENC):
            p = f"enc{l}"
            x = layer_norm(x + mha(x, x, p + "_sa"), p + "_ln1")
            ff = linear(jnp.maximum(linear(x, p + "_ff_w1", p + "_ff_b1"), 0.0),
                        p + "_ff_w2", p + "_ff_b2")
            x = layer_norm(x + ff, p + "_ln2")
        memory = layer_norm(x, "enc_norm")                       # (s_ex, d)

        # --- nn.Transformer decoder (tgt length == 1, no masks) ---
        y = tgt
        for l in range(N_DEC):
            p = f"dec{l}"
            # self-attention over a single token: softmax over one key == 1, so
            # the block is exactly out_proj(v_proj(y)) -- no scores / softmax.
            sa = linear(linear(y, p + "_sa_wv", p + "_sa_bv"),
                        p + "_sa_wo", p + "_sa_bo")
            y = layer_norm(y + sa, p + "_ln1")
            y = layer_norm(y + mha(y, memory, p + "_ca"), p + "_ln2")
            ff = linear(jnp.maximum(linear(y, p + "_ff_w1", p + "_ff_b1"), 0.0),
                        p + "_ff_w2", p + "_ff_b2")
            y = layer_norm(y + ff, p + "_ln3")
        y = layer_norm(y, "dec_norm")                            # (1, d)

        # output head: Linear(d,d) -> ReLU (lane-dense store).  The final
        # Linear(d,1) + bias is applied in the wrapper.
        out_ref[...] = jnp.maximum(linear(y, "head_w1", "head_b1"), 0.0)

    return kernel


# ----------------------------- parameters & packing ---------------------------

def init_params(key, state_dim, act_dim, d=D_MODEL, nhead=N_HEAD):
    """Random params mirroring TransformerCritic, packed into two stacked
    buffers.  Returns (W, VEC, widx, vidx, wd2, bd2)."""
    hd = d // nhead
    qscale = 1.0 / math.sqrt(hd)
    keys = iter(jax.random.split(key, 128))

    def rnd(shape, scale=0.1):
        return (scale * jax.random.normal(next(keys), shape)).astype(jnp.float32)

    wlist, vlist = [], []
    widx, vidx = {}, {}

    def add_w(name, arr):                         # weights pre-transposed (in, out)
        arr = jnp.asarray(arr, jnp.float32)
        if arr.shape[0] < d:                      # zero-pad input dim to d_model
            arr = jnp.pad(arr, ((0, d - arr.shape[0]), (0, 0)))
        widx[name] = len(wlist)
        wlist.append(arr)

    def add_v(name, arr):
        vidx[name] = len(vlist)
        vlist.append(jnp.asarray(arr, jnp.float32).reshape(d))

    zeros_d = jnp.zeros((d,), jnp.float32)
    ones_d = jnp.ones((d,), jnp.float32)

    # encoder_examples / encoder_states / output head (first layer)
    add_w("exenc_w1", rnd((state_dim + act_dim, d))); add_v("exenc_b1", zeros_d)
    add_w("exenc_w2", rnd((d, d)));                   add_v("exenc_b2", zeros_d)
    add_w("stenc_w1", rnd((state_dim, d)));           add_v("stenc_b1", zeros_d)
    add_w("stenc_w2", rnd((d, d)));                   add_v("stenc_b2", zeros_d)
    add_w("head_w1", rnd((d, d)));                    add_v("head_b1", zeros_d)

    def add_attn(prefix, with_qk=True):
        if with_qk:
            # fold 1/sqrt(head_dim) into the Q projection (weight AND bias)
            add_w(prefix + "_wq", rnd((d, d)) * qscale); add_v(prefix + "_bq", zeros_d * qscale)
            add_w(prefix + "_wk", rnd((d, d)));          add_v(prefix + "_bk", zeros_d)
        add_w(prefix + "_wv", rnd((d, d)));              add_v(prefix + "_bv", zeros_d)
        add_w(prefix + "_wo", rnd((d, d)));              add_v(prefix + "_bo", zeros_d)

    for l in range(N_ENC):
        p = f"enc{l}"
        add_attn(p + "_sa")
        add_w(p + "_ff_w1", rnd((d, DIM_FF))); add_v(p + "_ff_b1", zeros_d)
        add_w(p + "_ff_w2", rnd((DIM_FF, d))); add_v(p + "_ff_b2", zeros_d)
        add_v(p + "_ln1_g", ones_d); add_v(p + "_ln1_b", zeros_d)
        add_v(p + "_ln2_g", ones_d); add_v(p + "_ln2_b", zeros_d)
    add_v("enc_norm_g", ones_d); add_v("enc_norm_b", zeros_d)

    for l in range(N_DEC):
        p = f"dec{l}"
        # decoder self-attn over a length-1 target: only V / out projections
        # affect the output (softmax over one key is identity), so Q/K are
        # never needed.
        add_attn(p + "_sa", with_qk=False)
        add_attn(p + "_ca", with_qk=True)
        add_w(p + "_ff_w1", rnd((d, DIM_FF))); add_v(p + "_ff_b1", zeros_d)
        add_w(p + "_ff_w2", rnd((DIM_FF, d))); add_v(p + "_ff_b2", zeros_d)
        add_v(p + "_ln1_g", ones_d); add_v(p + "_ln1_b", zeros_d)
        add_v(p + "_ln2_g", ones_d); add_v(p + "_ln2_b", zeros_d)
        add_v(p + "_ln3_g", ones_d); add_v(p + "_ln3_b", zeros_d)
    add_v("dec_norm_g", ones_d); add_v("dec_norm_b", zeros_d)

    W = jnp.stack(wlist)        # (NW, d, d)  -> one DMA
    VEC = jnp.stack(vlist)      # (NV, d)     -> one DMA
    wd2 = rnd((d, 1))           # final Linear(d, 1), applied in the wrapper
    bd2 = jnp.zeros((1,), jnp.float32)
    return W, VEC, widx, vidx, wd2, bd2


# ------------------------------------ wrapper ----------------------------------

def transformer_critic_forward(packed, example_states, example_actions, obs,
                               *, number_datapoints, perm_key):
    """Mirrors TransformerCritic.forward (act=None, default info['env_id'])."""
    W, VEC, widx, vidx, wd2, bd2 = packed
    obs = obs.reshape(obs.shape[0], -1).astype(jnp.float32)      # obs.flatten(1)
    batch = obs.shape[0]
    num_envs, pool, _ = example_states.shape
    assert batch <= num_envs, "default env_id assumes batch <= number of envs"

    # plain-JAX glue (matches the torch wrapper): randperm sub-sampling,
    # env_id gather, concat.
    perm = jax.random.permutation(perm_key, pool)[:number_datapoints]
    env_idx = jnp.arange(num_envs)[:batch]
    ex_s = example_states[:, perm, :][env_idx]
    ex_a = example_actions[:, perm, :][env_idx]
    examples = jnp.concatenate([ex_s, ex_a], axis=-1).astype(jnp.float32)
    s_ex, feat = examples.shape[1], examples.shape[2]
    assert feat <= D_MODEL and obs.shape[-1] <= D_MODEL

    # zero-pad input features to d_model so every in-kernel matmul is (*,64)x(64,64)
    examples = jnp.pad(examples, ((0, 0), (0, 0), (0, D_MODEL - feat)))
    obs_p = jnp.pad(obs, ((0, 0), (0, D_MODEL - obs.shape[-1])))[:, None, :]   # (B,1,64)

    nw, nv = W.shape[0], VEC.shape[0]
    hidden = pl.pallas_call(
        make_kernel(s_ex, widx, vidx),
        grid=(batch,),                     # one step per batch row; "parallel"
                                           # lets v7x shard rows across both TCs
        out_shape=jax.ShapeDtypeStruct((batch, 1, D_MODEL), jnp.float32),
        in_specs=[
            pl.BlockSpec((None, s_ex, D_MODEL), lambda b: (b, 0, 0)),       # examples
            pl.BlockSpec((None, 1, D_MODEL), lambda b: (b, 0, 0)),          # obs
            pl.BlockSpec((nw, D_MODEL, D_MODEL), lambda b: (0, 0, 0)),      # weights (resident)
            pl.BlockSpec((nv, D_MODEL), lambda b: (0, 0)),                  # biases / norms
        ],
        out_specs=pl.BlockSpec((None, 1, D_MODEL), lambda b: (b, 0, 0)),
        compiler_params=pltpu.CompilerParams(
            dimension_semantics=("parallel",),
            vmem_limit_bytes=8 * 1024 * 1024),
    )(examples, obs_p, W, VEC)

    # final Linear(d_model, 1) of the output head outside the kernel so the
    # kernel's store stays lane-dense (64-wide) instead of a masked 1-wide store.
    h = hidden[:, 0, :]                                          # (B, d)
    return h @ wd2 + bd2                                         # (B, 1)


# ------------------------------------ main ------------------------------------

if __name__ == "__main__":
    key = jax.random.PRNGKey(0)
    k_obs, k_exs, k_exa, k_params, k_perm = jax.random.split(key, 5)

    STATE_DIM, ACT_DIM = 12, 4
    BATCH, NUM_ENVS, POOL, NUM_DATAPOINTS = 2, 10, 32, 8

    obs = jax.random.normal(k_obs, (BATCH, STATE_DIM), jnp.float32)
    example_states = jax.random.normal(k_exs, (NUM_ENVS, POOL, STATE_DIM), jnp.float32)
    example_actions = jax.random.normal(k_exa, (NUM_ENVS, POOL, ACT_DIM), jnp.float32)

    packed = init_params(k_params, STATE_DIM, ACT_DIM)

    values = transformer_critic_forward(
        packed, example_states, example_actions, obs,
        number_datapoints=NUM_DATAPOINTS, perm_key=k_perm)
    values = jax.block_until_ready(values)

    assert values.shape == (BATCH, 1), values.shape
    assert bool(jnp.all(jnp.isfinite(values)))
    print("KERNEL_OK")
</pallas_src>

<mosaic_0001>
module attributes {stable_mosaic.version = 11 : i64} {
  func.func @kernel(%arg0: i32, %arg1: memref<1x8x64xf32, #tpu.memory_space<vmem>>, %arg2: memref<1x1x64xf32, #tpu.memory_space<vmem>>, %arg3: memref<47x64x64xf32, #tpu.memory_space<vmem>>, %arg4: memref<81x64xf32, #tpu.memory_space<vmem>>, %arg5: memref<1x1x64xf32, #tpu.memory_space<vmem>>) attributes {dimension_semantics = [#tpu.dimension_semantics<parallel>], iteration_bounds = array<i64: 2>, scalar_prefetch = 0 : i64, scratch_operands = 0 : i64, tpu.core_type = #tpu.core_type<tc>, window_params = [{transform_indices = @transform_0, window_bounds = array<i64: 1, 8, 64>}, {transform_indices = @transform_1, window_bounds = array<i64: 1, 1, 64>}, {pipeline_mode = #tpu.pipeline_mode<synchronous>, transform_indices = @transform_2, window_bounds = array<i64: 47, 64, 64>}, {pipeline_mode = #tpu.pipeline_mode<synchronous>, transform_indices = @transform_3, window_bounds = array<i64: 81, 64>}, {transform_indices = @transform_4, window_bounds = array<i64: 1, 1, 64>}]} {
    %c0 = arith.constant 0 : index
    %c0_0 = arith.constant 0 : index
    %c0_1 = arith.constant 0 : index
    %0 = vector.load %arg1[%c0, %c0_0, %c0_1] : memref<1x8x64xf32, #tpu.memory_space<vmem>>, vector<1x8x64xf32>
    %1 = vector.shape_cast %0 : vector<1x8x64xf32> to vector<8x64xf32>
    %c0_2 = arith.constant 0 : index
    %c0_3 = arith.constant 0 : index
    %c0_4 = arith.constant 0 : index
    %2 = vector.load %arg2[%c0_2, %c0_3, %c0_4] : memref<1x1x64xf32, #tpu.memory_space<vmem>>, vector<1x1x64xf32>
    %3 = vector.shape_cast %2 : vector<1x1x64xf32> to vector<1x64xf32>
    %c0_5 = arith.constant 0 : index
    %c0_6 = arith.constant 0 : index
    %c0_7 = arith.constant 0 : index
    %4 = vector.load %arg3[%c0_5, %c0_6, %c0_7] : memref<47x64x64xf32, #tpu.memory_space<vmem>>, vector<1x64x64xf32>
    %5 = vector.shape_cast %4 : vector<1x64x64xf32> to vector<64x64xf32>
    %6 = arith.truncf %5 : vector<64x64xf32> to vector<64x64xbf16>
    %7 = arith.truncf %1 : vector<8x64xf32> to vector<8x64xbf16>
    %cst = arith.constant dense<0.000000e+00> : vector<8x64xf32>
    %8 = tpu.matmul %7, %6, %cst {dimension_numbers = #tpu.dot_dimension_numbers<[1], [0], [0], [1], [0, 0, 1, 1], [], []>} : vector<8x64xbf16>, vector<64x64xbf16>, vector<8x64xf32> -> vector<8x64xf32>
    %c0_8 = arith.constant 0 : index
    %c0_9 = arith.constant 0 : index
    %9 = vector.load %arg4[%c0_8, %c0_9] : memref<81x64xf32, #tpu.memory_space<vmem>>, vector<1x64xf32>
    %10 = vector.broadcast %9 : vector<1x64xf32> to vector<8x64xf32>
    %11 = arith.addf %8, %10 : vector<8x64xf32>
    %cst_10 = arith.constant 0.000000e+00 : f32
    %12 = vector.broadcast %cst_10 : f32 to vector<8x64xf32>
    %13 = arith.maximumf %11, %12 : vector<8x64xf32>
    %c1 = arith.constant 1 : index
    %c0_11 = arith.constant 0 : index
    %c0_12 = arith.constant 0 : index
    %14 = vector.load %arg3[%c1, %c0_11, %c0_12] : memref<47x64x64xf32, #tpu.memory_space<vmem>>, vector<1x64x64xf32>
    %15 = vector.shape_cast %14 : vector<1x64x64xf32> to vector<64x64xf32>
    %16 = arith.truncf %15 : vector<64x64xf32> to vector<64x64xbf16>
    %17 = arith.truncf %13 : vector<8x64xf32> to vector<8x64xbf16>
    %cst_13 = arith.constant dense<0.000000e+00> : vector<8x64xf32>
    %18 = tpu.matmul %17, %16, %cst_13 {dimension_numbers = #tpu.dot_dimension_numbers<[1], [0], [0], [1], [0, 0, 1, 1], [], []>} : vector<8x64xbf16>, vector<64x64xbf16>, vector<8x64xf32> -> vector<8x64xf32>
    %c1_14 = arith.constant 1 : index
    %c0_15 = arith.constant 0 : index
    %19 = vector.load %arg4[%c1_14, %c0_15] : memref<81x64xf32, #tpu.memory_space<vmem>>, vector<1x64xf32>
    %20 = vector.broadcast %19 : vector<1x64xf32> to vector<8x64xf32>
    %21 = arith.addf %18, %20 : vector<8x64xf32>
    %c2 = arith.constant 2 : index
    %c0_16 = arith.constant 0 : index
    %c0_17 = arith.constant 0 : index
    %22 = vector.load %arg3[%c2, %c0_16, %c0_17] : memref<47x64x64xf32, #tpu.memory_space<vmem>>, vector<1x64x64xf32>
    %23 = vector.shape_cast %22 : vector<1x64x64xf32> to vector<64x64xf32>
    %24 = arith.truncf %23 : vector<64x64xf32> to vector<64x64xbf16>
    %25 = arith.truncf %3 : vector<1x64xf32> to vector<1x64xbf16>
    %cst_18 = arith.constant dense<0.000000e+00> : vector<1x64xf32>
    %26 = tpu.matmul %25, %24, %cst_18 {dimension_numbers = #tpu.dot_dimension_numbers<[1], [0], [0], [1], [0, 0, 1, 1], [], []>} : vector<1x64xbf16>, vector<64x64xbf16>, vector<1x64xf32> -> vector<1x64xf32>
    %c2_19 = arith.constant 2 : index
    %c0_20 = arith.constant 0 : index
    %27 = vector.load %arg4[%c2_19, %c0_20] : memref<81x64xf32, #tpu.memory_space<vmem>>, vector<1x64xf32>
    %28 = arith.addf %26, %27 : vector<1x64xf32>
    %cst_21 = arith.constant 0.000000e+00 : f32
    %29 = vector.broadcast %cst_21 : f32 to vector<1x64xf32>
    %30 = arith.maximumf %28, %29 : vector<1x64xf32>
    %c3 = arith.constant 3 : index
    %c0_22 = arith.constant 0 : index
    %c0_23 = arith.constant 0 : index
    %31 = vector.load %arg3[%c3, %c0_22, %c0_23] : memref<47x64x64xf32, #tpu.memory_space<vmem>>, vector<1x64x64xf32>
    %32 = vector.shape_cast %31 : vector<1x64x64xf32> to vector<64x64xf32>
    %33 = arith.truncf %32 : vector<64x64xf32> to vector<64x64xbf16>
    %34 = arith.truncf %30 : vector<1x64xf32> to vector<1x64xbf16>
    %cst_24 = arith.constant dense<0.000000e+00> : vector<1x64xf32>
    %35 = tpu.matmul %34, %33, %cst_24 {dimension_numbers = #tpu.dot_dimension_numbers<[1], [0], [0], [1], [0, 0, 1, 1], [], []>} : vector<1x64xbf16>, vector<64x64xbf16>, vector<1x64xf32> -> vector<1x64xf32>
    %c3_25 = arith.constant 3 : index
    %c0_26 = arith.constant 0 : index
    %36 = vector.load %arg4[%c3_25, %c0_26] : memref<81x64xf32, #tpu.memory_space<vmem>>, vector<1x64xf32>
    %37 = arith.addf %35, %36 : vector<1x64xf32>
    %c5 = arith.constant 5 : index
    %c0_27 = arith.constant 0 : index
    %c0_28 = arith.constant 0 : index
    %38 = vector.load %arg3[%c5, %c0_27, %c0_28] : memref<47x64x64xf32, #tpu.memory_space<vmem>>, vector<1x64x64xf32>
    %39 = vector.shape_cast %38 : vector<1x64x64xf32> to vector<64x64xf32>
    %40 = arith.truncf %39 : vector<64x64xf32> to vector<64x64xbf16>
    %41 = arith.truncf %21 : vector<8x64xf32> to vector<8x64xbf16>
    %cst_29 = arith.constant dense<0.000000e+00> : vector<8x64xf32>
    %42 = tpu.matmul %41, %40, %cst_29 {dimension_numbers = #tpu.dot_dimension_numbers<[1], [0], [0], [1], [0, 0, 1, 1], [], []>} : vector<8x64xbf16>, vector<64x64xbf16>, vector<8x64xf32> -> vector<8x64xf32>
    %c5_30 = arith.constant 5 : index
    %c0_31 = arith.constant 0 : index
    %43 = vector.load %arg4[%c5_30, %c0_31] : memref<81x64xf32, #tpu.memory_space<vmem>>, vector<1x64xf32>
    %44 = vector.broadcast %43 : vector<1x64xf32> to vector<8x64xf32>
    %45 = arith.addf %42, %44 : vector<8x64xf32>
    %c6 = arith.constant 6 : index
    %c0_32 = arith.constant 0 : index
    %c0_33 = arith.constant 0 : index
    %46 = vector.load %arg3[%c6, %c0_32, %c0_33] : memref<47x64x64xf32, #tpu.memory_space<vmem>>, vector<1x64x64xf32>
    %47 = vector.shape_cast %46 : vector<1x64x64xf32> to vector<64x64xf32>
    %48 = arith.truncf %47 : vector<64x64xf32> to vector<64x64xbf16>
    %49 = arith.truncf %21 : vector<8x64xf32> to vector<8x64xbf16>
    %cst_34 = arith.constant dense<0.000000e+00> : vector<8x64xf32>
    %50 = tpu.matmul %49, %48, %cst_34 {dimension_numbers = #tpu.dot_dimension_numbers<[1], [0], [0], [1], [0, 0, 1, 1], [], []>} : vector<8x64xbf16>, vector<64x64xbf16>, vector<8x64xf32> -> vector<8x64xf32>
    %c6_35 = arith.constant 6 : index
    %c0_36 = arith.constant 0 : index
    %51 = vector.load %arg4[%c6_35, %c0_36] : memref<81x64xf32, #tpu.memory_space<vmem>>, vector<1x64xf32>
    %52 = vector.broadcast %51 : vector<1x64xf32> to vector<8x64xf32>
    %53 = arith.addf %50, %52 : vector<8x64xf32>
    %c7 = arith.constant 7 : index
    %c0_37 = arith.constant 0 : index
    %c0_38 = arith.constant 0 : index
    %54 = vector.load %arg3[%c7, %c0_37, %c0_38] : memref<47x64x64xf32, #tpu.memory_space<vmem>>, vector<1x64x64xf32>
    %55 = vector.shape_cast %54 : vector<1x64x64xf32> to vector<64x64xf32>
    %56 = arith.truncf %55 : vector<64x64xf32> to vector<64x64xbf16>
    %57 = arith.truncf %21 : vector<8x64xf32> to vector<8x64xbf16>
    %cst_39 = arith.constant dense<0.000000e+00> : vector<8x64xf32>
    %58 = tpu.matmul %57, %56, %cst_39 {dimension_numbers = #tpu.dot_dimension_numbers<[1], [0], [0], [1], [0, 0, 1, 1], [], []>} : vector<8x64xbf16>, vector<64x64xbf16>, vector<8x64xf32> -> vector<8x64xf32>
    %c7_40 = arith.constant 7 : index
    %c0_41 = arith.constant 0 : index
    %59 = vector.load %arg4[%c7_40, %c0_41] : memref<81x64xf32, #tpu.memory_space<vmem>>, vector<1x64xf32>
    %60 = vector.broadcast %59 : vector<1x64xf32> to vector<8x64xf32>
    %61 = arith.addf %58, %60 : vector<8x64xf32>
    %c8 = arith.constant 8 : index
    %c0_42 = arith.constant 0 : index
    %c0_43 = arith.constant 0 : index
    %62 = vector.load %arg3[%c8, %c0_42, %c0_43] : memref<47x64x64xf32, #tpu.memory_space<vmem>>, vector<1x64x64xf32>
    %63 = vector.shape_cast %62 : vector<1x64x64xf32> to vector<64x64xf32>
    %64 = arith.truncf %63 : vector<64x64xf32> to vector<64x64xbf16>
    %cst_44 = arith.constant 0.000000e+00 : f32
    %65 = vector.broadcast %cst_44 : f32 to vector<8x64xf32>
    %66 = vector.extract_strided_slice %45 {offsets = [0, 0], sizes = [8, 16], strides = [1, 1]} : vector<8x64xf32> to vector<8x16xf32>
    %67 = arith.truncf %66 : vector<8x16xf32> to vector<8x16xbf16>
    %68 = vector.extract_strided_slice %53 {offsets = [0, 0], sizes = [8, 16], strides = [1, 1]} : vector<8x64xf32> to vector<8x16xf32>
    %69 = arith.truncf %68 : vector<8x16xf32> to vector<8x16xbf16>
    %cst_45 = arith.constant dense<0.000000e+00> : vector<8x8xf32>
    %70 = tpu.matmul %67, %69, %cst_45 {dimension_numbers = #tpu.dot_dimension_numbers<[1], [1], [0], [0], [0, 0, 1, 0], [], []>} : vector<8x16xbf16>, vector<8x16xbf16>, vector<8x8xf32> -> vector<8x8xf32>
    %cst_46 = arith.constant dense<0xFF800000> : vector<8xf32>
    %71 = vector.multi_reduction <maximumf>, %70, %cst_46 [1] : vector<8x8xf32> to vector<8xf32>
    %72 = vector.shape_cast %71 : vector<8xf32> to vector<8x1xf32>
    %73 = vector.broadcast %72 : vector<8x1xf32> to vector<8x8xf32>
    %74 = arith.subf %70, %73 : vector<8x8xf32>
    %75 = math.exp %74 : vector<8x8xf32>
    %cst_47 = arith.constant dense<0.000000e+00> : vector<8xf32>
    %76 = vector.multi_reduction <add>, %75, %cst_47 [1] : vector<8x8xf32> to vector<8xf32>
    %77 = vector.shape_cast %76 : vector<8xf32> to vector<8x1xf32>
    %78 = tpu.reciprocal %77 {approx = true} : vector<8x1xf32> -> vector<8x1xf32>
    %79 = vector.broadcast %78 : vector<8x1xf32> to vector<8x8xf32>
    %80 = arith.mulf %75, %79 : vector<8x8xf32>
    %81 = vector.extract_strided_slice %61 {offsets = [0, 0], sizes = [8, 16], strides = [1, 1]} : vector<8x64xf32> to vector<8x16xf32>
    %82 = arith.truncf %80 : vector<8x8xf32> to vector<8x8xbf16>
    %83 = arith.truncf %81 : vector<8x16xf32> to vector<8x16xbf16>
    %cst_48 = arith.constant dense<0.000000e+00> : vector<8x16xf32>
    %84 = tpu.matmul %82, %83, %cst_48 {dimension_numbers = #tpu.dot_dimension_numbers<[1], [0], [0], [1], [0, 0, 1, 1], [], []>} : vector<8x8xbf16>, vector<8x16xbf16>, vector<8x16xf32> -> vector<8x16xf32>
    %85 = vector.extract_strided_slice %64 {offsets = [0, 0], sizes = [16, 64], strides = [1, 1]} : vector<64x64xbf16> to vector<16x64xbf16>
    %86 = arith.truncf %84 : vector<8x16xf32> to vector<8x16xbf16>
    %cst_49 = arith.constant dense<0.000000e+00> : vector<8x64xf32>
    %87 = tpu.matmul %86, %85, %cst_49 {dimension_numbers = #tpu.dot_dimension_numbers<[1], [0], [0], [1], [0, 0, 1, 1], [], []>} : vector<8x16xbf16>, vector<16x64xbf16>, vector<8x64xf32> -> vector<8x64xf32>
    %88 = arith.addf %65, %87 : vector<8x64xf32>
    %89 = vector.extract_strided_slice %45 {offsets = [0, 16], sizes = [8, 16], strides = [1, 1]} : vector<8x64xf32> to vector<8x16xf32>
    %90 = arith.truncf %89 : vector<8x16xf32> to vector<8x16xbf16>
    %91 = vector.extract_strided_slice %53 {offsets = [0, 16], sizes = [8, 16], strides = [1, 1]} : vector<8x64xf32> to vector<8x16xf32>
    %92 = arith.truncf %91 : vector<8x16xf32> to vector<8x16xbf16>
    %cst_50 = arith.constant dense<0.000000e+00> : vector<8x8xf32>
    %93 = tpu.matmul %90, %92, %cst_50 {dimension_numbers = #tpu.dot_dimension_numbers<[1], [1], [0], [0], [0, 0, 1, 0], [], []>} : vector<8x16xbf16>, vector<8x16xbf16>, vector<8x8xf32> -> vector<8x8xf32>
    %cst_51 = arith.constant dense<0xFF800000> : vector<8xf32>
    %94 = vector.multi_reduction <maximumf>, %93, %cst_51 [1] : vector<8x8xf32> to vector<8xf32>
    %95 = vector.shape_cast %94 : vector<8xf32> to vector<8x1xf32>
    %96 = vector.broadcast %95 : vector<8x1xf32> to vector<8x8xf32>
    %97 = arith.subf %93, %96 : vector<8x8xf32>
    %98 = math.exp %97 : vector<8x8xf32>
    %cst_52 = arith.constant dense<0.000000e+00> : vector<8xf32>
    %99 = vector.multi_reduction <add>, %98, %cst_52 [1] : vector<8x8xf32> to vector<8xf32>
    %100 = vector.shape_cast %99 : vector<8xf32> to vector<8x1xf32>
    %101 = tpu.reciprocal %100 {approx = true} : vector<8x1xf32> -> vector<8x1xf32>
    %102 = vector.broadcast %101 : vector<8x1xf32> to vector<8x8xf32>
    %103 = arith.mulf %98, %102 : vector<8x8xf32>
    %104 = vector.extract_strided_slice %61 {offsets = [0, 16], sizes = [8, 16], strides = [1, 1]} : vector<8x64xf32> to vector<8x16xf32>
    %105 = arith.truncf %103 : vector<8x8xf32> to vector<8x8xbf16>
    %106 = arith.truncf %104 : vector<8x16xf32> to vector<8x16xbf16>
    %cst_53 = arith.constant dense<0.000000e+00> : vector<8x16xf32>
    %107 = tpu.matmul %105, %106, %cst_53 {dimension_numbers = #tpu.dot_dimension_numbers<[1], [0], [0], [1], [0, 0, 1, 1], [], []>} : vector<8x8xbf16>, vector<8x16xbf16>, vector<8x16xf32> -> vector<8x16xf32>
    %108 = vector.extract_strided_slice %64 {offsets = [16, 0], sizes = [16, 64], strides = [1, 1]} : vector<64x64xbf16> to vector<16x64xbf16>
    %109 = arith.truncf %107 : vector<8x16xf32> to vector<8x16xbf16>
    %cst_54 = arith.constant dense<0.000000e+00> : vector<8x64xf32>
    %110 = tpu.matmul %109, %108, %cst_54 {dimension_numbers = #tpu.dot_dimension_numbers<[1], [0], [0], [1], [0, 0, 1, 1], [], []>} : vector<8x16xbf16>, vector<16x64xbf16>, vector<8x64xf32> -> vector<8x64xf32>
    %111 = arith.addf %88, %110 : vector<8x64xf32>
    %112 = vector.extract_strided_slice %45 {offsets = [0, 32], sizes = [8, 16], strides = [1, 1]} : vector<8x64xf32> to vector<8x16xf32>
    %113 = arith.truncf %112 : vector<8x16xf32> to vector<8x16xbf16>
    %114 = vector.extract_strided_slice %53 {offsets = [0, 32], sizes = [8, 16], strides = [1, 1]} : vector<8x64xf32> to vector<8x16xf32>
    %115 = arith.truncf %114 : vector<8x16xf32> to vector<8x16xbf16>
    %cst_55 = arith.constant dense<0.000000e+00> : vector<8x8xf32>
    %116 = tpu.matmul %113, %115, %cst_55 {dimension_numbers = #tpu.dot_dimension_numbers<[1], [1], [0], [0], [0, 0, 1, 0], [], []>} : vector<8x16xbf16>, vector<8x16xbf16>, vector<8x8xf32> -> vector<8x8xf32>
    %cst_56 = arith.constant dense<0xFF800000> : vector<8xf32>
    %117 = vector.multi_reduction <maximumf>, %116, %cst_56 [1] : vector<8x8xf32> to vector<8xf32>
    %118 = vector.shape_cast %117 : vector<8xf32> to vector<8x1xf32>
    %119 = vector.broadcast %118 : vector<8x1xf32> to vector<8x8xf32>
    %120 = arith.subf %116, %119 : vector<8x8xf32>
    %121 = math.exp %120 : vector<8x8xf32>
    %cst_57 = arith.constant dense<0.000000e+00> : vector<8xf32>
    %122 = vector.multi_reduction <add>, %121, %cst_57 [1] : vector<8x8xf32> to vector<8xf32>
    %123 = vector.shape_cast %122 : vector<8xf32> to vector<8x1xf32>
    %124 = tpu.reciprocal %123 {approx = true} : vector<8x1xf32> -> vector<8x1xf32>
    %125 = vector.broadcast %124 : vector<8x1xf32> to vector<8x8xf32>
    %126 = arith.mulf %121, %125 : vector<8x8xf32>
    %127 = vector.extract_strided_slice %61 {offsets = [0, 32], sizes = [8, 16], strides = [1, 1]} : vector<8x64xf32> to vector<8x16xf32>
    %128 = arith.truncf %126 : vector<8x8xf32> to vector<8x8xbf16>
    %129 = arith.truncf %127 : vector<8x16xf32> to vector<8x16xbf16>
    %cst_58 = arith.constant dense<0.000000e+00> : vector<8x16xf32>
    %130 = tpu.matmul %128, %129, %cst_58 {dimension_numbers = #tpu.dot_dimension_numbers<[1], [0], [0], [1], [0, 0, 1, 1], [], []>} : vector<8x8xbf16>, vector<8x16xbf16>, vector<8x16xf32> -> vector<8x16xf32>
    %131 = vector.extract_strided_slice %64 {offsets = [32, 0], sizes = [16, 64], strides = [1, 1]} : vector<64x64xbf16> to vector<16x64xbf16>
    %132 = arith.truncf %130 : vector<8x16xf32> to vector<8x16xbf16>
    %cst_59 = arith.constant dense<0.000000e+00> : vector<8x64xf32>
    %133 = tpu.matmul %132, %131, %cst_59 {dimension_numbers = #tpu.dot_dimension_numbers<[1], [0], [0], [1], [0, 0, 1, 1], [], []>} : vector<8x16xbf16>, vector<16x64xbf16>, vector<8x64xf32> -> vector<8x64xf32>
    %134 = arith.addf %111, %133 : vector<8x64xf32>
    %135 = vector.extract_strided_slice %45 {offsets = [0, 48], sizes = [8, 16], strides = [1, 1]} : vector<8x64xf32> to vector<8x16xf32>
    %136 = arith.truncf %135 : vector<8x16xf32> to vector<8x16xbf16>
    %137 = vector.extract_strided_slice %53 {offsets = [0, 48], sizes = [8, 16], strides = [1, 1]} : vector<8x64xf32> to vector<8x16xf32>
    %138 = arith.truncf %137 : vector<8x16xf32> to vector<8x16xbf16>
    %cst_60 = arith.constant dense<0.000000e+00> : vector<8x8xf32>
    %139 = tpu.matmul %136, %138, %cst_60 {dimension_numbers = #tpu.dot_dimension_numbers<[1], [1], [0], [0], [0, 0, 1, 0], [], []>} : vector<8x16xbf16>, vector<8x16xbf16>, vector<8x8xf32> -> vector<8x8xf32>
    %cst_61 = arith.constant dense<0xFF800000> : vector<8xf32>
    %140 = vector.multi_reduction <maximumf>, %139, %cst_61 [1] : vector<8x8xf32> to vector<8xf32>
    %141 = vector.shape_cast %140 : vector<8xf32> to vector<8x1xf32>
    %142 = vector.broadcast %141 : vector<8x1xf32> to vector<8x8xf32>
    %143 = arith.subf %139, %142 : vector<8x8xf32>
    %144 = math.exp %143 : vector<8x8xf32>
    %cst_62 = arith.constant dense<0.000000e+00> : vector<8xf32>
    %145 = vector.multi_reduction <add>, %144, %cst_62 [1] : vector<8x8xf32> to vector<8xf32>
    %146 = vector.shape_cast %145 : vector<8xf32> to vector<8x1xf32>
    %147 = tpu.reciprocal %146 {approx = true} : vector<8x1xf32> -> vector<8x1xf32>
    %148 = vector.broadcast %147 : vector<8x1xf32> to vector<8x8xf32>
    %149 = arith.mulf %144, %148 : vector<8x8xf32>
    %150 = vector.extract_strided_slice %61 {offsets = [0, 48], sizes = [8, 16], strides = [1, 1]} : vector<8x64xf32> to vector<8x16xf32>
    %151 = arith.truncf %149 : vector<8x8xf32> to vector<8x8xbf16>
    %152 = arith.truncf %150 : vector<8x16xf32> to vector<8x16xbf16>
    %cst_63 = arith.constant dense<0.000000e+00> : vector<8x16xf32>
    %153 = tpu.matmul %151, %152, %cst_63 {dimension_numbers = #tpu.dot_dimension_numbers<[1], [0], [0], [1], [0, 0, 1, 1], [], []>} : vector<8x8xbf16>, vector<8x16xbf16>, vector<8x16xf32> -> vector<8x16xf32>
    %154 = vector.extract_strided_slice %64 {offsets = [48, 0], sizes = [16, 64], strides = [1, 1]} : vector<64x64xbf16> to vector<16x64xbf16>
    %155 = arith.truncf %153 : vector<8x16xf32> to vector<8x16xbf16>
    %cst_64 = arith.constant dense<0.000000e+00> : vector<8x64xf32>
    %156 = tpu.matmul %155, %154, %cst_64 {dimension_numbers = #tpu.dot_dimension_numbers<[1], [0], [0], [1], [0, 0, 1, 1], [], []>} : vector<8x16xbf16>, vector<16x64xbf16>, vector<8x64xf32> -> vector<8x64xf32>
    %157 = arith.addf %134, %156 : vector<8x64xf32>
    %c8_65 = arith.constant 8 : index
    %c0_66 = arith.constant 0 : index
    %158 = vector.load %arg4[%c8_65, %c0_66] : memref<81x64xf32, #tpu.memory_space<vmem>>, vector<1x64xf32>
    %159 = vector.broadcast %158 : vector<1x64xf32> to vector<8x64xf32>
    %160 = arith.addf %157, %159 : vector<8x64xf32>
    %161 = arith.addf %21, %160 : vector<8x64xf32>
    %cst_67 = arith.constant dense<0.000000e+00> : vector<8xf32>
    %162 = vector.multi_reduction <add>, %161, %cst_67 [1] : vector<8x64xf32> to vector<8xf32>
    %163 = vector.shape_cast %162 : vector<8xf32> to vector<8x1xf32>
    %cst_68 = arith.constant 6.400000e+01 : f32
    %164 = vector.broadcast %cst_68 : f32 to vector<8x1xf32>
    %165 = arith.divf %163, %164 : vector<8x1xf32>
    %166 = vector.broadcast %165 : vector<8x1xf32> to vector<8x64xf32>
    %167 = arith.subf %161, %166 : vector<8x64xf32>
    %168 = arith.mulf %167, %167 : vector<8x64xf32>
    %cst_69 = arith.constant dense<0.000000e+00> : vector<8xf32>
    %169 = vector.multi_reduction <add>, %168, %cst_69 [1] : vector<8x64xf32> to vector<8xf32>
    %170 = vector.shape_cast %169 : vector<8xf32> to vector<8x1xf32>
    %cst_70 = arith.constant 6.400000e+01 : f32
    %171 = vector.broadcast %cst_70 : f32 to vector<8x1xf32>
    %172 = arith.divf %170, %171 : vector<8x1xf32>
    %173 = vector.broadcast %165 : vector<8x1xf32> to vector<8x64xf32>
    %174 = arith.subf %161, %173 : vector<8x64xf32>
    %cst_71 = arith.constant 9.99999974E-6 : f32
    %175 = vector.broadcast %cst_71 : f32 to vector<8x1xf32>
    %176 = arith.addf %172, %175 : vector<8x1xf32>
    %177 = math.rsqrt %176 : vector<8x1xf32>
    %178 = vector.broadcast %177 : vector<8x1xf32> to vector<8x64xf32>
    %179 = arith.mulf %174, %178 : vector<8x64xf32>
    %c11 = arith.constant 11 : index
    %c0_72 = arith.constant 0 : index
    %180 = vector.load %arg4[%c11, %c0_72] : memref<81x64xf32, #tpu.memory_space<vmem>>, vector<1x64xf32>
    %181 = vector.broadcast %180 : vector<1x64xf32> to vector<8x64xf32>
    %182 = arith.mulf %179, %181 : vector<8x64xf32>
    %c12 = arith.constant 12 : index
    %c0_73 = arith.constant 0 : index
    %183 = vector.load %arg4[%c12, %c0_73] : memref<81x64xf32, #tpu.memory_space<vmem>>, vector<1x64xf32>
    %184 = vector.broadcast %183 : vector<1x64xf32> to vector<8x64xf32>
    %185 = arith.addf %182, %184 : vector<8x64xf32>
    %c9 = arith.constant 9 : index
    %c0_74 = arith.constant 0 : index
    %c0_75 = arith.constant 0 : index
    %186 = vector.load %arg3[%c9, %c0_74, %c0_75] : memref<47x64x64xf32, #tpu.memory_space<vmem>>, vector<1x64x64xf32>
    %187 = vector.shape_cast %186 : vector<1x64x64xf32> to vector<64x64xf32>
    %188 = arith.truncf %187 : vector<64x64xf32> to vector<64x64xbf16>
    %189 = arith.truncf %185 : vector<8x64xf32> to vector<8x64xbf16>
    %cst_76 = arith.constant dense<0.000000e+00> : vector<8x64xf32>
    %190 = tpu.matmul %189, %188, %cst_76 {dimension_numbers = #tpu.dot_dimension_numbers<[1], [0], [0], [1], [0, 0, 1, 1], [], []>} : vector<8x64xbf16>, vector<64x64xbf16>, vector<8x64xf32> -> vector<8x64xf32>
    %c9_77 = arith.constant 9 : index
    %c0_78 = arith.constant 0 : index
    %191 = vector.load %arg4[%c9_77, %c0_78] : memref<81x64xf32, #tpu.memory_space<vmem>>, vector<1x64xf32>
    %192 = vector.broadcast %191 : vector<1x64xf32> to vector<8x64xf32>
    %193 = arith.addf %190, %192 : vector<8x64xf32>
    %cst_79 = arith.constant 0.000000e+00 : f32
    %194 = vector.broadcast %cst_79 : f32 to vector<8x64xf32>
    %195 = arith.maximumf %193, %194 : vector<8x64xf32>
    %c10 = arith.constant 10 : index
    %c0_80 = arith.constant 0 : index
    %c0_81 = arith.constant 0 : index
    %196 = vector.load %arg3[%c10, %c0_80, %c0_81] : memref<47x64x64xf32, #tpu.memory_space<vmem>>, vector<1x64x64xf32>
    %197 = vector.shape_cast %196 : vector<1x64x64xf32> to vector<64x64xf32>
    %198 = arith.truncf %197 : vector<64x64xf32> to vector<64x64xbf16>
    %199 = arith.truncf %195 : vector<8x64xf32> to vector<8x64xbf16>
    %cst_82 = arith.constant dense<0.000000e+00> : vector<8x64xf32>
    %200 = tpu.matmul %199, %198, %cst_82 {dimension_numbers = #tpu.dot_dimension_numbers<[1], [0], [0], [1], [0, 0, 1, 1], [], []>} : vector<8x64xbf16>, vector<64x64xbf16>, vector<8x64xf32> -> vector<8x64xf32>
    %c10_83 = arith.constant 10 : index
    %c0_84 = arith.constant 0 : index
    %201 = vector.load %arg4[%c10_83, %c0_84] : memref<81x64xf32, #tpu.memory_space<vmem>>, vector<1x64xf32>
    %202 = vector.broadcast %201 : vector<1x64xf32> to vector<8x64xf32>
    %203 = arith.addf %200, %202 : vector<8x64xf32>
    %204 = arith.addf %185, %203 : vector<8x64xf32>
    %cst_85 = arith.constant dense<0.000000e+00> : vector<8xf32>
    %205 = vector.multi_reduction <add>, %204, %cst_85 [1] : vector<8x64xf32> to vector<8xf32>
    %206 = vector.shape_cast %205 : vector<8xf32> to vector<8x1xf32>
    %cst_86 = arith.constant 6.400000e+01 : f32
    %207 = vector.broadcast %cst_86 : f32 to vector<8x1xf32>
    %208 = arith.divf %206, %207 : vector<8x1xf32>
    %209 = vector.broadcast %208 : vector<8x1xf32> to vector<8x64xf32>
    %210 = arith.subf %204, %209 : vector<8x64xf32>
    %211 = arith.mulf %210, %210 : vector<8x64xf32>
    %cst_87 = arith.constant dense<0.000000e+00> : vector<8xf32>
    %212 = vector.multi_reduction <add>, %211, %cst_87 [1] : vector<8x64xf32> to vector<8xf32>
    %213 = vector.shape_cast %212 : vector<8xf32> to vector<8x1xf32>
    %cst_88 = arith.constant 6.400000e+01 : f32
    %214 = vector.broadcast %cst_88 : f32 to vector<8x1xf32>
    %215 = arith.divf %213, %214 : vector<8x1xf32>
    %216 = vector.broadcast %208 : vector<8x1xf32> to vector<8x64xf32>
    %217 = arith.subf %204, %216 : vector<8x64xf32>
    %cst_89 = arith.constant 9.99999974E-6 : f32
    %218 = vector.broadcast %cst_89 : f32 to vector<8x1xf32>
    %219 = arith.addf %215, %218 : vector<8x1xf32>
    %220 = math.rsqrt %219 : vector<8x1xf32>
    %221 = vector.broadcast %220 : vector<8x1xf32> to vector<8x64xf32>
    %222 = arith.mulf %217, %221 : vector<8x64xf32>
    %c13 = arith.constant 13 : index
    %c0_90 = arith.constant 0 : index
    %223 = vector.load %arg4[%c13, %c0_90] : memref<81x64xf32, #tpu.memory_space<vmem>>, vector<1x64xf32>
    %224 = vector.broadcast %223 : vector<1x64xf32> to vector<8x64xf32>
    %225 = arith.mulf %222, %224 : vector<8x64xf32>
    %c14 = arith.constant 14 : index
    %c0_91 = arith.constant 0 : index
    %226 = vector.load %arg4[%c14, %c0_91] : memref<81x64xf32, #tpu.memory_space<vmem>>, vector<1x64xf32>
    %227 = vector.broadcast %226 : vector<1x64xf32> to vector<8x64xf32>
    %228 = arith.addf %225, %227 : vector<8x64xf32>
    %c11_92 = arith.constant 11 : index
    %c0_93 = arith.constant 0 : index
    %c0_94 = arith.constant 0 : index
    %229 = vector.load %arg3[%c11_92, %c0_93, %c0_94] : memref<47x64x64xf32, #tpu.memory_space<vmem>>, vector<1x64x64xf32>
    %230 = vector.shape_cast %229 : vector<1x64x64xf32> to vector<64x64xf32>
    %231 = arith.truncf %230 : vector<64x64xf32> to vector<64x64xbf16>
    %232 = arith.truncf %228 : vector<8x64xf32> to vector<8x64xbf16>
    %cst_95 = arith.constant dense<0.000000e+00> : vector<8x64xf32>
    %233 = tpu.matmul %232, %231, %cst_95 {dimension_numbers = #tpu.dot_dimension_numbers<[1], [0], [0], [1], [0, 0, 1, 1], [], []>} : vector<8x64xbf16>, vector<64x64xbf16>, vector<8x64xf32> -> vector<8x64xf32>
    %c15 = arith.constant 15 : index
    %c0_96 = arith.constant 0 : index
    %234 = vector.load %arg4[%c15, %c0_96] : memref<81x64xf32, #tpu.memory_space<vmem>>, vector<1x64xf32>
    %235 = vector.broadcast %234 : vector<1x64xf32> to vector<8x64xf32>
    %236 = arith.addf %233, %235 : vector<8x64xf32>
    %c12_97 = arith.constant 12 : index
    %c0_98 = arith.constant 0 : index
    %c0_99 = arith.constant 0 : index
    %237 = vector.load %arg3[%c12_97, %c0_98, %c0_99] : memref<47x64x64xf32, #tpu.memory_space<vmem>>, vector<1x64x64xf32>
    %238 = vector.shape_cast %237 : vector<1x64x64xf32> to vector<64x64xf32>
    %239 = arith.truncf %238 : vector<64x64xf32> to vector<64x64xbf16>
    %240 = arith.truncf %228 : vector<8x64xf32> to vector<8x64xbf16>
    %cst_100 = arith.constant dense<0.000000e+00> : vector<8x64xf32>
    %241 = tpu.matmul %240, %239, %cst_100 {dimension_numbers = #tpu.dot_dimension_numbers<[1], [0], [0], [1], [0, 0, 1, 1], [], []>} : vector<8x64xbf16>, vector<64x64xbf16>, vector<8x64xf32> -> vector<8x64xf32>
    %c16 = arith.constant 16 : index
    %c0_101 = arith.constant 0 : index
    %242 = vector.load %arg4[%c16, %c0_101] : memref<81x64xf32, #tpu.memory_space<vmem>>, vector<1x64xf32>
    %243 = vector.broadcast %242 : vector<1x64xf32> to vector<8x64xf32>
    %244 = arith.addf %241, %243 : vector<8x64xf32>
    %c13_102 = arith.constant 13 : index
    %c0_103 = arith.constant 0 : index
    %c0_104 = arith.constant 0 : index
    %245 = vector.load %arg3[%c13_102, %c0_103, %c0_104] : memref<47x64x64xf32, #tpu.memory_space<vmem>>, vector<1x64x64xf32>
    %246 = vector.shape_cast %245 : vector<1x64x64xf32> to vector<64x64xf32>
    %247 = arith.truncf %246 : vector<64x64xf32> to vector<64x64xbf16>
    %248 = arith.truncf %228 : vector<8x64xf32> to vector<8x64xbf16>
    %cst_105 = arith.constant dense<0.000000e+00> : vector<8x64xf32>
    %249 = tpu.matmul %248, %247, %cst_105 {dimension_numbers = #tpu.dot_dimension_numbers<[1], [0], [0], [1], [0, 0, 1, 1], [], []>} : vector<8x64xbf16>, vector<64x64xbf16>, vector<8x64xf32> -> vector<8x64xf32>
    %c17 = arith.constant 17 : index
    %c0_106 = arith.constant 0 : index
    %250 = vector.load %arg4[%c17, %c0_106] : memref<81x64xf32, #tpu.memory_space<vmem>>, vector<1x64xf32>
    %251 = vector.broadcast %250 : vector<1x64xf32> to vector<8x64xf32>
    %252 = arith.addf %249, %251 : vector<8x64xf32>
    %c14_107 = arith.constant 14 : index
    %c0_108 = arith.constant 0 : index
    %c0_109 = arith.constant 0 : index
    %253 = vector.load %arg3[%c14_107, %c0_108, %c0_109] : memref<47x64x64xf32, #tpu.memory_space<vmem>>, vector<1x64x64xf32>
    %254 = vector.shape_cast %253 : vector<1x64x64xf32> to vector<64x64xf32>
    %255 = arith.truncf %254 : vector<64x64xf32> to vector<64x64xbf16>
    %cst_110 = arith.constant 0.000000e+00 : f32
    %256 = vector.broadcast %cst_110 : f32 to vector<8x64xf32>
    %257 = vector.extract_strided_slice %236 {offsets = [0, 0], sizes = [8, 16], strides = [1, 1]} : vector<8x64xf32> to vector<8x16xf32>
    %258 = arith.truncf %257 : vector<8x16xf32> to vector<8x16xbf16>
    %259 = vector.extract_strided_slice %244 {offsets = [0, 0], sizes = [8, 16], strides = [1, 1]} : vector<8x64xf32> to vector<8x16xf32>
    %260 = arith.truncf %259 : vector<8x16xf32> to vector<8x16xbf16>
    %cst_111 = arith.constant dense<0.000000e+00> : vector<8x8xf32>
    %261 = tpu.matmul %258, %260, %cst_111 {dimension_numbers = #tpu.dot_dimension_numbers<[1], [1], [0], [0], [0, 0, 1, 0], [], []>} : vector<8x16xbf16>, vector<8x16xbf16>, vector<8x8xf32> -> vector<8x8xf32>
    %cst_112 = arith.constant dense<0xFF800000> : vector<8xf32>
    %262 = vector.multi_reduction <maximumf>, %261, %cst_112 [1] : vector<8x8xf32> to vector<8xf32>
    %263 = vector.shape_cast %262 : vector<8xf32> to vector<8x1xf32>
    %264 = vector.broadcast %263 : vector<8x1xf32> to vector<8x8xf32>
    %265 = arith.subf %261, %264 : vector<8x8xf32>
    %266 = math.exp %265 : vector<8x8xf32>
    %cst_113 = arith.constant dense<0.000000e+00> : vector<8xf32>
    %267 = vector.multi_reduction <add>, %266, %cst_113 [1] : vector<8x8xf32> to vector<8xf32>
    %268 = vector.shape_cast %267 : vector<8xf32> to vector<8x1xf32>
    %269 = tpu.reciprocal %268 {approx = true} : vector<8x1xf32> -> vector<8x1xf32>
    %270 = vector.broadcast %269 : vector<8x1xf32> to vector<8x8xf32>
    %271 = arith.mulf %266, %270 : vector<8x8xf32>
    %272 = vector.extract_strided_slice %252 {offsets = [0, 0], sizes = [8, 16], strides = [1, 1]} : vector<8x64xf32> to vector<8x16xf32>
    %273 = arith.truncf %271 : vector<8x8xf32> to vector<8x8xbf16>
    %274 = arith.truncf %272 : vector<8x16xf32> to vector<8x16xbf16>
    %cst_114 = arith.constant dense<0.000000e+00> : vector<8x16xf32>
    %275 = tpu.matmul %273, %274, %cst_114 {dimension_numbers = #tpu.dot_dimension_numbers<[1], [0], [0], [1], [0, 0, 1, 1], [], []>} : vector<8x8xbf16>, vector<8x16xbf16>, vector<8x16xf32> -> vector<8x16xf32>
    %276 = vector.extract_strided_slice %255 {offsets = [0, 0], sizes = [16, 64], strides = [1, 1]} : vector<64x64xbf16> to vector<16x64xbf16>
    %277 = arith.truncf %275 : vector<8x16xf32> to vector<8x16xbf16>
    %cst_115 = arith.constant dense<0.000000e+00> : vector<8x64xf32>
    %278 = tpu.matmul %277, %276, %cst_115 {dimension_numbers = #tpu.dot_dimension_numbers<[1], [0], [0], [1], [0, 0, 1, 1], [], []>} : vector<8x16xbf16>, vector<16x64xbf16>, vector<8x64xf32> -> vector<8x64xf32>
    %279 = arith.addf %256, %278 : vector<8x64xf32>
    %280 = vector.extract_strided_slice %236 {offsets = [0, 16], sizes = [8, 16], strides = [1, 1]} : vector<8x64xf32> to vector<8x16xf32>
    %281 = arith.truncf %280 : vector<8x16xf32> to vector<8x16xbf16>
    %282 = vector.extract_strided_slice %244 {offsets = [0, 16], sizes = [8, 16], strides = [1, 1]} : vector<8x64xf32> to vector<8x16xf32>
    %283 = arith.truncf %282 : vector<8x16xf32> to vector<8x16xbf16>
    %cst_116 = arith.constant dense<0.000000e+00> : vector<8x8xf32>
    %284 = tpu.matmul %281, %283, %cst_116 {dimension_numbers = #tpu.dot_dimension_numbers<[1], [1], [0], [0], [0, 0, 1, 0], [], []>} : vector<8x16xbf16>, vector<8x16xbf16>, vector<8x8xf32> -> vector<8x8xf32>
    %cst_117 = arith.constant dense<0xFF800000> : vector<8xf32>
    %285 = vector.multi_reduction <maximumf>, %284, %cst_117 [1] : vector<8x8xf32> to vector<8xf32>
    %286 = vector.shape_cast %285 : vector<8xf32> to vector<8x1xf32>
    %287 = vector.broadcast %286 : vector<8x1xf32> to vector<8x8xf32>
    %288 = arith.subf %284, %287 : vector<8x8xf32>
    %289 = math.exp %288 : vector<8x8xf32>
    %cst_118 = arith.constant dense<0.000000e+00> : vector<8xf32>
    %290 = vector.multi_reduction <add>, %289, %cst_118 [1] : vector<8x8xf32> to vector<8xf32>
    %291 = vector.shape_cast %290 : vector<8xf32> to vector<8x1xf32>
    %292 = tpu.reciprocal %291 {approx = true} : vector<8x1xf32> -> vector<8x1xf32>
    %293 = vector.broadcast %292 : vector<8x1xf32> to vector<8x8xf32>
    %294 = arith.mulf %289, %293 : vector<8x8xf32>
    %295 = vector.extract_strided_slice %252 {offsets = [0, 16], sizes = [8, 16], strides = [1, 1]} : vector<8x64xf32> to vector<8x16xf32>
    %296 = arith.truncf %294 : vector<8x8xf32> to vector<8x8xbf16>
    %297 = arith.truncf %295 : vector<8x16xf32> to vector<8x16xbf16>
    %cst_119 = arith.constant dense<0.000000e+00> : vector<8x16xf32>
    %298 = tpu.matmul %296, %297, %cst_119 {dimension_numbers = #tpu.dot_dimension_numbers<[1], [0], [0], [1], [0, 0, 1, 1], [], []>} : vector<8x8xbf16>, vector<8x16xbf16>, vector<8x16xf32> -> vector<8x16xf32>
    %299 = vector.extract_strided_slice %255 {offsets = [16, 0], sizes = [16, 64], strides = [1, 1]} : vector<64x64xbf16> to vector<16x64xbf16>
    %300 = arith.truncf %298 : vector<8x16xf32> to vector<8x16xbf16>
    %cst_120 = arith.constant dense<0.000000e+00> : vector<8x64xf32>
    %301 = tpu.matmul %300, %299, %cst_120 {dimension_numbers = #tpu.dot_dimension_numbers<[1], [0], [0], [1], [0, 0, 1, 1], [], []>} : vector<8x16xbf16>, vector<16x64xbf16>, vector<8x64xf32> -> vector<8x64xf32>
    %302 = arith.addf %279, %301 : vector<8x64xf32>
    %303 = vector.extract_strided_slice %236 {offsets = [0, 32], sizes = [8, 16], strides = [1, 1]} : vector<8x64xf32> to vector<8x16xf32>
    %304 = arith.truncf %303 : vector<8x16xf32> to vector<8x16xbf16>
    %305 = vector.extract_strided_slice %244 {offsets = [0, 32], sizes = [8, 16], strides = [1, 1]} : vector<8x64xf32> to vector<8x16xf32>
    %306 = arith.truncf %305 : vector<8x16xf32> to vector<8x16xbf16>
    %cst_121 = arith.constant dense<0.000000e+00> : vector<8x8xf32>
    %307 = tpu.matmul %304, %306, %cst_121 {dimension_numbers = #tpu.dot_dimension_numbers<[1], [1], [0], [0], [0, 0, 1, 0], [], []>} : vector<8x16xbf16>, vector<8x16xbf16>, vector<8x8xf32> -> vector<8x8xf32>
    %cst_122 = arith.constant dense<0xFF800000> : vector<8xf32>
    %308 = vector.multi_reduction <maximumf>, %307, %cst_122 [1] : vector<8x8xf32> to vector<8xf32>
    %309 = vector.shape_cast %308 : vector<8xf32> to vector<8x1xf32>
    %310 = vector.broadcast %309 : vector<8x1xf32> to vector<8x8xf32>
    %311 = arith.subf %307, %310 : vector<8x8xf32>
    %312 = math.exp %311 : vector<8x8xf32>
    %cst_123 = arith.constant dense<0.000000e+00> : vector<8xf32>
    %313 = vector.multi_reduction <add>, %312, %cst_123 [1] : vector<8x8xf32> to vector<8xf32>
    %314 = vector.shape_cast %313 : vector<8xf32> to vector<8x1xf32>
    %315 = tpu.reciprocal %314 {approx = true} : vector<8x1xf32> -> vector<8x1xf32>
    %316 = vector.broadcast %315 : vector<8x1xf32> to vector<8x8xf32>
    %317 = arith.mulf %312, %316 : vector<8x8xf32>
    %318 = vector.extract_strided_slice %252 {offsets = [0, 32], sizes = [8, 16], strides = [1, 1]} : vector<8x64xf32> to vector<8x16xf32>
    %319 = arith.truncf %317 : vector<8x8xf32> to vector<8x8xbf16>
    %320 = arith.truncf %318 : vector<8x16xf32> to vector<8x16xbf16>
    %cst_124 = arith.constant dense<0.000000e+00> : vector<8x16xf32>
    %321 = tpu.matmul %319, %320, %cst_124 {dimension_numbers = #tpu.dot_dimension_numbers<[1], [0], [0], [1], [0, 0, 1, 1], [], []>} : vector<8x8xbf16>, vector<8x16xbf16>, vector<8x16xf32> -> vector<8x16xf32>
    %322 = vector.extract_strided_slice %255 {offsets = [32, 0], sizes = [16, 64], strides = [1, 1]} : vector<64x64xbf16> to vector<16x64xbf16>
    %323 = arith.truncf %321 : vector<8x16xf32> to vector<8x16xbf16>
    %cst_125 = arith.constant dense<0.000000e+00> : vector<8x64xf32>
    %324 = tpu.matmul %323, %322, %cst_125 {dimension_numbers = #tpu.dot_dimension_numbers<[1], [0], [0], [1], [0, 0, 1, 1], [], []>} : vector<8x16xbf16>, vector<16x64xbf16>, vector<8x64xf32> -> vector<8x64xf32>
    %325 = arith.addf %302, %324 : vector<8x64xf32>
    %326 = vector.extract_strided_slice %236 {offsets = [0, 48], sizes = [8, 16], strides = [1, 1]} : vector<8x64xf32> to vector<8x16xf32>
    %327 = arith.truncf %326 : vector<8x16xf32> to vector<8x16xbf16>
    %328 = vector.extract_strided_slice %244 {offsets = [0, 48], sizes = [8, 16], strides = [1, 1]} : vector<8x64xf32> to vector<8x16xf32>
    %329 = arith.truncf %328 : vector<8x16xf32> to vector<8x16xbf16>
    %cst_126 = arith.constant dense<0.000000e+00> : vector<8x8xf32>
    %330 = tpu.matmul %327, %329, %cst_126 {dimension_numbers = #tpu.dot_dimension_numbers<[1], [1], [0], [0], [0, 0, 1, 0], [], []>} : vector<8x16xbf16>, vector<8x16xbf16>, vector<8x8xf32> -> vector<8x8xf32>
    %cst_127 = arith.constant dense<0xFF800000> : vector<8xf32>
    %331 = vector.multi_reduction <maximumf>, %330, %cst_127 [1] : vector<8x8xf32> to vector<8xf32>
    %332 = vector.shape_cast %331 : vector<8xf32> to vector<8x1xf32>
    %333 = vector.broadcast %332 : vector<8x1xf32> to vector<8x8xf32>
    %334 = arith.subf %330, %333 : vector<8x8xf32>
    %335 = math.exp %334 : vector<8x8xf32>
    %cst_128 = arith.constant dense<0.000000e+00> : vector<8xf32>
    %336 = vector.multi_reduction <add>, %335, %cst_128 [1] : vector<8x8xf32> to vector<8xf32>
    %337 = vector.shape_cast %336 : vector<8xf32> to vector<8x1xf32>
    %338 = tpu.reciprocal %337 {approx = true} : vector<8x1xf32> -> vector<8x1xf32>
    %339 = vector.broadcast %338 : vector<8x1xf32> to vector<8x8xf32>
    %340 = arith.mulf %335, %339 : vector<8x8xf32>
    %341 = vector.extract_strided_slice %252 {offsets = [0, 48], sizes = [8, 16], strides = [1, 1]} : vector<8x64xf32> to vector<8x16xf32>
    %342 = arith.truncf %340 : vector<8x8xf32> to vector<8x8xbf16>
    %343 = arith.truncf %341 : vector<8x16xf32> to vector<8x16xbf16>
    %cst_129 = arith.constant dense<0.000000e+00> : vector<8x16xf32>
    %344 = tpu.matmul %342, %343, %cst_129 {dimension_numbers = #tpu.dot_dimension_numbers<[1], [0], [0], [1], [0, 0, 1, 1], [], []>} : vector<8x8xbf16>, vector<8x16xbf16>, vector<8x16xf32> -> vector<8x16xf32>
    %345 = vector.extract_strided_slice %255 {offsets = [48, 0], sizes = [16, 64], strides = [1, 1]} : vector<64x64xbf16> to vector<16x64xbf16>
    %346 = arith.truncf %344 : vector<8x16xf32> to vector<8x16xbf16>
    %cst_130 = arith.constant dense<0.000000e+00> : vector<8x64xf32>
    %347 = tpu.matmul %346, %345, %cst_130 {dimension_numbers = #tpu.dot_dimension_numbers<[1], [0], [0], [1], [0, 0, 1, 1], [], []>} : vector<8x16xbf16>, vector<16x64xbf16>, vector<8x64xf32> -> vector<8x64xf32>
    %348 = arith.addf %325, %347 : vector<8x64xf32>
    %c18 = arith.constant 18 : index
    %c0_131 = arith.constant 0 : index
    %349 = vector.load %arg4[%c18, %c0_131] : memref<81x64xf32, #tpu.memory_space<vmem>>, vector<1x64xf32>
    %350 = vector.broadcast %349 : vector<1x64xf32> to vector<8x64xf32>
    %351 = arith.addf %348, %350 : vector<8x64xf32>
    %352 = arith.addf %228, %351 : vector<8x64xf32>
    %cst_132 = arith.constant dense<0.000000e+00> : vector<8xf32>
    %353 = vector.multi_reduction <add>, %352, %cst_132 [1] : vector<8x64xf32> to vector<8xf32>
    %354 = vector.shape_cast %353 : vector<8xf32> to vector<8x1xf32>
    %cst_133 = arith.constant 6.400000e+01 : f32
    %355 = vector.broadcast %cst_133 : f32 to vector<8x1xf32>
    %356 = arith.divf %354, %355 : vector<8x1xf32>
    %357 = vector.broadcast %356 : vector<8x1xf32> to vector<8x64xf32>
    %358 = arith.subf %352, %357 : vector<8x64xf32>
    %359 = arith.mulf %358, %358 : vector<8x64xf32>
    %cst_134 = arith.constant dense<0.000000e+00> : vector<8xf32>
    %360 = vector.multi_reduction <add>, %359, %cst_134 [1] : vector<8x64xf32> to vector<8xf32>
    %361 = vector.shape_cast %360 : vector<8xf32> to vector<8x1xf32>
    %cst_135 = arith.constant 6.400000e+01 : f32
    %362 = vector.broadcast %cst_135 : f32 to vector<8x1xf32>
    %363 = arith.divf %361, %362 : vector<8x1xf32>
    %364 = vector.broadcast %356 : vector<8x1xf32> to vector<8x64xf32>
    %365 = arith.subf %352, %364 : vector<8x64xf32>
    %cst_136 = arith.constant 9.99999974E-6 : f32
    %366 = vector.broadcast %cst_136 : f32 to vector<8x1xf32>
    %367 = arith.addf %363, %366 : vector<8x1xf32>
    %368 = math.rsqrt %367 : vector<8x1xf32>
    %369 = vector.broadcast %368 : vector<8x1xf32> to vector<8x64xf32>
    %370 = arith.mulf %365, %369 : vector<8x64xf32>
    %c21 = arith.constant 21 : index
    %c0_137 = arith.constant 0 : index
    %371 = vector.load %arg4[%c21, %c0_137] : memref<81x64xf32, #tpu.memory_space<vmem>>, vector<1x64xf32>
    %372 = vector.broadcast %371 : vector<1x64xf32> to vector<8x64xf32>
    %373 = arith.mulf %370, %372 : vector<8x64xf32>
    %c22 = arith.constant 22 : index
    %c0_138 = arith.constant 0 : index
    %374 = vector.load %arg4[%c22, %c0_138] : memref<81x64xf32, #tpu.memory_space<vmem>>, vector<1x64xf32>
    %375 = vector.broadcast %374 : vector<1x64xf32> to vector<8x64xf32>
    %376 = arith.addf %373, %375 : vector<8x64xf32>
    %c15_139 = arith.constant 15 : index
    %c0_140 = arith.constant 0 : index
    %c0_141 = arith.constant 0 : index
    %377 = vector.load %arg3[%c15_139, %c0_140, %c0_141] : memref<47x64x64xf32, #tpu.memory_space<vmem>>, vector<1x64x64xf32>
    %378 = vector.shape_cast %377 : vector<1x64x64xf32> to vector<64x64xf32>
    %379 = arith.truncf %378 : vector<64x64xf32> to vector<64x64xbf16>
    %380 = arith.truncf %376 : vector<8x64xf32> to vector<8x64xbf16>
    %cst_142 = arith.constant dense<0.000000e+00> : vector<8x64xf32>
    %381 = tpu.matmul %380, %379, %cst_142 {dimension_numbers = #tpu.dot_dimension_numbers<[1], [0], [0], [1], [0, 0, 1, 1], [], []>} : vector<8x64xbf16>, vector<64x64xbf16>, vector<8x64xf32> -> vector<8x64xf32>
    %c19 = arith.constant 19 : index
    %c0_143 = arith.constant 0 : index
    %382 = vector.load %arg4[%c19, %c0_143] : memref<81x64xf32, #tpu.memory_space<vmem>>, vector<1x64xf32>
    %383 = vector.broadcast %382 : vector<1x64xf32> to vector<8x64xf32>
    %384 = arith.addf %381, %383 : vector<8x64xf32>
    %cst_144 = arith.constant 0.000000e+00 : f32
    %385 = vector.broadcast %cst_144 : f32 to vector<8x64xf32>
    %386 = arith.maximumf %384, %385 : vector<8x64xf32>
    %c16_145 = arith.constant 16 : index
    %c0_146 = arith.constant 0 : index
    %c0_147 = arith.constant 0 : index
    %387 = vector.load %arg3[%c16_145, %c0_146, %c0_147] : memref<47x64x64xf32, #tpu.memory_space<vmem>>, vector<1x64x64xf32>
    %388 = vector.shape_cast %387 : vector<1x64x64xf32> to vector<64x64xf32>
    %389 = arith.truncf %388 : vector<64x64xf32> to vector<64x64xbf16>
    %390 = arith.truncf %386 : vector<8x64xf32> to vector<8x64xbf16>
    %cst_148 = arith.constant dense<0.000000e+00> : vector<8x64xf32>
    %391 = tpu.matmul %390, %389, %cst_148 {dimension_numbers = #tpu.dot_dimension_numbers<[1], [0], [0], [1], [0, 0, 1, 1], [], []>} : vector<8x64xbf16>, vector<64x64xbf16>, vector<8x64xf32> -> vector<8x64xf32>
    %c20 = arith.constant 20 : index
    %c0_149 = arith.constant 0 : index
    %392 = vector.load %arg4[%c20, %c0_149] : memref<81x64xf32, #tpu.memory_space<vmem>>, vector<1x64xf32>
    %393 = vector.broadcast %392 : vector<1x64xf32> to vector<8x64xf32>
    %394 = arith.addf %391, %393 : vector<8x64xf32>
    %395 = arith.addf %376, %394 : vector<8x64xf32>
    %cst_150 = arith.constant dense<0.000000e+00> : vector<8xf32>
    %396 = vector.multi_reduction <add>, %395, %cst_150 [1] : vector<8x64xf32> to vector<8xf32>
    %397 = vector.shape_cast %396 : vector<8xf32> to vector<8x1xf32>
    %cst_151 = arith.constant 6.400000e+01 : f32
    %398 = vector.broadcast %cst_151 : f32 to vector<8x1xf32>
    %399 = arith.divf %397, %398 : vector<8x1xf32>
    %400 = vector.broadcast %399 : vector<8x1xf32> to vector<8x64xf32>
    %401 = arith.subf %395, %400 : vector<8x64xf32>
    %402 = arith.mulf %401, %401 : vector<8x64xf32>
    %cst_152 = arith.constant dense<0.000000e+00> : vector<8xf32>
    %403 = vector.multi_reduction <add>, %402, %cst_152 [1] : vector<8x64xf32> to vector<8xf32>
    %404 = vector.shape_cast %403 : vector<8xf32> to vector<8x1xf32>
    %cst_153 = arith.constant 6.400000e+01 : f32
    %405 = vector.broadcast %cst_153 : f32 to vector<8x1xf32>
    %406 = arith.divf %404, %405 : vector<8x1xf32>
    %407 = vector.broadcast %399 : vector<8x1xf32> to vector<8x64xf32>
    %408 = arith.subf %395, %407 : vector<8x64xf32>
    %cst_154 = arith.constant 9.99999974E-6 : f32
    %409 = vector.broadcast %cst_154 : f32 to vector<8x1xf32>
    %410 = arith.addf %406, %409 : vector<8x1xf32>
    %411 = math.rsqrt %410 : vector<8x1xf32>
    %412 = vector.broadcast %411 : vector<8x1xf32> to vector<8x64xf32>
    %413 = arith.mulf %408, %412 : vector<8x64xf32>
    %c23 = arith.constant 23 : index
    %c0_155 = arith.constant 0 : index
    %414 = vector.load %arg4[%c23, %c0_155] : memref<81x64xf32, #tpu.memory_space<vmem>>, vector<1x64xf32>
    %415 = vector.broadcast %414 : vector<1x64xf32> to vector<8x64xf32>
    %416 = arith.mulf %413, %415 : vector<8x64xf32>
    %c24 = arith.constant 24 : index
    %c0_156 = arith.constant 0 : index
    %417 = vector.load %arg4[%c24, %c0_156] : memref<81x64xf32, #tpu.memory_space<vmem>>, vector<1x64xf32>
    %418 = vector.broadcast %417 : vector<1x64xf32> to vector<8x64xf32>
    %419 = arith.addf %416, %418 : vector<8x64xf32>
    %c17_157 = arith.constant 17 : index
    %c0_158 = arith.constant 0 : index
    %c0_159 = arith.constant 0 : index
    %420 = vector.load %arg3[%c17_157, %c0_158, %c0_159] : memref<47x64x64xf32, #tpu.memory_space<vmem>>, vector<1x64x64xf32>
    %421 = vector.shape_cast %420 : vector<1x64x64xf32> to vector<64x64xf32>
    %422 = arith.truncf %421 : vector<64x64xf32> to vector<64x64xbf16>
    %423 = arith.truncf %419 : vector<8x64xf32> to vector<8x64xbf16>
    %cst_160 = arith.constant dense<0.000000e+00> : vector<8x64xf32>
    %424 = tpu.matmul %423, %422, %cst_160 {dimension_numbers = #tpu.dot_dimension_numbers<[1], [0], [0], [1], [0, 0, 1, 1], [], []>} : vector<8x64xbf16>, vector<64x64xbf16>, vector<8x64xf32> -> vector<8x64xf32>
    %c25 = arith.constant 25 : index
    %c0_161 = arith.constant 0 : index
    %425 = vector.load %arg4[%c25, %c0_161] : memref<81x64xf32, #tpu.memory_space<vmem>>, vector<1x64xf32>
    %426 = vector.broadcast %425 : vector<1x64xf32> to vector<8x64xf32>
    %427 = arith.addf %424, %426 : vector<8x64xf32>
    %c18_162 = arith.constant 18 : index
    %c0_163 = arith.constant 0 : index
    %c0_164 = arith.constant 0 : index
    %428 = vector.load %arg3[%c18_162, %c0_163, %c0_164] : memref<47x64x64xf32, #tpu.memory_space<vmem>>, vector<1x64x64xf32>
    %429 = vector.shape_cast %428 : vector<1x64x64xf32> to vector<64x64xf32>
    %430 = arith.truncf %429 : vector<64x64xf32> to vector<64x64xbf16>
    %431 = arith.truncf %419 : vector<8x64xf32> to vector<8x64xbf16>
    %cst_165 = arith.constant dense<0.000000e+00> : vector<8x64xf32>
    %432 = tpu.matmul %431, %430, %cst_165 {dimension_numbers = #tpu.dot_dimension_numbers<[1], [0], [0], [1], [0, 0, 1, 1], [], []>} : vector<8x64xbf16>, vector<64x64xbf16>, vector<8x64xf32> -> vector<8x64xf32>
    %c26 = arith.constant 26 : index
    %c0_166 = arith.constant 0 : index
    %433 = vector.load %arg4[%c26, %c0_166] : memref<81x64xf32, #tpu.memory_space<vmem>>, vector<1x64xf32>
    %434 = vector.broadcast %433 : vector<1x64xf32> to vector<8x64xf32>
    %435 = arith.addf %432, %434 : vector<8x64xf32>
    %c19_167 = arith.constant 19 : index
    %c0_168 = arith.constant 0 : index
    %c0_169 = arith.constant 0 : index
    %436 = vector.load %arg3[%c19_167, %c0_168, %c0_169] : memref<47x64x64xf32, #tpu.memory_space<vmem>>, vector<1x64x64xf32>
    %437 = vector.shape_cast %436 : vector<1x64x64xf32> to vector<64x64xf32>
    %438 = arith.truncf %437 : vector<64x64xf32> to vector<64x64xbf16>
    %439 = arith.truncf %419 : vector<8x64xf32> to vector<8x64xbf16>
    %cst_170 = arith.constant dense<0.000000e+00> : vector<8x64xf32>
    %440 = tpu.matmul %439, %438, %cst_170 {dimension_numbers = #tpu.dot_dimension_numbers<[1], [0], [0], [1], [0, 0, 1, 1], [], []>} : vector<8x64xbf16>, vector<64x64xbf16>, vector<8x64xf32> -> vector<8x64xf32>
    %c27 = arith.constant 27 : index
    %c0_171 = arith.constant 0 : index
    %441 = vector.load %arg4[%c27, %c0_171] : memref<81x64xf32, #tpu.memory_space<vmem>>, vector<1x64xf32>
    %442 = vector.broadcast %441 : vector<1x64xf32> to vector<8x64xf32>
    %443 = arith.addf %440, %442 : vector<8x64xf32>
    %c20_172 = arith.constant 20 : index
    %c0_173 = arith.constant 0 : index
    %c0_174 = arith.constant 0 : index
    %444 = vector.load %arg3[%c20_172, %c0_173, %c0_174] : memref<47x64x64xf32, #tpu.memory_space<vmem>>, vector<1x64x64xf32>
    %445 = vector.shape_cast %444 : vector<1x64x64xf32> to vector<64x64xf32>
    %446 = arith.truncf %445 : vector<64x64xf32> to vector<64x64xbf16>
    %cst_175 = arith.constant 0.000000e+00 : f32
    %447 = vector.broadcast %cst_175 : f32 to vector<8x64xf32>
    %448 = vector.extract_strided_slice %427 {offsets = [0, 0], sizes = [8, 16], strides = [1, 1]} : vector<8x64xf32> to vector<8x16xf32>
    %449 = arith.truncf %448 : vector<8x16xf32> to vector<8x16xbf16>
    %450 = vector.extract_strided_slice %435 {offsets = [0, 0], sizes = [8, 16], strides = [1, 1]} : vector<8x64xf32> to vector<8x16xf32>
    %451 = arith.truncf %450 : vector<8x16xf32> to vector<8x16xbf16>
    %cst_176 = arith.constant dense<0.000000e+00> : vector<8x8xf32>
    %452 = tpu.matmul %449, %451, %cst_176 {dimension_numbers = #tpu.dot_dimension_numbers<[1], [1], [0], [0], [0, 0, 1, 0], [], []>} : vector<8x16xbf16>, vector<8x16xbf16>, vector<8x8xf32> -> vector<8x8xf32>
    %cst_177 = arith.constant dense<0xFF800000> : vector<8xf32>
    %453 = vector.multi_reduction <maximumf>, %452, %cst_177 [1] : vector<8x8xf32> to vector<8xf32>
    %454 = vector.shape_cast %453 : vector<8xf32> to vector<8x1xf32>
    %455 = vector.broadcast %454 : vector<8x1xf32> to vector<8x8xf32>
    %456 = arith.subf %452, %455 : vector<8x8xf32>
    %457 = math.exp %456 : vector<8x8xf32>
    %cst_178 = arith.constant dense<0.000000e+00> : vector<8xf32>
    %458 = vector.multi_reduction <add>, %457, %cst_178 [1] : vector<8x8xf32> to vector<8xf32>
    %459 = vector.shape_cast %458 : vector<8xf32> to vector<8x1xf32>
    %460 = tpu.reciprocal %459 {approx = true} : vector<8x1xf32> -> vector<8x1xf32>
    %461 = vector.broadcast %460 : vector<8x1xf32> to vector<8x8xf32>
    %462 = arith.mulf %457, %461 : vector<8x8xf32>
    %463 = vector.extract_strided_slice %443 {offsets = [0, 0], sizes = [8, 16], strides = [1, 1]} : vector<8x64xf32> to vector<8x16xf32>
    %464 = arith.truncf %462 : vector<8x8xf32> to vector<8x8xbf16>
    %465 = arith.truncf %463 : vector<8x16xf32> to vector<8x16xbf16>
    %cst_179 = arith.constant dense<0.000000e+00> : vector<8x16xf32>
    %466 = tpu.matmul %464, %465, %cst_179 {dimension_numbers = #tpu.dot_dimension_numbers<[1], [0], [0], [1], [0, 0, 1, 1], [], []>} : vector<8x8xbf16>, vector<8x16xbf16>, vector<8x16xf32> -> vector<8x16xf32>
    %467 = vector.extract_strided_slice %446 {offsets = [0, 0], sizes = [16, 64], strides = [1, 1]} : vector<64x64xbf16> to vector<16x64xbf16>
    %468 = arith.truncf %466 : vector<8x16xf32> to vector<8x16xbf16>
    %cst_180 = arith.constant dense<0.000000e+00> : vector<8x64xf32>
    %469 = tpu.matmul %468, %467, %cst_180 {dimension_numbers = #tpu.dot_dimension_numbers<[1], [0], [0], [1], [0, 0, 1, 1], [], []>} : vector<8x16xbf16>, vector<16x64xbf16>, vector<8x64xf32> -> vector<8x64xf32>
    %470 = arith.addf %447, %469 : vector<8x64xf32>
    %471 = vector.extract_strided_slice %427 {offsets = [0, 16], sizes = [8, 16], strides = [1, 1]} : vector<8x64xf32> to vector<8x16xf32>
    %472 = arith.truncf %471 : vector<8x16xf32> to vector<8x16xbf16>
    %473 = vector.extract_strided_slice %435 {offsets = [0, 16], sizes = [8, 16], strides = [1, 1]} : vector<8x64xf32> to vector<8x16xf32>
    %474 = arith.truncf %473 : vector<8x16xf32> to vector<8x16xbf16>
    %cst_181 = arith.constant dense<0.000000e+00> : vector<8x8xf32>
    %475 = tpu.matmul %472, %474, %cst_181 {dimension_numbers = #tpu.dot_dimension_numbers<[1], [1], [0], [0], [0, 0, 1, 0], [], []>} : vector<8x16xbf16>, vector<8x16xbf16>, vector<8x8xf32> -> vector<8x8xf32>
    %cst_182 = arith.constant dense<0xFF800000> : vector<8xf32>
    %476 = vector.multi_reduction <maximumf>, %475, %cst_182 [1] : vector<8x8xf32> to vector<8xf32>
    %477 = vector.shape_cast %476 : vector<8xf32> to vector<8x1xf32>
    %478 = vector.broadcast %477 : vector<8x1xf32> to vector<8x8xf32>
    %479 = arith.subf %475, %478 : vector<8x8xf32>
    %480 = math.exp %479 : vector<8x8xf32>
    %cst_183 = arith.constant dense<0.000000e+00> : vector<8xf32>
    %481 = vector.multi_reduction <add>, %480, %cst_183 [1] : vector<8x8xf32> to vector<8xf32>
    %482 = vector.shape_cast %481 : vector<8xf32> to vector<8x1xf32>
    %483 = tpu.reciprocal %482 {approx = true} : vector<8x1xf32> -> vector<8x1xf32>
    %484 = vector.broadcast %483 : vector<8x1xf32> to vector<8x8xf32>
    %485 = arith.mulf %480, %484 : vector<8x8xf32>
    %486 = vector.extract_strided_slice %443 {offsets = [0, 16], sizes = [8, 16], strides = [1, 1]} : vector<8x64xf32> to vector<8x16xf32>
    %487 = arith.truncf %485 : vector<8x8xf32> to vector<8x8xbf16>
    %488 = arith.truncf %486 : vector<8x16xf32> to vector<8x16xbf16>
    %cst_184 = arith.constant dense<0.000000e+00> : vector<8x16xf32>
    %489 = tpu.matmul %487, %488, %cst_184 {dimension_numbers = #tpu.dot_dimension_numbers<[1], [0], [0], [1], [0, 0, 1, 1], [], []>} : vector<8x8xbf16>, vector<8x16xbf16>, vector<8x16xf32> -> vector<8x16xf32>
    %490 = vector.extract_strided_slice %446 {offsets = [16, 0], sizes = [16, 64], strides = [1, 1]} : vector<64x64xbf16> to vector<16x64xbf16>
    %491 = arith.truncf %489 : vector<8x16xf32> to vector<8x16xbf16>
    %cst_185 = arith.constant dense<0.000000e+00> : vector<8x64xf32>
    %492 = tpu.matmul %491, %490, %cst_185 {dimension_numbers = #tpu.dot_dimension_numbers<[1], [0], [0], [1], [0, 0, 1, 1], [], []>} : vector<8x16xbf16>, vector<16x64xbf16>, vector<8x64xf32> -> vector<8x64xf32>
    %493 = arith.addf %470, %492 : vector<8x64xf32>
    %494 = vector.extract_strided_slice %427 {offsets = [0, 32], sizes = [8, 16], strides = [1, 1]} : vector<8x64xf32> to vector<8x16xf32>
    %495 = arith.truncf %494 : vector<8x16xf32> to vector<8x16xbf16>
    %496 = vector.extract_strided_slice %435 {offsets = [0, 32], sizes = [8, 16], strides = [1, 1]} : vector<8x64xf32> to vector<8x16xf32>
    %497 = arith.truncf %496 : vector<8x16xf32> to vector<8x16xbf16>
    %cst_186 = arith.constant dense<0.000000e+00> : vector<8x8xf32>
    %498 = tpu.matmul %495, %497, %cst_186 {dimension_numbers = #tpu.dot_dimension_numbers<[1], [1], [0], [0], [0, 0, 1, 0], [], []>} : vector<8x16xbf16>, vector<8x16xbf16>, vector<8x8xf32> -> vector<8x8xf32>
    %cst_187 = arith.constant dense<0xFF800000> : vector<8xf32>
    %499 = vector.multi_reduction <maximumf>, %498, %cst_187 [1] : vector<8x8xf32> to vector<8xf32>
    %500 = vector.shape_cast %499 : vector<8xf32> to vector<8x1xf32>
    %501 = vector.broadcast %500 : vector<8x1xf32> to vector<8x8xf32>
    %502 = arith.subf %498, %501 : vector<8x8xf32>
    %503 = math.exp %502 : vector<8x8xf32>
    %cst_188 = arith.constant dense<0.000000e+00> : vector<8xf32>
    %504 = vector.multi_reduction <add>, %503, %cst_188 [1] : vector<8x8xf32> to vector<8xf32>
    %505 = vector.shape_cast %504 : vector<8xf32> to vector<8x1xf32>
    %506 = tpu.reciprocal %505 {approx = true} : vector<8x1xf32> -> vector<8x1xf32>
    %507 = vector.broadcast %506 : vector<8x1xf32> to vector<8x8xf32>
    %508 = arith.mulf %503, %507 : vector<8x8xf32>
    %509 = vector.extract_strided_slice %443 {offsets = [0, 32], sizes = [8, 16], strides = [1, 1]} : vector<8x64xf32> to vector<8x16xf32>
    %510 = arith.truncf %508 : vector<8x8xf32> to vector<8x8xbf16>
    %511 = arith.truncf %509 : vector<8x16xf32> to vector<8x16xbf16>
    %cst_189 = arith.constant dense<0.000000e+00> : vector<8x16xf32>
    %512 = tpu.matmul %510, %511, %cst_189 {dimension_numbers = #tpu.dot_dimension_numbers<[1], [0], [0], [1], [0, 0, 1, 1], [], []>} : vector<8x8xbf16>, vector<8x16xbf16>, vector<8x16xf32> -> vector<8x16xf32>
    %513 = vector.extract_strided_slice %446 {offsets = [32, 0], sizes = [16, 64], strides = [1, 1]} : vector<64x64xbf16> to vector<16x64xbf16>
    %514 = arith.truncf %512 : vector<8x16xf32> to vector<8x16xbf16>
    %cst_190 = arith.constant dense<0.000000e+00> : vector<8x64xf32>
    %515 = tpu.matmul %514, %513, %cst_190 {dimension_numbers = #tpu.dot_dimension_numbers<[1], [0], [0], [1], [0, 0, 1, 1], [], []>} : vector<8x16xbf16>, vector<16x64xbf16>, vector<8x64xf32> -> vector<8x64xf32>
    %516 = arith.addf %493, %515 : vector<8x64xf32>
    %517 = vector.extract_strided_slice %427 {offsets = [0, 48], sizes = [8, 16], strides = [1, 1]} : vector<8x64xf32> to vector<8x16xf32>
    %518 = arith.truncf %517 : vector<8x16xf32> to vector<8x16xbf16>
    %519 = vector.extract_strided_slice %435 {offsets = [0, 48], sizes = [8, 16], strides = [1, 1]} : vector<8x64xf32> to vector<8x16xf32>
    %520 = arith.truncf %519 : vector<8x16xf32> to vector<8x16xbf16>
    %cst_191 = arith.constant dense<0.000000e+00> : vector<8x8xf32>
    %521 = tpu.matmul %518, %520, %cst_191 {dimension_numbers = #tpu.dot_dimension_numbers<[1], [1], [0], [0], [0, 0, 1, 0], [], []>} : vector<8x16xbf16>, vector<8x16xbf16>, vector<8x8xf32> -> vector<8x8xf32>
    %cst_192 = arith.constant dense<0xFF800000> : vector<8xf32>
    %522 = vector.multi_reduction <maximumf>, %521, %cst_192 [1] : vector<8x8xf32> to vector<8xf32>
    %523 = vector.shape_cast %522 : vector<8xf32> to vector<8x1xf32>
    %524 = vector.broadcast %523 : vector<8x1xf32> to vector<8x8xf32>
    %525 = arith.subf %521, %524 : vector<8x8xf32>
    %526 = math.exp %525 : vector<8x8xf32>
    %cst_193 = arith.constant dense<0.000000e+00> : vector<8xf32>
    %527 = vector.multi_reduction <add>, %526, %cst_193 [1] : vector<8x8xf32> to vector<8xf32>
    %528 = vector.shape_cast %527 : vector<8xf32> to vector<8x1xf32>
    %529 = tpu.reciprocal %528 {approx = true} : vector<8x1xf32> -> vector<8x1xf32>
    %530 = vector.broadcast %529 : vector<8x1xf32> to vector<8x8xf32>
    %531 = arith.mulf %526, %530 : vector<8x8xf32>
    %532 = vector.extract_strided_slice %443 {offsets = [0, 48], sizes = [8, 16], strides = [1, 1]} : vector<8x64xf32> to vector<8x16xf32>
    %533 = arith.truncf %531 : vector<8x8xf32> to vector<8x8xbf16>
    %534 = arith.truncf %532 : vector<8x16xf32> to vector<8x16xbf16>
    %cst_194 = arith.constant dense<0.000000e+00> : vector<8x16xf32>
    %535 = tpu.matmul %533, %534, %cst_194 {dimension_numbers = #tpu.dot_dimension_numbers<[1], [0], [0], [1], [0, 0, 1, 1], [], []>} : vector<8x8xbf16>, vector<8x16xbf16>, vector<8x16xf32> -> vector<8x16xf32>
    %536 = vector.extract_strided_slice %446 {offsets = [48, 0], sizes = [16, 64], strides = [1, 1]} : vector<64x64xbf16> to vector<16x64xbf16>
    %537 = arith.truncf %535 : vector<8x16xf32> to vector<8x16xbf16>
    %cst_195 = arith.constant dense<0.000000e+00> : vector<8x64xf32>
    %538 = tpu.matmul %537, %536, %cst_195 {dimension_numbers = #tpu.dot_dimension_numbers<[1], [0], [0], [1], [0, 0, 1, 1], [], []>} : vector<8x16xbf16>, vector<16x64xbf16>, vector<8x64xf32> -> vector<8x64xf32>
    %539 = arith.addf %516, %538 : vector<8x64xf32>
    %c28 = arith.constant 28 : index
    %c0_196 = arith.constant 0 : index
    %540 = vector.load %arg4[%c28, %c0_196] : memref<81x64xf32, #tpu.memory_space<vmem>>, vector<1x64xf32>
    %541 = vector.broadcast %540 : vector<1x64xf32> to vector<8x64xf32>
    %542 = arith.addf %539, %541 : vector<8x64xf32>
    %543 = arith.addf %419, %542 : vector<8x64xf32>
    %cst_197 = arith.constant dense<0.000000e+00> : vector<8xf32>
    %544 = vector.multi_reduction <add>, %543, %cst_197 [1] : vector<8x64xf32> to vector<8xf32>
    %545 = vector.shape_cast %544 : vector<8xf32> to vector<8x1xf32>
    %cst_198 = arith.constant 6.400000e+01 : f32
    %546 = vector.broadcast %cst_198 : f32 to vector<8x1xf32>
    %547 = arith.divf %545, %546 : vector<8x1xf32>
    %548 = vector.broadcast %547 : vector<8x1xf32> to vector<8x64xf32>
    %549 = arith.subf %543, %548 : vector<8x64xf32>
    %550 = arith.mulf %549, %549 : vector<8x64xf32>
    %cst_199 = arith.constant dense<0.000000e+00> : vector<8xf32>
    %551 = vector.multi_reduction <add>, %550, %cst_199 [1] : vector<8x64xf32> to vector<8xf32>
    %552 = vector.shape_cast %551 : vector<8xf32> to vector<8x1xf32>
    %cst_200 = arith.constant 6.400000e+01 : f32
    %553 = vector.broadcast %cst_200 : f32 to vector<8x1xf32>
    %554 = arith.divf %552, %553 : vector<8x1xf32>
    %555 = vector.broadcast %547 : vector<8x1xf32> to vector<8x64xf32>
    %556 = arith.subf %543, %555 : vector<8x64xf32>
    %cst_201 = arith.constant 9.99999974E-6 : f32
    %557 = vector.broadcast %cst_201 : f32 to vector<8x1xf32>
    %558 = arith.addf %554, %557 : vector<8x1xf32>
    %559 = math.rsqrt %558 : vector<8x1xf32>
    %560 = vector.broadcast %559 : vector<8x1xf32> to vector<8x64xf32>
    %561 = arith.mulf %556, %560 : vector<8x64xf32>
    %c31 = arith.constant 31 : index
    %c0_202 = arith.constant 0 : index
    %562 = vector.load %arg4[%c31, %c0_202] : memref<81x64xf32, #tpu.memory_space<vmem>>, vector<1x64xf32>
    %563 = vector.broadcast %562 : vector<1x64xf32> to vector<8x64xf32>
    %564 = arith.mulf %561, %563 : vector<8x64xf32>
    %c32 = arith.constant 32 : index
    %c0_203 = arith.constant 0 : index
    %565 = vector.load %arg4[%c32, %c0_203] : memref<81x64xf32, #tpu.memory_space<vmem>>, vector<1x64xf32>
    %566 = vector.broadcast %565 : vector<1x64xf32> to vector<8x64xf32>
    %567 = arith.addf %564, %566 : vector<8x64xf32>
    %c21_204 = arith.constant 21 : index
    %c0_205 = arith.constant 0 : index
    %c0_206 = arith.constant 0 : index
    %568 = vector.load %arg3[%c21_204, %c0_205, %c0_206] : memref<47x64x64xf32, #tpu.memory_space<vmem>>, vector<1x64x64xf32>
    %569 = vector.shape_cast %568 : vector<1x64x64xf32> to vector<64x64xf32>
    %570 = arith.truncf %569 : vector<64x64xf32> to vector<64x64xbf16>
    %571 = arith.truncf %567 : vector<8x64xf32> to vector<8x64xbf16>
    %cst_207 = arith.constant dense<0.000000e+00> : vector<8x64xf32>
    %572 = tpu.matmul %571, %570, %cst_207 {dimension_numbers = #tpu.dot_dimension_numbers<[1], [0], [0], [1], [0, 0, 1, 1], [], []>} : vector<8x64xbf16>, vector<64x64xbf16>, vector<8x64xf32> -> vector<8x64xf32>
    %c29 = arith.constant 29 : index
    %c0_208 = arith.constant 0 : index
    %573 = vector.load %arg4[%c29, %c0_208] : memref<81x64xf32, #tpu.memory_space<vmem>>, vector<1x64xf32>
    %574 = vector.broadcast %573 : vector<1x64xf32> to vector<8x64xf32>
    %575 = arith.addf %572, %574 : vector<8x64xf32>
    %cst_209 = arith.constant 0.000000e+00 : f32
    %576 = vector.broadcast %cst_209 : f32 to vector<8x64xf32>
    %577 = arith.maximumf %575, %576 : vector<8x64xf32>
    %c22_210 = arith.constant 22 : index
    %c0_211 = arith.constant 0 : index
    %c0_212 = arith.constant 0 : index
    %578 = vector.load %arg3[%c22_210, %c0_211, %c0_212] : memref<47x64x64xf32, #tpu.memory_space<vmem>>, vector<1x64x64xf32>
    %579 = vector.shape_cast %578 : vector<1x64x64xf32> to vector<64x64xf32>
    %580 = arith.truncf %579 : vector<64x64xf32> to vector<64x64xbf16>
    %581 = arith.truncf %577 : vector<8x64xf32> to vector<8x64xbf16>
    %cst_213 = arith.constant dense<0.000000e+00> : vector<8x64xf32>
    %582 = tpu.matmul %581, %580, %cst_213 {dimension_numbers = #tpu.dot_dimension_numbers<[1], [0], [0], [1], [0, 0, 1, 1], [], []>} : vector<8x64xbf16>, vector<64x64xbf16>, vector<8x64xf32> -> vector<8x64xf32>
    %c30 = arith.constant 30 : index
    %c0_214 = arith.constant 0 : index
    %583 = vector.load %arg4[%c30, %c0_214] : memref<81x64xf32, #tpu.memory_space<vmem>>, vector<1x64xf32>
    %584 = vector.broadcast %583 : vector<1x64xf32> to vector<8x64xf32>
    %585 = arith.addf %582, %584 : vector<8x64xf32>
    %586 = arith.addf %567, %585 : vector<8x64xf32>
    %cst_215 = arith.constant dense<0.000000e+00> : vector<8xf32>
    %587 = vector.multi_reduction <add>, %586, %cst_215 [1] : vector<8x64xf32> to vector<8xf32>
    %588 = vector.shape_cast %587 : vector<8xf32> to vector<8x1xf32>
    %cst_216 = arith.constant 6.400000e+01 : f32
    %589 = vector.broadcast %cst_216 : f32 to vector<8x1xf32>
    %590 = arith.divf %588, %589 : vector<8x1xf32>
    %591 = vector.broadcast %590 : vector<8x1xf32> to vector<8x64xf32>
    %592 = arith.subf %586, %591 : vector<8x64xf32>
    %593 = arith.mulf %592, %592 : vector<8x64xf32>
    %cst_217 = arith.constant dense<0.000000e+00> : vector<8xf32>
    %594 = vector.multi_reduction <add>, %593, %cst_217 [1] : vector<8x64xf32> to vector<8xf32>
    %595 = vector.shape_cast %594 : vector<8xf32> to vector<8x1xf32>
    %cst_218 = arith.constant 6.400000e+01 : f32
    %596 = vector.broadcast %cst_218 : f32 to vector<8x1xf32>
    %597 = arith.divf %595, %596 : vector<8x1xf32>
    %598 = vector.broadcast %590 : vector<8x1xf32> to vector<8x64xf32>
    %599 = arith.subf %586, %598 : vector<8x64xf32>
    %cst_219 = arith.constant 9.99999974E-6 : f32
    %600 = vector.broadcast %cst_219 : f32 to vector<8x1xf32>
    %601 = arith.addf %597, %600 : vector<8x1xf32>
    %602 = math.rsqrt %601 : vector<8x1xf32>
    %603 = vector.broadcast %602 : vector<8x1xf32> to vector<8x64xf32>
    %604 = arith.mulf %599, %603 : vector<8x64xf32>
    %c33 = arith.constant 33 : index
    %c0_220 = arith.constant 0 : index
    %605 = vector.load %arg4[%c33, %c0_220] : memref<81x64xf32, #tpu.memory_space<vmem>>, vector<1x64xf32>
    %606 = vector.broadcast %605 : vector<1x64xf32> to vector<8x64xf32>
    %607 = arith.mulf %604, %606 : vector<8x64xf32>
    %c34 = arith.constant 34 : index
    %c0_221 = arith.constant 0 : index
    %608 = vector.load %arg4[%c34, %c0_221] : memref<81x64xf32, #tpu.memory_space<vmem>>, vector<1x64xf32>
    %609 = vector.broadcast %608 : vector<1x64xf32> to vector<8x64xf32>
    %610 = arith.addf %607, %609 : vector<8x64xf32>
    %cst_222 = arith.constant dense<0.000000e+00> : vector<8xf32>
    %611 = vector.multi_reduction <add>, %610, %cst_222 [1] : vector<8x64xf32> to vector<8xf32>
    %612 = vector.shape_cast %611 : vector<8xf32> to vector<8x1xf32>
    %cst_223 = arith.constant 6.400000e+01 : f32
    %613 = vector.broadcast %cst_223 : f32 to vector<8x1xf32>
    %614 = arith.divf %612, %613 : vector<8x1xf32>
    %615 = vector.broadcast %614 : vector<8x1xf32> to vector<8x64xf32>
    %616 = arith.subf %610, %615 : vector<8x64xf32>
    %617 = arith.mulf %616, %616 : vector<8x64xf32>
    %cst_224 = arith.constant dense<0.000000e+00> : vector<8xf32>
    %618 = vector.multi_reduction <add>, %617, %cst_224 [1] : vector<8x64xf32> to vector<8xf32>
    %619 = vector.shape_cast %618 : vector<8xf32> to vector<8x1xf32>
    %cst_225 = arith.constant 6.400000e+01 : f32
    %620 = vector.broadcast %cst_225 : f32 to vector<8x1xf32>
    %621 = arith.divf %619, %620 : vector<8x1xf32>
    %622 = vector.broadcast %614 : vector<8x1xf32> to vector<8x64xf32>
    %623 = arith.subf %610, %622 : vector<8x64xf32>
    %cst_226 = arith.constant 9.99999974E-6 : f32
    %624 = vector.broadcast %cst_226 : f32 to vector<8x1xf32>
    %625 = arith.addf %621, %624 : vector<8x1xf32>
    %626 = math.rsqrt %625 : vector<8x1xf32>
    %627 = vector.broadcast %626 : vector<8x1xf32> to vector<8x64xf32>
    %628 = arith.mulf %623, %627 : vector<8x64xf32>
    %c35 = arith.constant 35 : index
    %c0_227 = arith.constant 0 : index
    %629 = vector.load %arg4[%c35, %c0_227] : memref<81x64xf32, #tpu.memory_space<vmem>>, vector<1x64xf32>
    %630 = vector.broadcast %629 : vector<1x64xf32> to vector<8x64xf32>
    %631 = arith.mulf %628, %630 : vector<8x64xf32>
    %c36 = arith.constant 36 : index
    %c0_228 = arith.constant 0 : index
    %632 = vector.load %arg4[%c36, %c0_228] : memref<81x64xf32, #tpu.memory_space<vmem>>, vector<1x64xf32>
    %633 = vector.broadcast %632 : vector<1x64xf32> to vector<8x64xf32>
    %634 = arith.addf %631, %633 : vector<8x64xf32>
    %c23_229 = arith.constant 23 : index
    %c0_230 = arith.constant 0 : index
    %c0_231 = arith.constant 0 : index
    %635 = vector.load %arg3[%c23_229, %c0_230, %c0_231] : memref<47x64x64xf32, #tpu.memory_space<vmem>>, vector<1x64x64xf32>
    %636 = vector.shape_cast %635 : vector<1x64x64xf32> to vector<64x64xf32>
    %637 = arith.truncf %636 : vector<64x64xf32> to vector<64x64xbf16>
    %638 = arith.truncf %37 : vector<1x64xf32> to vector<1x64xbf16>
    %cst_232 = arith.constant dense<0.000000e+00> : vector<1x64xf32>
    %639 = tpu.matmul %638, %637, %cst_232 {dimension_numbers = #tpu.dot_dimension_numbers<[1], [0], [0], [1], [0, 0, 1, 1], [], []>} : vector<1x64xbf16>, vector<64x64xbf16>, vector<1x64xf32> -> vector<1x64xf32>
    %c37 = arith.constant 37 : index
    %c0_233 = arith.constant 0 : index
    %640 = vector.load %arg4[%c37, %c0_233] : memref<81x64xf32, #tpu.memory_space<vmem>>, vector<1x64xf32>
    %641 = arith.addf %639, %640 : vector<1x64xf32>
    %c24_234 = arith.constant 24 : index
    %c0_235 = arith.constant 0 : index
    %c0_236 = arith.constant 0 : index
    %642 = vector.load %arg3[%c24_234, %c0_235, %c0_236] : memref<47x64x64xf32, #tpu.memory_space<vmem>>, vector<1x64x64xf32>
    %643 = vector.shape_cast %642 : vector<1x64x64xf32> to vector<64x64xf32>
    %644 = arith.truncf %643 : vector<64x64xf32> to vector<64x64xbf16>
    %645 = arith.truncf %641 : vector<1x64xf32> to vector<1x64xbf16>
    %cst_237 = arith.constant dense<0.000000e+00> : vector<1x64xf32>
    %646 = tpu.matmul %645, %644, %cst_237 {dimension_numbers = #tpu.dot_dimension_numbers<[1], [0], [0], [1], [0, 0, 1, 1], [], []>} : vector<1x64xbf16>, vector<64x64xbf16>, vector<1x64xf32> -> vector<1x64xf32>
    %c38 = arith.constant 38 : index
    %c0_238 = arith.constant 0 : index
    %647 = vector.load %arg4[%c38, %c0_238] : memref<81x64xf32, #tpu.memory_space<vmem>>, vector<1x64xf32>
    %648 = arith.addf %646, %647 : vector<1x64xf32>
    %649 = arith.addf %37, %648 : vector<1x64xf32>
    %cst_239 = arith.constant dense<0.000000e+00> : vector<1xf32>
    %650 = vector.multi_reduction <add>, %649, %cst_239 [1] : vector<1x64xf32> to vector<1xf32>
    %651 = vector.shape_cast %650 : vector<1xf32> to vector<1x1xf32>
    %cst_240 = arith.constant 6.400000e+01 : f32
    %652 = vector.broadcast %cst_240 : f32 to vector<1x1xf32>
    %653 = arith.divf %651, %652 : vector<1x1xf32>
    %654 = vector.broadcast %653 : vector<1x1xf32> to vector<1x64xf32>
    %655 = arith.subf %649, %654 : vector<1x64xf32>
    %656 = arith.mulf %655, %655 : vector<1x64xf32>
    %cst_241 = arith.constant dense<0.000000e+00> : vector<1xf32>
    %657 = vector.multi_reduction <add>, %656, %cst_241 [1] : vector<1x64xf32> to vector<1xf32>
    %658 = vector.shape_cast %657 : vector<1xf32> to vector<1x1xf32>
    %cst_242 = arith.constant 6.400000e+01 : f32
    %659 = vector.broadcast %cst_242 : f32 to vector<1x1xf32>
    %660 = arith.divf %658, %659 : vector<1x1xf32>
    %661 = vector.broadcast %653 : vector<1x1xf32> to vector<1x64xf32>
    %662 = arith.subf %649, %661 : vector<1x64xf32>
    %cst_243 = arith.constant 9.99999974E-6 : f32
    %663 = vector.broadcast %cst_243 : f32 to vector<1x1xf32>
    %664 = arith.addf %660, %663 : vector<1x1xf32>
    %665 = math.rsqrt %664 : vector<1x1xf32>
    %666 = vector.broadcast %665 : vector<1x1xf32> to vector<1x64xf32>
    %667 = arith.mulf %662, %666 : vector<1x64xf32>
    %c45 = arith.constant 45 : index
    %c0_244 = arith.constant 0 : index
    %668 = vector.load %arg4[%c45, %c0_244] : memref<81x64xf32, #tpu.memory_space<vmem>>, vector<1x64xf32>
    %669 = arith.mulf %667, %668 : vector<1x64xf32>
    %c46 = arith.constant 46 : index
    %c0_245 = arith.constant 0 : index
    %670 = vector.load %arg4[%c46, %c0_245] : memref<81x64xf32, #tpu.memory_space<vmem>>, vector<1x64xf32>
    %671 = arith.addf %669, %670 : vector<1x64xf32>
    %c25_246 = arith.constant 25 : index
    %c0_247 = arith.constant 0 : index
    %c0_248 = arith.constant 0 : index
    %672 = vector.load %arg3[%c25_246, %c0_247, %c0_248] : memref<47x64x64xf32, #tpu.memory_space<vmem>>, vector<1x64x64xf32>
    %673 = vector.shape_cast %672 : vector<1x64x64xf32> to vector<64x64xf32>
    %674 = arith.truncf %673 : vector<64x64xf32> to vector<64x64xbf16>
    %675 = arith.truncf %671 : vector<1x64xf32> to vector<1x64xbf16>
    %cst_249 = arith.constant dense<0.000000e+00> : vector<1x64xf32>
    %676 = tpu.matmul %675, %674, %cst_249 {dimension_numbers = #tpu.dot_dimension_numbers<[1], [0], [0], [1], [0, 0, 1, 1], [], []>} : vector<1x64xbf16>, vector<64x64xbf16>, vector<1x64xf32> -> vector<1x64xf32>
    %c39 = arith.constant 39 : index
    %c0_250 = arith.constant 0 : index
    %677 = vector.load %arg4[%c39, %c0_250] : memref<81x64xf32, #tpu.memory_space<vmem>>, vector<1x64xf32>
    %678 = arith.addf %676, %677 : vector<1x64xf32>
    %c26_251 = arith.constant 26 : index
    %c0_252 = arith.constant 0 : index
    %c0_253 = arith.constant 0 : index
    %679 = vector.load %arg3[%c26_251, %c0_252, %c0_253] : memref<47x64x64xf32, #tpu.memory_space<vmem>>, vector<1x64x64xf32>
    %680 = vector.shape_cast %679 : vector<1x64x64xf32> to vector<64x64xf32>
    %681 = arith.truncf %680 : vector<64x64xf32> to vector<64x64xbf16>
    %682 = arith.truncf %634 : vector<8x64xf32> to vector<8x64xbf16>
    %cst_254 = arith.constant dense<0.000000e+00> : vector<8x64xf32>
    %683 = tpu.matmul %682, %681, %cst_254 {dimension_numbers = #tpu.dot_dimension_numbers<[1], [0], [0], [1], [0, 0, 1, 1], [], []>} : vector<8x64xbf16>, vector<64x64xbf16>, vector<8x64xf32> -> vector<8x64xf32>
    %c40 = arith.constant 40 : index
    %c0_255 = arith.constant 0 : index
    %684 = vector.load %arg4[%c40, %c0_255] : memref<81x64xf32, #tpu.memory_space<vmem>>, vector<1x64xf32>
    %685 = vector.broadcast %684 : vector<1x64xf32> to vector<8x64xf32>
    %686 = arith.addf %683, %685 : vector<8x64xf32>
    %c27_256 = arith.constant 27 : index
    %c0_257 = arith.constant 0 : index
    %c0_258 = arith.constant 0 : index
    %687 = vector.load %arg3[%c27_256, %c0_257, %c0_258] : memref<47x64x64xf32, #tpu.memory_space<vmem>>, vector<1x64x64xf32>
    %688 = vector.shape_cast %687 : vector<1x64x64xf32> to vector<64x64xf32>
    %689 = arith.truncf %688 : vector<64x64xf32> to vector<64x64xbf16>
    %690 = arith.truncf %634 : vector<8x64xf32> to vector<8x64xbf16>
    %cst_259 = arith.constant dense<0.000000e+00> : vector<8x64xf32>
    %691 = tpu.matmul %690, %689, %cst_259 {dimension_numbers = #tpu.dot_dimension_numbers<[1], [0], [0], [1], [0, 0, 1, 1], [], []>} : vector<8x64xbf16>, vector<64x64xbf16>, vector<8x64xf32> -> vector<8x64xf32>
    %c41 = arith.constant 41 : index
    %c0_260 = arith.constant 0 : index
    %692 = vector.load %arg4[%c41, %c0_260] : memref<81x64xf32, #tpu.memory_space<vmem>>, vector<1x64xf32>
    %693 = vector.broadcast %692 : vector<1x64xf32> to vector<8x64xf32>
    %694 = arith.addf %691, %693 : vector<8x64xf32>
    %c28_261 = arith.constant 28 : index
    %c0_262 = arith.constant 0 : index
    %c0_263 = arith.constant 0 : index
    %695 = vector.load %arg3[%c28_261, %c0_262, %c0_263] : memref<47x64x64xf32, #tpu.memory_space<vmem>>, vector<1x64x64xf32>
    %696 = vector.shape_cast %695 : vector<1x64x64xf32> to vector<64x64xf32>
    %697 = arith.truncf %696 : vector<64x64xf32> to vector<64x64xbf16>
    %cst_264 = arith.constant 0.000000e+00 : f32
    %698 = vector.broadcast %cst_264 : f32 to vector<1x64xf32>
    %699 = vector.extract_strided_slice %678 {offsets = [0, 0], sizes = [1, 16], strides = [1, 1]} : vector<1x64xf32> to vector<1x16xf32>
    %700 = arith.truncf %699 : vector<1x16xf32> to vector<1x16xbf16>
    %701 = vector.extract_strided_slice %686 {offsets = [0, 0], sizes = [8, 16], strides = [1, 1]} : vector<8x64xf32> to vector<8x16xf32>
    %702 = arith.truncf %701 : vector<8x16xf32> to vector<8x16xbf16>
    %cst_265 = arith.constant dense<0.000000e+00> : vector<1x8xf32>
    %703 = tpu.matmul %700, %702, %cst_265 {dimension_numbers = #tpu.dot_dimension_numbers<[1], [1], [0], [0], [0, 0, 1, 0], [], []>} : vector<1x16xbf16>, vector<8x16xbf16>, vector<1x8xf32> -> vector<1x8xf32>
    %cst_266 = arith.constant dense<0xFF800000> : vector<1xf32>
    %704 = vector.multi_reduction <maximumf>, %703, %cst_266 [1] : vector<1x8xf32> to vector<1xf32>
    %705 = vector.shape_cast %704 : vector<1xf32> to vector<1x1xf32>
    %706 = vector.broadcast %705 : vector<1x1xf32> to vector<1x8xf32>
    %707 = arith.subf %703, %706 : vector<1x8xf32>
    %708 = math.exp %707 : vector<1x8xf32>
    %cst_267 = arith.constant dense<0.000000e+00> : vector<1xf32>
    %709 = vector.multi_reduction <add>, %708, %cst_267 [1] : vector<1x8xf32> to vector<1xf32>
    %710 = vector.shape_cast %709 : vector<1xf32> to vector<1x1xf32>
    %711 = tpu.reciprocal %710 {approx = true} : vector<1x1xf32> -> vector<1x1xf32>
    %712 = vector.broadcast %711 : vector<1x1xf32> to vector<1x8xf32>
    %713 = arith.mulf %708, %712 : vector<1x8xf32>
    %714 = vector.extract_strided_slice %694 {offsets = [0, 0], sizes = [8, 16], strides = [1, 1]} : vector<8x64xf32> to vector<8x16xf32>
    %715 = arith.truncf %713 : vector<1x8xf32> to vector<1x8xbf16>
    %716 = arith.truncf %714 : vector<8x16xf32> to vector<8x16xbf16>
    %cst_268 = arith.constant dense<0.000000e+00> : vector<1x16xf32>
    %717 = tpu.matmul %715, %716, %cst_268 {dimension_numbers = #tpu.dot_dimension_numbers<[1], [0], [0], [1], [0, 0, 1, 1], [], []>} : vector<1x8xbf16>, vector<8x16xbf16>, vector<1x16xf32> -> vector<1x16xf32>
    %718 = vector.extract_strided_slice %697 {offsets = [0, 0], sizes = [16, 64], strides = [1, 1]} : vector<64x64xbf16> to vector<16x64xbf16>
    %719 = arith.truncf %717 : vector<1x16xf32> to vector<1x16xbf16>
    %cst_269 = arith.constant dense<0.000000e+00> : vector<1x64xf32>
    %720 = tpu.matmul %719, %718, %cst_269 {dimension_numbers = #tpu.dot_dimension_numbers<[1], [0], [0], [1], [0, 0, 1, 1], [], []>} : vector<1x16xbf16>, vector<16x64xbf16>, vector<1x64xf32> -> vector<1x64xf32>
    %721 = arith.addf %698, %720 : vector<1x64xf32>
    %722 = vector.extract_strided_slice %678 {offsets = [0, 16], sizes = [1, 16], strides = [1, 1]} : vector<1x64xf32> to vector<1x16xf32>
    %723 = arith.truncf %722 : vector<1x16xf32> to vector<1x16xbf16>
    %724 = vector.extract_strided_slice %686 {offsets = [0, 16], sizes = [8, 16], strides = [1, 1]} : vector<8x64xf32> to vector<8x16xf32>
    %725 = arith.truncf %724 : vector<8x16xf32> to vector<8x16xbf16>
    %cst_270 = arith.constant dense<0.000000e+00> : vector<1x8xf32>
    %726 = tpu.matmul %723, %725, %cst_270 {dimension_numbers = #tpu.dot_dimension_numbers<[1], [1], [0], [0], [0, 0, 1, 0], [], []>} : vector<1x16xbf16>, vector<8x16xbf16>, vector<1x8xf32> -> vector<1x8xf32>
    %cst_271 = arith.constant dense<0xFF800000> : vector<1xf32>
    %727 = vector.multi_reduction <maximumf>, %726, %cst_271 [1] : vector<1x8xf32> to vector<1xf32>
    %728 = vector.shape_cast %727 : vector<1xf32> to vector<1x1xf32>
    %729 = vector.broadcast %728 : vector<1x1xf32> to vector<1x8xf32>
    %730 = arith.subf %726, %729 : vector<1x8xf32>
    %731 = math.exp %730 : vector<1x8xf32>
    %cst_272 = arith.constant dense<0.000000e+00> : vector<1xf32>
    %732 = vector.multi_reduction <add>, %731, %cst_272 [1] : vector<1x8xf32> to vector<1xf32>
    %733 = vector.shape_cast %732 : vector<1xf32> to vector<1x1xf32>
    %734 = tpu.reciprocal %733 {approx = true} : vector<1x1xf32> -> vector<1x1xf32>
    %735 = vector.broadcast %734 : vector<1x1xf32> to vector<1x8xf32>
    %736 = arith.mulf %731, %735 : vector<1x8xf32>
    %737 = vector.extract_strided_slice %694 {offsets = [0, 16], sizes = [8, 16], strides = [1, 1]} : vector<8x64xf32> to vector<8x16xf32>
    %738 = arith.truncf %736 : vector<1x8xf32> to vector<1x8xbf16>
    %739 = arith.truncf %737 : vector<8x16xf32> to vector<8x16xbf16>
    %cst_273 = arith.constant dense<0.000000e+00> : vector<1x16xf32>
    %740 = tpu.matmul %738, %739, %cst_273 {dimension_numbers = #tpu.dot_dimension_numbers<[1], [0], [0], [1], [0, 0, 1, 1], [], []>} : vector<1x8xbf16>, vector<8x16xbf16>, vector<1x16xf32> -> vector<1x16xf32>
    %741 = vector.extract_strided_slice %697 {offsets = [16, 0], sizes = [16, 64], strides = [1, 1]} : vector<64x64xbf16> to vector<16x64xbf16>
    %742 = arith.truncf %740 : vector<1x16xf32> to vector<1x16xbf16>
    %cst_274 = arith.constant dense<0.000000e+00> : vector<1x64xf32>
    %743 = tpu.matmul %742, %741, %cst_274 {dimension_numbers = #tpu.dot_dimension_numbers<[1], [0], [0], [1], [0, 0, 1, 1], [], []>} : vector<1x16xbf16>, vector<16x64xbf16>, vector<1x64xf32> -> vector<1x64xf32>
    %744 = arith.addf %721, %743 : vector<1x64xf32>
    %745 = vector.extract_strided_slice %678 {offsets = [0, 32], sizes = [1, 16], strides = [1, 1]} : vector<1x64xf32> to vector<1x16xf32>
    %746 = arith.truncf %745 : vector<1x16xf32> to vector<1x16xbf16>
    %747 = vector.extract_strided_slice %686 {offsets = [0, 32], sizes = [8, 16], strides = [1, 1]} : vector<8x64xf32> to vector<8x16xf32>
    %748 = arith.truncf %747 : vector<8x16xf32> to vector<8x16xbf16>
    %cst_275 = arith.constant dense<0.000000e+00> : vector<1x8xf32>
    %749 = tpu.matmul %746, %748, %cst_275 {dimension_numbers = #tpu.dot_dimension_numbers<[1], [1], [0], [0], [0, 0, 1, 0], [], []>} : vector<1x16xbf16>, vector<8x16xbf16>, vector<1x8xf32> -> vector<1x8xf32>
    %cst_276 = arith.constant dense<0xFF800000> : vector<1xf32>
    %750 = vector.multi_reduction <maximumf>, %749, %cst_276 [1] : vector<1x8xf32> to vector<1xf32>
    %751 = vector.shape_cast %750 : vector<1xf32> to vector<1x1xf32>
    %752 = vector.broadcast %751 : vector<1x1xf32> to vector<1x8xf32>
    %753 = arith.subf %749, %752 : vector<1x8xf32>
    %754 = math.exp %753 : vector<1x8xf32>
    %cst_277 = arith.constant dense<0.000000e+00> : vector<1xf32>
    %755 = vector.multi_reduction <add>, %754, %cst_277 [1] : vector<1x8xf32> to vector<1xf32>
    %756 = vector.shape_cast %755 : vector<1xf32> to vector<1x1xf32>
    %757 = tpu.reciprocal %756 {approx = true} : vector<1x1xf32> -> vector<1x1xf32>
    %758 = vector.broadcast %757 : vector<1x1xf32> to vector<1x8xf32>
    %759 = arith.mulf %754, %758 : vector<1x8xf32>
    %760 = vector.extract_strided_slice %694 {offsets = [0, 32], sizes = [8, 16], strides = [1, 1]} : vector<8x64xf32> to vector<8x16xf32>
    %761 = arith.truncf %759 : vector<1x8xf32> to vector<1x8xbf16>
    %762 = arith.truncf %760 : vector<8x16xf32> to vector<8x16xbf16>
    %cst_278 = arith.constant dense<0.000000e+00> : vector<1x16xf32>
    %763 = tpu.matmul %761, %762, %cst_278 {dimension_numbers = #tpu.dot_dimension_numbers<[1], [0], [0], [1], [0, 0, 1, 1], [], []>} : vector<1x8xbf16>, vector<8x16xbf16>, vector<1x16xf32> -> vector<1x16xf32>
    %764 = vector.extract_strided_slice %697 {offsets = [32, 0], sizes = [16, 64], strides = [1, 1]} : vector<64x64xbf16> to vector<16x64xbf16>
    %765 = arith.truncf %763 : vector<1x16xf32> to vector<1x16xbf16>
    %cst_279 = arith.constant dense<0.000000e+00> : vector<1x64xf32>
    %766 = tpu.matmul %765, %764, %cst_279 {dimension_numbers = #tpu.dot_dimension_numbers<[1], [0], [0], [1], [0, 0, 1, 1], [], []>} : vector<1x16xbf16>, vector<16x64xbf16>, vector<1x64xf32> -> vector<1x64xf32>
    %767 = arith.addf %744, %766 : vector<1x64xf32>
    %768 = vector.extract_strided_slice %678 {offsets = [0, 48], sizes = [1, 16], strides = [1, 1]} : vector<1x64xf32> to vector<1x16xf32>
    %769 = arith.truncf %768 : vector<1x16xf32> to vector<1x16xbf16>
    %770 = vector.extract_strided_slice %686 {offsets = [0, 48], sizes = [8, 16], strides = [1, 1]} : vector<8x64xf32> to vector<8x16xf32>
    %771 = arith.truncf %770 : vector<8x16xf32> to vector<8x16xbf16>
    %cst_280 = arith.constant dense<0.000000e+00> : vector<1x8xf32>
    %772 = tpu.matmul %769, %771, %cst_280 {dimension_numbers = #tpu.dot_dimension_numbers<[1], [1], [0], [0], [0, 0, 1, 0], [], []>} : vector<1x16xbf16>, vector<8x16xbf16>, vector<1x8xf32> -> vector<1x8xf32>
    %cst_281 = arith.constant dense<0xFF800000> : vector<1xf32>
    %773 = vector.multi_reduction <maximumf>, %772, %cst_281 [1] : vector<1x8xf32> to vector<1xf32>
    %774 = vector.shape_cast %773 : vector<1xf32> to vector<1x1xf32>
    %775 = vector.broadcast %774 : vector<1x1xf32> to vector<1x8xf32>
    %776 = arith.subf %772, %775 : vector<1x8xf32>
    %777 = math.exp %776 : vector<1x8xf32>
    %cst_282 = arith.constant dense<0.000000e+00> : vector<1xf32>
    %778 = vector.multi_reduction <add>, %777, %cst_282 [1] : vector<1x8xf32> to vector<1xf32>
    %779 = vector.shape_cast %778 : vector<1xf32> to vector<1x1xf32>
    %780 = tpu.reciprocal %779 {approx = true} : vector<1x1xf32> -> vector<1x1xf32>
    %781 = vector.broadcast %780 : vector<1x1xf32> to vector<1x8xf32>
    %782 = arith.mulf %777, %781 : vector<1x8xf32>
    %783 = vector.extract_strided_slice %694 {offsets = [0, 48], sizes = [8, 16], strides = [1, 1]} : vector<8x64xf32> to vector<8x16xf32>
    %784 = arith.truncf %782 : vector<1x8xf32> to vector<1x8xbf16>
    %785 = arith.truncf %783 : vector<8x16xf32> to vector<8x16xbf16>
    %cst_283 = arith.constant dense<0.000000e+00> : vector<1x16xf32>
    %786 = tpu.matmul %784, %785, %cst_283 {dimension_numbers = #tpu.dot_dimension_numbers<[1], [0], [0], [1], [0, 0, 1, 1], [], []>} : vector<1x8xbf16>, vector<8x16xbf16>, vector<1x16xf32> -> vector<1x16xf32>
    %787 = vector.extract_strided_slice %697 {offsets = [48, 0], sizes = [16, 64], strides = [1, 1]} : vector<64x64xbf16> to vector<16x64xbf16>
    %788 = arith.truncf %786 : vector<1x16xf32> to vector<1x16xbf16>
    %cst_284 = arith.constant dense<0.000000e+00> : vector<1x64xf32>
    %789 = tpu.matmul %788, %787, %cst_284 {dimension_numbers = #tpu.dot_dimension_numbers<[1], [0], [0], [1], [0, 0, 1, 1], [], []>} : vector<1x16xbf16>, vector<16x64xbf16>, vector<1x64xf32> -> vector<1x64xf32>
    %790 = arith.addf %767, %789 : vector<1x64xf32>
    %c42 = arith.constant 42 : index
    %c0_285 = arith.constant 0 : index
    %791 = vector.load %arg4[%c42, %c0_285] : memref<81x64xf32, #tpu.memory_space<vmem>>, vector<1x64xf32>
    %792 = arith.addf %790, %791 : vector<1x64xf32>
    %793 = arith.addf %671, %792 : vector<1x64xf32>
    %cst_286 = arith.constant dense<0.000000e+00> : vector<1xf32>
    %794 = vector.multi_reduction <add>, %793, %cst_286 [1] : vector<1x64xf32> to vector<1xf32>
    %795 = vector.shape_cast %794 : vector<1xf32> to vector<1x1xf32>
    %cst_287 = arith.constant 6.400000e+01 : f32
    %796 = vector.broadcast %cst_287 : f32 to vector<1x1xf32>
    %797 = arith.divf %795, %796 : vector<1x1xf32>
    %798 = vector.broadcast %797 : vector<1x1xf32> to vector<1x64xf32>
    %799 = arith.subf %793, %798 : vector<1x64xf32>
    %800 = arith.mulf %799, %799 : vector<1x64xf32>
    %cst_288 = arith.constant dense<0.000000e+00> : vector<1xf32>
    %801 = vector.multi_reduction <add>, %800, %cst_288 [1] : vector<1x64xf32> to vector<1xf32>
    %802 = vector.shape_cast %801 : vector<1xf32> to vector<1x1xf32>
    %cst_289 = arith.constant 6.400000e+01 : f32
    %803 = vector.broadcast %cst_289 : f32 to vector<1x1xf32>
    %804 = arith.divf %802, %803 : vector<1x1xf32>
    %805 = vector.broadcast %797 : vector<1x1xf32> to vector<1x64xf32>
    %806 = arith.subf %793, %805 : vector<1x64xf32>
    %cst_290 = arith.constant 9.99999974E-6 : f32
    %807 = vector.broadcast %cst_290 : f32 to vector<1x1xf32>
    %808 = arith.addf %804, %807 : vector<1x1xf32>
    %809 = math.rsqrt %808 : vector<1x1xf32>
    %810 = vector.broadcast %809 : vector<1x1xf32> to vector<1x64xf32>
    %811 = arith.mulf %806, %810 : vector<1x64xf32>
    %c47 = arith.constant 47 : index
    %c0_291 = arith.constant 0 : index
    %812 = vector.load %arg4[%c47, %c0_291] : memref<81x64xf32, #tpu.memory_space<vmem>>, vector<1x64xf32>
    %813 = arith.mulf %811, %812 : vector<1x64xf32>
    %c48 = arith.constant 48 : index
    %c0_292 = arith.constant 0 : index
    %814 = vector.load %arg4[%c48, %c0_292] : memref<81x64xf32, #tpu.memory_space<vmem>>, vector<1x64xf32>
    %815 = arith.addf %813, %814 : vector<1x64xf32>
    %c29_293 = arith.constant 29 : index
    %c0_294 = arith.constant 0 : index
    %c0_295 = arith.constant 0 : index
    %816 = vector.load %arg3[%c29_293, %c0_294, %c0_295] : memref<47x64x64xf32, #tpu.memory_space<vmem>>, vector<1x64x64xf32>
    %817 = vector.shape_cast %816 : vector<1x64x64xf32> to vector<64x64xf32>
    %818 = arith.truncf %817 : vector<64x64xf32> to vector<64x64xbf16>
    %819 = arith.truncf %815 : vector<1x64xf32> to vector<1x64xbf16>
    %cst_296 = arith.constant dense<0.000000e+00> : vector<1x64xf32>
    %820 = tpu.matmul %819, %818, %cst_296 {dimension_numbers = #tpu.dot_dimension_numbers<[1], [0], [0], [1], [0, 0, 1, 1], [], []>} : vector<1x64xbf16>, vector<64x64xbf16>, vector<1x64xf32> -> vector<1x64xf32>
    %c43 = arith.constant 43 : index
    %c0_297 = arith.constant 0 : index
    %821 = vector.load %arg4[%c43, %c0_297] : memref<81x64xf32, #tpu.memory_space<vmem>>, vector<1x64xf32>
    %822 = arith.addf %820, %821 : vector<1x64xf32>
    %cst_298 = arith.constant 0.000000e+00 : f32
    %823 = vector.broadcast %cst_298 : f32 to vector<1x64xf32>
    %824 = arith.maximumf %822, %823 : vector<1x64xf32>
    %c30_299 = arith.constant 30 : index
    %c0_300 = arith.constant 0 : index
    %c0_301 = arith.constant 0 : index
    %825 = vector.load %arg3[%c30_299, %c0_300, %c0_301] : memref<47x64x64xf32, #tpu.memory_space<vmem>>, vector<1x64x64xf32>
    %826 = vector.shape_cast %825 : vector<1x64x64xf32> to vector<64x64xf32>
    %827 = arith.truncf %826 : vector<64x64xf32> to vector<64x64xbf16>
    %828 = arith.truncf %824 : vector<1x64xf32> to vector<1x64xbf16>
    %cst_302 = arith.constant dense<0.000000e+00> : vector<1x64xf32>
    %829 = tpu.matmul %828, %827, %cst_302 {dimension_numbers = #tpu.dot_dimension_numbers<[1], [0], [0], [1], [0, 0, 1, 1], [], []>} : vector<1x64xbf16>, vector<64x64xbf16>, vector<1x64xf32> -> vector<1x64xf32>
    %c44 = arith.constant 44 : index
    %c0_303 = arith.constant 0 : index
    %830 = vector.load %arg4[%c44, %c0_303] : memref<81x64xf32, #tpu.memory_space<vmem>>, vector<1x64xf32>
    %831 = arith.addf %829, %830 : vector<1x64xf32>
    %832 = arith.addf %815, %831 : vector<1x64xf32>
    %cst_304 = arith.constant dense<0.000000e+00> : vector<1xf32>
    %833 = vector.multi_reduction <add>, %832, %cst_304 [1] : vector<1x64xf32> to vector<1xf32>
    %834 = vector.shape_cast %833 : vector<1xf32> to vector<1x1xf32>
    %cst_305 = arith.constant 6.400000e+01 : f32
    %835 = vector.broadcast %cst_305 : f32 to vector<1x1xf32>
    %836 = arith.divf %834, %835 : vector<1x1xf32>
    %837 = vector.broadcast %836 : vector<1x1xf32> to vector<1x64xf32>
    %838 = arith.subf %832, %837 : vector<1x64xf32>
    %839 = arith.mulf %838, %838 : vector<1x64xf32>
    %cst_306 = arith.constant dense<0.000000e+00> : vector<1xf32>
    %840 = vector.multi_reduction <add>, %839, %cst_306 [1] : vector<1x64xf32> to vector<1xf32>
    %841 = vector.shape_cast %840 : vector<1xf32> to vector<1x1xf32>
    %cst_307 = arith.constant 6.400000e+01 : f32
    %842 = vector.broadcast %cst_307 : f32 to vector<1x1xf32>
    %843 = arith.divf %841, %842 : vector<1x1xf32>
    %844 = vector.broadcast %836 : vector<1x1xf32> to vector<1x64xf32>
    %845 = arith.subf %832, %844 : vector<1x64xf32>
    %cst_308 = arith.constant 9.99999974E-6 : f32
    %846 = vector.broadcast %cst_308 : f32 to vector<1x1xf32>
    %847 = arith.addf %843, %846 : vector<1x1xf32>
    %848 = math.rsqrt %847 : vector<1x1xf32>
    %849 = vector.broadcast %848 : vector<1x1xf32> to vector<1x64xf32>
    %850 = arith.mulf %845, %849 : vector<1x64xf32>
    %c49 = arith.constant 49 : index
    %c0_309 = arith.constant 0 : index
    %851 = vector.load %arg4[%c49, %c0_309] : memref<81x64xf32, #tpu.memory_space<vmem>>, vector<1x64xf32>
    %852 = arith.mulf %850, %851 : vector<1x64xf32>
    %c50 = arith.constant 50 : index
    %c0_310 = arith.constant 0 : index
    %853 = vector.load %arg4[%c50, %c0_310] : memref<81x64xf32, #tpu.memory_space<vmem>>, vector<1x64xf32>
    %854 = arith.addf %852, %853 : vector<1x64xf32>
    %c31_311 = arith.constant 31 : index
    %c0_312 = arith.constant 0 : index
    %c0_313 = arith.constant 0 : index
    %855 = vector.load %arg3[%c31_311, %c0_312, %c0_313] : memref<47x64x64xf32, #tpu.memory_space<vmem>>, vector<1x64x64xf32>
    %856 = vector.shape_cast %855 : vector<1x64x64xf32> to vector<64x64xf32>
    %857 = arith.truncf %856 : vector<64x64xf32> to vector<64x64xbf16>
    %858 = arith.truncf %854 : vector<1x64xf32> to vector<1x64xbf16>
    %cst_314 = arith.constant dense<0.000000e+00> : vector<1x64xf32>
    %859 = tpu.matmul %858, %857, %cst_314 {dimension_numbers = #tpu.dot_dimension_numbers<[1], [0], [0], [1], [0, 0, 1, 1], [], []>} : vector<1x64xbf16>, vector<64x64xbf16>, vector<1x64xf32> -> vector<1x64xf32>
    %c51 = arith.constant 51 : index
    %c0_315 = arith.constant 0 : index
    %860 = vector.load %arg4[%c51, %c0_315] : memref<81x64xf32, #tpu.memory_space<vmem>>, vector<1x64xf32>
    %861 = arith.addf %859, %860 : vector<1x64xf32>
    %c32_316 = arith.constant 32 : index
    %c0_317 = arith.constant 0 : index
    %c0_318 = arith.constant 0 : index
    %862 = vector.load %arg3[%c32_316, %c0_317, %c0_318] : memref<47x64x64xf32, #tpu.memory_space<vmem>>, vector<1x64x64xf32>
    %863 = vector.shape_cast %862 : vector<1x64x64xf32> to vector<64x64xf32>
    %864 = arith.truncf %863 : vector<64x64xf32> to vector<64x64xbf16>
    %865 = arith.truncf %861 : vector<1x64xf32> to vector<1x64xbf16>
    %cst_319 = arith.constant dense<0.000000e+00> : vector<1x64xf32>
    %866 = tpu.matmul %865, %864, %cst_319 {dimension_numbers = #tpu.dot_dimension_numbers<[1], [0], [0], [1], [0, 0, 1, 1], [], []>} : vector<1x64xbf16>, vector<64x64xbf16>, vector<1x64xf32> -> vector<1x64xf32>
    %c52 = arith.constant 52 : index
    %c0_320 = arith.constant 0 : index
    %867 = vector.load %arg4[%c52, %c0_320] : memref<81x64xf32, #tpu.memory_space<vmem>>, vector<1x64xf32>
    %868 = arith.addf %866, %867 : vector<1x64xf32>
    %869 = arith.addf %854, %868 : vector<1x64xf32>
    %cst_321 = arith.constant dense<0.000000e+00> : vector<1xf32>
    %870 = vector.multi_reduction <add>, %869, %cst_321 [1] : vector<1x64xf32> to vector<1xf32>
    %871 = vector.shape_cast %870 : vector<1xf32> to vector<1x1xf32>
    %cst_322 = arith.constant 6.400000e+01 : f32
    %872 = vector.broadcast %cst_322 : f32 to vector<1x1xf32>
    %873 = arith.divf %871, %872 : vector<1x1xf32>
    %874 = vector.broadcast %873 : vector<1x1xf32> to vector<1x64xf32>
    %875 = arith.subf %869, %874 : vector<1x64xf32>
    %876 = arith.mulf %875, %875 : vector<1x64xf32>
    %cst_323 = arith.constant dense<0.000000e+00> : vector<1xf32>
    %877 = vector.multi_reduction <add>, %876, %cst_323 [1] : vector<1x64xf32> to vector<1xf32>
    %878 = vector.shape_cast %877 : vector<1xf32> to vector<1x1xf32>
    %cst_324 = arith.constant 6.400000e+01 : f32
    %879 = vector.broadcast %cst_324 : f32 to vector<1x1xf32>
    %880 = arith.divf %878, %879 : vector<1x1xf32>
    %881 = vector.broadcast %873 : vector<1x1xf32> to vector<1x64xf32>
    %882 = arith.subf %869, %881 : vector<1x64xf32>
    %cst_325 = arith.constant 9.99999974E-6 : f32
    %883 = vector.broadcast %cst_325 : f32 to vector<1x1xf32>
    %884 = arith.addf %880, %883 : vector<1x1xf32>
    %885 = math.rsqrt %884 : vector<1x1xf32>
    %886 = vector.broadcast %885 : vector<1x1xf32> to vector<1x64xf32>
    %887 = arith.mulf %882, %886 : vector<1x64xf32>
    %c59 = arith.constant 59 : index
    %c0_326 = arith.constant 0 : index
    %888 = vector.load %arg4[%c59, %c0_326] : memref<81x64xf32, #tpu.memory_space<vmem>>, vector<1x64xf32>
    %889 = arith.mulf %887, %888 : vector<1x64xf32>
    %c60 = arith.constant 60 : index
    %c0_327 = arith.constant 0 : index
    %890 = vector.load %arg4[%c60, %c0_327] : memref<81x64xf32, #tpu.memory_space<vmem>>, vector<1x64xf32>
    %891 = arith.addf %889, %890 : vector<1x64xf32>
    %c33_328 = arith.constant 33 : index
    %c0_329 = arith.constant 0 : index
    %c0_330 = arith.constant 0 : index
    %892 = vector.load %arg3[%c33_328, %c0_329, %c0_330] : memref<47x64x64xf32, #tpu.memory_space<vmem>>, vector<1x64x64xf32>
    %893 = vector.shape_cast %892 : vector<1x64x64xf32> to vector<64x64xf32>
    %894 = arith.truncf %893 : vector<64x64xf32> to vector<64x64xbf16>
    %895 = arith.truncf %891 : vector<1x64xf32> to vector<1x64xbf16>
    %cst_331 = arith.constant dense<0.000000e+00> : vector<1x64xf32>
    %896 = tpu.matmul %895, %894, %cst_331 {dimension_numbers = #tpu.dot_dimension_numbers<[1], [0], [0], [1], [0, 0, 1, 1], [], []>} : vector<1x64xbf16>, vector<64x64xbf16>, vector<1x64xf32> -> vector<1x64xf32>
    %c53 = arith.constant 53 : index
    %c0_332 = arith.constant 0 : index
    %897 = vector.load %arg4[%c53, %c0_332] : memref<81x64xf32, #tpu.memory_space<vmem>>, vector<1x64xf32>
    %898 = arith.addf %896, %897 : vector<1x64xf32>
    %c34_333 = arith.constant 34 : index
    %c0_334 = arith.constant 0 : index
    %c0_335 = arith.constant 0 : index
    %899 = vector.load %arg3[%c34_333, %c0_334, %c0_335] : memref<47x64x64xf32, #tpu.memory_space<vmem>>, vector<1x64x64xf32>
    %900 = vector.shape_cast %899 : vector<1x64x64xf32> to vector<64x64xf32>
    %901 = arith.truncf %900 : vector<64x64xf32> to vector<64x64xbf16>
    %902 = arith.truncf %634 : vector<8x64xf32> to vector<8x64xbf16>
    %cst_336 = arith.constant dense<0.000000e+00> : vector<8x64xf32>
    %903 = tpu.matmul %902, %901, %cst_336 {dimension_numbers = #tpu.dot_dimension_numbers<[1], [0], [0], [1], [0, 0, 1, 1], [], []>} : vector<8x64xbf16>, vector<64x64xbf16>, vector<8x64xf32> -> vector<8x64xf32>
    %c54 = arith.constant 54 : index
    %c0_337 = arith.constant 0 : index
    %904 = vector.load %arg4[%c54, %c0_337] : memref<81x64xf32, #tpu.memory_space<vmem>>, vector<1x64xf32>
    %905 = vector.broadcast %904 : vector<1x64xf32> to vector<8x64xf32>
    %906 = arith.addf %903, %905 : vector<8x64xf32>
    %c35_338 = arith.constant 35 : index
    %c0_339 = arith.constant 0 : index
    %c0_340 = arith.constant 0 : index
    %907 = vector.load %arg3[%c35_338, %c0_339, %c0_340] : memref<47x64x64xf32, #tpu.memory_space<vmem>>, vector<1x64x64xf32>
    %908 = vector.shape_cast %907 : vector<1x64x64xf32> to vector<64x64xf32>
    %909 = arith.truncf %908 : vector<64x64xf32> to vector<64x64xbf16>
    %910 = arith.truncf %634 : vector<8x64xf32> to vector<8x64xbf16>
    %cst_341 = arith.constant dense<0.000000e+00> : vector<8x64xf32>
    %911 = tpu.matmul %910, %909, %cst_341 {dimension_numbers = #tpu.dot_dimension_numbers<[1], [0], [0], [1], [0, 0, 1, 1], [], []>} : vector<8x64xbf16>, vector<64x64xbf16>, vector<8x64xf32> -> vector<8x64xf32>
    %c55 = arith.constant 55 : index
    %c0_342 = arith.constant 0 : index
    %912 = vector.load %arg4[%c55, %c0_342] : memref<81x64xf32, #tpu.memory_space<vmem>>, vector<1x64xf32>
    %913 = vector.broadcast %912 : vector<1x64xf32> to vector<8x64xf32>
    %914 = arith.addf %911, %913 : vector<8x64xf32>
    %c36_343 = arith.constant 36 : index
    %c0_344 = arith.constant 0 : index
    %c0_345 = arith.constant 0 : index
    %915 = vector.load %arg3[%c36_343, %c0_344, %c0_345] : memref<47x64x64xf32, #tpu.memory_space<vmem>>, vector<1x64x64xf32>
    %916 = vector.shape_cast %915 : vector<1x64x64xf32> to vector<64x64xf32>
    %917 = arith.truncf %916 : vector<64x64xf32> to vector<64x64xbf16>
    %cst_346 = arith.constant 0.000000e+00 : f32
    %918 = vector.broadcast %cst_346 : f32 to vector<1x64xf32>
    %919 = vector.extract_strided_slice %898 {offsets = [0, 0], sizes = [1, 16], strides = [1, 1]} : vector<1x64xf32> to vector<1x16xf32>
    %920 = arith.truncf %919 : vector<1x16xf32> to vector<1x16xbf16>
    %921 = vector.extract_strided_slice %906 {offsets = [0, 0], sizes = [8, 16], strides = [1, 1]} : vector<8x64xf32> to vector<8x16xf32>
    %922 = arith.truncf %921 : vector<8x16xf32> to vector<8x16xbf16>
    %cst_347 = arith.constant dense<0.000000e+00> : vector<1x8xf32>
    %923 = tpu.matmul %920, %922, %cst_347 {dimension_numbers = #tpu.dot_dimension_numbers<[1], [1], [0], [0], [0, 0, 1, 0], [], []>} : vector<1x16xbf16>, vector<8x16xbf16>, vector<1x8xf32> -> vector<1x8xf32>
    %cst_348 = arith.constant dense<0xFF800000> : vector<1xf32>
    %924 = vector.multi_reduction <maximumf>, %923, %cst_348 [1] : vector<1x8xf32> to vector<1xf32>
    %925 = vector.shape_cast %924 : vector<1xf32> to vector<1x1xf32>
    %926 = vector.broadcast %925 : vector<1x1xf32> to vector<1x8xf32>
    %927 = arith.subf %923, %926 : vector<1x8xf32>
    %928 = math.exp %927 : vector<1x8xf32>
    %cst_349 = arith.constant dense<0.000000e+00> : vector<1xf32>
    %929 = vector.multi_reduction <add>, %928, %cst_349 [1] : vector<1x8xf32> to vector<1xf32>
    %930 = vector.shape_cast %929 : vector<1xf32> to vector<1x1xf32>
    %931 = tpu.reciprocal %930 {approx = true} : vector<1x1xf32> -> vector<1x1xf32>
    %932 = vector.broadcast %931 : vector<1x1xf32> to vector<1x8xf32>
    %933 = arith.mulf %928, %932 : vector<1x8xf32>
    %934 = vector.extract_strided_slice %914 {offsets = [0, 0], sizes = [8, 16], strides = [1, 1]} : vector<8x64xf32> to vector<8x16xf32>
    %935 = arith.truncf %933 : vector<1x8xf32> to vector<1x8xbf16>
    %936 = arith.truncf %934 : vector<8x16xf32> to vector<8x16xbf16>
    %cst_350 = arith.constant dense<0.000000e+00> : vector<1x16xf32>
    %937 = tpu.matmul %935, %936, %cst_350 {dimension_numbers = #tpu.dot_dimension_numbers<[1], [0], [0], [1], [0, 0, 1, 1], [], []>} : vector<1x8xbf16>, vector<8x16xbf16>, vector<1x16xf32> -> vector<1x16xf32>
    %938 = vector.extract_strided_slice %917 {offsets = [0, 0], sizes = [16, 64], strides = [1, 1]} : vector<64x64xbf16> to vector<16x64xbf16>
    %939 = arith.truncf %937 : vector<1x16xf32> to vector<1x16xbf16>
    %cst_351 = arith.constant dense<0.000000e+00> : vector<1x64xf32>
    %940 = tpu.matmul %939, %938, %cst_351 {dimension_numbers = #tpu.dot_dimension_numbers<[1], [0], [0], [1], [0, 0, 1, 1], [], []>} : vector<1x16xbf16>, vector<16x64xbf16>, vector<1x64xf32> -> vector<1x64xf32>
    %941 = arith.addf %918, %940 : vector<1x64xf32>
    %942 = vector.extract_strided_slice %898 {offsets = [0, 16], sizes = [1, 16], strides = [1, 1]} : vector<1x64xf32> to vector<1x16xf32>
    %943 = arith.truncf %942 : vector<1x16xf32> to vector<1x16xbf16>
    %944 = vector.extract_strided_slice %906 {offsets = [0, 16], sizes = [8, 16], strides = [1, 1]} : vector<8x64xf32> to vector<8x16xf32>
    %945 = arith.truncf %944 : vector<8x16xf32> to vector<8x16xbf16>
    %cst_352 = arith.constant dense<0.000000e+00> : vector<1x8xf32>
    %946 = tpu.matmul %943, %945, %cst_352 {dimension_numbers = #tpu.dot_dimension_numbers<[1], [1], [0], [0], [0, 0, 1, 0], [], []>} : vector<1x16xbf16>, vector<8x16xbf16>, vector<1x8xf32> -> vector<1x8xf32>
    %cst_353 = arith.constant dense<0xFF800000> : vector<1xf32>
    %947 = vector.multi_reduction <maximumf>, %946, %cst_353 [1] : vector<1x8xf32> to vector<1xf32>
    %948 = vector.shape_cast %947 : vector<1xf32> to vector<1x1xf32>
    %949 = vector.broadcast %948 : vector<1x1xf32> to vector<1x8xf32>
    %950 = arith.subf %946, %949 : vector<1x8xf32>
    %951 = math.exp %950 : vector<1x8xf32>
    %cst_354 = arith.constant dense<0.000000e+00> : vector<1xf32>
    %952 = vector.multi_reduction <add>, %951, %cst_354 [1] : vector<1x8xf32> to vector<1xf32>
    %953 = vector.shape_cast %952 : vector<1xf32> to vector<1x1xf32>
    %954 = tpu.reciprocal %953 {approx = true} : vector<1x1xf32> -> vector<1x1xf32>
    %955 = vector.broadcast %954 : vector<1x1xf32> to vector<1x8xf32>
    %956 = arith.mulf %951, %955 : vector<1x8xf32>
    %957 = vector.extract_strided_slice %914 {offsets = [0, 16], sizes = [8, 16], strides = [1, 1]} : vector<8x64xf32> to vector<8x16xf32>
    %958 = arith.truncf %956 : vector<1x8xf32> to vector<1x8xbf16>
    %959 = arith.truncf %957 : vector<8x16xf32> to vector<8x16xbf16>
    %cst_355 = arith.constant dense<0.000000e+00> : vector<1x16xf32>
    %960 = tpu.matmul %958, %959, %cst_355 {dimension_numbers = #tpu.dot_dimension_numbers<[1], [0], [0], [1], [0, 0, 1, 1], [], []>} : vector<1x8xbf16>, vector<8x16xbf16>, vector<1x16xf32> -> vector<1x16xf32>
    %961 = vector.extract_strided_slice %917 {offsets = [16, 0], sizes = [16, 64], strides = [1, 1]} : vector<64x64xbf16> to vector<16x64xbf16>
    %962 = arith.truncf %960 : vector<1x16xf32> to vector<1x16xbf16>
    %cst_356 = arith.constant dense<0.000000e+00> : vector<1x64xf32>
    %963 = tpu.matmul %962, %961, %cst_356 {dimension_numbers = #tpu.dot_dimension_numbers<[1], [0], [0], [1], [0, 0, 1, 1], [], []>} : vector<1x16xbf16>, vector<16x64xbf16>, vector<1x64xf32> -> vector<1x64xf32>
    %964 = arith.addf %941, %963 : vector<1x64xf32>
    %965 = vector.extract_strided_slice %898 {offsets = [0, 32], sizes = [1, 16], strides = [1, 1]} : vector<1x64xf32> to vector<1x16xf32>
    %966 = arith.truncf %965 : vector<1x16xf32> to vector<1x16xbf16>
    %967 = vector.extract_strided_slice %906 {offsets = [0, 32], sizes = [8, 16], strides = [1, 1]} : vector<8x64xf32> to vector<8x16xf32>
    %968 = arith.truncf %967 : vector<8x16xf32> to vector<8x16xbf16>
    %cst_357 = arith.constant dense<0.000000e+00> : vector<1x8xf32>
    %969 = tpu.matmul %966, %968, %cst_357 {dimension_numbers = #tpu.dot_dimension_numbers<[1], [1], [0], [0], [0, 0, 1, 0], [], []>} : vector<1x16xbf16>, vector<8x16xbf16>, vector<1x8xf32> -> vector<1x8xf32>
    %cst_358 = arith.constant dense<0xFF800000> : vector<1xf32>
    %970 = vector.multi_reduction <maximumf>, %969, %cst_358 [1] : vector<1x8xf32> to vector<1xf32>
    %971 = vector.shape_cast %970 : vector<1xf32> to vector<1x1xf32>
    %972 = vector.broadcast %971 : vector<1x1xf32> to vector<1x8xf32>
    %973 = arith.subf %969, %972 : vector<1x8xf32>
    %974 = math.exp %973 : vector<1x8xf32>
    %cst_359 = arith.constant dense<0.000000e+00> : vector<1xf32>
    %975 = vector.multi_reduction <add>, %974, %cst_359 [1] : vector<1x8xf32> to vector<1xf32>
    %976 = vector.shape_cast %975 : vector<1xf32> to vector<1x1xf32>
    %977 = tpu.reciprocal %976 {approx = true} : vector<1x1xf32> -> vector<1x1xf32>
    %978 = vector.broadcast %977 : vector<1x1xf32> to vector<1x8xf32>
    %979 = arith.mulf %974, %978 : vector<1x8xf32>
    %980 = vector.extract_strided_slice %914 {offsets = [0, 32], sizes = [8, 16], strides = [1, 1]} : vector<8x64xf32> to vector<8x16xf32>
    %981 = arith.truncf %979 : vector<1x8xf32> to vector<1x8xbf16>
    %982 = arith.truncf %980 : vector<8x16xf32> to vector<8x16xbf16>
    %cst_360 = arith.constant dense<0.000000e+00> : vector<1x16xf32>
    %983 = tpu.matmul %981, %982, %cst_360 {dimension_numbers = #tpu.dot_dimension_numbers<[1], [0], [0], [1], [0, 0, 1, 1], [], []>} : vector<1x8xbf16>, vector<8x16xbf16>, vector<1x16xf32> -> vector<1x16xf32>
    %984 = vector.extract_strided_slice %917 {offsets = [32, 0], sizes = [16, 64], strides = [1, 1]} : vector<64x64xbf16> to vector<16x64xbf16>
    %985 = arith.truncf %983 : vector<1x16xf32> to vector<1x16xbf16>
    %cst_361 = arith.constant dense<0.000000e+00> : vector<1x64xf32>
    %986 = tpu.matmul %985, %984, %cst_361 {dimension_numbers = #tpu.dot_dimension_numbers<[1], [0], [0], [1], [0, 0, 1, 1], [], []>} : vector<1x16xbf16>, vector<16x64xbf16>, vector<1x64xf32> -> vector<1x64xf32>
    %987 = arith.addf %964, %986 : vector<1x64xf32>
    %988 = vector.extract_strided_slice %898 {offsets = [0, 48], sizes = [1, 16], strides = [1, 1]} : vector<1x64xf32> to vector<1x16xf32>
    %989 = arith.truncf %988 : vector<1x16xf32> to vector<1x16xbf16>
    %990 = vector.extract_strided_slice %906 {offsets = [0, 48], sizes = [8, 16], strides = [1, 1]} : vector<8x64xf32> to vector<8x16xf32>
    %991 = arith.truncf %990 : vector<8x16xf32> to vector<8x16xbf16>
    %cst_362 = arith.constant dense<0.000000e+00> : vector<1x8xf32>
    %992 = tpu.matmul %989, %991, %cst_362 {dimension_numbers = #tpu.dot_dimension_numbers<[1], [1], [0], [0], [0, 0, 1, 0], [], []>} : vector<1x16xbf16>, vector<8x16xbf16>, vector<1x8xf32> -> vector<1x8xf32>
    %cst_363 = arith.constant dense<0xFF800000> : vector<1xf32>
    %993 = vector.multi_reduction <maximumf>, %992, %cst_363 [1] : vector<1x8xf32> to vector<1xf32>
    %994 = vector.shape_cast %993 : vector<1xf32> to vector<1x1xf32>
    %995 = vector.broadcast %994 : vector<1x1xf32> to vector<1x8xf32>
    %996 = arith.subf %992, %995 : vector<1x8xf32>
    %997 = math.exp %996 : vector<1x8xf32>
    %cst_364 = arith.constant dense<0.000000e+00> : vector<1xf32>
    %998 = vector.multi_reduction <add>, %997, %cst_364 [1] : vector<1x8xf32> to vector<1xf32>
    %999 = vector.shape_cast %998 : vector<1xf32> to vector<1x1xf32>
    %1000 = tpu.reciprocal %999 {approx = true} : vector<1x1xf32> -> vector<1x1xf32>
    %1001 = vector.broadcast %1000 : vector<1x1xf32> to vector<1x8xf32>
    %1002 = arith.mulf %997, %1001 : vector<1x8xf32>
    %1003 = vector.extract_strided_slice %914 {offsets = [0, 48], sizes = [8, 16], strides = [1, 1]} : vector<8x64xf32> to vector<8x16xf32>
    %1004 = arith.truncf %1002 : vector<1x8xf32> to vector<1x8xbf16>
    %1005 = arith.truncf %1003 : vector<8x16xf32> to vector<8x16xbf16>
    %cst_365 = arith.constant dense<0.000000e+00> : vector<1x16xf32>
    %1006 = tpu.matmul %1004, %1005, %cst_365 {dimension_numbers = #tpu.dot_dimension_numbers<[1], [0], [0], [1], [0, 0, 1, 1], [], []>} : vector<1x8xbf16>, vector<8x16xbf16>, vector<1x16xf32> -> vector<1x16xf32>
    %1007 = vector.extract_strided_slice %917 {offsets = [48, 0], sizes = [16, 64], strides = [1, 1]} : vector<64x64xbf16> to vector<16x64xbf16>
    %1008 = arith.truncf %1006 : vector<1x16xf32> to vector<1x16xbf16>
    %cst_366 = arith.constant dense<0.000000e+00> : vector<1x64xf32>
    %1009 = tpu.matmul %1008, %1007, %cst_366 {dimension_numbers = #tpu.dot_dimension_numbers<[1], [0], [0], [1], [0, 0, 1, 1], [], []>} : vector<1x16xbf16>, vector<16x64xbf16>, vector<1x64xf32> -> vector<1x64xf32>
    %1010 = arith.addf %987, %1009 : vector<1x64xf32>
    %c56 = arith.constant 56 : index
    %c0_367 = arith.constant 0 : index
    %1011 = vector.load %arg4[%c56, %c0_367] : memref<81x64xf32, #tpu.memory_space<vmem>>, vector<1x64xf32>
    %1012 = arith.addf %1010, %1011 : vector<1x64xf32>
    %1013 = arith.addf %891, %1012 : vector<1x64xf32>
    %cst_368 = arith.constant dense<0.000000e+00> : vector<1xf32>
    %1014 = vector.multi_reduction <add>, %1013, %cst_368 [1] : vector<1x64xf32> to vector<1xf32>
    %1015 = vector.shape_cast %1014 : vector<1xf32> to vector<1x1xf32>
    %cst_369 = arith.constant 6.400000e+01 : f32
    %1016 = vector.broadcast %cst_369 : f32 to vector<1x1xf32>
    %1017 = arith.divf %1015, %1016 : vector<1x1xf32>
    %1018 = vector.broadcast %1017 : vector<1x1xf32> to vector<1x64xf32>
    %1019 = arith.subf %1013, %1018 : vector<1x64xf32>
    %1020 = arith.mulf %1019, %1019 : vector<1x64xf32>
    %cst_370 = arith.constant dense<0.000000e+00> : vector<1xf32>
    %1021 = vector.multi_reduction <add>, %1020, %cst_370 [1] : vector<1x64xf32> to vector<1xf32>
    %1022 = vector.shape_cast %1021 : vector<1xf32> to vector<1x1xf32>
    %cst_371 = arith.constant 6.400000e+01 : f32
    %1023 = vector.broadcast %cst_371 : f32 to vector<1x1xf32>
    %1024 = arith.divf %1022, %1023 : vector<1x1xf32>
    %1025 = vector.broadcast %1017 : vector<1x1xf32> to vector<1x64xf32>
    %1026 = arith.subf %1013, %1025 : vector<1x64xf32>
    %cst_372 = arith.constant 9.99999974E-6 : f32
    %1027 = vector.broadcast %cst_372 : f32 to vector<1x1xf32>
    %1028 = arith.addf %1024, %1027 : vector<1x1xf32>
    %1029 = math.rsqrt %1028 : vector<1x1xf32>
    %1030 = vector.broadcast %1029 : vector<1x1xf32> to vector<1x64xf32>
    %1031 = arith.mulf %1026, %1030 : vector<1x64xf32>
    %c61 = arith.constant 61 : index
    %c0_373 = arith.constant 0 : index
    %1032 = vector.load %arg4[%c61, %c0_373] : memref<81x64xf32, #tpu.memory_space<vmem>>, vector<1x64xf32>
    %1033 = arith.mulf %1031, %1032 : vector<1x64xf32>
    %c62 = arith.constant 62 : index
    %c0_374 = arith.constant 0 : index
    %1034 = vector.load %arg4[%c62, %c0_374] : memref<81x64xf32, #tpu.memory_space<vmem>>, vector<1x64xf32>
    %1035 = arith.addf %1033, %1034 : vector<1x64xf32>
    %c37_375 = arith.constant 37 : index
    %c0_376 = arith.constant 0 : index
    %c0_377 = arith.constant 0 : index
    %1036 = vector.load %arg3[%c37_375, %c0_376, %c0_377] : memref<47x64x64xf32, #tpu.memory_space<vmem>>, vector<1x64x64xf32>
    %1037 = vector.shape_cast %1036 : vector<1x64x64xf32> to vector<64x64xf32>
    %1038 = arith.truncf %1037 : vector<64x64xf32> to vector<64x64xbf16>
    %1039 = arith.truncf %1035 : vector<1x64xf32> to vector<1x64xbf16>
    %cst_378 = arith.constant dense<0.000000e+00> : vector<1x64xf32>
    %1040 = tpu.matmul %1039, %1038, %cst_378 {dimension_numbers = #tpu.dot_dimension_numbers<[1], [0], [0], [1], [0, 0, 1, 1], [], []>} : vector<1x64xbf16>, vector<64x64xbf16>, vector<1x64xf32> -> vector<1x64xf32>
    %c57 = arith.constant 57 : index
    %c0_379 = arith.constant 0 : index
    %1041 = vector.load %arg4[%c57, %c0_379] : memref<81x64xf32, #tpu.memory_space<vmem>>, vector<1x64xf32>
    %1042 = arith.addf %1040, %1041 : vector<1x64xf32>
    %cst_380 = arith.constant 0.000000e+00 : f32
    %1043 = vector.broadcast %cst_380 : f32 to vector<1x64xf32>
    %1044 = arith.maximumf %1042, %1043 : vector<1x64xf32>
    %c38_381 = arith.constant 38 : index
    %c0_382 = arith.constant 0 : index
    %c0_383 = arith.constant 0 : index
    %1045 = vector.load %arg3[%c38_381, %c0_382, %c0_383] : memref<47x64x64xf32, #tpu.memory_space<vmem>>, vector<1x64x64xf32>
    %1046 = vector.shape_cast %1045 : vector<1x64x64xf32> to vector<64x64xf32>
    %1047 = arith.truncf %1046 : vector<64x64xf32> to vector<64x64xbf16>
    %1048 = arith.truncf %1044 : vector<1x64xf32> to vector<1x64xbf16>
    %cst_384 = arith.constant dense<0.000000e+00> : vector<1x64xf32>
    %1049 = tpu.matmul %1048, %1047, %cst_384 {dimension_numbers = #tpu.dot_dimension_numbers<[1], [0], [0], [1], [0, 0, 1, 1], [], []>} : vector<1x64xbf16>, vector<64x64xbf16>, vector<1x64xf32> -> vector<1x64xf32>
    %c58 = arith.constant 58 : index
    %c0_385 = arith.constant 0 : index
    %1050 = vector.load %arg4[%c58, %c0_385] : memref<81x64xf32, #tpu.memory_space<vmem>>, vector<1x64xf32>
    %1051 = arith.addf %1049, %1050 : vector<1x64xf32>
    %1052 = arith.addf %1035, %1051 : vector<1x64xf32>
    %cst_386 = arith.constant dense<0.000000e+00> : vector<1xf32>
    %1053 = vector.multi_reduction <add>, %1052, %cst_386 [1] : vector<1x64xf32> to vector<1xf32>
    %1054 = vector.shape_cast %1053 : vector<1xf32> to vector<1x1xf32>
    %cst_387 = arith.constant 6.400000e+01 : f32
    %1055 = vector.broadcast %cst_387 : f32 to vector<1x1xf32>
    %1056 = arith.divf %1054, %1055 : vector<1x1xf32>
    %1057 = vector.broadcast %1056 : vector<1x1xf32> to vector<1x64xf32>
    %1058 = arith.subf %1052, %1057 : vector<1x64xf32>
    %1059 = arith.mulf %1058, %1058 : vector<1x64xf32>
    %cst_388 = arith.constant dense<0.000000e+00> : vector<1xf32>
    %1060 = vector.multi_reduction <add>, %1059, %cst_388 [1] : vector<1x64xf32> to vector<1xf32>
    %1061 = vector.shape_cast %1060 : vector<1xf32> to vector<1x1xf32>
    %cst_389 = arith.constant 6.400000e+01 : f32
    %1062 = vector.broadcast %cst_389 : f32 to vector<1x1xf32>
    %1063 = arith.divf %1061, %1062 : vector<1x1xf32>
    %1064 = vector.broadcast %1056 : vector<1x1xf32> to vector<1x64xf32>
    %1065 = arith.subf %1052, %1064 : vector<1x64xf32>
    %cst_390 = arith.constant 9.99999974E-6 : f32
    %1066 = vector.broadcast %cst_390 : f32 to vector<1x1xf32>
    %1067 = arith.addf %1063, %1066 : vector<1x1xf32>
    %1068 = math.rsqrt %1067 : vector<1x1xf32>
    %1069 = vector.broadcast %1068 : vector<1x1xf32> to vector<1x64xf32>
    %1070 = arith.mulf %1065, %1069 : vector<1x64xf32>
    %c63 = arith.constant 63 : index
    %c0_391 = arith.constant 0 : index
    %1071 = vector.load %arg4[%c63, %c0_391] : memref<81x64xf32, #tpu.memory_space<vmem>>, vector<1x64xf32>
    %1072 = arith.mulf %1070, %1071 : vector<1x64xf32>
    %c64 = arith.constant 64 : index
    %c0_392 = arith.constant 0 : index
    %1073 = vector.load %arg4[%c64, %c0_392] : memref<81x64xf32, #tpu.memory_space<vmem>>, vector<1x64xf32>
    %1074 = arith.addf %1072, %1073 : vector<1x64xf32>
    %c39_393 = arith.constant 39 : index
    %c0_394 = arith.constant 0 : index
    %c0_395 = arith.constant 0 : index
    %1075 = vector.load %arg3[%c39_393, %c0_394, %c0_395] : memref<47x64x64xf32, #tpu.memory_space<vmem>>, vector<1x64x64xf32>
    %1076 = vector.shape_cast %1075 : vector<1x64x64xf32> to vector<64x64xf32>
    %1077 = arith.truncf %1076 : vector<64x64xf32> to vector<64x64xbf16>
    %1078 = arith.truncf %1074 : vector<1x64xf32> to vector<1x64xbf16>
    %cst_396 = arith.constant dense<0.000000e+00> : vector<1x64xf32>
    %1079 = tpu.matmul %1078, %1077, %cst_396 {dimension_numbers = #tpu.dot_dimension_numbers<[1], [0], [0], [1], [0, 0, 1, 1], [], []>} : vector<1x64xbf16>, vector<64x64xbf16>, vector<1x64xf32> -> vector<1x64xf32>
    %c65 = arith.constant 65 : index
    %c0_397 = arith.constant 0 : index
    %1080 = vector.load %arg4[%c65, %c0_397] : memref<81x64xf32, #tpu.memory_space<vmem>>, vector<1x64xf32>
    %1081 = arith.addf %1079, %1080 : vector<1x64xf32>
    %c40_398 = arith.constant 40 : index
    %c0_399 = arith.constant 0 : index
    %c0_400 = arith.constant 0 : index
    %1082 = vector.load %arg3[%c40_398, %c0_399, %c0_400] : memref<47x64x64xf32, #tpu.memory_space<vmem>>, vector<1x64x64xf32>
    %1083 = vector.shape_cast %1082 : vector<1x64x64xf32> to vector<64x64xf32>
    %1084 = arith.truncf %1083 : vector<64x64xf32> to vector<64x64xbf16>
    %1085 = arith.truncf %1081 : vector<1x64xf32> to vector<1x64xbf16>
    %cst_401 = arith.constant dense<0.000000e+00> : vector<1x64xf32>
    %1086 = tpu.matmul %1085, %1084, %cst_401 {dimension_numbers = #tpu.dot_dimension_numbers<[1], [0], [0], [1], [0, 0, 1, 1], [], []>} : vector<1x64xbf16>, vector<64x64xbf16>, vector<1x64xf32> -> vector<1x64xf32>
    %c66 = arith.constant 66 : index
    %c0_402 = arith.constant 0 : index
    %1087 = vector.load %arg4[%c66, %c0_402] : memref<81x64xf32, #tpu.memory_space<vmem>>, vector<1x64xf32>
    %1088 = arith.addf %1086, %1087 : vector<1x64xf32>
    %1089 = arith.addf %1074, %1088 : vector<1x64xf32>
    %cst_403 = arith.constant dense<0.000000e+00> : vector<1xf32>
    %1090 = vector.multi_reduction <add>, %1089, %cst_403 [1] : vector<1x64xf32> to vector<1xf32>
    %1091 = vector.shape_cast %1090 : vector<1xf32> to vector<1x1xf32>
    %cst_404 = arith.constant 6.400000e+01 : f32
    %1092 = vector.broadcast %cst_404 : f32 to vector<1x1xf32>
    %1093 = arith.divf %1091, %1092 : vector<1x1xf32>
    %1094 = vector.broadcast %1093 : vector<1x1xf32> to vector<1x64xf32>
    %1095 = arith.subf %1089, %1094 : vector<1x64xf32>
    %1096 = arith.mulf %1095, %1095 : vector<1x64xf32>
    %cst_405 = arith.constant dense<0.000000e+00> : vector<1xf32>
    %1097 = vector.multi_reduction <add>, %1096, %cst_405 [1] : vector<1x64xf32> to vector<1xf32>
    %1098 = vector.shape_cast %1097 : vector<1xf32> to vector<1x1xf32>
    %cst_406 = arith.constant 6.400000e+01 : f32
    %1099 = vector.broadcast %cst_406 : f32 to vector<1x1xf32>
    %1100 = arith.divf %1098, %1099 : vector<1x1xf32>
    %1101 = vector.broadcast %1093 : vector<1x1xf32> to vector<1x64xf32>
    %1102 = arith.subf %1089, %1101 : vector<1x64xf32>
    %cst_407 = arith.constant 9.99999974E-6 : f32
    %1103 = vector.broadcast %cst_407 : f32 to vector<1x1xf32>
    %1104 = arith.addf %1100, %1103 : vector<1x1xf32>
    %1105 = math.rsqrt %1104 : vector<1x1xf32>
    %1106 = vector.broadcast %1105 : vector<1x1xf32> to vector<1x64xf32>
    %1107 = arith.mulf %1102, %1106 : vector<1x64xf32>
    %c73 = arith.constant 73 : index
    %c0_408 = arith.constant 0 : index
    %1108 = vector.load %arg4[%c73, %c0_408] : memref<81x64xf32, #tpu.memory_space<vmem>>, vector<1x64xf32>
    %1109 = arith.mulf %1107, %1108 : vector<1x64xf32>
    %c74 = arith.constant 74 : index
    %c0_409 = arith.constant 0 : index
    %1110 = vector.load %arg4[%c74, %c0_409] : memref<81x64xf32, #tpu.memory_space<vmem>>, vector<1x64xf32>
    %1111 = arith.addf %1109, %1110 : vector<1x64xf32>
    %c41_410 = arith.constant 41 : index
    %c0_411 = arith.constant 0 : index
    %c0_412 = arith.constant 0 : index
    %1112 = vector.load %arg3[%c41_410, %c0_411, %c0_412] : memref<47x64x64xf32, #tpu.memory_space<vmem>>, vector<1x64x64xf32>
    %1113 = vector.shape_cast %1112 : vector<1x64x64xf32> to vector<64x64xf32>
    %1114 = arith.truncf %1113 : vector<64x64xf32> to vector<64x64xbf16>
    %1115 = arith.truncf %1111 : vector<1x64xf32> to vector<1x64xbf16>
    %cst_413 = arith.constant dense<0.000000e+00> : vector<1x64xf32>
    %1116 = tpu.matmul %1115, %1114, %cst_413 {dimension_numbers = #tpu.dot_dimension_numbers<[1], [0], [0], [1], [0, 0, 1, 1], [], []>} : vector<1x64xbf16>, vector<64x64xbf16>, vector<1x64xf32> -> vector<1x64xf32>
    %c67 = arith.constant 67 : index
    %c0_414 = arith.constant 0 : index
    %1117 = vector.load %arg4[%c67, %c0_414] : memref<81x64xf32, #tpu.memory_space<vmem>>, vector<1x64xf32>
    %1118 = arith.addf %1116, %1117 : vector<1x64xf32>
    %c42_415 = arith.constant 42 : index
    %c0_416 = arith.constant 0 : index
    %c0_417 = arith.constant 0 : index
    %1119 = vector.load %arg3[%c42_415, %c0_416, %c0_417] : memref<47x64x64xf32, #tpu.memory_space<vmem>>, vector<1x64x64xf32>
    %1120 = vector.shape_cast %1119 : vector<1x64x64xf32> to vector<64x64xf32>
    %1121 = arith.truncf %1120 : vector<64x64xf32> to vector<64x64xbf16>
    %1122 = arith.truncf %634 : vector<8x64xf32> to vector<8x64xbf16>
    %cst_418 = arith.constant dense<0.000000e+00> : vector<8x64xf32>
    %1123 = tpu.matmul %1122, %1121, %cst_418 {dimension_numbers = #tpu.dot_dimension_numbers<[1], [0], [0], [1], [0, 0, 1, 1], [], []>} : vector<8x64xbf16>, vector<64x64xbf16>, vector<8x64xf32> -> vector<8x64xf32>
    %c68 = arith.constant 68 : index
    %c0_419 = arith.constant 0 : index
    %1124 = vector.load %arg4[%c68, %c0_419] : memref<81x64xf32, #tpu.memory_space<vmem>>, vector<1x64xf32>
    %1125 = vector.broadcast %1124 : vector<1x64xf32> to vector<8x64xf32>
    %1126 = arith.addf %1123, %1125 : vector<8x64xf32>
    %c43_420 = arith.constant 43 : index
    %c0_421 = arith.constant 0 : index
    %c0_422 = arith.constant 0 : index
    %1127 = vector.load %arg3[%c43_420, %c0_421, %c0_422] : memref<47x64x64xf32, #tpu.memory_space<vmem>>, vector<1x64x64xf32>
    %1128 = vector.shape_cast %1127 : vector<1x64x64xf32> to vector<64x64xf32>
    %1129 = arith.truncf %1128 : vector<64x64xf32> to vector<64x64xbf16>
    %1130 = arith.truncf %634 : vector<8x64xf32> to vector<8x64xbf16>
    %cst_423 = arith.constant dense<0.000000e+00> : vector<8x64xf32>
    %1131 = tpu.matmul %1130, %1129, %cst_423 {dimension_numbers = #tpu.dot_dimension_numbers<[1], [0], [0], [1], [0, 0, 1, 1], [], []>} : vector<8x64xbf16>, vector<64x64xbf16>, vector<8x64xf32> -> vector<8x64xf32>
    %c69 = arith.constant 69 : index
    %c0_424 = arith.constant 0 : index
    %1132 = vector.load %arg4[%c69, %c0_424] : memref<81x64xf32, #tpu.memory_space<vmem>>, vector<1x64xf32>
    %1133 = vector.broadcast %1132 : vector<1x64xf32> to vector<8x64xf32>
    %1134 = arith.addf %1131, %1133 : vector<8x64xf32>
    %c44_425 = arith.constant 44 : index
    %c0_426 = arith.constant 0 : index
    %c0_427 = arith.constant 0 : index
    %1135 = vector.load %arg3[%c44_425, %c0_426, %c0_427] : memref<47x64x64xf32, #tpu.memory_space<vmem>>, vector<1x64x64xf32>
    %1136 = vector.shape_cast %1135 : vector<1x64x64xf32> to vector<64x64xf32>
    %1137 = arith.truncf %1136 : vector<64x64xf32> to vector<64x64xbf16>
    %cst_428 = arith.constant 0.000000e+00 : f32
    %1138 = vector.broadcast %cst_428 : f32 to vector<1x64xf32>
    %1139 = vector.extract_strided_slice %1118 {offsets = [0, 0], sizes = [1, 16], strides = [1, 1]} : vector<1x64xf32> to vector<1x16xf32>
    %1140 = arith.truncf %1139 : vector<1x16xf32> to vector<1x16xbf16>
    %1141 = vector.extract_strided_slice %1126 {offsets = [0, 0], sizes = [8, 16], strides = [1, 1]} : vector<8x64xf32> to vector<8x16xf32>
    %1142 = arith.truncf %1141 : vector<8x16xf32> to vector<8x16xbf16>
    %cst_429 = arith.constant dense<0.000000e+00> : vector<1x8xf32>
    %1143 = tpu.matmul %1140, %1142, %cst_429 {dimension_numbers = #tpu.dot_dimension_numbers<[1], [1], [0], [0], [0, 0, 1, 0], [], []>} : vector<1x16xbf16>, vector<8x16xbf16>, vector<1x8xf32> -> vector<1x8xf32>
    %cst_430 = arith.constant dense<0xFF800000> : vector<1xf32>
    %1144 = vector.multi_reduction <maximumf>, %1143, %cst_430 [1] : vector<1x8xf32> to vector<1xf32>
    %1145 = vector.shape_cast %1144 : vector<1xf32> to vector<1x1xf32>
    %1146 = vector.broadcast %1145 : vector<1x1xf32> to vector<1x8xf32>
    %1147 = arith.subf %1143, %1146 : vector<1x8xf32>
    %1148 = math.exp %1147 : vector<1x8xf32>
    %cst_431 = arith.constant dense<0.000000e+00> : vector<1xf32>
    %1149 = vector.multi_reduction <add>, %1148, %cst_431 [1] : vector<1x8xf32> to vector<1xf32>
    %1150 = vector.shape_cast %1149 : vector<1xf32> to vector<1x1xf32>
    %1151 = tpu.reciprocal %1150 {approx = true} : vector<1x1xf32> -> vector<1x1xf32>
    %1152 = vector.broadcast %1151 : vector<1x1xf32> to vector<1x8xf32>
    %1153 = arith.mulf %1148, %1152 : vector<1x8xf32>
    %1154 = vector.extract_strided_slice %1134 {offsets = [0, 0], sizes = [8, 16], strides = [1, 1]} : vector<8x64xf32> to vector<8x16xf32>
    %1155 = arith.truncf %1153 : vector<1x8xf32> to vector<1x8xbf16>
    %1156 = arith.truncf %1154 : vector<8x16xf32> to vector<8x16xbf16>
    %cst_432 = arith.constant dense<0.000000e+00> : vector<1x16xf32>
    %1157 = tpu.matmul %1155, %1156, %cst_432 {dimension_numbers = #tpu.dot_dimension_numbers<[1], [0], [0], [1], [0, 0, 1, 1], [], []>} : vector<1x8xbf16>, vector<8x16xbf16>, vector<1x16xf32> -> vector<1x16xf32>
    %1158 = vector.extract_strided_slice %1137 {offsets = [0, 0], sizes = [16, 64], strides = [1, 1]} : vector<64x64xbf16> to vector<16x64xbf16>
    %1159 = arith.truncf %1157 : vector<1x16xf32> to vector<1x16xbf16>
    %cst_433 = arith.constant dense<0.000000e+00> : vector<1x64xf32>
    %1160 = tpu.matmul %1159, %1158, %cst_433 {dimension_numbers = #tpu.dot_dimension_numbers<[1], [0], [0], [1], [0, 0, 1, 1], [], []>} : vector<1x16xbf16>, vector<16x64xbf16>, vector<1x64xf32> -> vector<1x64xf32>
    %1161 = arith.addf %1138, %1160 : vector<1x64xf32>
    %1162 = vector.extract_strided_slice %1118 {offsets = [0, 16], sizes = [1, 16], strides = [1, 1]} : vector<1x64xf32> to vector<1x16xf32>
    %1163 = arith.truncf %1162 : vector<1x16xf32> to vector<1x16xbf16>
    %1164 = vector.extract_strided_slice %1126 {offsets = [0, 16], sizes = [8, 16], strides = [1, 1]} : vector<8x64xf32> to vector<8x16xf32>
    %1165 = arith.truncf %1164 : vector<8x16xf32> to vector<8x16xbf16>
    %cst_434 = arith.constant dense<0.000000e+00> : vector<1x8xf32>
    %1166 = tpu.matmul %1163, %1165, %cst_434 {dimension_numbers = #tpu.dot_dimension_numbers<[1], [1], [0], [0], [0, 0, 1, 0], [], []>} : vector<1x16xbf16>, vector<8x16xbf16>, vector<1x8xf32> -> vector<1x8xf32>
    %cst_435 = arith.constant dense<0xFF800000> : vector<1xf32>
    %1167 = vector.multi_reduction <maximumf>, %1166, %cst_435 [1] : vector<1x8xf32> to vector<1xf32>
    %1168 = vector.shape_cast %1167 : vector<1xf32> to vector<1x1xf32>
    %1169 = vector.broadcast %1168 : vector<1x1xf32> to vector<1x8xf32>
    %1170 = arith.subf %1166, %1169 : vector<1x8xf32>
    %1171 = math.exp %1170 : vector<1x8xf32>
    %cst_436 = arith.constant dense<0.000000e+00> : vector<1xf32>
    %1172 = vector.multi_reduction <add>, %1171, %cst_436 [1] : vector<1x8xf32> to vector<1xf32>
    %1173 = vector.shape_cast %1172 : vector<1xf32> to vector<1x1xf32>
    %1174 = tpu.reciprocal %1173 {approx = true} : vector<1x1xf32> -> vector<1x1xf32>
    %1175 = vector.broadcast %1174 : vector<1x1xf32> to vector<1x8xf32>
    %1176 = arith.mulf %1171, %1175 : vector<1x8xf32>
    %1177 = vector.extract_strided_slice %1134 {offsets = [0, 16], sizes = [8, 16], strides = [1, 1]} : vector<8x64xf32> to vector<8x16xf32>
    %1178 = arith.truncf %1176 : vector<1x8xf32> to vector<1x8xbf16>
    %1179 = arith.truncf %1177 : vector<8x16xf32> to vector<8x16xbf16>
    %cst_437 = arith.constant dense<0.000000e+00> : vector<1x16xf32>
    %1180 = tpu.matmul %1178, %1179, %cst_437 {dimension_numbers = #tpu.dot_dimension_numbers<[1], [0], [0], [1], [0, 0, 1, 1], [], []>} : vector<1x8xbf16>, vector<8x16xbf16>, vector<1x16xf32> -> vector<1x16xf32>
    %1181 = vector.extract_strided_slice %1137 {offsets = [16, 0], sizes = [16, 64], strides = [1, 1]} : vector<64x64xbf16> to vector<16x64xbf16>
    %1182 = arith.truncf %1180 : vector<1x16xf32> to vector<1x16xbf16>
    %cst_438 = arith.constant dense<0.000000e+00> : vector<1x64xf32>
    %1183 = tpu.matmul %1182, %1181, %cst_438 {dimension_numbers = #tpu.dot_dimension_numbers<[1], [0], [0], [1], [0, 0, 1, 1], [], []>} : vector<1x16xbf16>, vector<16x64xbf16>, vector<1x64xf32> -> vector<1x64xf32>
    %1184 = arith.addf %1161, %1183 : vector<1x64xf32>
    %1185 = vector.extract_strided_slice %1118 {offsets = [0, 32], sizes = [1, 16], strides = [1, 1]} : vector<1x64xf32> to vector<1x16xf32>
    %1186 = arith.truncf %1185 : vector<1x16xf32> to vector<1x16xbf16>
    %1187 = vector.extract_strided_slice %1126 {offsets = [0, 32], sizes = [8, 16], strides = [1, 1]} : vector<8x64xf32> to vector<8x16xf32>
    %1188 = arith.truncf %1187 : vector<8x16xf32> to vector<8x16xbf16>
    %cst_439 = arith.constant dense<0.000000e+00> : vector<1x8xf32>
    %1189 = tpu.matmul %1186, %1188, %cst_439 {dimension_numbers = #tpu.dot_dimension_numbers<[1], [1], [0], [0], [0, 0, 1, 0], [], []>} : vector<1x16xbf16>, vector<8x16xbf16>, vector<1x8xf32> -> vector<1x8xf32>
    %cst_440 = arith.constant dense<0xFF800000> : vector<1xf32>
    %1190 = vector.multi_reduction <maximumf>, %1189, %cst_440 [1] : vector<1x8xf32> to vector<1xf32>
    %1191 = vector.shape_cast %1190 : vector<1xf32> to vector<1x1xf32>
    %1192 = vector.broadcast %1191 : vector<1x1xf32> to vector<1x8xf32>
    %1193 = arith.subf %1189, %1192 : vector<1x8xf32>
    %1194 = math.exp %1193 : vector<1x8xf32>
    %cst_441 = arith.constant dense<0.000000e+00> : vector<1xf32>
    %1195 = vector.multi_reduction <add>, %1194, %cst_441 [1] : vector<1x8xf32> to vector<1xf32>
    %1196 = vector.shape_cast %1195 : vector<1xf32> to vector<1x1xf32>
    %1197 = tpu.reciprocal %1196 {approx = true} : vector<1x1xf32> -> vector<1x1xf32>
    %1198 = vector.broadcast %1197 : vector<1x1xf32> to vector<1x8xf32>
    %1199 = arith.mulf %1194, %1198 : vector<1x8xf32>
    %1200 = vector.extract_strided_slice %1134 {offsets = [0, 32], sizes = [8, 16], strides = [1, 1]} : vector<8x64xf32> to vector<8x16xf32>
    %1201 = arith.truncf %1199 : vector<1x8xf32> to vector<1x8xbf16>
    %1202 = arith.truncf %1200 : vector<8x16xf32> to vector<8x16xbf16>
    %cst_442 = arith.constant dense<0.000000e+00> : vector<1x16xf32>
    %1203 = tpu.matmul %1201, %1202, %cst_442 {dimension_numbers = #tpu.dot_dimension_numbers<[1], [0], [0], [1], [0, 0, 1, 1], [], []>} : vector<1x8xbf16>, vector<8x16xbf16>, vector<1x16xf32> -> vector<1x16xf32>
    %1204 = vector.extract_strided_slice %1137 {offsets = [32, 0], sizes = [16, 64], strides = [1, 1]} : vector<64x64xbf16> to vector<16x64xbf16>
    %1205 = arith.truncf %1203 : vector<1x16xf32> to vector<1x16xbf16>
    %cst_443 = arith.constant dense<0.000000e+00> : vector<1x64xf32>
    %1206 = tpu.matmul %1205, %1204, %cst_443 {dimension_numbers = #tpu.dot_dimension_numbers<[1], [0], [0], [1], [0, 0, 1, 1], [], []>} : vector<1x16xbf16>, vector<16x64xbf16>, vector<1x64xf32> -> vector<1x64xf32>
    %1207 = arith.addf %1184, %1206 : vector<1x64xf32>
    %1208 = vector.extract_strided_slice %1118 {offsets = [0, 48], sizes = [1, 16], strides = [1, 1]} : vector<1x64xf32> to vector<1x16xf32>
    %1209 = arith.truncf %1208 : vector<1x16xf32> to vector<1x16xbf16>
    %1210 = vector.extract_strided_slice %1126 {offsets = [0, 48], sizes = [8, 16], strides = [1, 1]} : vector<8x64xf32> to vector<8x16xf32>
    %1211 = arith.truncf %1210 : vector<8x16xf32> to vector<8x16xbf16>
    %cst_444 = arith.constant dense<0.000000e+00> : vector<1x8xf32>
    %1212 = tpu.matmul %1209, %1211, %cst_444 {dimension_numbers = #tpu.dot_dimension_numbers<[1], [1], [0], [0], [0, 0, 1, 0], [], []>} : vector<1x16xbf16>, vector<8x16xbf16>, vector<1x8xf32> -> vector<1x8xf32>
    %cst_445 = arith.constant dense<0xFF800000> : vector<1xf32>
    %1213 = vector.multi_reduction <maximumf>, %1212, %cst_445 [1] : vector<1x8xf32> to vector<1xf32>
    %1214 = vector.shape_cast %1213 : vector<1xf32> to vector<1x1xf32>
    %1215 = vector.broadcast %1214 : vector<1x1xf32> to vector<1x8xf32>
    %1216 = arith.subf %1212, %1215 : vector<1x8xf32>
    %1217 = math.exp %1216 : vector<1x8xf32>
    %cst_446 = arith.constant dense<0.000000e+00> : vector<1xf32>
    %1218 = vector.multi_reduction <add>, %1217, %cst_446 [1] : vector<1x8xf32> to vector<1xf32>
    %1219 = vector.shape_cast %1218 : vector<1xf32> to vector<1x1xf32>
    %1220 = tpu.reciprocal %1219 {approx = true} : vector<1x1xf32> -> vector<1x1xf32>
    %1221 = vector.broadcast %1220 : vector<1x1xf32> to vector<1x8xf32>
    %1222 = arith.mulf %1217, %1221 : vector<1x8xf32>
    %1223 = vector.extract_strided_slice %1134 {offsets = [0, 48], sizes = [8, 16], strides = [1, 1]} : vector<8x64xf32> to vector<8x16xf32>
    %1224 = arith.truncf %1222 : vector<1x8xf32> to vector<1x8xbf16>
    %1225 = arith.truncf %1223 : vector<8x16xf32> to vector<8x16xbf16>
    %cst_447 = arith.constant dense<0.000000e+00> : vector<1x16xf32>
    %1226 = tpu.matmul %1224, %1225, %cst_447 {dimension_numbers = #tpu.dot_dimension_numbers<[1], [0], [0], [1], [0, 0, 1, 1], [], []>} : vector<1x8xbf16>, vector<8x16xbf16>, vector<1x16xf32> -> vector<1x16xf32>
    %1227 = vector.extract_strided_slice %1137 {offsets = [48, 0], sizes = [16, 64], strides = [1, 1]} : vector<64x64xbf16> to vector<16x64xbf16>
    %1228 = arith.truncf %1226 : vector<1x16xf32> to vector<1x16xbf16>
    %cst_448 = arith.constant dense<0.000000e+00> : vector<1x64xf32>
    %1229 = tpu.matmul %1228, %1227, %cst_448 {dimension_numbers = #tpu.dot_dimension_numbers<[1], [0], [0], [1], [0, 0, 1, 1], [], []>} : vector<1x16xbf16>, vector<16x64xbf16>, vector<1x64xf32> -> vector<1x64xf32>
    %1230 = arith.addf %1207, %1229 : vector<1x64xf32>
    %c70 = arith.constant 70 : index
    %c0_449 = arith.constant 0 : index
    %1231 = vector.load %arg4[%c70, %c0_449] : memref<81x64xf32, #tpu.memory_space<vmem>>, vector<1x64xf32>
    %1232 = arith.addf %1230, %1231 : vector<1x64xf32>
    %1233 = arith.addf %1111, %1232 : vector<1x64xf32>
    %cst_450 = arith.constant dense<0.000000e+00> : vector<1xf32>
    %1234 = vector.multi_reduction <add>, %1233, %cst_450 [1] : vector<1x64xf32> to vector<1xf32>
    %1235 = vector.shape_cast %1234 : vector<1xf32> to vector<1x1xf32>
    %cst_451 = arith.constant 6.400000e+01 : f32
    %1236 = vector.broadcast %cst_451 : f32 to vector<1x1xf32>
    %1237 = arith.divf %1235, %1236 : vector<1x1xf32>
    %1238 = vector.broadcast %1237 : vector<1x1xf32> to vector<1x64xf32>
    %1239 = arith.subf %1233, %1238 : vector<1x64xf32>
    %1240 = arith.mulf %1239, %1239 : vector<1x64xf32>
    %cst_452 = arith.constant dense<0.000000e+00> : vector<1xf32>
    %1241 = vector.multi_reduction <add>, %1240, %cst_452 [1] : vector<1x64xf32> to vector<1xf32>
    %1242 = vector.shape_cast %1241 : vector<1xf32> to vector<1x1xf32>
    %cst_453 = arith.constant 6.400000e+01 : f32
    %1243 = vector.broadcast %cst_453 : f32 to vector<1x1xf32>
    %1244 = arith.divf %1242, %1243 : vector<1x1xf32>
    %1245 = vector.broadcast %1237 : vector<1x1xf32> to vector<1x64xf32>
    %1246 = arith.subf %1233, %1245 : vector<1x64xf32>
    %cst_454 = arith.constant 9.99999974E-6 : f32
    %1247 = vector.broadcast %cst_454 : f32 to vector<1x1xf32>
    %1248 = arith.addf %1244, %1247 : vector<1x1xf32>
    %1249 = math.rsqrt %1248 : vector<1x1xf32>
    %1250 = vector.broadcast %1249 : vector<1x1xf32> to vector<1x64xf32>
    %1251 = arith.mulf %1246, %1250 : vector<1x64xf32>
    %c75 = arith.constant 75 : index
    %c0_455 = arith.constant 0 : index
    %1252 = vector.load %arg4[%c75, %c0_455] : memref<81x64xf32, #tpu.memory_space<vmem>>, vector<1x64xf32>
    %1253 = arith.mulf %1251, %1252 : vector<1x64xf32>
    %c76 = arith.constant 76 : index
    %c0_456 = arith.constant 0 : index
    %1254 = vector.load %arg4[%c76, %c0_456] : memref<81x64xf32, #tpu.memory_space<vmem>>, vector<1x64xf32>
    %1255 = arith.addf %1253, %1254 : vector<1x64xf32>
    %c45_457 = arith.constant 45 : index
    %c0_458 = arith.constant 0 : index
    %c0_459 = arith.constant 0 : index
    %1256 = vector.load %arg3[%c45_457, %c0_458, %c0_459] : memref<47x64x64xf32, #tpu.memory_space<vmem>>, vector<1x64x64xf32>
    %1257 = vector.shape_cast %1256 : vector<1x64x64xf32> to vector<64x64xf32>
    %1258 = arith.truncf %1257 : vector<64x64xf32> to vector<64x64xbf16>
    %1259 = arith.truncf %1255 : vector<1x64xf32> to vector<1x64xbf16>
    %cst_460 = arith.constant dense<0.000000e+00> : vector<1x64xf32>
    %1260 = tpu.matmul %1259, %1258, %cst_460 {dimension_numbers = #tpu.dot_dimension_numbers<[1], [0], [0], [1], [0, 0, 1, 1], [], []>} : vector<1x64xbf16>, vector<64x64xbf16>, vector<1x64xf32> -> vector<1x64xf32>
    %c71 = arith.constant 71 : index
    %c0_461 = arith.constant 0 : index
    %1261 = vector.load %arg4[%c71, %c0_461] : memref<81x64xf32, #tpu.memory_space<vmem>>, vector<1x64xf32>
    %1262 = arith.addf %1260, %1261 : vector<1x64xf32>
    %cst_462 = arith.constant 0.000000e+00 : f32
    %1263 = vector.broadcast %cst_462 : f32 to vector<1x64xf32>
    %1264 = arith.maximumf %1262, %1263 : vector<1x64xf32>
    %c46_463 = arith.constant 46 : index
    %c0_464 = arith.constant 0 : index
    %c0_465 = arith.constant 0 : index
    %1265 = vector.load %arg3[%c46_463, %c0_464, %c0_465] : memref<47x64x64xf32, #tpu.memory_space<vmem>>, vector<1x64x64xf32>
    %1266 = vector.shape_cast %1265 : vector<1x64x64xf32> to vector<64x64xf32>
    %1267 = arith.truncf %1266 : vector<64x64xf32> to vector<64x64xbf16>
    %1268 = arith.truncf %1264 : vector<1x64xf32> to vector<1x64xbf16>
    %cst_466 = arith.constant dense<0.000000e+00> : vector<1x64xf32>
    %1269 = tpu.matmul %1268, %1267, %cst_466 {dimension_numbers = #tpu.dot_dimension_numbers<[1], [0], [0], [1], [0, 0, 1, 1], [], []>} : vector<1x64xbf16>, vector<64x64xbf16>, vector<1x64xf32> -> vector<1x64xf32>
    %c72 = arith.constant 72 : index
    %c0_467 = arith.constant 0 : index
    %1270 = vector.load %arg4[%c72, %c0_467] : memref<81x64xf32, #tpu.memory_space<vmem>>, vector<1x64xf32>
    %1271 = arith.addf %1269, %1270 : vector<1x64xf32>
    %1272 = arith.addf %1255, %1271 : vector<1x64xf32>
    %cst_468 = arith.constant dense<0.000000e+00> : vector<1xf32>
    %1273 = vector.multi_reduction <add>, %1272, %cst_468 [1] : vector<1x64xf32> to vector<1xf32>
    %1274 = vector.shape_cast %1273 : vector<1xf32> to vector<1x1xf32>
    %cst_469 = arith.constant 6.400000e+01 : f32
    %1275 = vector.broadcast %cst_469 : f32 to vector<1x1xf32>
    %1276 = arith.divf %1274, %1275 : vector<1x1xf32>
    %1277 = vector.broadcast %1276 : vector<1x1xf32> to vector<1x64xf32>
    %1278 = arith.subf %1272, %1277 : vector<1x64xf32>
    %1279 = arith.mulf %1278, %1278 : vector<1x64xf32>
    %cst_470 = arith.constant dense<0.000000e+00> : vector<1xf32>
    %1280 = vector.multi_reduction <add>, %1279, %cst_470 [1] : vector<1x64xf32> to vector<1xf32>
    %1281 = vector.shape_cast %1280 : vector<1xf32> to vector<1x1xf32>
    %cst_471 = arith.constant 6.400000e+01 : f32
    %1282 = vector.broadcast %cst_471 : f32 to vector<1x1xf32>
    %1283 = arith.divf %1281, %1282 : vector<1x1xf32>
    %1284 = vector.broadcast %1276 : vector<1x1xf32> to vector<1x64xf32>
    %1285 = arith.subf %1272, %1284 : vector<1x64xf32>
    %cst_472 = arith.constant 9.99999974E-6 : f32
    %1286 = vector.broadcast %cst_472 : f32 to vector<1x1xf32>
    %1287 = arith.addf %1283, %1286 : vector<1x1xf32>
    %1288 = math.rsqrt %1287 : vector<1x1xf32>
    %1289 = vector.broadcast %1288 : vector<1x1xf32> to vector<1x64xf32>
    %1290 = arith.mulf %1285, %1289 : vector<1x64xf32>
    %c77 = arith.constant 77 : index
    %c0_473 = arith.constant 0 : index
    %1291 = vector.load %arg4[%c77, %c0_473] : memref<81x64xf32, #tpu.memory_space<vmem>>, vector<1x64xf32>
    %1292 = arith.mulf %1290, %1291 : vector<1x64xf32>
    %c78 = arith.constant 78 : index
    %c0_474 = arith.constant 0 : index
    %1293 = vector.load %arg4[%c78, %c0_474] : memref<81x64xf32, #tpu.memory_space<vmem>>, vector<1x64xf32>
    %1294 = arith.addf %1292, %1293 : vector<1x64xf32>
    %cst_475 = arith.constant dense<0.000000e+00> : vector<1xf32>
    %1295 = vector.multi_reduction <add>, %1294, %cst_475 [1] : vector<1x64xf32> to vector<1xf32>
    %1296 = vector.shape_cast %1295 : vector<1xf32> to vector<1x1xf32>
    %cst_476 = arith.constant 6.400000e+01 : f32
    %1297 = vector.broadcast %cst_476 : f32 to vector<1x1xf32>
    %1298 = arith.divf %1296, %1297 : vector<1x1xf32>
    %1299 = vector.broadcast %1298 : vector<1x1xf32> to vector<1x64xf32>
    %1300 = arith.subf %1294, %1299 : vector<1x64xf32>
    %1301 = arith.mulf %1300, %1300 : vector<1x64xf32>
    %cst_477 = arith.constant dense<0.000000e+00> : vector<1xf32>
    %1302 = vector.multi_reduction <add>, %1301, %cst_477 [1] : vector<1x64xf32> to vector<1xf32>
    %1303 = vector.shape_cast %1302 : vector<1xf32> to vector<1x1xf32>
    %cst_478 = arith.constant 6.400000e+01 : f32
    %1304 = vector.broadcast %cst_478 : f32 to vector<1x1xf32>
    %1305 = arith.divf %1303, %1304 : vector<1x1xf32>
    %1306 = vector.broadcast %1298 : vector<1x1xf32> to vector<1x64xf32>
    %1307 = arith.subf %1294, %1306 : vector<1x64xf32>
    %cst_479 = arith.constant 9.99999974E-6 : f32
    %1308 = vector.broadcast %cst_479 : f32 to vector<1x1xf32>
    %1309 = arith.addf %1305, %1308 : vector<1x1xf32>
    %1310 = math.rsqrt %1309 : vector<1x1xf32>
    %1311 = vector.broadcast %1310 : vector<1x1xf32> to vector<1x64xf32>
    %1312 = arith.mulf %1307, %1311 : vector<1x64xf32>
    %c79 = arith.constant 79 : index
    %c0_480 = arith.constant 0 : index
    %1313 = vector.load %arg4[%c79, %c0_480] : memref<81x64xf32, #tpu.memory_space<vmem>>, vector<1x64xf32>
    %1314 = arith.mulf %1312, %1313 : vector<1x64xf32>
    %c80 = arith.constant 80 : index
    %c0_481 = arith.constant 0 : index
    %1315 = vector.load %arg4[%c80, %c0_481] : memref<81x64xf32, #tpu.memory_space<vmem>>, vector<1x64xf32>
    %1316 = arith.addf %1314, %1315 : vector<1x64xf32>
    %c4 = arith.constant 4 : index
    %c0_482 = arith.constant 0 : index
    %c0_483 = arith.constant 0 : index
    %1317 = vector.load %arg3[%c4, %c0_482, %c0_483] : memref<47x64x64xf32, #tpu.memory_space<vmem>>, vector<1x64x64xf32>
    %1318 = vector.shape_cast %1317 : vector<1x64x64xf32> to vector<64x64xf32>
    %1319 = arith.truncf %1318 : vector<64x64xf32> to vector<64x64xbf16>
    %1320 = arith.truncf %1316 : vector<1x64xf32> to vector<1x64xbf16>
    %cst_484 = arith.constant dense<0.000000e+00> : vector<1x64xf32>
    %1321 = tpu.matmul %1320, %1319, %cst_484 {dimension_numbers = #tpu.dot_dimension_numbers<[1], [0], [0], [1], [0, 0, 1, 1], [], []>} : vector<1x64xbf16>, vector<64x64xbf16>, vector<1x64xf32> -> vector<1x64xf32>
    %c4_485 = arith.constant 4 : index
    %c0_486 = arith.constant 0 : index
    %1322 = vector.load %arg4[%c4_485, %c0_486] : memref<81x64xf32, #tpu.memory_space<vmem>>, vector<1x64xf32>
    %1323 = arith.addf %1321, %1322 : vector<1x64xf32>
    %cst_487 = arith.constant 0.000000e+00 : f32
    %1324 = vector.broadcast %cst_487 : f32 to vector<1x64xf32>
    %1325 = arith.maximumf %1323, %1324 : vector<1x64xf32>
    %c0_488 = arith.constant 0 : index
    %c0_489 = arith.constant 0 : index
    %c0_490 = arith.constant 0 : index
    %1326 = vector.load %arg5[%c0_488, %c0_489, %c0_490] : memref<1x1x64xf32, #tpu.memory_space<vmem>>, vector<1x1x64xf32>
    %1327 = vector.shape_cast %1326 : vector<1x1x64xf32> to vector<1x64xf32>
    %1328 = vector.shape_cast %1325 : vector<1x64xf32> to vector<1x1x64xf32>
    tpu.vector_store %arg5[%c0_488, %c0_489, %c0_490], %1328 {strides = array<i32>} : memref<1x1x64xf32, #tpu.memory_space<vmem>>, vector<1x1x64xf32>,
    return
  }
  func.func @transform_0(%arg0: i32) -> (i32, i32, i32) {
    %c0_i32 = arith.constant 0 : i32
    %c0_i32_0 = arith.constant 0 : i32
    %c0_i32_1 = arith.constant 0 : i32
    return %arg0, %c0_i32, %c0_i32_0 : i32, i32, i32
  }
  func.func @transform_1(%arg0: i32) -> (i32, i32, i32) {
    %c0_i32 = arith.constant 0 : i32
    %c0_i32_0 = arith.constant 0 : i32
    %c0_i32_1 = arith.constant 0 : i32
    return %arg0, %c0_i32, %c0_i32_0 : i32, i32, i32
  }
  func.func @transform_2(%arg0: i32) -> (i32, i32, i32) {
    %c0_i32 = arith.constant 0 : i32
    %c0_i32_0 = arith.constant 0 : i32
    %c0_i32_1 = arith.constant 0 : i32
    %c0_i32_2 = arith.constant 0 : i32
    return %c0_i32, %c0_i32_0, %c0_i32_1 : i32, i32, i32
  }
  func.func @transform_3(%arg0: i32) -> (i32, i32) {
    %c0_i32 = arith.constant 0 : i32
    %c0_i32_0 = arith.constant 0 : i32
    %c0_i32_1 = arith.constant 0 : i32
    return %c0_i32, %c0_i32_0 : i32, i32
  }
  func.func @transform_4(%arg0: i32) -> (i32, i32, i32) {
    %c0_i32 = arith.constant 0 : i32
    %c0_i32_0 = arith.constant 0 : i32
    %c0_i32_1 = arith.constant 0 : i32
    return %arg0, %c0_i32, %c0_i32_0 : i32, i32, i32
  }
}

</mosaic_0001>

<llo_original>
// kernel: tpu_custom_call.1
$region0: #{tpu_custom_call.1}
  #allocation0 [shape = 'u32[]', space=smem, size = 0x4, offset = 0x4, fixed_abs, tag = 'smem constant byte address 0x4 - core index']
  #allocation1 [shape = 'u32[144,128]{1,0:T(1,128)}', space=vmem, size = 0x12000, scoped, tag = 'internal scratch']
  %s0 = inlined_call_operand.hbm [shape: f32[2,8,64], index: 0, kind: input, shape index: {}]
  %s1 = inlined_call_operand.hbm [shape: f32[2,1,64], index: 1, kind: input, shape index: {}]
  %s2 = inlined_call_operand.hbm [shape: f32[47,64,64], index: 2, kind: input, shape index: {}]
  %s3 = inlined_call_operand.vmem [shape: f32[81,64], index: 3, kind: input, shape index: {}]
  %s4 = inlined_call_operand.hbm [shape: f32[2,1,64], index: 4, kind: output, shape index: {}]
  %s5 = sld [smem:[#allocation0]]
  $region61: #{tpu_custom_call.1} parent=0
    _
  %s7 = ssub.s32 1, %s5
  %s8 = scalar_select 0, %s7, %s5
  $region1: #{tpu_custom_call.1} parent=0
    #allocation2 [shape = 'u8[8192]{0}', space=vmem, size = 0x2000, scoped, tag = 'input window, operand 0']
    #allocation3 [shape = 's32[2]{0}', space=sflag, size = 0x8, scoped, tag = 'scoped memory for tpu_custom_call.1']
    #allocation4 [shape = 's32[2]{0}', space=sflag, size = 0x8, scoped, tag = 'scoped memory for tpu_custom_call.1']
    #allocation5 [shape = 'u8[1024]{0}', space=vmem, size = 0x400, scoped, tag = 'input window, operand 1']
    #allocation6 [shape = 's32[2]{0}', space=sflag, size = 0x8, scoped, tag = 'scoped memory for tpu_custom_call.1']
    #allocation7 [shape = 'u8[1540096]{0}', space=vmem, size = 0x178000, scoped, tag = 'input window, operand 2, single buffered']
    #allocation8 [shape = 'u8[1024]{0}', space=vmem, size = 0x400, scoped, tag = 'output window, operand 0']
    %9 = vsyncpa [#allocation3], 0
    %s10 = scalar_lea.sflag [#allocation3], 1
    %11 = vsyncpa %s10, 0
    %12 = vsyncpa [#allocation6], 0
    %s13 = scalar_lea.sflag [#allocation6], 1
    %14 = vsyncpa %s13, 0
    %15 = vsyncpa [#allocation4], 0
    %s16 = scalar_lea.sflag [#allocation4], 1
    %17 = vsyncpa %s16, 0
    loop: start=0, step=1, limit=4
    $region2: #{tpu_custom_call.1} parent=1 // loop_pre_header
      _
    $region3: #{tpu_custom_call.1} parent=1 // loop_header
      %s19 = sphi 0, %s23
      %p20 = scmp.ge.s32.totalorder %s19, 4
      %s29 = sphi 0, %s31
      %s32 = sphi 0, %s29
      %s33 = sphi 0, %s32
      %s49 = sphi 0, %s33
      %s55 = sphi 0, %s57
      %s58 = sphi 0, %s55
      %s59 = sphi 0, %s58
      %s75 = sphi 0, %s59
      %s79 = sphi 0, %s79
      %s81 = sphi 0, %s79
      %s82 = sphi 0, %s81
      %s96 = sphi 0, %s82
      %s100 = sphi 0, %s100
      %s102 = sphi 0, %s100
      %s103 = sphi 0, %s102
      %s117 = sphi 0, %s103
      %s123 = sphi 0, %s125
      %s126 = sphi 0, %s123
      %s127 = sphi 0, %s126
      %s143 = sphi 0, %s127
    $region4: #{tpu_custom_call.1} parent=1 // loop_header_branch
      %22 = sbr.rel (%p20) target = $region8
    $region5: #{tpu_custom_call.1} parent=1 // loop_body
      %s24 = ssub.s32 %s19, 1
      %s25 = ssub.s32 %s19, 2
      %s26 = sadd.s32 %s19, 1
      %s27 = ssub.s32 %s19, %s26
      %p28 = scmp.eq.s32.totalorder %s27, 0
      %s30 = sadd.s32 %s29, 1
      %s31 = scalar_select %p28, %s29, %s30
      %p34 = pneg %p28
      %p35 = scmp.eq.s32.totalorder %s19, 1
      %p36 = por %p34, %p35
      %p37 = scmp.ne.s32.totalorder %s29, %s32
      %p38 = scmp.eq.s32.totalorder %s19, 0
      %p39 = por %p37, %p38
      %p40 = scmp.ne.s32.totalorder %s29, %s32
      %p41 = scmp.eq.s32.totalorder %s24, 1
      %p42 = por %p40, %p41
      %p43 = scmp.ne.s32.totalorder %s32, %s33
      %p44 = scmp.eq.s32.totalorder %s24, 0
      %p45 = por %p43, %p44
      %p46 = scmp.ne.s32.totalorder %s32, %s33
      %p47 = scmp.eq.s32.totalorder %s25, 1
      %p48 = por %p46, %p47
      %p50 = scmp.ne.s32.totalorder %s33, %s49
      %p51 = scmp.eq.s32.totalorder %s25, 0
      %p52 = por %p50, %p51
      %s53 = ssub.s32 %s19, %s26
      %p54 = scmp.eq.s32.totalorder %s53, 0
      %s56 = sadd.s32 %s55, 1
      %s57 = scalar_select %p54, %s55, %s56
      %p60 = pneg %p54
      %p61 = scmp.eq.s32.totalorder %s19, 1
      %p62 = por %p60, %p61
      %p63 = scmp.ne.s32.totalorder %s55, %s58
      %p64 = scmp.eq.s32.totalorder %s19, 0
      %p65 = por %p63, %p64
      %p66 = scmp.ne.s32.totalorder %s55, %s58
      %p67 = scmp.eq.s32.totalorder %s24, 1
      %p68 = por %p66, %p67
      %p69 = scmp.ne.s32.totalorder %s58, %s59
      %p70 = scmp.eq.s32.totalorder %s24, 0
      %p71 = por %p69, %p70
      %p72 = scmp.ne.s32.totalorder %s58, %s59
      %p73 = scmp.eq.s32.totalorder %s25, 1
      %p74 = por %p72, %p73
      %p76 = scmp.ne.s32.totalorder %s59, %s75
      %p77 = scmp.eq.s32.totalorder %s25, 0
      %p78 = por %p76, %p77
      %s80 = sadd.s32 %s79, 1
      %p83 = scmp.eq.s32.totalorder %s19, 1
      %p84 = scmp.ne.s32.totalorder %s79, %s81
      %p85 = scmp.eq.s32.totalorder %s19, 0
      %p86 = por %p84, %p85
      %p87 = scmp.ne.s32.totalorder %s79, %s81
      %p88 = scmp.eq.s32.totalorder %s24, 1
      %p89 = por %p87, %p88
      %p90 = scmp.ne.s32.totalorder %s81, %s82
      %p91 = scmp.eq.s32.totalorder %s24, 0
      %p92 = por %p90, %p91
      %p93 = scmp.ne.s32.totalorder %s81, %s82
      %p94 = scmp.eq.s32.totalorder %s25, 1
      %p95 = por %p93, %p94
      %p97 = scmp.ne.s32.totalorder %s82, %s96
      %p98 = scmp.eq.s32.totalorder %s25, 0
      %p99 = por %p97, %p98
      %s101 = sadd.s32 %s100, 1
      %p104 = scmp.eq.s32.totalorder %s19, 1
      %p105 = scmp.ne.s32.totalorder %s100, %s102
      %p106 = scmp.eq.s32.totalorder %s19, 0
      %p107 = por %p105, %p106
      %p108 = scmp.ne.s32.totalorder %s100, %s102
      %p109 = scmp.eq.s32.totalorder %s24, 1
      %p110 = por %p108, %p109
      %p111 = scmp.ne.s32.totalorder %s102, %s103
      %p112 = scmp.eq.s32.totalorder %s24, 0
      %p113 = por %p111, %p112
      %p114 = scmp.ne.s32.totalorder %s102, %s103
      %p115 = scmp.eq.s32.totalorder %s25, 1
      %p116 = por %p114, %p115
      %p118 = scmp.ne.s32.totalorder %s103, %s117
      %p119 = scmp.eq.s32.totalorder %s25, 0
      %p120 = por %p118, %p119
      %s121 = ssub.s32 %s19, %s26
      %p122 = scmp.eq.s32.totalorder %s121, 0
      %s124 = sadd.s32 %s123, 1
      %s125 = scalar_select %p122, %s123, %s124
      %p128 = pneg %p122
      %p129 = scmp.eq.s32.totalorder %s19, 1
      %p130 = por %p128, %p129
      %p131 = scmp.ne.s32.totalorder %s123, %s126
      %p132 = scmp.eq.s32.totalorder %s19, 0
      %p133 = por %p131, %p132
      %p134 = scmp.ne.s32.totalorder %s123, %s126
      %p135 = scmp.eq.s32.totalorder %s24, 1
      %p136 = por %p134, %p135
      %p137 = scmp.ne.s32.totalorder %s126, %s127
      %p138 = scmp.eq.s32.totalorder %s24, 0
      %p139 = por %p137, %p138
      %p140 = scmp.ne.s32.totalorder %s126, %s127
      %p141 = scmp.eq.s32.totalorder %s25, 1
      %p142 = por %p140, %p141
      %p144 = scmp.ne.s32.totalorder %s127, %s143
      %p145 = scmp.eq.s32.totalorder %s25, 0
      %p146 = por %p144, %p145
      %p147 = scmp.le.s32.totalorder 1, %s19
      %p148 = scmp.lt.s32.totalorder %s19, 3
      %p149 = pnand %p147, %p148
      %p150 = pneg %p149
      // Predicated region
      $region9: #{tpu_custom_call.1} parent=5 // pred_check
        _
      $region10: #{tpu_custom_call.1} parent=5 // pred_check_branch
        %152 = sbr.rel (%p149) target = $region12
      $region11: #{tpu_custom_call.1} parent=5 // pred_region
        %s153 = ssub.s32 %s19, 1
        // Predicated region
        $region13: #{tpu_custom_call.1} parent=11 // pred_check
          %p154 = pneg %p92
        $region14: #{tpu_custom_call.1} parent=11 // pred_check_branch
          %156 = sbr.rel (%p154) target = $region16
        $region15: #{tpu_custom_call.1} parent=11 // pred_region
          %s158 = ssub.s32 48128, 48128
          %159 = vsyncadd [#allocation6], %s158
          %s160 = sshll.u32 [#allocation7], 4
          %s161 = int_to_ptr.vmem [resolvable:$true] %s160
          %166 = dma.hbm_to_vmem [thread:$0]  %s2, 48128, %s161, [#allocation6], 128, 128, 8
        $region16: #{tpu_custom_call.1} parent=11 // pred_fallthru
          _
        // Predicated region
        $region17: #{tpu_custom_call.1} parent=11 // pred_check
          %p167 = pneg %p113
        $region18: #{tpu_custom_call.1} parent=11 // pred_check_branch
          %169 = sbr.rel (%p167) target = $region20
        $region19: #{tpu_custom_call.1} parent=11 // pred_region
          _
        $region20: #{tpu_custom_call.1} parent=11 // pred_fallthru
          _
      $region12: #{tpu_custom_call.1} parent=5 // pred_fallthru
        _
      %p170 = scmp.lt.s32.totalorder %s19, 2
      // Predicated region
      $region21: #{tpu_custom_call.1} parent=5 // pred_check
        %p171 = pneg %p170
      $region22: #{tpu_custom_call.1} parent=5 // pred_check_branch
        %173 = sbr.rel (%p171) target = $region24
      $region23: #{tpu_custom_call.1} parent=5 // pred_region
        // Predicated region
        $region25: #{tpu_custom_call.1} parent=23 // pred_check
          %p174 = pneg %p39
        $region26: #{tpu_custom_call.1} parent=23 // pred_check_branch
          %176 = sbr.rel (%p174) target = $region28
        $region27: #{tpu_custom_call.1} parent=23 // pred_region
          %s177 = sand.u32 %s29, 1
          %s178 = scalar_lea.sflag [#allocation3], %s177
          %s179 = sand.u32 %s29, 1
          %s180 = smul.addr %s179, 8
          %s181 = scalar_lea.vmem [#allocation2], %s180
          %s183 = ssub.s32 128, 128
          %184 = vsyncadd %s178, %s183
          %s185 = smul.addr %s19, 128
          %s186 = scalar_lea.hbm %s0, %s185
          %s188 = sshll.u32 %s181, 4
          %s189 = int_to_ptr.vmem [resolvable:$true] %s188
          %191 = dma.hbm_to_vmem [thread:$0]  %s186, 128, %s189, %s178
        $region28: #{tpu_custom_call.1} parent=23 // pred_fallthru
          _
        // Predicated region
        $region29: #{tpu_custom_call.1} parent=23 // pred_check
          %p192 = pneg %p65
        $region30: #{tpu_custom_call.1} parent=23 // pred_check_branch
          %194 = sbr.rel (%p192) target = $region32
        $region31: #{tpu_custom_call.1} parent=23 // pred_region
          %s195 = sand.u32 %s19, 1
          %s196 = scalar_lea.sflag [#allocation6], %s195
          %s197 = sand.u32 %s55, 1
          %s198 = scalar_lea.vmem [#allocation5], %s197
          %s200 = ssub.s32 16, 16
          %201 = vsyncadd %s196, %s200
          %s202 = smul.addr %s19, 16
          %s203 = scalar_lea.hbm %s1, %s202
          %s205 = sshll.u32 %s198, 4
          %s206 = int_to_ptr.vmem [resolvable:$true] %s205
          %208 = dma.hbm_to_vmem [thread:$0]  %s203, 16, %s206, %s196
        $region32: #{tpu_custom_call.1} parent=23 // pred_fallthru
          _
      $region24: #{tpu_custom_call.1} parent=5 // pred_fallthru
        _
      %p209 = scmp.le.s32.totalorder 1, %s19
      %p210 = scmp.lt.s32.totalorder %s19, 3
      %p211 = pnand %p209, %p210
      %p212 = pneg %p211
      // Predicated region
      $region33: #{tpu_custom_call.1} parent=5 // pred_check
        _
      $region34: #{tpu_custom_call.1} parent=5 // pred_check_branch
        %214 = sbr.rel (%p211) target = $region36
      $region35: #{tpu_custom_call.1} parent=5 // pred_region
        %s215 = ssub.s32 %s19, 1
        %s216 = sand.u32 %s32, 1
        %s217 = scalar_lea.sflag [#allocation3], %s216
        %s218 = sand.u32 %s32, 1
        %s219 = smul.addr %s218, 8
        %s220 = scalar_lea.vmem [#allocation2], %s219
        // Predicated region
        $region37: #{tpu_custom_call.1} parent=35 // pred_check
          %p221 = pneg %p45
        $region38: #{tpu_custom_call.1} parent=35 // pred_check_branch
          %223 = sbr.rel (%p221) target = $region40
        $region39: #{tpu_custom_call.1} parent=35 // pred_region
          %224 = dma.done %s217, 128
        $region40: #{tpu_custom_call.1} parent=35 // pred_fallthru
          _
        %s225 = sand.u32 %s24, 1
        %s226 = scalar_lea.sflag [#allocation6], %s225
        %s227 = sand.u32 %s58, 1
        %s228 = scalar_lea.vmem [#allocation5], %s227
        // Predicated region
        $region41: #{tpu_custom_call.1} parent=35 // pred_check
          %p229 = pneg %p71
        $region42: #{tpu_custom_call.1} parent=35 // pred_check_branch
          %231 = sbr.rel (%p229) target = $region44
        $region43: #{tpu_custom_call.1} parent=35 // pred_region
          %232 = dma.done %s226, 16
        $region44: #{tpu_custom_call.1} parent=35 // pred_fallthru
          _
        // Predicated region
        $region45: #{tpu_custom_call.1} parent=35 // pred_check
          %p233 = pneg %p92
        $region46: #{tpu_custom_call.1} parent=35 // pred_check_branch
          %235 = sbr.rel (%p233) target = $region48
        $region47: #{tpu_custom_call.1} parent=35 // pred_region
          %236 = dma.done [#allocation6], 48128
        $region48: #{tpu_custom_call.1} parent=35 // pred_fallthru
          _
        %s237 = sand.u32 %s32, 1
        %s238 = scalar_lea.sflag [#allocation3], %s237
        %s239 = sand.u32 %s32, 1
        %s240 = smul.addr %s239, 8
        %s241 = scalar_lea.vmem [#allocation2], %s240
        %p242 = pneg %p45
        %p243 = pneg %p42
        %s244 = sand.u32 %s24, 1
        %s245 = scalar_lea.sflag [#allocation6], %s244
        %s246 = sand.u32 %s58, 1
        %s247 = scalar_lea.vmem [#allocation5], %s246
        %p248 = pneg %p71
        %p249 = pneg %p68
        %p250 = pneg %p92
        %p251 = pneg %p89
        %p252 = pneg %p113
        %p253 = pneg %p110
        %p254 = pneg %p139
        %p255 = pneg %p136
        %s256 = sand.u32 %s126, 1
        %s257 = scalar_lea.sflag [#allocation4], %s256
        %s258 = sand.u32 %s126, 1
        %s259 = scalar_lea.vmem [#allocation8], %s258
        %v261 = vld [vmem:[%s220] sm:$0xff]
        %v262 = vld [vmem:[%s228] sm:$0x1]
        %v263 = vld [vmem:[#allocation7] sm:$0xff]
        %v264 = vld [vmem:[#allocation7 + $0x8] sm:$0xff]
        %v265 = vld [vmem:[#allocation7 + $0x10] sm:$0xff]
        %v266 = vld [vmem:[#allocation7 + $0x18] sm:$0xff]
        %v267 = vld [vmem:[#allocation7 + $0x20] sm:$0xff]
        %v268 = vld [vmem:[#allocation7 + $0x28] sm:$0xff]
        %v269 = vld [vmem:[#allocation7 + $0x30] sm:$0xff]
        %v270 = vld [vmem:[#allocation7 + $0x38] sm:$0xff]
        %v271 = vpack.c.bf16 %v264, %v263
        %v272 = vpack.c.bf16 %v266, %v265
        %v273 = vpack.c.bf16 %v268, %v267
        %v274 = vpack.c.bf16 %v270, %v269
        %v275 = vpack.c.bf16 %v261, %v261
        %v276 = vld [vmem:[%s3] sm:$0x1]
        %v277 = vlaneseq
        %v278 = vshrl.u32 %v277, 7
        %v279 = vsub.s32 0, %v278
        %v280 = vrot.slane %v276, %v279
        %vm281 = vcmask 523264
        %v283 = vsel %vm281, %v275, 0
        %285 = vmatprep.subr.bf16.mxu0 0
        %286 = vmatpush1.bf16.msra.mxu0 %v271
        %287 = vmatprep.subr.bf16.mxu0 0
        %288 = vmatpush1.bf16.msra.mxu0 %v272
        %289 = vmatprep.subr.bf16.mxu0 0
        %290 = vmatpush1.bf16.msra.mxu0 %v273
        %291 = vmatprep.subr.bf16.mxu0 0
        %292 = vmatpush1.bf16.msra.mxu0 %v274
        %293 = vmatprep.subr.bf16.mxu0 0
        %294 = vmatpush1.bf16.msra.mxu0 0
        %295 = vmatprep.subr.bf16.mxu0 0
        %296 = vmatpush1.bf16.msra.mxu0 0
        %297 = vmatprep.subr.bf16.mxu0 0
        %298 = vmatpush1.bf16.msra.mxu0 0
        %299 = vmatprep.subr.bf16.mxu0 0
        %300 = vmatpush1.bf16.msra.mxu0 0
        %301 = vmatprep.subr.bf16.mxu0 0
        %302 = vmatpush1.bf16.msra.mxu0 0
        %303 = vmatprep.subr.bf16.mxu0 0
        %304 = vmatpush1.bf16.msra.mxu0 0
        %305 = vmatprep.subr.bf16.mxu0 0
        %306 = vmatpush1.bf16.msra.mxu0 0
        %307 = vmatprep.subr.bf16.mxu0 0
        %308 = vmatpush1.bf16.msra.mxu0 0
        %309 = vmatprep.subr.bf16.mxu0 0
        %310 = vmatpush1.bf16.msra.mxu0 0
        %311 = vmatprep.subr.bf16.mxu0 0
        %312 = vmatpush1.bf16.msra.mxu0 0
        %313 = vmatprep.subr.bf16.mxu0 0
        %314 = vmatpush1.bf16.msra.mxu0 0
        %315 = vmatprep.subr.bf16.mxu0 0
        %316 = vmatpush1.bf16.msra.mxu0 0
        %317 = vmatprep.mubr.bf16.mxu0 0
        %318 = vmatmul.mubr.bf16.gmra.mrb[0].mxu0 %v283
        %v319 = vpop.f32.mrb[0].mxu0
        %v320 = vadd.f32 %v280, %v319
        %v321 = vpop.f32.mrb[0].mxu0
        %v322 = vpop.f32.mrb[0].mxu0
        %v323 = vpop.f32.mrb[0].mxu0
        %324 = vdwg.mxu0
        %v325 = vmax.f32 %v320, 0.0
        %s326 = scalar_lea.vmem [#allocation7], 64
        %v327 = vld [vmem:[%s326] sm:$0xff]
        %v328 = vld [vmem:[%s326 + $0x8] sm:$0xff]
        %v329 = vld [vmem:[%s326 + $0x10] sm:$0xff]
        %v330 = vld [vmem:[%s326 + $0x18] sm:$0xff]
        %v331 = vld [vmem:[%s326 + $0x20] sm:$0xff]
        %v332 = vld [vmem:[%s326 + $0x28] sm:$0xff]
        %v333 = vld [vmem:[%s326 + $0x30] sm:$0xff]
        %v334 = vld [vmem:[%s326 + $0x38] sm:$0xff]
        %v335 = vpack.c.bf16 %v328, %v327
        %v336 = vpack.c.bf16 %v330, %v329
        %v337 = vpack.c.bf16 %v332, %v331
        %v338 = vpack.c.bf16 %v334, %v333
        %v339 = vpack.c.bf16 %v325, %v325
        %v340 = vld [vmem:[%s3 + $0x1] sm:$0x1]
        %v341 = vlaneseq
        %v342 = vshrl.u32 %v341, 7
        %v343 = vsub.s32 0, %v342
        %v344 = vrot.slane %v340, %v343
        %v346 = vsel %vm281, %v339, 0
        %348 = vmatprep.subr.bf16.mxu0 0
        %349 = vmatpush1.bf16.msra.mxu0 %v335
        %350 = vmatprep.subr.bf16.mxu0 0
        %351 = vmatpush1.bf16.msra.mxu0 %v336
        %352 = vmatprep.subr.bf16.mxu0 0
        %353 = vmatpush1.bf16.msra.mxu0 %v337
        %354 = vmatprep.subr.bf16.mxu0 0
        %355 = vmatpush1.bf16.msra.mxu0 %v338
        %356 = vmatprep.subr.bf16.mxu0 0
        %357 = vmatpush1.bf16.msra.mxu0 0
        %358 = vmatprep.subr.bf16.mxu0 0
        %359 = vmatpush1.bf16.msra.mxu0 0
        %360 = vmatprep.subr.bf16.mxu0 0
        %361 = vmatpush1.bf16.msra.mxu0 0
        %362 = vmatprep.subr.bf16.mxu0 0
        %363 = vmatpush1.bf16.msra.mxu0 0
        %364 = vmatprep.subr.bf16.mxu0 0
        %365 = vmatpush1.bf16.msra.mxu0 0
        %366 = vmatprep.subr.bf16.mxu0 0
        %367 = vmatpush1.bf16.msra.mxu0 0
        %368 = vmatprep.subr.bf16.mxu0 0
        %369 = vmatpush1.bf16.msra.mxu0 0
        %370 = vmatprep.subr.bf16.mxu0 0
        %371 = vmatpush1.bf16.msra.mxu0 0
        %372 = vmatprep.subr.bf16.mxu0 0
        %373 = vmatpush1.bf16.msra.mxu0 0
        %374 = vmatprep.subr.bf16.mxu0 0
        %375 = vmatpush1.bf16.msra.mxu0 0
        %376 = vmatprep.subr.bf16.mxu0 0
        %377 = vmatpush1.bf16.msra.mxu0 0
        %378 = vmatprep.subr.bf16.mxu0 0
        %379 = vmatpush1.bf16.msra.mxu0 0
        %380 = vmatprep.mubr.bf16.mxu0 0
        %381 = vmatmul.mubr.bf16.gmra.mrb[0].mxu0 %v346
        %v382 = vpop.f32.mrb[0].mxu0
        %v383 = vadd.f32 %v344, %v382
        %v384 = vpop.f32.mrb[0].mxu0
        %v385 = vpop.f32.mrb[0].mxu0
        %v386 = vpop.f32.mrb[0].mxu0
        %387 = vdwg.mxu0
        %s388 = scalar_lea.vmem [#allocation7], 128
        %v389 = vld [vmem:[%s388] sm:$0xff]
        %v390 = vld [vmem:[%s388 + $0x8] sm:$0xff]
        %v391 = vld [vmem:[%s388 + $0x10] sm:$0xff]
        %v392 = vld [vmem:[%s388 + $0x18] sm:$0xff]
        %v393 = vld [vmem:[%s388 + $0x20] sm:$0xff]
        %v394 = vld [vmem:[%s388 + $0x28] sm:$0xff]
        %v395 = vld [vmem:[%s388 + $0x30] sm:$0xff]
        %v396 = vld [vmem:[%s388 + $0x38] sm:$0xff]
        %v397 = vpack.c.bf16 %v390, %v389
        %v398 = vpack.c.bf16 %v392, %v391
        %v399 = vpack.c.bf16 %v394, %v393
        %v400 = vpack.c.bf16 %v396, %v395
        %v401 = vpack.c.bf16 %v262, %v262
        %v402 = vld [vmem:[%s3 + $0x2] sm:$0x1]
        %v404 = vsel %vm281, %v401, 0
        %406 = vmatprep.subr.bf16.mxu0 0
        %407 = vmatpush1.bf16.msra.mxu0 %v397
        %408 = vmatprep.subr.bf16.mxu0 0
        %409 = vmatpush1.bf16.msra.mxu0 %v398
        %410 = vmatprep.subr.bf16.mxu0 0
        %411 = vmatpush1.bf16.msra.mxu0 %v399
        %412 = vmatprep.subr.bf16.mxu0 0
        %413 = vmatpush1.bf16.msra.mxu0 %v400
        %414 = vmatprep.subr.bf16.mxu0 0
        %415 = vmatpush1.bf16.msra.mxu0 0
        %416 = vmatprep.subr.bf16.mxu0 0
        %417 = vmatpush1.bf16.msra.mxu0 0
        %418 = vmatprep.subr.bf16.mxu0 0
        %419 = vmatpush1.bf16.msra.mxu0 0
        %420 = vmatprep.subr.bf16.mxu0 0
        %421 = vmatpush1.bf16.msra.mxu0 0
        %422 = vmatprep.subr.bf16.mxu0 0
        %423 = vmatpush1.bf16.msra.mxu0 0
        %424 = vmatprep.subr.bf16.mxu0 0
        %425 = vmatpush1.bf16.msra.mxu0 0
        %426 = vmatprep.subr.bf16.mxu0 0
        %427 = vmatpush1.bf16.msra.mxu0 0
        %428 = vmatprep.subr.bf16.mxu0 0
        %429 = vmatpush1.bf16.msra.mxu0 0
        %430 = vmatprep.subr.bf16.mxu0 0
        %431 = vmatpush1.bf16.msra.mxu0 0
        %432 = vmatprep.subr.bf16.mxu0 0
        %433 = vmatpush1.bf16.msra.mxu0 0
        %434 = vmatprep.subr.bf16.mxu0 0
        %435 = vmatpush1.bf16.msra.mxu0 0
        %436 = vmatprep.subr.bf16.mxu0 0
        %437 = vmatpush1.bf16.msra.mxu0 0
        %438 = vmatprep.mubr.bf16.mxu0 0
        %439 = vmatmul.mubr.bf16.gmra.mrb[0].mxu0 %v404
        %v440 = vpop.f32.mrb[0].mxu0
        %v441 = vadd.f32 %v402, %v440
        %v442 = vpop.f32.mrb[0].mxu0
        %v443 = vpop.f32.mrb[0].mxu0
        %v444 = vpop.f32.mrb[0].mxu0
        %445 = vdwg.mxu0
        %v446 = vmax.f32 %v441, 0.0
        %s447 = scalar_lea.vmem [#allocation7], 192
        %v448 = vld [vmem:[%s447] sm:$0xff]
        %v449 = vld [vmem:[%s447 + $0x8] sm:$0xff]
        %v450 = vld [vmem:[%s447 + $0x10] sm:$0xff]
        %v451 = vld [vmem:[%s447 + $0x18] sm:$0xff]
        %v452 = vld [vmem:[%s447 + $0x20] sm:$0xff]
        %v453 = vld [vmem:[%s447 + $0x28] sm:$0xff]
        %v454 = vld [vmem:[%s447 + $0x30] sm:$0xff]
        %v455 = vld [vmem:[%s447 + $0x38] sm:$0xff]
        %v456 = vpack.c.bf16 %v449, %v448
        %v457 = vpack.c.bf16 %v451, %v450
        %v458 = vpack.c.bf16 %v453, %v452
        %v459 = vpack.c.bf16 %v455, %v454
        %v460 = vpack.c.bf16 %v446, %v446
        %v461 = vld [vmem:[%s3 + $0x3] sm:$0x1]
        %v463 = vsel %vm281, %v460, 0
        %465 = vmatprep.subr.bf16.mxu0 0
        %466 = vmatpush1.bf16.msra.mxu0 %v456
        %467 = vmatprep.subr.bf16.mxu0 0
        %468 = vmatpush1.bf16.msra.mxu0 %v457
        %469 = vmatprep.subr.bf16.mxu0 0
        %470 = vmatpush1.bf16.msra.mxu0 %v458
        %471 = vmatprep.subr.bf16.mxu0 0
        %472 = vmatpush1.bf16.msra.mxu0 %v459
        %473 = vmatprep.subr.bf16.mxu0 0
        %474 = vmatpush1.bf16.msra.mxu0 0
        %475 = vmatprep.subr.bf16.mxu0 0
        %476 = vmatpush1.bf16.msra.mxu0 0
        %477 = vmatprep.subr.bf16.mxu0 0
        %478 = vmatpush1.bf16.msra.mxu0 0
        %479 = vmatprep.subr.bf16.mxu0 0
        %480 = vmatpush1.bf16.msra.mxu0 0
        %481 = vmatprep.subr.bf16.mxu0 0
        %482 = vmatpush1.bf16.msra.mxu0 0
        %483 = vmatprep.subr.bf16.mxu0 0
        %484 = vmatpush1.bf16.msra.mxu0 0
        %485 = vmatprep.subr.bf16.mxu0 0
        %486 = vmatpush1.bf16.msra.mxu0 0
        %487 = vmatprep.subr.bf16.mxu0 0
        %488 = vmatpush1.bf16.msra.mxu0 0
        %489 = vmatprep.subr.bf16.mxu0 0
        %490 = vmatpush1.bf16.msra.mxu0 0
        %491 = vmatprep.subr.bf16.mxu0 0
        %492 = vmatpush1.bf16.msra.mxu0 0
        %493 = vmatprep.subr.bf16.mxu0 0
        %494 = vmatpush1.bf16.msra.mxu0 0
        %495 = vmatprep.subr.bf16.mxu0 0
        %496 = vmatpush1.bf16.msra.mxu0 0
        %497 = vmatprep.mubr.bf16.mxu0 0
        %498 = vmatmul.mubr.bf16.gmra.mrb[0].mxu0 %v463
        %v499 = vpop.f32.mrb[0].mxu0
        %v500 = vadd.f32 %v461, %v499
        %v501 = vpop.f32.mrb[0].mxu0
        %v502 = vpop.f32.mrb[0].mxu0
        %v503 = vpop.f32.mrb[0].mxu0
        %504 = vdwg.mxu0
        %s505 = scalar_lea.vmem [#allocation7], 320
        %v506 = vld [vmem:[%s505] sm:$0xff]
        %v507 = vld [vmem:[%s505 + $0x8] sm:$0xff]
        %v508 = vld [vmem:[%s505 + $0x10] sm:$0xff]
        %v509 = vld [vmem:[%s505 + $0x18] sm:$0xff]
        %v510 = vld [vmem:[%s505 + $0x20] sm:$0xff]
        %v511 = vld [vmem:[%s505 + $0x28] sm:$0xff]
        %v512 = vld [vmem:[%s505 + $0x30] sm:$0xff]
        %v513 = vld [vmem:[%s505 + $0x38] sm:$0xff]
        %v514 = vpack.c.bf16 %v507, %v506
        %v515 = vpack.c.bf16 %v509, %v508
        %v516 = vpack.c.bf16 %v511, %v510
        %v517 = vpack.c.bf16 %v513, %v512
        %v518 = vpack.c.bf16 %v383, %v383
        %v519 = vld [vmem:[%s3 + $0x5] sm:$0x1]
        %v520 = vlaneseq
        %v521 = vshrl.u32 %v520, 7
        %v522 = vsub.s32 0, %v521
        %v523 = vrot.slane %v519, %v522
        %v525 = vsel %vm281, %v518, 0
        %527 = vmatprep.subr.bf16.mxu0 0
        %528 = vmatpush1.bf16.msra.mxu0 %v514
        %529 = vmatprep.subr.bf16.mxu0 0
        %530 = vmatpush1.bf16.msra.mxu0 %v515
        %531 = vmatprep.subr.bf16.mxu0 0
        %532 = vmatpush1.bf16.msra.mxu0 %v516
        %533 = vmatprep.subr.bf16.mxu0 0
        %534 = vmatpush1.bf16.msra.mxu0 %v517
        %535 = vmatprep.subr.bf16.mxu0 0
        %536 = vmatpush1.bf16.msra.mxu0 0
        %537 = vmatprep.subr.bf16.mxu0 0
        %538 = vmatpush1.bf16.msra.mxu0 0
        %539 = vmatprep.subr.bf16.mxu0 0
        %540 = vmatpush1.bf16.msra.mxu0 0
        %541 = vmatprep.subr.bf16.mxu0 0
        %542 = vmatpush1.bf16.msra.mxu0 0
        %543 = vmatprep.subr.bf16.mxu0 0
        %544 = vmatpush1.bf16.msra.mxu0 0
        %545 = vmatprep.subr.bf16.mxu0 0
        %546 = vmatpush1.bf16.msra.mxu0 0
        %547 = vmatprep.subr.bf16.mxu0 0
        %548 = vmatpush1.bf16.msra.mxu0 0
        %549 = vmatprep.subr.bf16.mxu0 0
        %550 = vmatpush1.bf16.msra.mxu0 0
        %551 = vmatprep.subr.bf16.mxu0 0
        %552 = vmatpush1.bf16.msra.mxu0 0
        %553 = vmatprep.subr.bf16.mxu0 0
        %554 = vmatpush1.bf16.msra.mxu0 0
        %555 = vmatprep.subr.bf16.mxu0 0
        %556 = vmatpush1.bf16.msra.mxu0 0
        %557 = vmatprep.subr.bf16.mxu0 0
        %558 = vmatpush1.bf16.msra.mxu0 0
        %559 = vmatprep.mubr.bf16.mxu0 0
        %560 = vmatmul.mubr.bf16.gmra.mrb[0].mxu0 %v525
        %v561 = vpop.f32.mrb[0].mxu0
        %v562 = vadd.f32 %v523, %v561
        %v563 = vpop.f32.mrb[0].mxu0
        %v564 = vpop.f32.mrb[0].mxu0
        %v565 = vpop.f32.mrb[0].mxu0
        %566 = vdwg.mxu0
        %s567 = scalar_lea.vmem [#allocation7], 384
        %v568 = vld [vmem:[%s567] sm:$0xff]
        %v569 = vld [vmem:[%s567 + $0x8] sm:$0xff]
        %v570 = vld [vmem:[%s567 + $0x10] sm:$0xff]
        %v571 = vld [vmem:[%s567 + $0x18] sm:$0xff]
        %v572 = vld [vmem:[%s567 + $0x20] sm:$0xff]
        %v573 = vld [vmem:[%s567 + $0x28] sm:$0xff]
        %v574 = vld [vmem:[%s567 + $0x30] sm:$0xff]
        %v575 = vld [vmem:[%s567 + $0x38] sm:$0xff]
        %v576 = vpack.c.bf16 %v569, %v568
        %v577 = vpack.c.bf16 %v571, %v570
        %v578 = vpack.c.bf16 %v573, %v572
        %v579 = vpack.c.bf16 %v575, %v574
        %v580 = vld [vmem:[%s3 + $0x6] sm:$0x1]
        %v581 = vlaneseq
        %v582 = vshrl.u32 %v581, 7
        %v583 = vsub.s32 0, %v582
        %v584 = vrot.slane %v580, %v583
        %585 = vmatprep.subr.bf16.mxu0 0
        %586 = vmatpush1.bf16.msra.mxu0 %v576
        %587 = vmatprep.subr.bf16.mxu0 0
        %588 = vmatpush1.bf16.msra.mxu0 %v577
        %589 = vmatprep.subr.bf16.mxu0 0
        %590 = vmatpush1.bf16.msra.mxu0 %v578
        %591 = vmatprep.subr.bf16.mxu0 0
        %592 = vmatpush1.bf16.msra.mxu0 %v579
        %593 = vmatprep.subr.bf16.mxu0 0
        %594 = vmatpush1.bf16.msra.mxu0 0
        %595 = vmatprep.subr.bf16.mxu0 0
        %596 = vmatpush1.bf16.msra.mxu0 0
        %597 = vmatprep.subr.bf16.mxu0 0
        %598 = vmatpush1.bf16.msra.mxu0 0
        %599 = vmatprep.subr.bf16.mxu0 0
        %600 = vmatpush1.bf16.msra.mxu0 0
        %601 = vmatprep.subr.bf16.mxu0 0
        %602 = vmatpush1.bf16.msra.mxu0 0
        %603 = vmatprep.subr.bf16.mxu0 0
        %604 = vmatpush1.bf16.msra.mxu0 0
        %605 = vmatprep.subr.bf16.mxu0 0
        %606 = vmatpush1.bf16.msra.mxu0 0
        %607 = vmatprep.subr.bf16.mxu0 0
        %608 = vmatpush1.bf16.msra.mxu0 0
        %609 = vmatprep.subr.bf16.mxu0 0
        %610 = vmatpush1.bf16.msra.mxu0 0
        %611 = vmatprep.subr.bf16.mxu0 0
        %612 = vmatpush1.bf16.msra.mxu0 0
        %613 = vmatprep.subr.bf16.mxu0 0
        %614 = vmatpush1.bf16.msra.mxu0 0
        %615 = vmatprep.subr.bf16.mxu0 0
        %616 = vmatpush1.bf16.msra.mxu0 0
        %617 = vmatprep.mubr.bf16.mxu0 0
        %618 = vmatmul.mubr.bf16.gmra.mrb[0].mxu0 %v525
        %v619 = vpop.f32.mrb[0].mxu0
        %v620 = vadd.f32 %v584, %v619
        %v621 = vpop.f32.mrb[0].mxu0
        %v622 = vpop.f32.mrb[0].mxu0
        %v623 = vpop.f32.mrb[0].mxu0
        %624 = vdwg.mxu0
        %s625 = scalar_lea.vmem [#allocation7], 448
        %v626 = vld [vmem:[%s625] sm:$0xff]
        %v627 = vld [vmem:[%s625 + $0x8] sm:$0xff]
        %v628 = vld [vmem:[%s625 + $0x10] sm:$0xff]
        %v629 = vld [vmem:[%s625 + $0x18] sm:$0xff]
        %v630 = vld [vmem:[%s625 + $0x20] sm:$0xff]
        %v631 = vld [vmem:[%s625 + $0x28] sm:$0xff]
        %v632 = vld [vmem:[%s625 + $0x30] sm:$0xff]
        %v633 = vld [vmem:[%s625 + $0x38] sm:$0xff]
        %v634 = vpack.c.bf16 %v627, %v626
        %v635 = vpack.c.bf16 %v629, %v628
        %v636 = vpack.c.bf16 %v631, %v630
        %v637 = vpack.c.bf16 %v633, %v632
        %v638 = vld [vmem:[%s3 + $0x7] sm:$0x1]
        %v639 = vlaneseq
        %v640 = vshrl.u32 %v639, 7
        %v641 = vsub.s32 0, %v640
        %v642 = vrot.slane %v638, %v641
        %643 = vmatprep.subr.bf16.mxu0 0
        %644 = vmatpush1.bf16.msra.mxu0 %v634
        %645 = vmatprep.subr.bf16.mxu0 0
        %646 = vmatpush1.bf16.msra.mxu0 %v635
        %647 = vmatprep.subr.bf16.mxu0 0
        %648 = vmatpush1.bf16.msra.mxu0 %v636
        %649 = vmatprep.subr.bf16.mxu0 0
        %650 = vmatpush1.bf16.msra.mxu0 %v637
        %651 = vmatprep.subr.bf16.mxu0 0
        %652 = vmatpush1.bf16.msra.mxu0 0
        %653 = vmatprep.subr.bf16.mxu0 0
        %654 = vmatpush1.bf16.msra.mxu0 0
        %655 = vmatprep.subr.bf16.mxu0 0
        %656 = vmatpush1.bf16.msra.mxu0 0
        %657 = vmatprep.subr.bf16.mxu0 0
        %658 = vmatpush1.bf16.msra.mxu0 0
        %659 = vmatprep.subr.bf16.mxu0 0
        %660 = vmatpush1.bf16.msra.mxu0 0
        %661 = vmatprep.subr.bf16.mxu0 0
        %662 = vmatpush1.bf16.msra.mxu0 0
        %663 = vmatprep.subr.bf16.mxu0 0
        %664 = vmatpush1.bf16.msra.mxu0 0
        %665 = vmatprep.subr.bf16.mxu0 0
        %666 = vmatpush1.bf16.msra.mxu0 0
        %667 = vmatprep.subr.bf16.mxu0 0
        %668 = vmatpush1.bf16.msra.mxu0 0
        %669 = vmatprep.subr.bf16.mxu0 0
        %670 = vmatpush1.bf16.msra.mxu0 0
        %671 = vmatprep.subr.bf16.mxu0 0
        %672 = vmatpush1.bf16.msra.mxu0 0
        %673 = vmatprep.subr.bf16.mxu0 0
        %674 = vmatpush1.bf16.msra.mxu0 0
        %675 = vmatprep.mubr.bf16.mxu0 0
        %676 = vmatmul.mubr.bf16.gmra.mrb[0].mxu0 %v525
        %v677 = vpop.f32.mrb[0].mxu0
        %v678 = vadd.f32 %v642, %v677
        %v679 = vpop.f32.mrb[0].mxu0
        %v680 = vpop.f32.mrb[0].mxu0
        %v681 = vpop.f32.mrb[0].mxu0
        %682 = vdwg.mxu0
        %s683 = scalar_lea.vmem [#allocation7], 512
        %v684 = vld [vmem:[%s683] sm:$0xff]
        %v685 = vld [vmem:[%s683 + $0x8] sm:$0xff]
        %v686 = vld [vmem:[%s683 + $0x10] sm:$0xff]
        %v687 = vld [vmem:[%s683 + $0x18] sm:$0xff]
        %v688 = vld [vmem:[%s683 + $0x20] sm:$0xff]
        %v689 = vld [vmem:[%s683 + $0x28] sm:$0xff]
        %v690 = vld [vmem:[%s683 + $0x30] sm:$0xff]
        %v691 = vld [vmem:[%s683 + $0x38] sm:$0xff]
        %v692 = vpack.c.bf16 %v685, %v684
        %v693 = vpack.c.bf16 %v687, %v686
        %v694 = vpack.c.bf16 %v689, %v688
        %v695 = vpack.c.bf16 %v691, %v690
        %v696 = vpack.c.bf16 %v562, %v562
        %v697 = vpack.c.bf16 %v620, %v620
        %vm698 = vcmask 130048
        %v700 = vsel %vm698, %v696, 0
        %v703 = vsel %vm698, %v697, 0
        %705 = vmatprep.subr.bf16.mxu0 0
        %706 = vmatpush1.bf16.xpose.msra.mxu0 %v703
        %707 = vmatprep.subr.bf16.mxu0 0
        %708 = vmatpush1.bf16.xpose.msra.mxu0 0
        %709 = vmatprep.subr.bf16.mxu0 0
        %710 = vmatpush1.bf16.xpose.msra.mxu0 0
        %711 = vmatprep.subr.bf16.mxu0 0
        %712 = vmatpush1.bf16.xpose.msra.mxu0 0
        %713 = vmatprep.subr.bf16.mxu0 0
        %714 = vmatpush1.bf16.xpose.msra.mxu0 0
        %715 = vmatprep.subr.bf16.mxu0 0
        %716 = vmatpush1.bf16.xpose.msra.mxu0 0
        %717 = vmatprep.subr.bf16.mxu0 0
        %718 = vmatpush1.bf16.xpose.msra.mxu0 0
        %719 = vmatprep.subr.bf16.mxu0 0
        %720 = vmatpush1.bf16.xpose.msra.mxu0 0
        %721 = vmatprep.subr.bf16.mxu0 0
        %722 = vmatpush1.bf16.xpose.msra.mxu0 0
        %723 = vmatprep.subr.bf16.mxu0 0
        %724 = vmatpush1.bf16.xpose.msra.mxu0 0
        %725 = vmatprep.subr.bf16.mxu0 0
        %726 = vmatpush1.bf16.xpose.msra.mxu0 0
        %727 = vmatprep.subr.bf16.mxu0 0
        %728 = vmatpush1.bf16.xpose.msra.mxu0 0
        %729 = vmatprep.subr.bf16.mxu0 0
        %730 = vmatpush1.bf16.xpose.msra.mxu0 0
        %731 = vmatprep.subr.bf16.mxu0 0
        %732 = vmatpush1.bf16.xpose.msra.mxu0 0
        %733 = vmatprep.subr.bf16.mxu0 0
        %734 = vmatpush1.bf16.xpose.msra.mxu0 0
        %735 = vmatprep.subr.bf16.mxu0 0
        %736 = vmatpush1.bf16.xpose.msra.mxu0 0
        %737 = vmatprep.mubr.bf16.mxu0 0
        %738 = vmatmul.mubr.bf16.gmra.mrb[0].mxu0 %v700
        %v739 = vpop.f32.mrb[0].mxu0
        %v740 = vadd.f32 0.0, %v739
        %v741 = vpop.f32.mrb[0].mxu0
        %v742 = vpop.f32.mrb[0].mxu0
        %v743 = vpop.f32.mrb[0].mxu0
        %744 = vdwg.mxu0
        %vm745 = vcmask 64512
        %v746 = vsel %vm745, %v740, -inf
        %747 = vmax.xlane.f32.xlu0 %v746
        %v748 = vpop.xlane.xlu0 %747
        %v749 = vsub.f32 %v740, %v748
        %v750 = vmul.f32 %v749, 1.442695
        %v751 = vpow.pop %v750
        %v752 = vsel %vm745, %v751, 0.0
        %753 = vadd.xlane.f32.xlu0 %v752
        %v754 = vpop.xlane.xlu0 %753
        %v755 = vrcp.pop %v754
        %v756 = vmul.f32 %v751, %v755
        %v757 = vpack.c.bf16 %v756, %v756
        %v758 = vpack.c.bf16 %v678, %v678
        %v760 = vsel %vm745, %v757, 0
        %vm762 = vcmask 1043456
        %v764 = vsel %vm762, %v758, 0
        %766 = vmatprep.subr.bf16.mxu0 0
        %767 = vmatpush1.bf16.msra.mxu0 %v764
        %768 = vmatprep.subr.bf16.mxu0 0
        %769 = vmatpush1.bf16.msra.mxu0 0
        %770 = vmatprep.subr.bf16.mxu0 0
        %771 = vmatpush1.bf16.msra.mxu0 0
        %772 = vmatprep.subr.bf16.mxu0 0
        %773 = vmatpush1.bf16.msra.mxu0 0
        %774 = vmatprep.subr.bf16.mxu0 0
        %775 = vmatpush1.bf16.msra.mxu0 0
        %776 = vmatprep.subr.bf16.mxu0 0
        %777 = vmatpush1.bf16.msra.mxu0 0
        %778 = vmatprep.subr.bf16.mxu0 0
        %779 = vmatpush1.bf16.msra.mxu0 0
        %780 = vmatprep.subr.bf16.mxu0 0
        %781 = vmatpush1.bf16.msra.mxu0 0
        %782 = vmatprep.subr.bf16.mxu0 0
        %783 = vmatpush1.bf16.msra.mxu0 0
        %784 = vmatprep.subr.bf16.mxu0 0
        %785 = vmatpush1.bf16.msra.mxu0 0
        %786 = vmatprep.subr.bf16.mxu0 0
        %787 = vmatpush1.bf16.msra.mxu0 0
        %788 = vmatprep.subr.bf16.mxu0 0
        %789 = vmatpush1.bf16.msra.mxu0 0
        %790 = vmatprep.subr.bf16.mxu0 0
        %791 = vmatpush1.bf16.msra.mxu0 0
        %792 = vmatprep.subr.bf16.mxu0 0
        %793 = vmatpush1.bf16.msra.mxu0 0
        %794 = vmatprep.subr.bf16.mxu0 0
        %795 = vmatpush1.bf16.msra.mxu0 0
        %796 = vmatprep.subr.bf16.mxu0 0
        %797 = vmatpush1.bf16.msra.mxu0 0
        %798 = vmatprep.mubr.bf16.mxu0 0
        %799 = vmatmul.mubr.bf16.gmra.mrb[0].mxu0 %v760
        %v800 = vpop.f32.mrb[0].mxu0
        %v801 = vadd.f32 0.0, %v800
        %v802 = vpop.f32.mrb[0].mxu0
        %v803 = vpop.f32.mrb[0].mxu0
        %v804 = vpop.f32.mrb[0].mxu0
        %805 = vdwg.mxu0
        %v806 = vpack.c.bf16 %v801, %v801
        %808 = vrot.lane.b32.xlu0 %v696, 112
        %v809 = vpop.permute.xlu0 %808
        %811 = vrot.lane.b32.xlu0 %v697, 112
        %v812 = vpop.permute.xlu0 %811
        %v814 = vsel %vm698, %v809, 0
        %v817 = vsel %vm698, %v812, 0
        %819 = vmatprep.subr.bf16.mxu0 0
        %820 = vmatpush1.bf16.xpose.msra.mxu0 %v817
        %821 = vmatprep.subr.bf16.mxu0 0
        %822 = vmatpush1.bf16.xpose.msra.mxu0 0
        %823 = vmatprep.subr.bf16.mxu0 0
        %824 = vmatpush1.bf16.xpose.msra.mxu0 0
        %825 = vmatprep.subr.bf16.mxu0 0
        %826 = vmatpush1.bf16.xpose.msra.mxu0 0
        %827 = vmatprep.subr.bf16.mxu0 0
        %828 = vmatpush1.bf16.xpose.msra.mxu0 0
        %829 = vmatprep.subr.bf16.mxu0 0
        %830 = vmatpush1.bf16.xpose.msra.mxu0 0
        %831 = vmatprep.subr.bf16.mxu0 0
        %832 = vmatpush1.bf16.xpose.msra.mxu0 0
        %833 = vmatprep.subr.bf16.mxu0 0
        %834 = vmatpush1.bf16.xpose.msra.mxu0 0
        %835 = vmatprep.subr.bf16.mxu0 0
        %836 = vmatpush1.bf16.xpose.msra.mxu0 0
        %837 = vmatprep.subr.bf16.mxu0 0
        %838 = vmatpush1.bf16.xpose.msra.mxu0 0
        %839 = vmatprep.subr.bf16.mxu0 0
        %840 = vmatpush1.bf16.xpose.msra.mxu0 0
        %841 = vmatprep.subr.bf16.mxu0 0
        %842 = vmatpush1.bf16.xpose.msra.mxu0 0
        %843 = vmatprep.subr.bf16.mxu0 0
        %844 = vmatpush1.bf16.xpose.msra.mxu0 0
        %845 = vmatprep.subr.bf16.mxu0 0
        %846 = vmatpush1.bf16.xpose.msra.mxu0 0
        %847 = vmatprep.subr.bf16.mxu0 0
        %848 = vmatpush1.bf16.xpose.msra.mxu0 0
        %849 = vmatprep.subr.bf16.mxu0 0
        %850 = vmatpush1.bf16.xpose.msra.mxu0 0
        %851 = vmatprep.mubr.bf16.mxu0 0
        %852 = vmatmul.mubr.bf16.gmra.mrb[0].mxu0 %v814
        %v853 = vpop.f32.mrb[0].mxu0
        %v854 = vadd.f32 0.0, %v853
        %v855 = vpop.f32.mrb[0].mxu0
        %v856 = vpop.f32.mrb[0].mxu0
        %v857 = vpop.f32.mrb[0].mxu0
        %858 = vdwg.mxu0
        %v859 = vsel %vm745, %v854, -inf
        %860 = vmax.xlane.f32.xlu0 %v859
        %v861 = vpop.xlane.xlu0 %860
        %v862 = vsub.f32 %v854, %v861
        %v863 = vmul.f32 %v862, 1.442695
        %v864 = vpow.pop %v863
        %v865 = vsel %vm745, %v864, 0.0
        %866 = vadd.xlane.f32.xlu0 %v865
        %v867 = vpop.xlane.xlu0 %866
        %v868 = vrcp.pop %v867
        %v869 = vmul.f32 %v864, %v868
        %v870 = vpack.c.bf16 %v869, %v869
        %872 = vrot.lane.b32.xlu0 %v758, 112
        %v873 = vpop.permute.xlu0 %872
        %v875 = vsel %vm745, %v870, 0
        %v878 = vsel %vm762, %v873, 0
        %880 = vmatprep.subr.bf16.mxu0 0
        %881 = vmatpush1.bf16.msra.mxu0 %v878
        %882 = vmatprep.subr.bf16.mxu0 0
        %883 = vmatpush1.bf16.msra.mxu0 0
        %884 = vmatprep.subr.bf16.mxu0 0
        %885 = vmatpush1.bf16.msra.mxu0 0
        %886 = vmatprep.subr.bf16.mxu0 0
        %887 = vmatpush1.bf16.msra.mxu0 0
        %888 = vmatprep.subr.bf16.mxu0 0
        %889 = vmatpush1.bf16.msra.mxu0 0
        %890 = vmatprep.subr.bf16.mxu0 0
        %891 = vmatpush1.bf16.msra.mxu0 0
        %892 = vmatprep.subr.bf16.mxu0 0
        %893 = vmatpush1.bf16.msra.mxu0 0
        %894 = vmatprep.subr.bf16.mxu0 0
        %895 = vmatpush1.bf16.msra.mxu0 0
        %896 = vmatprep.subr.bf16.mxu0 0
        %897 = vmatpush1.bf16.msra.mxu0 0
        %898 = vmatprep.subr.bf16.mxu0 0
        %899 = vmatpush1.bf16.msra.mxu0 0
        %900 = vmatprep.subr.bf16.mxu0 0
        %901 = vmatpush1.bf16.msra.mxu0 0
        %902 = vmatprep.subr.bf16.mxu0 0
        %903 = vmatpush1.bf16.msra.mxu0 0
        %904 = vmatprep.subr.bf16.mxu0 0
        %905 = vmatpush1.bf16.msra.mxu0 0
        %906 = vmatprep.subr.bf16.mxu0 0
        %907 = vmatpush1.bf16.msra.mxu0 0
        %908 = vmatprep.subr.bf16.mxu0 0
        %909 = vmatpush1.bf16.msra.mxu0 0
        %910 = vmatprep.subr.bf16.mxu0 0
        %911 = vmatpush1.bf16.msra.mxu0 0
        %912 = vmatprep.mubr.bf16.mxu0 0
        %913 = vmatmul.mubr.bf16.gmra.mrb[0].mxu0 %v875
        %v914 = vpop.f32.mrb[0].mxu0
        %v915 = vadd.f32 0.0, %v914
        %v916 = vpop.f32.mrb[0].mxu0
        %v917 = vpop.f32.mrb[0].mxu0
        %v918 = vpop.f32.mrb[0].mxu0
        %919 = vdwg.mxu0
        %v920 = vpack.c.bf16 %v915, %v915
        %v922 = vsel %vm698, %v920, 0
        %924 = vmatprep.subr.bf16.mxu0 0
        %925 = vmatpush1.bf16.msra.mxu0 %v693
        %926 = vmatprep.subr.bf16.mxu0 0
        %927 = vmatpush1.bf16.msra.mxu0 0
        %928 = vmatprep.subr.bf16.mxu0 0
        %929 = vmatpush1.bf16.msra.mxu0 0
        %930 = vmatprep.subr.bf16.mxu0 0
        %931 = vmatpush1.bf16.msra.mxu0 0
        %932 = vmatprep.subr.bf16.mxu0 0
        %933 = vmatpush1.bf16.msra.mxu0 0
        %934 = vmatprep.subr.bf16.mxu0 0
        %935 = vmatpush1.bf16.msra.mxu0 0
        %936 = vmatprep.subr.bf16.mxu0 0
        %937 = vmatpush1.bf16.msra.mxu0 0
        %938 = vmatprep.subr.bf16.mxu0 0
        %939 = vmatpush1.bf16.msra.mxu0 0
        %940 = vmatprep.subr.bf16.mxu0 0
        %941 = vmatpush1.bf16.msra.mxu0 0
        %942 = vmatprep.subr.bf16.mxu0 0
        %943 = vmatpush1.bf16.msra.mxu0 0
        %944 = vmatprep.subr.bf16.mxu0 0
        %945 = vmatpush1.bf16.msra.mxu0 0
        %946 = vmatprep.subr.bf16.mxu0 0
        %947 = vmatpush1.bf16.msra.mxu0 0
        %948 = vmatprep.subr.bf16.mxu0 0
        %949 = vmatpush1.bf16.msra.mxu0 0
        %950 = vmatprep.subr.bf16.mxu0 0
        %951 = vmatpush1.bf16.msra.mxu0 0
        %952 = vmatprep.subr.bf16.mxu0 0
        %953 = vmatpush1.bf16.msra.mxu0 0
        %954 = vmatprep.subr.bf16.mxu0 0
        %955 = vmatpush1.bf16.msra.mxu0 0
        %956 = vmatprep.mubr.bf16.mxu0 0
        %957 = vmatmul.mubr.bf16.gmra.mrb[0].mxu0 %v922
        %v958 = vpop.f32.mrb[0].mxu0
        %v959 = vadd.f32 0.0, %v958
        %v960 = vpop.f32.mrb[0].mxu0
        %v961 = vpop.f32.mrb[0].mxu0
        %v962 = vpop.f32.mrb[0].mxu0
        %963 = vdwg.mxu0
        %v965 = vsel %vm698, %v806, 0
        %967 = vmatprep.subr.bf16.mxu0 0
        %968 = vmatpush1.bf16.msra.mxu0 %v692
        %969 = vmatprep.subr.bf16.mxu0 0
        %970 = vmatpush1.bf16.msra.mxu0 0
        %971 = vmatprep.subr.bf16.mxu0 0
        %972 = vmatpush1.bf16.msra.mxu0 0
        %973 = vmatprep.subr.bf16.mxu0 0
        %974 = vmatpush1.bf16.msra.mxu0 0
        %975 = vmatprep.subr.bf16.mxu0 0
        %976 = vmatpush1.bf16.msra.mxu0 0
        %977 = vmatprep.subr.bf16.mxu0 0
        %978 = vmatpush1.bf16.msra.mxu0 0
        %979 = vmatprep.subr.bf16.mxu0 0
        %980 = vmatpush1.bf16.msra.mxu0 0
        %981 = vmatprep.subr.bf16.mxu0 0
        %982 = vmatpush1.bf16.msra.mxu0 0
        %983 = vmatprep.subr.bf16.mxu0 0
        %984 = vmatpush1.bf16.msra.mxu0 0
        %985 = vmatprep.subr.bf16.mxu0 0
        %986 = vmatpush1.bf16.msra.mxu0 0
        %987 = vmatprep.subr.bf16.mxu0 0
        %988 = vmatpush1.bf16.msra.mxu0 0
        %989 = vmatprep.subr.bf16.mxu0 0
        %990 = vmatpush1.bf16.msra.mxu0 0
        %991 = vmatprep.subr.bf16.mxu0 0
        %992 = vmatpush1.bf16.msra.mxu0 0
        %993 = vmatprep.subr.bf16.mxu0 0
        %994 = vmatpush1.bf16.msra.mxu0 0
        %995 = vmatprep.subr.bf16.mxu0 0
        %996 = vmatpush1.bf16.msra.mxu0 0
        %997 = vmatprep.subr.bf16.mxu0 0
        %998 = vmatpush1.bf16.msra.mxu0 0
        %999 = vmatprep.mubr.bf16.mxu0 0
        %1000 = vmatmul.mubr.bf16.gmra.mrb[0].mxu0 %v965
        %v1001 = vpop.f32.mrb[0].mxu0
        %v1002 = vadd.f32 %v959, %v1001
        %v1003 = vpop.f32.mrb[0].mxu0
        %v1004 = vpop.f32.mrb[0].mxu0
        %v1005 = vpop.f32.mrb[0].mxu0
        %1006 = vdwg.mxu0
        %1007 = vrot.lane.b32.xlu0 %v696, 96
        %v1008 = vpop.permute.xlu0 %1007
        %1009 = vrot.lane.b32.xlu0 %v697, 96
        %v1010 = vpop.permute.xlu0 %1009
        %v1012 = vsel %vm698, %v1008, 0
        %v1015 = vsel %vm698, %v1010, 0
        %1017 = vmatprep.subr.bf16.mxu0 0
        %1018 = vmatpush1.bf16.xpose.msra.mxu0 %v1015
        %1019 = vmatprep.subr.bf16.mxu0 0
        %1020 = vmatpush1.bf16.xpose.msra.mxu0 0
        %1021 = vmatprep.subr.bf16.mxu0 0
        %1022 = vmatpush1.bf16.xpose.msra.mxu0 0
        %1023 = vmatprep.subr.bf16.mxu0 0
        %1024 = vmatpush1.bf16.xpose.msra.mxu0 0
        %1025 = vmatprep.subr.bf16.mxu0 0
        %1026 = vmatpush1.bf16.xpose.msra.mxu0 0
        %1027 = vmatprep.subr.bf16.mxu0 0
        %1028 = vmatpush1.bf16.xpose.msra.mxu0 0
        %1029 = vmatprep.subr.bf16.mxu0 0
        %1030 = vmatpush1.bf16.xpose.msra.mxu0 0
        %1031 = vmatprep.subr.bf16.mxu0 0
        %1032 = vmatpush1.bf16.xpose.msra.mxu0 0
        %1033 = vmatprep.subr.bf16.mxu0 0
        %1034 = vmatpush1.bf16.xpose.msra.mxu0 0
        %1035 = vmatprep.subr.bf16.mxu0 0
        %1036 = vmatpush1.bf16.xpose.msra.mxu0 0
        %1037 = vmatprep.subr.bf16.mxu0 0
        %1038 = vmatpush1.bf16.xpose.msra.mxu0 0
        %1039 = vmatprep.subr.bf16.mxu0 0
        %1040 = vmatpush1.bf16.xpose.msra.mxu0 0
        %1041 = vmatprep.subr.bf16.mxu0 0
        %1042 = vmatpush1.bf16.xpose.msra.mxu0 0
        %1043 = vmatprep.subr.bf16.mxu0 0
        %1044 = vmatpush1.bf16.xpose.msra.mxu0 0
        %1045 = vmatprep.subr.bf16.mxu0 0
        %1046 = vmatpush1.bf16.xpose.msra.mxu0 0
        %1047 = vmatprep.subr.bf16.mxu0 0
        %1048 = vmatpush1.bf16.xpose.msra.mxu0 0
        %1049 = vmatprep.mubr.bf16.mxu0 0
        %1050 = vmatmul.mubr.bf16.gmra.mrb[0].mxu0 %v1012
        %v1051 = vpop.f32.mrb[0].mxu0
        %v1052 = vadd.f32 0.0, %v1051
        %v1053 = vpop.f32.mrb[0].mxu0
        %v1054 = vpop.f32.mrb[0].mxu0
        %v1055 = vpop.f32.mrb[0].mxu0
        %1056 = vdwg.mxu0
        %v1057 = vsel %vm745, %v1052, -inf
        %1058 = vmax.xlane.f32.xlu0 %v1057
        %v1059 = vpop.xlane.xlu0 %1058
        %v1060 = vsub.f32 %v1052, %v1059
        %v1061 = vmul.f32 %v1060, 1.442695
        %v1062 = vpow.pop %v1061
        %v1063 = vsel %vm745, %v1062, 0.0
        %1064 = vadd.xlane.f32.xlu0 %v1063
        %v1065 = vpop.xlane.xlu0 %1064
        %v1066 = vrcp.pop %v1065
        %v1067 = vmul.f32 %v1062, %v1066
        %v1068 = vpack.c.bf16 %v1067, %v1067
        %1069 = vrot.lane.b32.xlu0 %v758, 96
        %v1070 = vpop.permute.xlu0 %1069
        %v1072 = vsel %vm745, %v1068, 0
        %v1075 = vsel %vm762, %v1070, 0
        %1077 = vmatprep.subr.bf16.mxu0 0
        %1078 = vmatpush1.bf16.msra.mxu0 %v1075
        %1079 = vmatprep.subr.bf16.mxu0 0
        %1080 = vmatpush1.bf16.msra.mxu0 0
        %1081 = vmatprep.subr.bf16.mxu0 0
        %1082 = vmatpush1.bf16.msra.mxu0 0
        %1083 = vmatprep.subr.bf16.mxu0 0
        %1084 = vmatpush1.bf16.msra.mxu0 0
        %1085 = vmatprep.subr.bf16.mxu0 0
        %1086 = vmatpush1.bf16.msra.mxu0 0
        %1087 = vmatprep.subr.bf16.mxu0 0
        %1088 = vmatpush1.bf16.msra.mxu0 0
        %1089 = vmatprep.subr.bf16.mxu0 0
        %1090 = vmatpush1.bf16.msra.mxu0 0
        %1091 = vmatprep.subr.bf16.mxu0 0
        %1092 = vmatpush1.bf16.msra.mxu0 0
        %1093 = vmatprep.subr.bf16.mxu0 0
        %1094 = vmatpush1.bf16.msra.mxu0 0
        %1095 = vmatprep.subr.bf16.mxu0 0
        %1096 = vmatpush1.bf16.msra.mxu0 0
        %1097 = vmatprep.subr.bf16.mxu0 0
        %1098 = vmatpush1.bf16.msra.mxu0 0
        %1099 = vmatprep.subr.bf16.mxu0 0
        %1100 = vmatpush1.bf16.msra.mxu0 0
        %1101 = vmatprep.subr.bf16.mxu0 0
        %1102 = vmatpush1.bf16.msra.mxu0 0
        %1103 = vmatprep.subr.bf16.mxu0 0
        %1104 = vmatpush1.bf16.msra.mxu0 0
        %1105 = vmatprep.subr.bf16.mxu0 0
        %1106 = vmatpush1.bf16.msra.mxu0 0
        %1107 = vmatprep.subr.bf16.mxu0 0
        %1108 = vmatpush1.bf16.msra.mxu0 0
        %1109 = vmatprep.mubr.bf16.mxu0 0
        %1110 = vmatmul.mubr.bf16.gmra.mrb[0].mxu0 %v1072
        %v1111 = vpop.f32.mrb[0].mxu0
        %v1112 = vadd.f32 0.0, %v1111
        %v1113 = vpop.f32.mrb[0].mxu0
        %v1114 = vpop.f32.mrb[0].mxu0
        %v1115 = vpop.f32.mrb[0].mxu0
        %1116 = vdwg.mxu0
        %v1117 = vpack.c.bf16 %v1112, %v1112
        %v1119 = vsel %vm698, %v1117, 0
        %1121 = vmatprep.subr.bf16.mxu0 0
        %1122 = vmatpush1.bf16.msra.mxu0 %v694
        %1123 = vmatprep.subr.bf16.mxu0 0
        %1124 = vmatpush1.bf16.msra.mxu0 0
        %1125 = vmatprep.subr.bf16.mxu0 0
        %1126 = vmatpush1.bf16.msra.mxu0 0
        %1127 = vmatprep.subr.bf16.mxu0 0
        %1128 = vmatpush1.bf16.msra.mxu0 0
        %1129 = vmatprep.subr.bf16.mxu0 0
        %1130 = vmatpush1.bf16.msra.mxu0 0
        %1131 = vmatprep.subr.bf16.mxu0 0
        %1132 = vmatpush1.bf16.msra.mxu0 0
        %1133 = vmatprep.subr.bf16.mxu0 0
        %1134 = vmatpush1.bf16.msra.mxu0 0
        %1135 = vmatprep.subr.bf16.mxu0 0
        %1136 = vmatpush1.bf16.msra.mxu0 0
        %1137 = vmatprep.subr.bf16.mxu0 0
        %1138 = vmatpush1.bf16.msra.mxu0 0
        %1139 = vmatprep.subr.bf16.mxu0 0
        %1140 = vmatpush1.bf16.msra.mxu0 0
        %1141 = vmatprep.subr.bf16.mxu0 0
        %1142 = vmatpush1.bf16.msra.mxu0 0
        %1143 = vmatprep.subr.bf16.mxu0 0
        %1144 = vmatpush1.bf16.msra.mxu0 0
        %1145 = vmatprep.subr.bf16.mxu0 0
        %1146 = vmatpush1.bf16.msra.mxu0 0
        %1147 = vmatprep.subr.bf16.mxu0 0
        %1148 = vmatpush1.bf16.msra.mxu0 0
        %1149 = vmatprep.subr.bf16.mxu0 0
        %1150 = vmatpush1.bf16.msra.mxu0 0
        %1151 = vmatprep.subr.bf16.mxu0 0
        %1152 = vmatpush1.bf16.msra.mxu0 0
        %1153 = vmatprep.mubr.bf16.mxu0 0
        %1154 = vmatmul.mubr.bf16.gmra.mrb[0].mxu0 %v1119
        %v1155 = vpop.f32.mrb[0].mxu0
        %v1156 = vadd.f32 0.0, %v1155
        %v1157 = vpop.f32.mrb[0].mxu0
        %v1158 = vpop.f32.mrb[0].mxu0
        %v1159 = vpop.f32.mrb[0].mxu0
        %1160 = vdwg.mxu0
        %v1161 = vadd.f32 %v1002, %v1156
        %1162 = vrot.lane.b32.xlu0 %v696, 80
        %v1163 = vpop.permute.xlu0 %1162
        %1164 = vrot.lane.b32.xlu0 %v697, 80
        %v1165 = vpop.permute.xlu0 %1164
        %v1167 = vsel %vm698, %v1163, 0
        %v1170 = vsel %vm698, %v1165, 0
        %1172 = vmatprep.subr.bf16.mxu0 0
        %1173 = vmatpush1.bf16.xpose.msra.mxu0 %v1170
        %1174 = vmatprep.subr.bf16.mxu0 0
        %1175 = vmatpush1.bf16.xpose.msra.mxu0 0
        %1176 = vmatprep.subr.bf16.mxu0 0
        %1177 = vmatpush1.bf16.xpose.msra.mxu0 0
        %1178 = vmatprep.subr.bf16.mxu0 0
        %1179 = vmatpush1.bf16.xpose.msra.mxu0 0
        %1180 = vmatprep.subr.bf16.mxu0 0
        %1181 = vmatpush1.bf16.xpose.msra.mxu0 0
        %1182 = vmatprep.subr.bf16.mxu0 0
        %1183 = vmatpush1.bf16.xpose.msra.mxu0 0
        %1184 = vmatprep.subr.bf16.mxu0 0
        %1185 = vmatpush1.bf16.xpose.msra.mxu0 0
        %1186 = vmatprep.subr.bf16.mxu0 0
        %1187 = vmatpush1.bf16.xpose.msra.mxu0 0
        %1188 = vmatprep.subr.bf16.mxu0 0
        %1189 = vmatpush1.bf16.xpose.msra.mxu0 0
        %1190 = vmatprep.subr.bf16.mxu0 0
        %1191 = vmatpush1.bf16.xpose.msra.mxu0 0
        %1192 = vmatprep.subr.bf16.mxu0 0
        %1193 = vmatpush1.bf16.xpose.msra.mxu0 0
        %1194 = vmatprep.subr.bf16.mxu0 0
        %1195 = vmatpush1.bf16.xpose.msra.mxu0 0
        %1196 = vmatprep.subr.bf16.mxu0 0
        %1197 = vmatpush1.bf16.xpose.msra.mxu0 0
        %1198 = vmatprep.subr.bf16.mxu0 0
        %1199 = vmatpush1.bf16.xpose.msra.mxu0 0
        %1200 = vmatprep.subr.bf16.mxu0 0
        %1201 = vmatpush1.bf16.xpose.msra.mxu0 0
        %1202 = vmatprep.subr.bf16.mxu0 0
        %1203 = vmatpush1.bf16.xpose.msra.mxu0 0
        %1204 = vmatprep.mubr.bf16.mxu0 0
        %1205 = vmatmul.mubr.bf16.gmra.mrb[0].mxu0 %v1167
        %v1206 = vpop.f32.mrb[0].mxu0
        %v1207 = vadd.f32 0.0, %v1206
        %v1208 = vpop.f32.mrb[0].mxu0
        %v1209 = vpop.f32.mrb[0].mxu0
        %v1210 = vpop.f32.mrb[0].mxu0
        %1211 = vdwg.mxu0
        %v1212 = vsel %vm745, %v1207, -inf
        %1213 = vmax.xlane.f32.xlu0 %v1212
        %v1214 = vpop.xlane.xlu0 %1213
        %v1215 = vsub.f32 %v1207, %v1214
        %v1216 = vmul.f32 %v1215, 1.442695
        %v1217 = vpow.pop %v1216
        %v1218 = vsel %vm745, %v1217, 0.0
        %1219 = vadd.xlane.f32.xlu0 %v1218
        %v1220 = vpop.xlane.xlu0 %1219
        %v1221 = vrcp.pop %v1220
        %v1222 = vmul.f32 %v1217, %v1221
        %v1223 = vpack.c.bf16 %v1222, %v1222
        %1224 = vrot.lane.b32.xlu0 %v758, 80
        %v1225 = vpop.permute.xlu0 %1224
        %v1227 = vsel %vm745, %v1223, 0
        %v1230 = vsel %vm762, %v1225, 0
        %1232 = vmatprep.subr.bf16.mxu0 0
        %1233 = vmatpush1.bf16.msra.mxu0 %v1230
        %1234 = vmatprep.subr.bf16.mxu0 0
        %1235 = vmatpush1.bf16.msra.mxu0 0
        %1236 = vmatprep.subr.bf16.mxu0 0
        %1237 = vmatpush1.bf16.msra.mxu0 0
        %1238 = vmatprep.subr.bf16.mxu0 0
        %1239 = vmatpush1.bf16.msra.mxu0 0
        %1240 = vmatprep.subr.bf16.mxu0 0
        %1241 = vmatpush1.bf16.msra.mxu0 0
        %1242 = vmatprep.subr.bf16.mxu0 0
        %1243 = vmatpush1.bf16.msra.mxu0 0
        %1244 = vmatprep.subr.bf16.mxu0 0
        %1245 = vmatpush1.bf16.msra.mxu0 0
        %1246 = vmatprep.subr.bf16.mxu0 0
        %1247 = vmatpush1.bf16.msra.mxu0 0
        %1248 = vmatprep.subr.bf16.mxu0 0
        %1249 = vmatpush1.bf16.msra.mxu0 0
        %1250 = vmatprep.subr.bf16.mxu0 0
        %1251 = vmatpush1.bf16.msra.mxu0 0
        %1252 = vmatprep.subr.bf16.mxu0 0
        %1253 = vmatpush1.bf16.msra.mxu0 0
        %1254 = vmatprep.subr.bf16.mxu0 0
        %1255 = vmatpush1.bf16.msra.mxu0 0
        %1256 = vmatprep.subr.bf16.mxu0 0
        %1257 = vmatpush1.bf16.msra.mxu0 0
        %1258 = vmatprep.subr.bf16.mxu0 0
        %1259 = vmatpush1.bf16.msra.mxu0 0
        %1260 = vmatprep.subr.bf16.mxu0 0
        %1261 = vmatpush1.bf16.msra.mxu0 0
        %1262 = vmatprep.subr.bf16.mxu0 0
        %1263 = vmatpush1.bf16.msra.mxu0 0
        %1264 = vmatprep.mubr.bf16.mxu0 0
        %1265 = vmatmul.mubr.bf16.gmra.mrb[0].mxu0 %v1227
        %v1266 = vpop.f32.mrb[0].mxu0
        %v1267 = vadd.f32 0.0, %v1266
        %v1268 = vpop.f32.mrb[0].mxu0
        %v1269 = vpop.f32.mrb[0].mxu0
        %v1270 = vpop.f32.mrb[0].mxu0
        %1271 = vdwg.mxu0
        %v1272 = vpack.c.bf16 %v1267, %v1267
        %v1274 = vsel %vm698, %v1272, 0
        %1276 = vmatprep.subr.bf16.mxu0 0
        %1277 = vmatpush1.bf16.msra.mxu0 %v695
        %1278 = vmatprep.subr.bf16.mxu0 0
        %1279 = vmatpush1.bf16.msra.mxu0 0
        %1280 = vmatprep.subr.bf16.mxu0 0
        %1281 = vmatpush1.bf16.msra.mxu0 0
        %1282 = vmatprep.subr.bf16.mxu0 0
        %1283 = vmatpush1.bf16.msra.mxu0 0
        %1284 = vmatprep.subr.bf16.mxu0 0
        %1285 = vmatpush1.bf16.msra.mxu0 0
        %1286 = vmatprep.subr.bf16.mxu0 0
        %1287 = vmatpush1.bf16.msra.mxu0 0
        %1288 = vmatprep.subr.bf16.mxu0 0
        %1289 = vmatpush1.bf16.msra.mxu0 0
        %1290 = vmatprep.subr.bf16.mxu0 0
        %1291 = vmatpush1.bf16.msra.mxu0 0
        %1292 = vmatprep.subr.bf16.mxu0 0
        %1293 = vmatpush1.bf16.msra.mxu0 0
        %1294 = vmatprep.subr.bf16.mxu0 0
        %1295 = vmatpush1.bf16.msra.mxu0 0
        %1296 = vmatprep.subr.bf16.mxu0 0
        %1297 = vmatpush1.bf16.msra.mxu0 0
        %1298 = vmatprep.subr.bf16.mxu0 0
        %1299 = vmatpush1.bf16.msra.mxu0 0
        %1300 = vmatprep.subr.bf16.mxu0 0
        %1301 = vmatpush1.bf16.msra.mxu0 0
        %1302 = vmatprep.subr.bf16.mxu0 0
        %1303 = vmatpush1.bf16.msra.mxu0 0
        %1304 = vmatprep.subr.bf16.mxu0 0
        %1305 = vmatpush1.bf16.msra.mxu0 0
        %1306 = vmatprep.subr.bf16.mxu0 0
        %1307 = vmatpush1.bf16.msra.mxu0 0
        %1308 = vmatprep.mubr.bf16.mxu0 0
        %1309 = vmatmul.mubr.bf16.gmra.mrb[0].mxu0 %v1274
        %v1310 = vpop.f32.mrb[0].mxu0
        %v1311 = vadd.f32 0.0, %v1310
        %v1312 = vpop.f32.mrb[0].mxu0
        %v1313 = vpop.f32.mrb[0].mxu0
        %v1314 = vpop.f32.mrb[0].mxu0
        %1315 = vdwg.mxu0
        %v1316 = vadd.f32 %v1161, %v1311
        %v1317 = vld [vmem:[%s3 + $0x8] sm:$0x1]
        %v1318 = vlaneseq
        %v1319 = vshrl.u32 %v1318, 7
        %v1320 = vsub.s32 0, %v1319
        %v1321 = vrot.slane %v1317, %v1320
        %v1322 = vadd.f32 %v1316, %v1321
        %v1323 = vadd.f32 %v383, %v1322
        %v1324 = vsel %vm281, %v1323, 0.0
        %1325 = vadd.xlane.f32.xlu0 %v1324
        %v1326 = vpop.xlane.xlu0 %1325
        %v1327 = vrcp.pop 64.0
        %v1328 = vmul.f32 %v1326, %v1327
        %v1329 = vsub.f32 %v1323, %v1328
        %v1330 = vmul.f32 %v1329, %v1329
        %v1331 = vsel %vm281, %v1330, 0.0
        %1332 = vadd.xlane.f32.xlu0 %v1331
        %v1333 = vpop.xlane.xlu0 %1332
        %v1334 = vmul.f32 %v1333, %v1327
        %v1335 = vadd.f32 %v1334, 1e-05
        %v1336 = vrsqrt.pop %v1335
        %v1337 = vmul.f32 %v1329, %v1336
        %v1338 = vld [vmem:[%s3 + $0xb] sm:$0x1]
        %v1339 = vlaneseq
        %v1340 = vshrl.u32 %v1339, 7
        %v1341 = vsub.s32 0, %v1340
        %v1342 = vrot.slane %v1338, %v1341
        %v1343 = vmul.f32 %v1337, %v1342
        %v1344 = vld [vmem:[%s3 + $0xc] sm:$0x1]
        %v1345 = vlaneseq
        %v1346 = vshrl.u32 %v1345, 7
        %v1347 = vsub.s32 0, %v1346
        %v1348 = vrot.slane %v1344, %v1347
        %v1349 = vadd.f32 %v1343, %v1348
        %s1350 = scalar_lea.vmem [#allocation7], 576
        %v1351 = vld [vmem:[%s1350] sm:$0xff]
        %v1352 = vld [vmem:[%s1350 + $0x8] sm:$0xff]
        %v1353 = vld [vmem:[%s1350 + $0x10] sm:$0xff]
        %v1354 = vld [vmem:[%s1350 + $0x18] sm:$0xff]
        %v1355 = vld [vmem:[%s1350 + $0x20] sm:$0xff]
        %v1356 = vld [vmem:[%s1350 + $0x28] sm:$0xff]
        %v1357 = vld [vmem:[%s1350 + $0x30] sm:$0xff]
        %v1358 = vld [vmem:[%s1350 + $0x38] sm:$0xff]
        %v1359 = vpack.c.bf16 %v1352, %v1351
        %v1360 = vpack.c.bf16 %v1354, %v1353
        %v1361 = vpack.c.bf16 %v1356, %v1355
        %v1362 = vpack.c.bf16 %v1358, %v1357
        %v1363 = vpack.c.bf16 %v1349, %v1349
        %v1364 = vld [vmem:[%s3 + $0x9] sm:$0x1]
        %v1365 = vlaneseq
        %v1366 = vshrl.u32 %v1365, 7
        %v1367 = vsub.s32 0, %v1366
        %v1368 = vrot.slane %v1364, %v1367
        %v1370 = vsel %vm281, %v1363, 0
        %1372 = vmatprep.subr.bf16.mxu0 0
        %1373 = vmatpush1.bf16.msra.mxu0 %v1359
        %1374 = vmatprep.subr.bf16.mxu0 0
        %1375 = vmatpush1.bf16.msra.mxu0 %v1360
        %1376 = vmatprep.subr.bf16.mxu0 0
        %1377 = vmatpush1.bf16.msra.mxu0 %v1361
        %1378 = vmatprep.subr.bf16.mxu0 0
        %1379 = vmatpush1.bf16.msra.mxu0 %v1362
        %1380 = vmatprep.subr.bf16.mxu0 0
        %1381 = vmatpush1.bf16.msra.mxu0 0
        %1382 = vmatprep.subr.bf16.mxu0 0
        %1383 = vmatpush1.bf16.msra.mxu0 0
        %1384 = vmatprep.subr.bf16.mxu0 0
        %1385 = vmatpush1.bf16.msra.mxu0 0
        %1386 = vmatprep.subr.bf16.mxu0 0
        %1387 = vmatpush1.bf16.msra.mxu0 0
        %1388 = vmatprep.subr.bf16.mxu0 0
        %1389 = vmatpush1.bf16.msra.mxu0 0
        %1390 = vmatprep.subr.bf16.mxu0 0
        %1391 = vmatpush1.bf16.msra.mxu0 0
        %1392 = vmatprep.subr.bf16.mxu0 0
        %1393 = vmatpush1.bf16.msra.mxu0 0
        %1394 = vmatprep.subr.bf16.mxu0 0
        %1395 = vmatpush1.bf16.msra.mxu0 0
        %1396 = vmatprep.subr.bf16.mxu0 0
        %1397 = vmatpush1.bf16.msra.mxu0 0
        %1398 = vmatprep.subr.bf16.mxu0 0
        %1399 = vmatpush1.bf16.msra.mxu0 0
        %1400 = vmatprep.subr.bf16.mxu0 0
        %1401 = vmatpush1.bf16.msra.mxu0 0
        %1402 = vmatprep.subr.bf16.mxu0 0
        %1403 = vmatpush1.bf16.msra.mxu0 0
        %1404 = vmatprep.mubr.bf16.mxu0 0
        %1405 = vmatmul.mubr.bf16.gmra.mrb[0].mxu0 %v1370
        %v1406 = vpop.f32.mrb[0].mxu0
        %v1407 = vadd.f32 %v1368, %v1406
        %v1408 = vpop.f32.mrb[0].mxu0
        %v1409 = vpop.f32.mrb[0].mxu0
        %v1410 = vpop.f32.mrb[0].mxu0
        %1411 = vdwg.mxu0
        %v1412 = vmax.f32 %v1407, 0.0
        %s1413 = scalar_lea.vmem [#allocation7], 640
        %v1414 = vld [vmem:[%s1413] sm:$0xff]
        %v1415 = vld [vmem:[%s1413 + $0x8] sm:$0xff]
        %v1416 = vld [vmem:[%s1413 + $0x10] sm:$0xff]
        %v1417 = vld [vmem:[%s1413 + $0x18] sm:$0xff]
        %v1418 = vld [vmem:[%s1413 + $0x20] sm:$0xff]
        %v1419 = vld [vmem:[%s1413 + $0x28] sm:$0xff]
        %v1420 = vld [vmem:[%s1413 + $0x30] sm:$0xff]
        %v1421 = vld [vmem:[%s1413 + $0x38] sm:$0xff]
        %v1422 = vpack.c.bf16 %v1415, %v1414
        %v1423 = vpack.c.bf16 %v1417, %v1416
        %v1424 = vpack.c.bf16 %v1419, %v1418
        %v1425 = vpack.c.bf16 %v1421, %v1420
        %v1426 = vpack.c.bf16 %v1412, %v1412
        %v1427 = vld [vmem:[%s3 + $0xa] sm:$0x1]
        %v1428 = vlaneseq
        %v1429 = vshrl.u32 %v1428, 7
        %v1430 = vsub.s32 0, %v1429
        %v1431 = vrot.slane %v1427, %v1430
        %v1433 = vsel %vm281, %v1426, 0
        %1435 = vmatprep.subr.bf16.mxu0 0
        %1436 = vmatpush1.bf16.msra.mxu0 %v1422
        %1437 = vmatprep.subr.bf16.mxu0 0
        %1438 = vmatpush1.bf16.msra.mxu0 %v1423
        %1439 = vmatprep.subr.bf16.mxu0 0
        %1440 = vmatpush1.bf16.msra.mxu0 %v1424
        %1441 = vmatprep.subr.bf16.mxu0 0
        %1442 = vmatpush1.bf16.msra.mxu0 %v1425
        %1443 = vmatprep.subr.bf16.mxu0 0
        %1444 = vmatpush1.bf16.msra.mxu0 0
        %1445 = vmatprep.subr.bf16.mxu0 0
        %1446 = vmatpush1.bf16.msra.mxu0 0
        %1447 = vmatprep.subr.bf16.mxu0 0
        %1448 = vmatpush1.bf16.msra.mxu0 0
        %1449 = vmatprep.subr.bf16.mxu0 0
        %1450 = vmatpush1.bf16.msra.mxu0 0
        %1451 = vmatprep.subr.bf16.mxu0 0
        %1452 = vmatpush1.bf16.msra.mxu0 0
        %1453 = vmatprep.subr.bf16.mxu0 0
        %1454 = vmatpush1.bf16.msra.mxu0 0
        %1455 = vmatprep.subr.bf16.mxu0 0
        %1456 = vmatpush1.bf16.msra.mxu0 0
        %1457 = vmatprep.subr.bf16.mxu0 0
        %1458 = vmatpush1.bf16.msra.mxu0 0
        %1459 = vmatprep.subr.bf16.mxu0 0
        %1460 = vmatpush1.bf16.msra.mxu0 0
        %1461 = vmatprep.subr.bf16.mxu0 0
        %1462 = vmatpush1.bf16.msra.mxu0 0
        %1463 = vmatprep.subr.bf16.mxu0 0
        %1464 = vmatpush1.bf16.msra.mxu0 0
        %1465 = vmatprep.subr.bf16.mxu0 0
        %1466 = vmatpush1.bf16.msra.mxu0 0
        %1467 = vmatprep.mubr.bf16.mxu0 0
        %1468 = vmatmul.mubr.bf16.gmra.mrb[0].mxu0 %v1433
        %v1469 = vpop.f32.mrb[0].mxu0
        %v1470 = vadd.f32 %v1431, %v1469
        %v1471 = vpop.f32.mrb[0].mxu0
        %v1472 = vpop.f32.mrb[0].mxu0
        %v1473 = vpop.f32.mrb[0].mxu0
        %1474 = vdwg.mxu0
        %v1475 = vadd.f32 %v1349, %v1470
        %v1476 = vsel %vm281, %v1475, 0.0
        %1477 = vadd.xlane.f32.xlu0 %v1476
        %v1478 = vpop.xlane.xlu0 %1477
        %v1479 = vmul.f32 %v1478, %v1327
        %v1480 = vsub.f32 %v1475, %v1479
        %v1481 = vmul.f32 %v1480, %v1480
        %v1482 = vsel %vm281, %v1481, 0.0
        %1483 = vadd.xlane.f32.xlu0 %v1482
        %v1484 = vpop.xlane.xlu0 %1483
        %v1485 = vmul.f32 %v1484, %v1327
        %v1486 = vadd.f32 %v1485, 1e-05
        %v1487 = vrsqrt.pop %v1486
        %v1488 = vmul.f32 %v1480, %v1487
        %v1489 = vld [vmem:[%s3 + $0xd] sm:$0x1]
        %v1490 = vlaneseq
        %v1491 = vshrl.u32 %v1490, 7
        %v1492 = vsub.s32 0, %v1491
        %v1493 = vrot.slane %v1489, %v1492
        %v1494 = vmul.f32 %v1488, %v1493
        %v1495 = vld [vmem:[%s3 + $0xe] sm:$0x1]
        %v1496 = vlaneseq
        %v1497 = vshrl.u32 %v1496, 7
        %v1498 = vsub.s32 0, %v1497
        %v1499 = vrot.slane %v1495, %v1498
        %v1500 = vadd.f32 %v1494, %v1499
        %s1501 = scalar_lea.vmem [#allocation7], 704
        %v1502 = vld [vmem:[%s1501] sm:$0xff]
        %v1503 = vld [vmem:[%s1501 + $0x8] sm:$0xff]
        %v1504 = vld [vmem:[%s1501 + $0x10] sm:$0xff]
        %v1505 = vld [vmem:[%s1501 + $0x18] sm:$0xff]
        %v1506 = vld [vmem:[%s1501 + $0x20] sm:$0xff]
        %v1507 = vld [vmem:[%s1501 + $0x28] sm:$0xff]
        %v1508 = vld [vmem:[%s1501 + $0x30] sm:$0xff]
        %v1509 = vld [vmem:[%s1501 + $0x38] sm:$0xff]
        %v1510 = vpack.c.bf16 %v1503, %v1502
        %v1511 = vpack.c.bf16 %v1505, %v1504
        %v1512 = vpack.c.bf16 %v1507, %v1506
        %v1513 = vpack.c.bf16 %v1509, %v1508
        %v1514 = vpack.c.bf16 %v1500, %v1500
        %v1515 = vld [vmem:[%s3 + $0xf] sm:$0x1]
        %v1516 = vlaneseq
        %v1517 = vshrl.u32 %v1516, 7
        %v1518 = vsub.s32 0, %v1517
        %v1519 = vrot.slane %v1515, %v1518
        %v1521 = vsel %vm281, %v1514, 0
        %1523 = vmatprep.subr.bf16.mxu0 0
        %1524 = vmatpush1.bf16.msra.mxu0 %v1510
        %1525 = vmatprep.subr.bf16.mxu0 0
        %1526 = vmatpush1.bf16.msra.mxu0 %v1511
        %1527 = vmatprep.subr.bf16.mxu0 0
        %1528 = vmatpush1.bf16.msra.mxu0 %v1512
        %1529 = vmatprep.subr.bf16.mxu0 0
        %1530 = vmatpush1.bf16.msra.mxu0 %v1513
        %1531 = vmatprep.subr.bf16.mxu0 0
        %1532 = vmatpush1.bf16.msra.mxu0 0
        %1533 = vmatprep.subr.bf16.mxu0 0
        %1534 = vmatpush1.bf16.msra.mxu0 0
        %1535 = vmatprep.subr.bf16.mxu0 0
        %1536 = vmatpush1.bf16.msra.mxu0 0
        %1537 = vmatprep.subr.bf16.mxu0 0
        %1538 = vmatpush1.bf16.msra.mxu0 0
        %1539 = vmatprep.subr.bf16.mxu0 0
        %1540 = vmatpush1.bf16.msra.mxu0 0
        %1541 = vmatprep.subr.bf16.mxu0 0
        %1542 = vmatpush1.bf16.msra.mxu0 0
        %1543 = vmatprep.subr.bf16.mxu0 0
        %1544 = vmatpush1.bf16.msra.mxu0 0
        %1545 = vmatprep.subr.bf16.mxu0 0
        %1546 = vmatpush1.bf16.msra.mxu0 0
        %1547 = vmatprep.subr.bf16.mxu0 0
        %1548 = vmatpush1.bf16.msra.mxu0 0
        %1549 = vmatprep.subr.bf16.mxu0 0
        %1550 = vmatpush1.bf16.msra.mxu0 0
        %1551 = vmatprep.subr.bf16.mxu0 0
        %1552 = vmatpush1.bf16.msra.mxu0 0
        %1553 = vmatprep.subr.bf16.mxu0 0
        %1554 = vmatpush1.bf16.msra.mxu0 0
        %1555 = vmatprep.mubr.bf16.mxu0 0
        %1556 = vmatmul.mubr.bf16.gmra.mrb[0].mxu0 %v1521
        %v1557 = vpop.f32.mrb[0].mxu0
        %v1558 = vadd.f32 %v1519, %v1557
        %v1559 = vpop.f32.mrb[0].mxu0
        %v1560 = vpop.f32.mrb[0].mxu0
        %v1561 = vpop.f32.mrb[0].mxu0
        %1562 = vdwg.mxu0
        %s1563 = scalar_lea.vmem [#allocation7], 768
        %v1564 = vld [vmem:[%s1563] sm:$0xff]
        %v1565 = vld [vmem:[%s1563 + $0x8] sm:$0xff]
        %v1566 = vld [vmem:[%s1563 + $0x10] sm:$0xff]
        %v1567 = vld [vmem:[%s1563 + $0x18] sm:$0xff]
        %v1568 = vld [vmem:[%s1563 + $0x20] sm:$0xff]
        %v1569 = vld [vmem:[%s1563 + $0x28] sm:$0xff]
        %v1570 = vld [vmem:[%s1563 + $0x30] sm:$0xff]
        %v1571 = vld [vmem:[%s1563 + $0x38] sm:$0xff]
        %v1572 = vpack.c.bf16 %v1565, %v1564
        %v1573 = vpack.c.bf16 %v1567, %v1566
        %v1574 = vpack.c.bf16 %v1569, %v1568
        %v1575 = vpack.c.bf16 %v1571, %v1570
        %v1576 = vld [vmem:[%s3 + $0x10] sm:$0x1]
        %v1577 = vlaneseq
        %v1578 = vshrl.u32 %v1577, 7
        %v1579 = vsub.s32 0, %v1578
        %v1580 = vrot.slane %v1576, %v1579
        %1581 = vmatprep.subr.bf16.mxu0 0
        %1582 = vmatpush1.bf16.msra.mxu0 %v1572
        %1583 = vmatprep.subr.bf16.mxu0 0
        %1584 = vmatpush1.bf16.msra.mxu0 %v1573
        %1585 = vmatprep.subr.bf16.mxu0 0
        %1586 = vmatpush1.bf16.msra.mxu0 %v1574
        %1587 = vmatprep.subr.bf16.mxu0 0
        %1588 = vmatpush1.bf16.msra.mxu0 %v1575
        %1589 = vmatprep.subr.bf16.mxu0 0
        %1590 = vmatpush1.bf16.msra.mxu0 0
        %1591 = vmatprep.subr.bf16.mxu0 0
        %1592 = vmatpush1.bf16.msra.mxu0 0
        %1593 = vmatprep.subr.bf16.mxu0 0
        %1594 = vmatpush1.bf16.msra.mxu0 0
        %1595 = vmatprep.subr.bf16.mxu0 0
        %1596 = vmatpush1.bf16.msra.mxu0 0
        %1597 = vmatprep.subr.bf16.mxu0 0
        %1598 = vmatpush1.bf16.msra.mxu0 0
        %1599 = vmatprep.subr.bf16.mxu0 0
        %1600 = vmatpush1.bf16.msra.mxu0 0
        %1601 = vmatprep.subr.bf16.mxu0 0
        %1602 = vmatpush1.bf16.msra.mxu0 0
        %1603 = vmatprep.subr.bf16.mxu0 0
        %1604 = vmatpush1.bf16.msra.mxu0 0
        %1605 = vmatprep.subr.bf16.mxu0 0
        %1606 = vmatpush1.bf16.msra.mxu0 0
        %1607 = vmatprep.subr.bf16.mxu0 0
        %1608 = vmatpush1.bf16.msra.mxu0 0
        %1609 = vmatprep.subr.bf16.mxu0 0
        %1610 = vmatpush1.bf16.msra.mxu0 0
        %1611 = vmatprep.subr.bf16.mxu0 0
        %1612 = vmatpush1.bf16.msra.mxu0 0
        %1613 = vmatprep.mubr.bf16.mxu0 0
        %1614 = vmatmul.mubr.bf16.gmra.mrb[0].mxu0 %v1521
        %v1615 = vpop.f32.mrb[0].mxu0
        %v1616 = vadd.f32 %v1580, %v1615
        %v1617 = vpop.f32.mrb[0].mxu0
        %v1618 = vpop.f32.mrb[0].mxu0
        %v1619 = vpop.f32.mrb[0].mxu0
        %1620 = vdwg.mxu0
        %s1621 = scalar_lea.vmem [#allocation7], 832
        %v1622 = vld [vmem:[%s1621] sm:$0xff]
        %v1623 = vld [vmem:[%s1621 + $0x8] sm:$0xff]
        %v1624 = vld [vmem:[%s1621 + $0x10] sm:$0xff]
        %v1625 = vld [vmem:[%s1621 + $0x18] sm:$0xff]
        %v1626 = vld [vmem:[%s1621 + $0x20] sm:$0xff]
        %v1627 = vld [vmem:[%s1621 + $0x28] sm:$0xff]
        %v1628 = vld [vmem:[%s1621 + $0x30] sm:$0xff]
        %v1629 = vld [vmem:[%s1621 + $0x38] sm:$0xff]
        %v1630 = vpack.c.bf16 %v1623, %v1622
        %v1631 = vpack.c.bf16 %v1625, %v1624
        %v1632 = vpack.c.bf16 %v1627, %v1626
        %v1633 = vpack.c.bf16 %v1629, %v1628
        %v1634 = vld [vmem:[%s3 + $0x11] sm:$0x1]
        %v1635 = vlaneseq
        %v1636 = vshrl.u32 %v1635, 7
        %v1637 = vsub.s32 0, %v1636
        %v1638 = vrot.slane %v1634, %v1637
        %1639 = vmatprep.subr.bf16.mxu0 0
        %1640 = vmatpush1.bf16.msra.mxu0 %v1630
        %1641 = vmatprep.subr.bf16.mxu0 0
        %1642 = vmatpush1.bf16.msra.mxu0 %v1631
        %1643 = vmatprep.subr.bf16.mxu0 0
        %1644 = vmatpush1.bf16.msra.mxu0 %v1632
        %1645 = vmatprep.subr.bf16.mxu0 0
        %1646 = vmatpush1.bf16.msra.mxu0 %v1633
        %1647 = vmatprep.subr.bf16.mxu0 0
        %1648 = vmatpush1.bf16.msra.mxu0 0
        %1649 = vmatprep.subr.bf16.mxu0 0
        %1650 = vmatpush1.bf16.msra.mxu0 0
        %1651 = vmatprep.subr.bf16.mxu0 0
        %1652 = vmatpush1.bf16.msra.mxu0 0
        %1653 = vmatprep.subr.bf16.mxu0 0
        %1654 = vmatpush1.bf16.msra.mxu0 0
        %1655 = vmatprep.subr.bf16.mxu0 0
        %1656 = vmatpush1.bf16.msra.mxu0 0
        %1657 = vmatprep.subr.bf16.mxu0 0
        %1658 = vmatpush1.bf16.msra.mxu0 0
        %1659 = vmatprep.subr.bf16.mxu0 0
        %1660 = vmatpush1.bf16.msra.mxu0 0
        %1661 = vmatprep.subr.bf16.mxu0 0
        %1662 = vmatpush1.bf16.msra.mxu0 0
        %1663 = vmatprep.subr.bf16.mxu0 0
        %1664 = vmatpush1.bf16.msra.mxu0 0
        %1665 = vmatprep.subr.bf16.mxu0 0
        %1666 = vmatpush1.bf16.msra.mxu0 0
        %1667 = vmatprep.subr.bf16.mxu0 0
        %1668 = vmatpush1.bf16.msra.mxu0 0
        %1669 = vmatprep.subr.bf16.mxu0 0
        %1670 = vmatpush1.bf16.msra.mxu0 0
        %1671 = vmatprep.mubr.bf16.mxu0 0
        %1672 = vmatmul.mubr.bf16.gmra.mrb[0].mxu0 %v1521
        %v1673 = vpop.f32.mrb[0].mxu0
        %v1674 = vadd.f32 %v1638, %v1673
        %v1675 = vpop.f32.mrb[0].mxu0
        %v1676 = vpop.f32.mrb[0].mxu0
        %v1677 = vpop.f32.mrb[0].mxu0
        %1678 = vdwg.mxu0
        %s1679 = scalar_lea.vmem [#allocation7], 896
        %v1680 = vld [vmem:[%s1679] sm:$0xff]
        %v1681 = vld [vmem:[%s1679 + $0x8] sm:$0xff]
        %v1682 = vld [vmem:[%s1679 + $0x10] sm:$0xff]
        %v1683 = vld [vmem:[%s1679 + $0x18] sm:$0xff]
        %v1684 = vld [vmem:[%s1679 + $0x20] sm:$0xff]
        %v1685 = vld [vmem:[%s1679 + $0x28] sm:$0xff]
        %v1686 = vld [vmem:[%s1679 + $0x30] sm:$0xff]
        %v1687 = vld [vmem:[%s1679 + $0x38] sm:$0xff]
        %v1688 = vpack.c.bf16 %v1681, %v1680
        %v1689 = vpack.c.bf16 %v1683, %v1682
        %v1690 = vpack.c.bf16 %v1685, %v1684
        %v1691 = vpack.c.bf16 %v1687, %v1686
        %v1692 = vpack.c.bf16 %v1558, %v1558
        %v1693 = vpack.c.bf16 %v1616, %v1616
        %v1695 = vsel %vm698, %v1692, 0
        %v1698 = vsel %vm698, %v1693, 0
        %1700 = vmatprep.subr.bf16.mxu0 0
        %1701 = vmatpush1.bf16.xpose.msra.mxu0 %v1698
        %1702 = vmatprep.subr.bf16.mxu0 0
        %1703 = vmatpush1.bf16.xpose.msra.mxu0 0
        %1704 = vmatprep.subr.bf16.mxu0 0
        %1705 = vmatpush1.bf16.xpose.msra.mxu0 0
        %1706 = vmatprep.subr.bf16.mxu0 0
        %1707 = vmatpush1.bf16.xpose.msra.mxu0 0
        %1708 = vmatprep.subr.bf16.mxu0 0
        %1709 = vmatpush1.bf16.xpose.msra.mxu0 0
        %1710 = vmatprep.subr.bf16.mxu0 0
        %1711 = vmatpush1.bf16.xpose.msra.mxu0 0
        %1712 = vmatprep.subr.bf16.mxu0 0
        %1713 = vmatpush1.bf16.xpose.msra.mxu0 0
        %1714 = vmatprep.subr.bf16.mxu0 0
        %1715 = vmatpush1.bf16.xpose.msra.mxu0 0
        %1716 = vmatprep.subr.bf16.mxu0 0
        %1717 = vmatpush1.bf16.xpose.msra.mxu0 0
        %1718 = vmatprep.subr.bf16.mxu0 0
        %1719 = vmatpush1.bf16.xpose.msra.mxu0 0
        %1720 = vmatprep.subr.bf16.mxu0 0
        %1721 = vmatpush1.bf16.xpose.msra.mxu0 0
        %1722 = vmatprep.subr.bf16.mxu0 0
        %1723 = vmatpush1.bf16.xpose.msra.mxu0 0
        %1724 = vmatprep.subr.bf16.mxu0 0
        %1725 = vmatpush1.bf16.xpose.msra.mxu0 0
        %1726 = vmatprep.subr.bf16.mxu0 0
        %1727 = vmatpush1.bf16.xpose.msra.mxu0 0
        %1728 = vmatprep.subr.bf16.mxu0 0
        %1729 = vmatpush1.bf16.xpose.msra.mxu0 0
        %1730 = vmatprep.subr.bf16.mxu0 0
        %1731 = vmatpush1.bf16.xpose.msra.mxu0 0
        %1732 = vmatprep.mubr.bf16.mxu0 0
        %1733 = vmatmul.mubr.bf16.gmra.mrb[0].mxu0 %v1695
        %v1734 = vpop.f32.mrb[0].mxu0
        %v1735 = vadd.f32 0.0, %v1734
        %v1736 = vpop.f32.mrb[0].mxu0
        %v1737 = vpop.f32.mrb[0].mxu0
        %v1738 = vpop.f32.mrb[0].mxu0
        %1739 = vdwg.mxu0
        %v1740 = vsel %vm745, %v1735, -inf
        %1741 = vmax.xlane.f32.xlu0 %v1740
        %v1742 = vpop.xlane.xlu0 %1741
        %v1743 = vsub.f32 %v1735, %v1742
        %v1744 = vmul.f32 %v1743, 1.442695
        %v1745 = vpow.pop %v1744
        %v1746 = vsel %vm745, %v1745, 0.0
        %1747 = vadd.xlane.f32.xlu0 %v1746
        %v1748 = vpop.xlane.xlu0 %1747
        %v1749 = vrcp.pop %v1748
        %v1750 = vmul.f32 %v1745, %v1749
        %v1751 = vpack.c.bf16 %v1750, %v1750
        %v1752 = vpack.c.bf16 %v1674, %v1674
        %v1754 = vsel %vm745, %v1751, 0
        %v1757 = vsel %vm762, %v1752, 0
        %1759 = vmatprep.subr.bf16.mxu0 0
        %1760 = vmatpush1.bf16.msra.mxu0 %v1757
        %1761 = vmatprep.subr.bf16.mxu0 0
        %1762 = vmatpush1.bf16.msra.mxu0 0
        %1763 = vmatprep.subr.bf16.mxu0 0
        %1764 = vmatpush1.bf16.msra.mxu0 0
        %1765 = vmatprep.subr.bf16.mxu0 0
        %1766 = vmatpush1.bf16.msra.mxu0 0
        %1767 = vmatprep.subr.bf16.mxu0 0
        %1768 = vmatpush1.bf16.msra.mxu0 0
        %1769 = vmatprep.subr.bf16.mxu0 0
        %1770 = vmatpush1.bf16.msra.mxu0 0
        %1771 = vmatprep.subr.bf16.mxu0 0
        %1772 = vmatpush1.bf16.msra.mxu0 0
        %1773 = vmatprep.subr.bf16.mxu0 0
        %1774 = vmatpush1.bf16.msra.mxu0 0
        %1775 = vmatprep.subr.bf16.mxu0 0
        %1776 = vmatpush1.bf16.msra.mxu0 0
        %1777 = vmatprep.subr.bf16.mxu0 0
        %1778 = vmatpush1.bf16.msra.mxu0 0
        %1779 = vmatprep.subr.bf16.mxu0 0
        %1780 = vmatpush1.bf16.msra.mxu0 0
        %1781 = vmatprep.subr.bf16.mxu0 0
        %1782 = vmatpush1.bf16.msra.mxu0 0
        %1783 = vmatprep.subr.bf16.mxu0 0
        %1784 = vmatpush1.bf16.msra.mxu0 0
        %1785 = vmatprep.subr.bf16.mxu0 0
        %1786 = vmatpush1.bf16.msra.mxu0 0
        %1787 = vmatprep.subr.bf16.mxu0 0
        %1788 = vmatpush1.bf16.msra.mxu0 0
        %1789 = vmatprep.subr.bf16.mxu0 0
        %1790 = vmatpush1.bf16.msra.mxu0 0
        %1791 = vmatprep.mubr.bf16.mxu0 0
        %1792 = vmatmul.mubr.bf16.gmra.mrb[0].mxu0 %v1754
        %v1793 = vpop.f32.mrb[0].mxu0
        %v1794 = vadd.f32 0.0, %v1793
        %v1795 = vpop.f32.mrb[0].mxu0
        %v1796 = vpop.f32.mrb[0].mxu0
        %v1797 = vpop.f32.mrb[0].mxu0
        %1798 = vdwg.mxu0
        %v1799 = vpack.c.bf16 %v1794, %v1794
        %1801 = vrot.lane.b32.xlu0 %v1692, 112
        %v1802 = vpop.permute.xlu0 %1801
        %1804 = vrot.lane.b32.xlu0 %v1693, 112
        %v1805 = vpop.permute.xlu0 %1804
        %v1807 = vsel %vm698, %v1802, 0
        %v1810 = vsel %vm698, %v1805, 0
        %1812 = vmatprep.subr.bf16.mxu0 0
        %1813 = vmatpush1.bf16.xpose.msra.mxu0 %v1810
        %1814 = vmatprep.subr.bf16.mxu0 0
        %1815 = vmatpush1.bf16.xpose.msra.mxu0 0
        %1816 = vmatprep.subr.bf16.mxu0 0
        %1817 = vmatpush1.bf16.xpose.msra.mxu0 0
        %1818 = vmatprep.subr.bf16.mxu0 0
        %1819 = vmatpush1.bf16.xpose.msra.mxu0 0
        %1820 = vmatprep.subr.bf16.mxu0 0
        %1821 = vmatpush1.bf16.xpose.msra.mxu0 0
        %1822 = vmatprep.subr.bf16.mxu0 0
        %1823 = vmatpush1.bf16.xpose.msra.mxu0 0
        %1824 = vmatprep.subr.bf16.mxu0 0
        %1825 = vmatpush1.bf16.xpose.msra.mxu0 0
        %1826 = vmatprep.subr.bf16.mxu0 0
        %1827 = vmatpush1.bf16.xpose.msra.mxu0 0
        %1828 = vmatprep.subr.bf16.mxu0 0
        %1829 = vmatpush1.bf16.xpose.msra.mxu0 0
        %1830 = vmatprep.subr.bf16.mxu0 0
        %1831 = vmatpush1.bf16.xpose.msra.mxu0 0
        %1832 = vmatprep.subr.bf16.mxu0 0
        %1833 = vmatpush1.bf16.xpose.msra.mxu0 0
        %1834 = vmatprep.subr.bf16.mxu0 0
        %1835 = vmatpush1.bf16.xpose.msra.mxu0 0
        %1836 = vmatprep.subr.bf16.mxu0 0
        %1837 = vmatpush1.bf16.xpose.msra.mxu0 0
        %1838 = vmatprep.subr.bf16.mxu0 0
        %1839 = vmatpush1.bf16.xpose.msra.mxu0 0
        %1840 = vmatprep.subr.bf16.mxu0 0
        %1841 = vmatpush1.bf16.xpose.msra.mxu0 0
        %1842 = vmatprep.subr.bf16.mxu0 0
        %1843 = vmatpush1.bf16.xpose.msra.mxu0 0
        %1844 = vmatprep.mubr.bf16.mxu0 0
        %1845 = vmatmul.mubr.bf16.gmra.mrb[0].mxu0 %v1807
        %v1846 = vpop.f32.mrb[0].mxu0
        %v1847 = vadd.f32 0.0, %v1846
        %v1848 = vpop.f32.mrb[0].mxu0
        %v1849 = vpop.f32.mrb[0].mxu0
        %v1850 = vpop.f32.mrb[0].mxu0
        %1851 = vdwg.mxu0
        %v1852 = vsel %vm745, %v1847, -inf
        %1853 = vmax.xlane.f32.xlu0 %v1852
        %v1854 = vpop.xlane.xlu0 %1853
        %v1855 = vsub.f32 %v1847, %v1854
        %v1856 = vmul.f32 %v1855, 1.442695
        %v1857 = vpow.pop %v1856
        %v1858 = vsel %vm745, %v1857, 0.0
        %1859 = vadd.xlane.f32.xlu0 %v1858
        %v1860 = vpop.xlane.xlu0 %1859
        %v1861 = vrcp.pop %v1860
        %v1862 = vmul.f32 %v1857, %v1861
        %v1863 = vpack.c.bf16 %v1862, %v1862
        %1865 = vrot.lane.b32.xlu0 %v1752, 112
        %v1866 = vpop.permute.xlu0 %1865
        %v1868 = vsel %vm745, %v1863, 0
        %v1871 = vsel %vm762, %v1866, 0
        %1873 = vmatprep.subr.bf16.mxu0 0
        %1874 = vmatpush1.bf16.msra.mxu0 %v1871
        %1875 = vmatprep.subr.bf16.mxu0 0
        %1876 = vmatpush1.bf16.msra.mxu0 0
        %1877 = vmatprep.subr.bf16.mxu0 0
        %1878 = vmatpush1.bf16.msra.mxu0 0
        %1879 = vmatprep.subr.bf16.mxu0 0
        %1880 = vmatpush1.bf16.msra.mxu0 0
        %1881 = vmatprep.subr.bf16.mxu0 0
        %1882 = vmatpush1.bf16.msra.mxu0 0
        %1883 = vmatprep.subr.bf16.mxu0 0
        %1884 = vmatpush1.bf16.msra.mxu0 0
        %1885 = vmatprep.subr.bf16.mxu0 0
        %1886 = vmatpush1.bf16.msra.mxu0 0
        %1887 = vmatprep.subr.bf16.mxu0 0
        %1888 = vmatpush1.bf16.msra.mxu0 0
        %1889 = vmatprep.subr.bf16.mxu0 0
        %1890 = vmatpush1.bf16.msra.mxu0 0
        %1891 = vmatprep.subr.bf16.mxu0 0
        %1892 = vmatpush1.bf16.msra.mxu0 0
        %1893 = vmatprep.subr.bf16.mxu0 0
        %1894 = vmatpush1.bf16.msra.mxu0 0
        %1895 = vmatprep.subr.bf16.mxu0 0
        %1896 = vmatpush1.bf16.msra.mxu0 0
        %1897 = vmatprep.subr.bf16.mxu0 0
        %1898 = vmatpush1.bf16.msra.mxu0 0
        %1899 = vmatprep.subr.bf16.mxu0 0
        %1900 = vmatpush1.bf16.msra.mxu0 0
        %1901 = vmatprep.subr.bf16.mxu0 0
        %1902 = vmatpush1.bf16.msra.mxu0 0
        %1903 = vmatprep.subr.bf16.mxu0 0
        %1904 = vmatpush1.bf16.msra.mxu0 0
        %1905 = vmatprep.mubr.bf16.mxu0 0
        %1906 = vmatmul.mubr.bf16.gmra.mrb[0].mxu0 %v1868
        %v1907 = vpop.f32.mrb[0].mxu0
        %v1908 = vadd.f32 0.0, %v1907
        %v1909 = vpop.f32.mrb[0].mxu0
        %v1910 = vpop.f32.mrb[0].mxu0
        %v1911 = vpop.f32.mrb[0].mxu0
        %1912 = vdwg.mxu0
        %v1913 = vpack.c.bf16 %v1908, %v1908
        %v1915 = vsel %vm698, %v1913, 0
        %1917 = vmatprep.subr.bf16.mxu0 0
        %1918 = vmatpush1.bf16.msra.mxu0 %v1689
        %1919 = vmatprep.subr.bf16.mxu0 0
        %1920 = vmatpush1.bf16.msra.mxu0 0
        %1921 = vmatprep.subr.bf16.mxu0 0
        %1922 = vmatpush1.bf16.msra.mxu0 0
        %1923 = vmatprep.subr.bf16.mxu0 0
        %1924 = vmatpush1.bf16.msra.mxu0 0
        %1925 = vmatprep.subr.bf16.mxu0 0
        %1926 = vmatpush1.bf16.msra.mxu0 0
        %1927 = vmatprep.subr.bf16.mxu0 0
        %1928 = vmatpush1.bf16.msra.mxu0 0
        %1929 = vmatprep.subr.bf16.mxu0 0
        %1930 = vmatpush1.bf16.msra.mxu0 0
        %1931 = vmatprep.subr.bf16.mxu0 0
        %1932 = vmatpush1.bf16.msra.mxu0 0
        %1933 = vmatprep.subr.bf16.mxu0 0
        %1934 = vmatpush1.bf16.msra.mxu0 0
        %1935 = vmatprep.subr.bf16.mxu0 0
        %1936 = vmatpush1.bf16.msra.mxu0 0
        %1937 = vmatprep.subr.bf16.mxu0 0
        %1938 = vmatpush1.bf16.msra.mxu0 0
        %1939 = vmatprep.subr.bf16.mxu0 0
        %1940 = vmatpush1.bf16.msra.mxu0 0
        %1941 = vmatprep.subr.bf16.mxu0 0
        %1942 = vmatpush1.bf16.msra.mxu0 0
        %1943 = vmatprep.subr.bf16.mxu0 0
        %1944 = vmatpush1.bf16.msra.mxu0 0
        %1945 = vmatprep.subr.bf16.mxu0 0
        %1946 = vmatpush1.bf16.msra.mxu0 0
        %1947 = vmatprep.subr.bf16.mxu0 0
        %1948 = vmatpush1.bf16.msra.mxu0 0
        %1949 = vmatprep.mubr.bf16.mxu0 0
        %1950 = vmatmul.mubr.bf16.gmra.mrb[0].mxu0 %v1915
        %v1951 = vpop.f32.mrb[0].mxu0
        %v1952 = vadd.f32 0.0, %v1951
        %v1953 = vpop.f32.mrb[0].mxu0
        %v1954 = vpop.f32.mrb[0].mxu0
        %v1955 = vpop.f32.mrb[0].mxu0
        %1956 = vdwg.mxu0
        %v1958 = vsel %vm698, %v1799, 0
        %1960 = vmatprep.subr.bf16.mxu0 0
        %1961 = vmatpush1.bf16.msra.mxu0 %v1688
        %1962 = vmatprep.subr.bf16.mxu0 0
        %1963 = vmatpush1.bf16.msra.mxu0 0
        %1964 = vmatprep.subr.bf16.mxu0 0
        %1965 = vmatpush1.bf16.msra.mxu0 0
        %1966 = vmatprep.subr.bf16.mxu0 0
        %1967 = vmatpush1.bf16.msra.mxu0 0
        %1968 = vmatprep.subr.bf16.mxu0 0
        %1969 = vmatpush1.bf16.msra.mxu0 0
        %1970 = vmatprep.subr.bf16.mxu0 0
        %1971 = vmatpush1.bf16.msra.mxu0 0
        %1972 = vmatprep.subr.bf16.mxu0 0
        %1973 = vmatpush1.bf16.msra.mxu0 0
        %1974 = vmatprep.subr.bf16.mxu0 0
        %1975 = vmatpush1.bf16.msra.mxu0 0
        %1976 = vmatprep.subr.bf16.mxu0 0
        %1977 = vmatpush1.bf16.msra.mxu0 0
        %1978 = vmatprep.subr.bf16.mxu0 0
        %1979 = vmatpush1.bf16.msra.mxu0 0
        %1980 = vmatprep.subr.bf16.mxu0 0
        %1981 = vmatpush1.bf16.msra.mxu0 0
        %1982 = vmatprep.subr.bf16.mxu0 0
        %1983 = vmatpush1.bf16.msra.mxu0 0
        %1984 = vmatprep.subr.bf16.mxu0 0
        %1985 = vmatpush1.bf16.msra.mxu0 0
        %1986 = vmatprep.subr.bf16.mxu0 0
        %1987 = vmatpush1.bf16.msra.mxu0 0
        %1988 = vmatprep.subr.bf16.mxu0 0
        %1989 = vmatpush1.bf16.msra.mxu0 0
        %1990 = vmatprep.subr.bf16.mxu0 0
        %1991 = vmatpush1.bf16.msra.mxu0 0
        %1992 = vmatprep.mubr.bf16.mxu0 0
        %1993 = vmatmul.mubr.bf16.gmra.mrb[0].mxu0 %v1958
        %v1994 = vpop.f32.mrb[0].mxu0
        %v1995 = vadd.f32 %v1952, %v1994
        %v1996 = vpop.f32.mrb[0].mxu0
        %v1997 = vpop.f32.mrb[0].mxu0
        %v1998 = vpop.f32.mrb[0].mxu0
        %1999 = vdwg.mxu0
        %2000 = vrot.lane.b32.xlu0 %v1692, 96
        %v2001 = vpop.permute.xlu0 %2000
        %2002 = vrot.lane.b32.xlu0 %v1693, 96
        %v2003 = vpop.permute.xlu0 %2002
        %v2005 = vsel %vm698, %v2001, 0
        %v2008 = vsel %vm698, %v2003, 0
        %2010 = vmatprep.subr.bf16.mxu0 0
        %2011 = vmatpush1.bf16.xpose.msra.mxu0 %v2008
        %2012 = vmatprep.subr.bf16.mxu0 0
        %2013 = vmatpush1.bf16.xpose.msra.mxu0 0
        %2014 = vmatprep.subr.bf16.mxu0 0
        %2015 = vmatpush1.bf16.xpose.msra.mxu0 0
        %2016 = vmatprep.subr.bf16.mxu0 0
        %2017 = vmatpush1.bf16.xpose.msra.mxu0 0
        %2018 = vmatprep.subr.bf16.mxu0 0
        %2019 = vmatpush1.bf16.xpose.msra.mxu0 0
        %2020 = vmatprep.subr.bf16.mxu0 0
        %2021 = vmatpush1.bf16.xpose.msra.mxu0 0
        %2022 = vmatprep.subr.bf16.mxu0 0
        %2023 = vmatpush1.bf16.xpose.msra.mxu0 0
        %2024 = vmatprep.subr.bf16.mxu0 0
        %2025 = vmatpush1.bf16.xpose.msra.mxu0 0
        %2026 = vmatprep.subr.bf16.mxu0 0
        %2027 = vmatpush1.bf16.xpose.msra.mxu0 0
        %2028 = vmatprep.subr.bf16.mxu0 0
        %2029 = vmatpush1.bf16.xpose.msra.mxu0 0
        %2030 = vmatprep.subr.bf16.mxu0 0
        %2031 = vmatpush1.bf16.xpose.msra.mxu0 0
        %2032 = vmatprep.subr.bf16.mxu0 0
        %2033 = vmatpush1.bf16.xpose.msra.mxu0 0
        %2034 = vmatprep.subr.bf16.mxu0 0
        %2035 = vmatpush1.bf16.xpose.msra.mxu0 0
        %2036 = vmatprep.subr.bf16.mxu0 0
        %2037 = vmatpush1.bf16.xpose.msra.mxu0 0
        %2038 = vmatprep.subr.bf16.mxu0 0
        %2039 = vmatpush1.bf16.xpose.msra.mxu0 0
        %2040 = vmatprep.subr.bf16.mxu0 0
        %2041 = vmatpush1.bf16.xpose.msra.mxu0 0
        %2042 = vmatprep.mubr.bf16.mxu0 0
        %2043 = vmatmul.mubr.bf16.gmra.mrb[0].mxu0 %v2005
        %v2044 = vpop.f32.mrb[0].mxu0
        %v2045 = vadd.f32 0.0, %v2044
        %v2046 = vpop.f32.mrb[0].mxu0
        %v2047 = vpop.f32.mrb[0].mxu0
        %v2048 = vpop.f32.mrb[0].mxu0
        %2049 = vdwg.mxu0
        %v2050 = vsel %vm745, %v2045, -inf
        %2051 = vmax.xlane.f32.xlu0 %v2050
        %v2052 = vpop.xlane.xlu0 %2051
        %v2053 = vsub.f32 %v2045, %v2052
        %v2054 = vmul.f32 %v2053, 1.442695
        %v2055 = vpow.pop %v2054
        %v2056 = vsel %vm745, %v2055, 0.0
        %2057 = vadd.xlane.f32.xlu0 %v2056
        %v2058 = vpop.xlane.xlu0 %2057
        %v2059 = vrcp.pop %v2058
        %v2060 = vmul.f32 %v2055, %v2059
        %v2061 = vpack.c.bf16 %v2060, %v2060
        %2062 = vrot.lane.b32.xlu0 %v1752, 96
        %v2063 = vpop.permute.xlu0 %2062
        %v2065 = vsel %vm745, %v2061, 0
        %v2068 = vsel %vm762, %v2063, 0
        %2070 = vmatprep.subr.bf16.mxu0 0
        %2071 = vmatpush1.bf16.msra.mxu0 %v2068
        %2072 = vmatprep.subr.bf16.mxu0 0
        %2073 = vmatpush1.bf16.msra.mxu0 0
        %2074 = vmatprep.subr.bf16.mxu0 0
        %2075 = vmatpush1.bf16.msra.mxu0 0
        %2076 = vmatprep.subr.bf16.mxu0 0
        %2077 = vmatpush1.bf16.msra.mxu0 0
        %2078 = vmatprep.subr.bf16.mxu0 0
        %2079 = vmatpush1.bf16.msra.mxu0 0
        %2080 = vmatprep.subr.bf16.mxu0 0
        %2081 = vmatpush1.bf16.msra.mxu0 0
        %2082 = vmatprep.subr.bf16.mxu0 0
        %2083 = vmatpush1.bf16.msra.mxu0 0
        %2084 = vmatprep.subr.bf16.mxu0 0
        %2085 = vmatpush1.bf16.msra.mxu0 0
        %2086 = vmatprep.subr.bf16.mxu0 0
        %2087 = vmatpush1.bf16.msra.mxu0 0
        %2088 = vmatprep.subr.bf16.mxu0 0
        %2089 = vmatpush1.bf16.msra.mxu0 0
        %2090 = vmatprep.subr.bf16.mxu0 0
        %2091 = vmatpush1.bf16.msra.mxu0 0
        %2092 = vmatprep.subr.bf16.mxu0 0
        %2093 = vmatpush1.bf16.msra.mxu0 0
        %2094 = vmatprep.subr.bf16.mxu0 0
        %2095 = vmatpush1.bf16.msra.mxu0 0
        %2096 = vmatprep.subr.bf16.mxu0 0
        %2097 = vmatpush1.bf16.msra.mxu0 0
        %2098 = vmatprep.subr.bf16.mxu0 0
        %2099 = vmatpush1.bf16.msra.mxu0 0
        %2100 = vmatprep.subr.bf16.mxu0 0
        %2101 = vmatpush1.bf16.msra.mxu0 0
        %2102 = vmatprep.mubr.bf16.mxu0 0
        %2103 = vmatmul.mubr.bf16.gmra.mrb[0].mxu0 %v2065
        %v2104 = vpop.f32.mrb[0].mxu0
        %v2105 = vadd.f32 0.0, %v2104
        %v2106 = vpop.f32.mrb[0].mxu0
        %v2107 = vpop.f32.mrb[0].mxu0
        %v2108 = vpop.f32.mrb[0].mxu0
        %2109 = vdwg.mxu0
        %v2110 = vpack.c.bf16 %v2105, %v2105
        %v2112 = vsel %vm698, %v2110, 0
        %2114 = vmatprep.subr.bf16.mxu0 0
        %2115 = vmatpush1.bf16.msra.mxu0 %v1690
        %2116 = vmatprep.subr.bf16.mxu0 0
        %2117 = vmatpush1.bf16.msra.mxu0 0
        %2118 = vmatprep.subr.bf16.mxu0 0
        %2119 = vmatpush1.bf16.msra.mxu0 0
        %2120 = vmatprep.subr.bf16.mxu0 0
        %2121 = vmatpush1.bf16.msra.mxu0 0
        %2122 = vmatprep.subr.bf16.mxu0 0
        %2123 = vmatpush1.bf16.msra.mxu0 0
        %2124 = vmatprep.subr.bf16.mxu0 0
        %2125 = vmatpush1.bf16.msra.mxu0 0
        %2126 = vmatprep.subr.bf16.mxu0 0
        %2127 = vmatpush1.bf16.msra.mxu0 0
        %2128 = vmatprep.subr.bf16.mxu0 0
        %2129 = vmatpush1.bf16.msra.mxu0 0
        %2130 = vmatprep.subr.bf16.mxu0 0
        %2131 = vmatpush1.bf16.msra.mxu0 0
        %2132 = vmatprep.subr.bf16.mxu0 0
        %2133 = vmatpush1.bf16.msra.mxu0 0
        %2134 = vmatprep.subr.bf16.mxu0 0
        %2135 = vmatpush1.bf16.msra.mxu0 0
        %2136 = vmatprep.subr.bf16.mxu0 0
        %2137 = vmatpush1.bf16.msra.mxu0 0
        %2138 = vmatprep.subr.bf16.mxu0 0
        %2139 = vmatpush1.bf16.msra.mxu0 0
        %2140 = vmatprep.subr.bf16.mxu0 0
        %2141 = vmatpush1.bf16.msra.mxu0 0
        %2142 = vmatprep.subr.bf16.mxu0 0
        %2143 = vmatpush1.bf16.msra.mxu0 0
        %2144 = vmatprep.subr.bf16.mxu0 0
        %2145 = vmatpush1.bf16.msra.mxu0 0
        %2146 = vmatprep.mubr.bf16.mxu0 0
        %2147 = vmatmul.mubr.bf16.gmra.mrb[0].mxu0 %v2112
        %v2148 = vpop.f32.mrb[0].mxu0
        %v2149 = vadd.f32 0.0, %v2148
        %v2150 = vpop.f32.mrb[0].mxu0
        %v2151 = vpop.f32.mrb[0].mxu0
        %v2152 = vpop.f32.mrb[0].mxu0
        %2153 = vdwg.mxu0
        %v2154 = vadd.f32 %v1995, %v2149
        %2155 = vrot.lane.b32.xlu0 %v1692, 80
        %v2156 = vpop.permute.xlu0 %2155
        %2157 = vrot.lane.b32.xlu0 %v1693, 80
        %v2158 = vpop.permute.xlu0 %2157
        %v2160 = vsel %vm698, %v2156, 0
        %v2163 = vsel %vm698, %v2158, 0
        %2165 = vmatprep.subr.bf16.mxu0 0
        %2166 = vmatpush1.bf16.xpose.msra.mxu0 %v2163
        %2167 = vmatprep.subr.bf16.mxu0 0
        %2168 = vmatpush1.bf16.xpose.msra.mxu0 0
        %2169 = vmatprep.subr.bf16.mxu0 0
        %2170 = vmatpush1.bf16.xpose.msra.mxu0 0
        %2171 = vmatprep.subr.bf16.mxu0 0
        %2172 = vmatpush1.bf16.xpose.msra.mxu0 0
        %2173 = vmatprep.subr.bf16.mxu0 0
        %2174 = vmatpush1.bf16.xpose.msra.mxu0 0
        %2175 = vmatprep.subr.bf16.mxu0 0
        %2176 = vmatpush1.bf16.xpose.msra.mxu0 0
        %2177 = vmatprep.subr.bf16.mxu0 0
        %2178 = vmatpush1.bf16.xpose.msra.mxu0 0
        %2179 = vmatprep.subr.bf16.mxu0 0
        %2180 = vmatpush1.bf16.xpose.msra.mxu0 0
        %2181 = vmatprep.subr.bf16.mxu0 0
        %2182 = vmatpush1.bf16.xpose.msra.mxu0 0
        %2183 = vmatprep.subr.bf16.mxu0 0
        %2184 = vmatpush1.bf16.xpose.msra.mxu0 0
        %2185 = vmatprep.subr.bf16.mxu0 0
        %2186 = vmatpush1.bf16.xpose.msra.mxu0 0
        %2187 = vmatprep.subr.bf16.mxu0 0
        %2188 = vmatpush1.bf16.xpose.msra.mxu0 0
        %2189 = vmatprep.subr.bf16.mxu0 0
        %2190 = vmatpush1.bf16.xpose.msra.mxu0 0
        %2191 = vmatprep.subr.bf16.mxu0 0
        %2192 = vmatpush1.bf16.xpose.msra.mxu0 0
        %2193 = vmatprep.subr.bf16.mxu0 0
        %2194 = vmatpush1.bf16.xpose.msra.mxu0 0
        %2195 = vmatprep.subr.bf16.mxu0 0
        %2196 = vmatpush1.bf16.xpose.msra.mxu0 0
        %2197 = vmatprep.mubr.bf16.mxu0 0
        %2198 = vmatmul.mubr.bf16.gmra.mrb[0].mxu0 %v2160
        %v2199 = vpop.f32.mrb[0].mxu0
        %v2200 = vadd.f32 0.0, %v2199
        %v2201 = vpop.f32.mrb[0].mxu0
        %v2202 = vpop.f32.mrb[0].mxu0
        %v2203 = vpop.f32.mrb[0].mxu0
        %2204 = vdwg.mxu0
        %v2205 = vsel %vm745, %v2200, -inf
        %2206 = vmax.xlane.f32.xlu0 %v2205
        %v2207 = vpop.xlane.xlu0 %2206
        %v2208 = vsub.f32 %v2200, %v2207
        %v2209 = vmul.f32 %v2208, 1.442695
        %v2210 = vpow.pop %v2209
        %v2211 = vsel %vm745, %v2210, 0.0
        %2212 = vadd.xlane.f32.xlu0 %v2211
        %v2213 = vpop.xlane.xlu0 %2212
        %v2214 = vrcp.pop %v2213
        %v2215 = vmul.f32 %v2210, %v2214
        %v2216 = vpack.c.bf16 %v2215, %v2215
        %2217 = vrot.lane.b32.xlu0 %v1752, 80
        %v2218 = vpop.permute.xlu0 %2217
        %v2220 = vsel %vm745, %v2216, 0
        %v2223 = vsel %vm762, %v2218, 0
        %2225 = vmatprep.subr.bf16.mxu0 0
        %2226 = vmatpush1.bf16.msra.mxu0 %v2223
        %2227 = vmatprep.subr.bf16.mxu0 0
        %2228 = vmatpush1.bf16.msra.mxu0 0
        %2229 = vmatprep.subr.bf16.mxu0 0
        %2230 = vmatpush1.bf16.msra.mxu0 0
        %2231 = vmatprep.subr.bf16.mxu0 0
        %2232 = vmatpush1.bf16.msra.mxu0 0
        %2233 = vmatprep.subr.bf16.mxu0 0
        %2234 = vmatpush1.bf16.msra.mxu0 0
        %2235 = vmatprep.subr.bf16.mxu0 0
        %2236 = vmatpush1.bf16.msra.mxu0 0
        %2237 = vmatprep.subr.bf16.mxu0 0
        %2238 = vmatpush1.bf16.msra.mxu0 0
        %2239 = vmatprep.subr.bf16.mxu0 0
        %2240 = vmatpush1.bf16.msra.mxu0 0
        %2241 = vmatprep.subr.bf16.mxu0 0
        %2242 = vmatpush1.bf16.msra.mxu0 0
        %2243 = vmatprep.subr.bf16.mxu0 0
        %2244 = vmatpush1.bf16.msra.mxu0 0
        %2245 = vmatprep.subr.bf16.mxu0 0
        %2246 = vmatpush1.bf16.msra.mxu0 0
        %2247 = vmatprep.subr.bf16.mxu0 0
        %2248 = vmatpush1.bf16.msra.mxu0 0
        %2249 = vmatprep.subr.bf16.mxu0 0
        %2250 = vmatpush1.bf16.msra.mxu0 0
        %2251 = vmatprep.subr.bf16.mxu0 0
        %2252 = vmatpush1.bf16.msra.mxu0 0
        %2253 = vmatprep.subr.bf16.mxu0 0
        %2254 = vmatpush1.bf16.msra.mxu0 0
        %2255 = vmatprep.subr.bf16.mxu0 0
        %2256 = vmatpush1.bf16.msra.mxu0 0
        %2257 = vmatprep.mubr.bf16.mxu0 0
        %2258 = vmatmul.mubr.bf16.gmra.mrb[0].mxu0 %v2220
        %v2259 = vpop.f32.mrb[0].mxu0
        %v2260 = vadd.f32 0.0, %v2259
        %v2261 = vpop.f32.mrb[0].mxu0
        %v2262 = vpop.f32.mrb[0].mxu0
        %v2263 = vpop.f32.mrb[0].mxu0
        %2264 = vdwg.mxu0
        %v2265 = vpack.c.bf16 %v2260, %v2260
        %v2267 = vsel %vm698, %v2265, 0
        %2269 = vmatprep.subr.bf16.mxu0 0
        %2270 = vmatpush1.bf16.msra.mxu0 %v1691
        %2271 = vmatprep.subr.bf16.mxu0 0
        %2272 = vmatpush1.bf16.msra.mxu0 0
        %2273 = vmatprep.subr.bf16.mxu0 0
        %2274 = vmatpush1.bf16.msra.mxu0 0
        %2275 = vmatprep.subr.bf16.mxu0 0
        %2276 = vmatpush1.bf16.msra.mxu0 0
        %2277 = vmatprep.subr.bf16.mxu0 0
        %2278 = vmatpush1.bf16.msra.mxu0 0
        %2279 = vmatprep.subr.bf16.mxu0 0
        %2280 = vmatpush1.bf16.msra.mxu0 0
        %2281 = vmatprep.subr.bf16.mxu0 0
        %2282 = vmatpush1.bf16.msra.mxu0 0
        %2283 = vmatprep.subr.bf16.mxu0 0
        %2284 = vmatpush1.bf16.msra.mxu0 0
        %2285 = vmatprep.subr.bf16.mxu0 0
        %2286 = vmatpush1.bf16.msra.mxu0 0
        %2287 = vmatprep.subr.bf16.mxu0 0
        %2288 = vmatpush1.bf16.msra.mxu0 0
        %2289 = vmatprep.subr.bf16.mxu0 0
        %2290 = vmatpush1.bf16.msra.mxu0 0
        %2291 = vmatprep.subr.bf16.mxu0 0
        %2292 = vmatpush1.bf16.msra.mxu0 0
        %2293 = vmatprep.subr.bf16.mxu0 0
        %2294 = vmatpush1.bf16.msra.mxu0 0
        %2295 = vmatprep.subr.bf16.mxu0 0
        %2296 = vmatpush1.bf16.msra.mxu0 0
        %2297 = vmatprep.subr.bf16.mxu0 0
        %2298 = vmatpush1.bf16.msra.mxu0 0
        %2299 = vmatprep.subr.bf16.mxu0 0
        %2300 = vmatpush1.bf16.msra.mxu0 0
        %2301 = vmatprep.mubr.bf16.mxu0 0
        %2302 = vmatmul.mubr.bf16.gmra.mrb[0].mxu0 %v2267
        %v2303 = vpop.f32.mrb[0].mxu0
        %v2304 = vadd.f32 0.0, %v2303
        %v2305 = vpop.f32.mrb[0].mxu0
        %v2306 = vpop.f32.mrb[0].mxu0
        %v2307 = vpop.f32.mrb[0].mxu0
        %2308 = vdwg.mxu0
        %v2309 = vadd.f32 %v2154, %v2304
        %v2310 = vld [vmem:[%s3 + $0x12] sm:$0x1]
        %v2311 = vlaneseq
        %v2312 = vshrl.u32 %v2311, 7
        %v2313 = vsub.s32 0, %v2312
        %v2314 = vrot.slane %v2310, %v2313
        %v2315 = vadd.f32 %v2309, %v2314
        %v2316 = vadd.f32 %v1500, %v2315
        %v2317 = vsel %vm281, %v2316, 0.0
        %2318 = vadd.xlane.f32.xlu0 %v2317
        %v2319 = vpop.xlane.xlu0 %2318
        %v2320 = vmul.f32 %v2319, %v1327
        %v2321 = vsub.f32 %v2316, %v2320
        %v2322 = vmul.f32 %v2321, %v2321
        %v2323 = vsel %vm281, %v2322, 0.0
        %2324 = vadd.xlane.f32.xlu0 %v2323
        %v2325 = vpop.xlane.xlu0 %2324
        %v2326 = vmul.f32 %v2325, %v1327
        %v2327 = vadd.f32 %v2326, 1e-05
        %v2328 = vrsqrt.pop %v2327
        %v2329 = vmul.f32 %v2321, %v2328
        %v2330 = vld [vmem:[%s3 + $0x15] sm:$0x1]
        %v2331 = vlaneseq
        %v2332 = vshrl.u32 %v2331, 7
        %v2333 = vsub.s32 0, %v2332
        %v2334 = vrot.slane %v2330, %v2333
        %v2335 = vmul.f32 %v2329, %v2334
        %v2336 = vld [vmem:[%s3 + $0x16] sm:$0x1]
        %v2337 = vlaneseq
        %v2338 = vshrl.u32 %v2337, 7
        %v2339 = vsub.s32 0, %v2338
        %v2340 = vrot.slane %v2336, %v2339
        %v2341 = vadd.f32 %v2335, %v2340
        %s2342 = scalar_lea.vmem [#allocation7], 960
        %v2343 = vld [vmem:[%s2342] sm:$0xff]
        %v2344 = vld [vmem:[%s2342 + $0x8] sm:$0xff]
        %v2345 = vld [vmem:[%s2342 + $0x10] sm:$0xff]
        %v2346 = vld [vmem:[%s2342 + $0x18] sm:$0xff]
        %v2347 = vld [vmem:[%s2342 + $0x20] sm:$0xff]
        %v2348 = vld [vmem:[%s2342 + $0x28] sm:$0xff]
        %v2349 = vld [vmem:[%s2342 + $0x30] sm:$0xff]
        %v2350 = vld [vmem:[%s2342 + $0x38] sm:$0xff]
        %v2351 = vpack.c.bf16 %v2344, %v2343
        %v2352 = vpack.c.bf16 %v2346, %v2345
        %v2353 = vpack.c.bf16 %v2348, %v2347
        %v2354 = vpack.c.bf16 %v2350, %v2349
        %v2355 = vpack.c.bf16 %v2341, %v2341
        %v2356 = vld [vmem:[%s3 + $0x13] sm:$0x1]
        %v2357 = vlaneseq
        %v2358 = vshrl.u32 %v2357, 7
        %v2359 = vsub.s32 0, %v2358
        %v2360 = vrot.slane %v2356, %v2359
        %v2362 = vsel %vm281, %v2355, 0
        %2364 = vmatprep.subr.bf16.mxu0 0
        %2365 = vmatpush1.bf16.msra.mxu0 %v2351
        %2366 = vmatprep.subr.bf16.mxu0 0
        %2367 = vmatpush1.bf16.msra.mxu0 %v2352
        %2368 = vmatprep.subr.bf16.mxu0 0
        %2369 = vmatpush1.bf16.msra.mxu0 %v2353
        %2370 = vmatprep.subr.bf16.mxu0 0
        %2371 = vmatpush1.bf16.msra.mxu0 %v2354
        %2372 = vmatprep.subr.bf16.mxu0 0
        %2373 = vmatpush1.bf16.msra.mxu0 0
        %2374 = vmatprep.subr.bf16.mxu0 0
        %2375 = vmatpush1.bf16.msra.mxu0 0
        %2376 = vmatprep.subr.bf16.mxu0 0
        %2377 = vmatpush1.bf16.msra.mxu0 0
        %2378 = vmatprep.subr.bf16.mxu0 0
        %2379 = vmatpush1.bf16.msra.mxu0 0
        %2380 = vmatprep.subr.bf16.mxu0 0
        %2381 = vmatpush1.bf16.msra.mxu0 0
        %2382 = vmatprep.subr.bf16.mxu0 0
        %2383 = vmatpush1.bf16.msra.mxu0 0
        %2384 = vmatprep.subr.bf16.mxu0 0
        %2385 = vmatpush1.bf16.msra.mxu0 0
        %2386 = vmatprep.subr.bf16.mxu0 0
        %2387 = vmatpush1.bf16.msra.mxu0 0
        %2388 = vmatprep.subr.bf16.mxu0 0
        %2389 = vmatpush1.bf16.msra.mxu0 0
        %2390 = vmatprep.subr.bf16.mxu0 0
        %2391 = vmatpush1.bf16.msra.mxu0 0
        %2392 = vmatprep.subr.bf16.mxu0 0
        %2393 = vmatpush1.bf16.msra.mxu0 0
        %2394 = vmatprep.subr.bf16.mxu0 0
        %2395 = vmatpush1.bf16.msra.mxu0 0
        %2396 = vmatprep.mubr.bf16.mxu0 0
        %2397 = vmatmul.mubr.bf16.gmra.mrb[0].mxu0 %v2362
        %v2398 = vpop.f32.mrb[0].mxu0
        %v2399 = vadd.f32 %v2360, %v2398
        %v2400 = vpop.f32.mrb[0].mxu0
        %v2401 = vpop.f32.mrb[0].mxu0
        %v2402 = vpop.f32.mrb[0].mxu0
        %2403 = vdwg.mxu0
        %v2404 = vmax.f32 %v2399, 0.0
        %s2405 = scalar_lea.vmem [#allocation7], 1024
        %v2406 = vld [vmem:[%s2405] sm:$0xff]
        %v2407 = vld [vmem:[%s2405 + $0x8] sm:$0xff]
        %v2408 = vld [vmem:[%s2405 + $0x10] sm:$0xff]
        %v2409 = vld [vmem:[%s2405 + $0x18] sm:$0xff]
        %v2410 = vld [vmem:[%s2405 + $0x20] sm:$0xff]
        %v2411 = vld [vmem:[%s2405 + $0x28] sm:$0xff]
        %v2412 = vld [vmem:[%s2405 + $0x30] sm:$0xff]
        %v2413 = vld [vmem:[%s2405 + $0x38] sm:$0xff]
        %v2414 = vpack.c.bf16 %v2407, %v2406
        %v2415 = vpack.c.bf16 %v2409, %v2408
        %v2416 = vpack.c.bf16 %v2411, %v2410
        %v2417 = vpack.c.bf16 %v2413, %v2412
        %v2418 = vpack.c.bf16 %v2404, %v2404
        %v2419 = vld [vmem:[%s3 + $0x14] sm:$0x1]
        %v2420 = vlaneseq
        %v2421 = vshrl.u32 %v2420, 7
        %v2422 = vsub.s32 0, %v2421
        %v2423 = vrot.slane %v2419, %v2422
        %v2425 = vsel %vm281, %v2418, 0
        %2427 = vmatprep.subr.bf16.mxu0 0
        %2428 = vmatpush1.bf16.msra.mxu0 %v2414
        %2429 = vmatprep.subr.bf16.mxu0 0
        %2430 = vmatpush1.bf16.msra.mxu0 %v2415
        %2431 = vmatprep.subr.bf16.mxu0 0
        %2432 = vmatpush1.bf16.msra.mxu0 %v2416
        %2433 = vmatprep.subr.bf16.mxu0 0
        %2434 = vmatpush1.bf16.msra.mxu0 %v2417
        %2435 = vmatprep.subr.bf16.mxu0 0
        %2436 = vmatpush1.bf16.msra.mxu0 0
        %2437 = vmatprep.subr.bf16.mxu0 0
        %2438 = vmatpush1.bf16.msra.mxu0 0
        %2439 = vmatprep.subr.bf16.mxu0 0
        %2440 = vmatpush1.bf16.msra.mxu0 0
        %2441 = vmatprep.subr.bf16.mxu0 0
        %2442 = vmatpush1.bf16.msra.mxu0 0
        %2443 = vmatprep.subr.bf16.mxu0 0
        %2444 = vmatpush1.bf16.msra.mxu0 0
        %2445 = vmatprep.subr.bf16.mxu0 0
        %2446 = vmatpush1.bf16.msra.mxu0 0
        %2447 = vmatprep.subr.bf16.mxu0 0
        %2448 = vmatpush1.bf16.msra.mxu0 0
        %2449 = vmatprep.subr.bf16.mxu0 0
        %2450 = vmatpush1.bf16.msra.mxu0 0
        %2451 = vmatprep.subr.bf16.mxu0 0
        %2452 = vmatpush1.bf16.msra.mxu0 0
        %2453 = vmatprep.subr.bf16.mxu0 0
        %2454 = vmatpush1.bf16.msra.mxu0 0
        %2455 = vmatprep.subr.bf16.mxu0 0
        %2456 = vmatpush1.bf16.msra.mxu0 0
        %2457 = vmatprep.subr.bf16.mxu0 0
        %2458 = vmatpush1.bf16.msra.mxu0 0
        %2459 = vmatprep.mubr.bf16.mxu0 0
        %2460 = vmatmul.mubr.bf16.gmra.mrb[0].mxu0 %v2425
        %v2461 = vpop.f32.mrb[0].mxu0
        %v2462 = vadd.f32 %v2423, %v2461
        %v2463 = vpop.f32.mrb[0].mxu0
        %v2464 = vpop.f32.mrb[0].mxu0
        %v2465 = vpop.f32.mrb[0].mxu0
        %2466 = vdwg.mxu0
        %v2467 = vadd.f32 %v2341, %v2462
        %v2468 = vsel %vm281, %v2467, 0.0
        %2469 = vadd.xlane.f32.xlu0 %v2468
        %v2470 = vpop.xlane.xlu0 %2469
        %v2471 = vmul.f32 %v2470, %v1327
        %v2472 = vsub.f32 %v2467, %v2471
        %v2473 = vmul.f32 %v2472, %v2472
        %v2474 = vsel %vm281, %v2473, 0.0
        %2475 = vadd.xlane.f32.xlu0 %v2474
        %v2476 = vpop.xlane.xlu0 %2475
        %v2477 = vmul.f32 %v2476, %v1327
        %v2478 = vadd.f32 %v2477, 1e-05
        %v2479 = vrsqrt.pop %v2478
        %v2480 = vmul.f32 %v2472, %v2479
        %v2481 = vld [vmem:[%s3 + $0x17] sm:$0x1]
        %v2482 = vlaneseq
        %v2483 = vshrl.u32 %v2482, 7
        %v2484 = vsub.s32 0, %v2483
        %v2485 = vrot.slane %v2481, %v2484
        %v2486 = vmul.f32 %v2480, %v2485
        %v2487 = vld [vmem:[%s3 + $0x18] sm:$0x1]
        %v2488 = vlaneseq
        %v2489 = vshrl.u32 %v2488, 7
        %v2490 = vsub.s32 0, %v2489
        %v2491 = vrot.slane %v2487, %v2490
        %v2492 = vadd.f32 %v2486, %v2491
        %s2493 = scalar_lea.vmem [#allocation7], 1088
        %v2494 = vld [vmem:[%s2493] sm:$0xff]
        %v2495 = vld [vmem:[%s2493 + $0x8] sm:$0xff]
        %v2496 = vld [vmem:[%s2493 + $0x10] sm:$0xff]
        %v2497 = vld [vmem:[%s2493 + $0x18] sm:$0xff]
        %v2498 = vld [vmem:[%s2493 + $0x20] sm:$0xff]
        %v2499 = vld [vmem:[%s2493 + $0x28] sm:$0xff]
        %v2500 = vld [vmem:[%s2493 + $0x30] sm:$0xff]
        %v2501 = vld [vmem:[%s2493 + $0x38] sm:$0xff]
        %v2502 = vpack.c.bf16 %v2495, %v2494
        %v2503 = vpack.c.bf16 %v2497, %v2496
        %v2504 = vpack.c.bf16 %v2499, %v2498
        %v2505 = vpack.c.bf16 %v2501, %v2500
        %v2506 = vpack.c.bf16 %v2492, %v2492
        %v2507 = vld [vmem:[%s3 + $0x19] sm:$0x1]
        %v2508 = vlaneseq
        %v2509 = vshrl.u32 %v2508, 7
        %v2510 = vsub.s32 0, %v2509
        %v2511 = vrot.slane %v2507, %v2510
        %v2513 = vsel %vm281, %v2506, 0
        %2515 = vmatprep.subr.bf16.mxu0 0
        %2516 = vmatpush1.bf16.msra.mxu0 %v2502
        %2517 = vmatprep.subr.bf16.mxu0 0
        %2518 = vmatpush1.bf16.msra.mxu0 %v2503
        %2519 = vmatprep.subr.bf16.mxu0 0
        %2520 = vmatpush1.bf16.msra.mxu0 %v2504
        %2521 = vmatprep.subr.bf16.mxu0 0
        %2522 = vmatpush1.bf16.msra.mxu0 %v2505
        %2523 = vmatprep.subr.bf16.mxu0 0
        %2524 = vmatpush1.bf16.msra.mxu0 0
        %2525 = vmatprep.subr.bf16.mxu0 0
        %2526 = vmatpush1.bf16.msra.mxu0 0
        %2527 = vmatprep.subr.bf16.mxu0 0
        %2528 = vmatpush1.bf16.msra.mxu0 0
        %2529 = vmatprep.subr.bf16.mxu0 0
        %2530 = vmatpush1.bf16.msra.mxu0 0
        %2531 = vmatprep.subr.bf16.mxu0 0
        %2532 = vmatpush1.bf16.msra.mxu0 0
        %2533 = vmatprep.subr.bf16.mxu0 0
        %2534 = vmatpush1.bf16.msra.mxu0 0
        %2535 = vmatprep.subr.bf16.mxu0 0
        %2536 = vmatpush1.bf16.msra.mxu0 0
        %2537 = vmatprep.subr.bf16.mxu0 0
        %2538 = vmatpush1.bf16.msra.mxu0 0
        %2539 = vmatprep.subr.bf16.mxu0 0
        %2540 = vmatpush1.bf16.msra.mxu0 0
        %2541 = vmatprep.subr.bf16.mxu0 0
        %2542 = vmatpush1.bf16.msra.mxu0 0
        %2543 = vmatprep.subr.bf16.mxu0 0
        %2544 = vmatpush1.bf16.msra.mxu0 0
        %2545 = vmatprep.subr.bf16.mxu0 0
        %2546 = vmatpush1.bf16.msra.mxu0 0
        %2547 = vmatprep.mubr.bf16.mxu0 0
        %2548 = vmatmul.mubr.bf16.gmra.mrb[0].mxu0 %v2513
        %v2549 = vpop.f32.mrb[0].mxu0
        %v2550 = vadd.f32 %v2511, %v2549
        %v2551 = vpop.f32.mrb[0].mxu0
        %v2552 = vpop.f32.mrb[0].mxu0
        %v2553 = vpop.f32.mrb[0].mxu0
        %2554 = vdwg.mxu0
        %s2555 = scalar_lea.vmem [#allocation7], 1152
        %v2556 = vld [vmem:[%s2555] sm:$0xff]
        %v2557 = vld [vmem:[%s2555 + $0x8] sm:$0xff]
        %v2558 = vld [vmem:[%s2555 + $0x10] sm:$0xff]
        %v2559 = vld [vmem:[%s2555 + $0x18] sm:$0xff]
        %v2560 = vld [vmem:[%s2555 + $0x20] sm:$0xff]
        %v2561 = vld [vmem:[%s2555 + $0x28] sm:$0xff]
        %v2562 = vld [vmem:[%s2555 + $0x30] sm:$0xff]
        %v2563 = vld [vmem:[%s2555 + $0x38] sm:$0xff]
        %v2564 = vpack.c.bf16 %v2557, %v2556
        %v2565 = vpack.c.bf16 %v2559, %v2558
        %v2566 = vpack.c.bf16 %v2561, %v2560
        %v2567 = vpack.c.bf16 %v2563, %v2562
        %v2568 = vld [vmem:[%s3 + $0x1a] sm:$0x1]
        %v2569 = vlaneseq
        %v2570 = vshrl.u32 %v2569, 7
        %v2571 = vsub.s32 0, %v2570
        %v2572 = vrot.slane %v2568, %v2571
        %2573 = vmatprep.subr.bf16.mxu0 0
        %2574 = vmatpush1.bf16.msra.mxu0 %v2564
        %2575 = vmatprep.subr.bf16.mxu0 0
        %2576 = vmatpush1.bf16.msra.mxu0 %v2565
        %2577 = vmatprep.subr.bf16.mxu0 0
        %2578 = vmatpush1.bf16.msra.mxu0 %v2566
        %2579 = vmatprep.subr.bf16.mxu0 0
        %2580 = vmatpush1.bf16.msra.mxu0 %v2567
        %2581 = vmatprep.subr.bf16.mxu0 0
        %2582 = vmatpush1.bf16.msra.mxu0 0
        %2583 = vmatprep.subr.bf16.mxu0 0
        %2584 = vmatpush1.bf16.msra.mxu0 0
        %2585 = vmatprep.subr.bf16.mxu0 0
        %2586 = vmatpush1.bf16.msra.mxu0 0
        %2587 = vmatprep.subr.bf16.mxu0 0
        %2588 = vmatpush1.bf16.msra.mxu0 0
        %2589 = vmatprep.subr.bf16.mxu0 0
        %2590 = vmatpush1.bf16.msra.mxu0 0
        %2591 = vmatprep.subr.bf16.mxu0 0
        %2592 = vmatpush1.bf16.msra.mxu0 0
        %2593 = vmatprep.subr.bf16.mxu0 0
        %2594 = vmatpush1.bf16.msra.mxu0 0
        %2595 = vmatprep.subr.bf16.mxu0 0
        %2596 = vmatpush1.bf16.msra.mxu0 0
        %2597 = vmatprep.subr.bf16.mxu0 0
        %2598 = vmatpush1.bf16.msra.mxu0 0
        %2599 = vmatprep.subr.bf16.mxu0 0
        %2600 = vmatpush1.bf16.msra.mxu0 0
        %2601 = vmatprep.subr.bf16.mxu0 0
        %2602 = vmatpush1.bf16.msra.mxu0 0
        %2603 = vmatprep.subr.bf16.mxu0 0
        %2604 = vmatpush1.bf16.msra.mxu0 0
        %2605 = vmatprep.mubr.bf16.mxu0 0
        %2606 = vmatmul.mubr.bf16.gmra.mrb[0].mxu0 %v2513
        %v2607 = vpop.f32.mrb[0].mxu0
        %v2608 = vadd.f32 %v2572, %v2607
        %v2609 = vpop.f32.mrb[0].mxu0
        %v2610 = vpop.f32.mrb[0].mxu0
        %v2611 = vpop.f32.mrb[0].mxu0
        %2612 = vdwg.mxu0
        %s2613 = scalar_lea.vmem [#allocation7], 1216
        %v2614 = vld [vmem:[%s2613] sm:$0xff]
        %v2615 = vld [vmem:[%s2613 + $0x8] sm:$0xff]
        %v2616 = vld [vmem:[%s2613 + $0x10] sm:$0xff]
        %v2617 = vld [vmem:[%s2613 + $0x18] sm:$0xff]
        %v2618 = vld [vmem:[%s2613 + $0x20] sm:$0xff]
        %v2619 = vld [vmem:[%s2613 + $0x28] sm:$0xff]
        %v2620 = vld [vmem:[%s2613 + $0x30] sm:$0xff]
        %v2621 = vld [vmem:[%s2613 + $0x38] sm:$0xff]
        %v2622 = vpack.c.bf16 %v2615, %v2614
        %v2623 = vpack.c.bf16 %v2617, %v2616
        %v2624 = vpack.c.bf16 %v2619, %v2618
        %v2625 = vpack.c.bf16 %v2621, %v2620
        %v2626 = vld [vmem:[%s3 + $0x1b] sm:$0x1]
        %v2627 = vlaneseq
        %v2628 = vshrl.u32 %v2627, 7
        %v2629 = vsub.s32 0, %v2628
        %v2630 = vrot.slane %v2626, %v2629
        %2631 = vmatprep.subr.bf16.mxu0 0
        %2632 = vmatpush1.bf16.msra.mxu0 %v2622
        %2633 = vmatprep.subr.bf16.mxu0 0
        %2634 = vmatpush1.bf16.msra.mxu0 %v2623
        %2635 = vmatprep.subr.bf16.mxu0 0
        %2636 = vmatpush1.bf16.msra.mxu0 %v2624
        %2637 = vmatprep.subr.bf16.mxu0 0
        %2638 = vmatpush1.bf16.msra.mxu0 %v2625
        %2639 = vmatprep.subr.bf16.mxu0 0
        %2640 = vmatpush1.bf16.msra.mxu0 0
        %2641 = vmatprep.subr.bf16.mxu0 0
        %2642 = vmatpush1.bf16.msra.mxu0 0
        %2643 = vmatprep.subr.bf16.mxu0 0
        %2644 = vmatpush1.bf16.msra.mxu0 0
        %2645 = vmatprep.subr.bf16.mxu0 0
        %2646 = vmatpush1.bf16.msra.mxu0 0
        %2647 = vmatprep.subr.bf16.mxu0 0
        %2648 = vmatpush1.bf16.msra.mxu0 0
        %2649 = vmatprep.subr.bf16.mxu0 0
        %2650 = vmatpush1.bf16.msra.mxu0 0
        %2651 = vmatprep.subr.bf16.mxu0 0
        %2652 = vmatpush1.bf16.msra.mxu0 0
        %2653 = vmatprep.subr.bf16.mxu0 0
        %2654 = vmatpush1.bf16.msra.mxu0 0
        %2655 = vmatprep.subr.bf16.mxu0 0
        %2656 = vmatpush1.bf16.msra.mxu0 0
        %2657 = vmatprep.subr.bf16.mxu0 0
        %2658 = vmatpush1.bf16.msra.mxu0 0
        %2659 = vmatprep.subr.bf16.mxu0 0
        %2660 = vmatpush1.bf16.msra.mxu0 0
        %2661 = vmatprep.subr.bf16.mxu0 0
        %2662 = vmatpush1.bf16.msra.mxu0 0
        %2663 = vmatprep.mubr.bf16.mxu0 0
        %2664 = vmatmul.mubr.bf16.gmra.mrb[0].mxu0 %v2513
        %v2665 = vpop.f32.mrb[0].mxu0
        %v2666 = vadd.f32 %v2630, %v2665
        %v2667 = vpop.f32.mrb[0].mxu0
        %v2668 = vpop.f32.mrb[0].mxu0
        %v2669 = vpop.f32.mrb[0].mxu0
        %2670 = vdwg.mxu0
        %s2671 = scalar_lea.vmem [#allocation7], 1280
        %v2672 = vld [vmem:[%s2671] sm:$0xff]
        %v2673 = vld [vmem:[%s2671 + $0x8] sm:$0xff]
        %v2674 = vld [vmem:[%s2671 + $0x10] sm:$0xff]
        %v2675 = vld [vmem:[%s2671 + $0x18] sm:$0xff]
        %v2676 = vld [vmem:[%s2671 + $0x20] sm:$0xff]
        %v2677 = vld [vmem:[%s2671 + $0x28] sm:$0xff]
        %v2678 = vld [vmem:[%s2671 + $0x30] sm:$0xff]
        %v2679 = vld [vmem:[%s2671 + $0x38] sm:$0xff]
        %v2680 = vpack.c.bf16 %v2673, %v2672
        %v2681 = vpack.c.bf16 %v2675, %v2674
        %v2682 = vpack.c.bf16 %v2677, %v2676
        %v2683 = vpack.c.bf16 %v2679, %v2678
        %v2684 = vpack.c.bf16 %v2550, %v2550
        %v2685 = vpack.c.bf16 %v2608, %v2608
        %v2687 = vsel %vm698, %v2684, 0
        %v2690 = vsel %vm698, %v2685, 0
        %2692 = vmatprep.subr.bf16.mxu0 0
        %2693 = vmatpush1.bf16.xpose.msra.mxu0 %v2690
        %2694 = vmatprep.subr.bf16.mxu0 0
        %2695 = vmatpush1.bf16.xpose.msra.mxu0 0
        %2696 = vmatprep.subr.bf16.mxu0 0
        %2697 = vmatpush1.bf16.xpose.msra.mxu0 0
        %2698 = vmatprep.subr.bf16.mxu0 0
        %2699 = vmatpush1.bf16.xpose.msra.mxu0 0
        %2700 = vmatprep.subr.bf16.mxu0 0
        %2701 = vmatpush1.bf16.xpose.msra.mxu0 0
        %2702 = vmatprep.subr.bf16.mxu0 0
        %2703 = vmatpush1.bf16.xpose.msra.mxu0 0
        %2704 = vmatprep.subr.bf16.mxu0 0
        %2705 = vmatpush1.bf16.xpose.msra.mxu0 0
        %2706 = vmatprep.subr.bf16.mxu0 0
        %2707 = vmatpush1.bf16.xpose.msra.mxu0 0
        %2708 = vmatprep.subr.bf16.mxu0 0
        %2709 = vmatpush1.bf16.xpose.msra.mxu0 0
        %2710 = vmatprep.subr.bf16.mxu0 0
        %2711 = vmatpush1.bf16.xpose.msra.mxu0 0
        %2712 = vmatprep.subr.bf16.mxu0 0
        %2713 = vmatpush1.bf16.xpose.msra.mxu0 0
        %2714 = vmatprep.subr.bf16.mxu0 0
        %2715 = vmatpush1.bf16.xpose.msra.mxu0 0
        %2716 = vmatprep.subr.bf16.mxu0 0
        %2717 = vmatpush1.bf16.xpose.msra.mxu0 0
        %2718 = vmatprep.subr.bf16.mxu0 0
        %2719 = vmatpush1.bf16.xpose.msra.mxu0 0
        %2720 = vmatprep.subr.bf16.mxu0 0
        %2721 = vmatpush1.bf16.xpose.msra.mxu0 0
        %2722 = vmatprep.subr.bf16.mxu0 0
        %2723 = vmatpush1.bf16.xpose.msra.mxu0 0
        %2724 = vmatprep.mubr.bf16.mxu0 0
        %2725 = vmatmul.mubr.bf16.gmra.mrb[0].mxu0 %v2687
        %v2726 = vpop.f32.mrb[0].mxu0
        %v2727 = vadd.f32 0.0, %v2726
        %v2728 = vpop.f32.mrb[0].mxu0
        %v2729 = vpop.f32.mrb[0].mxu0
        %v2730 = vpop.f32.mrb[0].mxu0
        %2731 = vdwg.mxu0
        %v2732 = vsel %vm745, %v2727, -inf
        %2733 = vmax.xlane.f32.xlu0 %v2732
        %v2734 = vpop.xlane.xlu0 %2733
        %v2735 = vsub.f32 %v2727, %v2734
        %v2736 = vmul.f32 %v2735, 1.442695
        %v2737 = vpow.pop %v2736
        %v2738 = vsel %vm745, %v2737, 0.0
        %2739 = vadd.xlane.f32.xlu0 %v2738
        %v2740 = vpop.xlane.xlu0 %2739
        %v2741 = vrcp.pop %v2740
        %v2742 = vmul.f32 %v2737, %v2741
        %v2743 = vpack.c.bf16 %v2742, %v2742
        %v2744 = vpack.c.bf16 %v2666, %v2666
        %v2746 = vsel %vm745, %v2743, 0
        %v2749 = vsel %vm762, %v2744, 0
        %2751 = vmatprep.subr.bf16.mxu0 0
        %2752 = vmatpush1.bf16.msra.mxu0 %v2749
        %2753 = vmatprep.subr.bf16.mxu0 0
        %2754 = vmatpush1.bf16.msra.mxu0 0
        %2755 = vmatprep.subr.bf16.mxu0 0
        %2756 = vmatpush1.bf16.msra.mxu0 0
        %2757 = vmatprep.subr.bf16.mxu0 0
        %2758 = vmatpush1.bf16.msra.mxu0 0
        %2759 = vmatprep.subr.bf16.mxu0 0
        %2760 = vmatpush1.bf16.msra.mxu0 0
        %2761 = vmatprep.subr.bf16.mxu0 0
        %2762 = vmatpush1.bf16.msra.mxu0 0
        %2763 = vmatprep.subr.bf16.mxu0 0
        %2764 = vmatpush1.bf16.msra.mxu0 0
        %2765 = vmatprep.subr.bf16.mxu0 0
        %2766 = vmatpush1.bf16.msra.mxu0 0
        %2767 = vmatprep.subr.bf16.mxu0 0
        %2768 = vmatpush1.bf16.msra.mxu0 0
        %2769 = vmatprep.subr.bf16.mxu0 0
        %2770 = vmatpush1.bf16.msra.mxu0 0
        %2771 = vmatprep.subr.bf16.mxu0 0
        %2772 = vmatpush1.bf16.msra.mxu0 0
        %2773 = vmatprep.subr.bf16.mxu0 0
        %2774 = vmatpush1.bf16.msra.mxu0 0
        %2775 = vmatprep.subr.bf16.mxu0 0
        %2776 = vmatpush1.bf16.msra.mxu0 0
        %2777 = vmatprep.subr.bf16.mxu0 0
        %2778 = vmatpush1.bf16.msra.mxu0 0
        %2779 = vmatprep.subr.bf16.mxu0 0
        %2780 = vmatpush1.bf16.msra.mxu0 0
        %2781 = vmatprep.subr.bf16.mxu0 0
        %2782 = vmatpush1.bf16.msra.mxu0 0
        %2783 = vmatprep.mubr.bf16.mxu0 0
        %2784 = vmatmul.mubr.bf16.gmra.mrb[0].mxu0 %v2746
        %v2785 = vpop.f32.mrb[0].mxu0
        %v2786 = vadd.f32 0.0, %v2785
        %v2787 = vpop.f32.mrb[0].mxu0
        %v2788 = vpop.f32.mrb[0].mxu0
        %v2789 = vpop.f32.mrb[0].mxu0
        %2790 = vdwg.mxu0
        %v2791 = vpack.c.bf16 %v2786, %v2786
        %2793 = vrot.lane.b32.xlu0 %v2684, 112
        %v2794 = vpop.permute.xlu0 %2793
        %2796 = vrot.lane.b32.xlu0 %v2685, 112
        %v2797 = vpop.permute.xlu0 %2796
        %v2799 = vsel %vm698, %v2794, 0
        %v2802 = vsel %vm698, %v2797, 0
        %2804 = vmatprep.subr.bf16.mxu0 0
        %2805 = vmatpush1.bf16.xpose.msra.mxu0 %v2802
        %2806 = vmatprep.subr.bf16.mxu0 0
        %2807 = vmatpush1.bf16.xpose.msra.mxu0 0
        %2808 = vmatprep.subr.bf16.mxu0 0
        %2809 = vmatpush1.bf16.xpose.msra.mxu0 0
        %2810 = vmatprep.subr.bf16.mxu0 0
        %2811 = vmatpush1.bf16.xpose.msra.mxu0 0
        %2812 = vmatprep.subr.bf16.mxu0 0
        %2813 = vmatpush1.bf16.xpose.msra.mxu0 0
        %2814 = vmatprep.subr.bf16.mxu0 0
        %2815 = vmatpush1.bf16.xpose.msra.mxu0 0
        %2816 = vmatprep.subr.bf16.mxu0 0
        %2817 = vmatpush1.bf16.xpose.msra.mxu0 0
        %2818 = vmatprep.subr.bf16.mxu0 0
        %2819 = vmatpush1.bf16.xpose.msra.mxu0 0
        %2820 = vmatprep.subr.bf16.mxu0 0
        %2821 = vmatpush1.bf16.xpose.msra.mxu0 0
        %2822 = vmatprep.subr.bf16.mxu0 0
        %2823 = vmatpush1.bf16.xpose.msra.mxu0 0
        %2824 = vmatprep.subr.bf16.mxu0 0
        %2825 = vmatpush1.bf16.xpose.msra.mxu0 0
        %2826 = vmatprep.subr.bf16.mxu0 0
        %2827 = vmatpush1.bf16.xpose.msra.mxu0 0
        %2828 = vmatprep.subr.bf16.mxu0 0
        %2829 = vmatpush1.bf16.xpose.msra.mxu0 0
        %2830 = vmatprep.subr.bf16.mxu0 0
        %2831 = vmatpush1.bf16.xpose.msra.mxu0 0
        %2832 = vmatprep.subr.bf16.mxu0 0
        %2833 = vmatpush1.bf16.xpose.msra.mxu0 0
        %2834 = vmatprep.subr.bf16.mxu0 0
        %2835 = vmatpush1.bf16.xpose.msra.mxu0 0
        %2836 = vmatprep.mubr.bf16.mxu0 0
        %2837 = vmatmul.mubr.bf16.gmra.mrb[0].mxu0 %v2799
        %v2838 = vpop.f32.mrb[0].mxu0
        %v2839 = vadd.f32 0.0, %v2838
        %v2840 = vpop.f32.mrb[0].mxu0
        %v2841 = vpop.f32.mrb[0].mxu0
        %v2842 = vpop.f32.mrb[0].mxu0
        %2843 = vdwg.mxu0
        %v2844 = vsel %vm745, %v2839, -inf
        %2845 = vmax.xlane.f32.xlu0 %v2844
        %v2846 = vpop.xlane.xlu0 %2845
        %v2847 = vsub.f32 %v2839, %v2846
        %v2848 = vmul.f32 %v2847, 1.442695
        %v2849 = vpow.pop %v2848
        %v2850 = vsel %vm745, %v2849, 0.0
        %2851 = vadd.xlane.f32.xlu0 %v2850
        %v2852 = vpop.xlane.xlu0 %2851
        %v2853 = vrcp.pop %v2852
        %v2854 = vmul.f32 %v2849, %v2853
        %v2855 = vpack.c.bf16 %v2854, %v2854
        %2857 = vrot.lane.b32.xlu0 %v2744, 112
        %v2858 = vpop.permute.xlu0 %2857
        %v2860 = vsel %vm745, %v2855, 0
        %v2863 = vsel %vm762, %v2858, 0
        %2865 = vmatprep.subr.bf16.mxu0 0
        %2866 = vmatpush1.bf16.msra.mxu0 %v2863
        %2867 = vmatprep.subr.bf16.mxu0 0
        %2868 = vmatpush1.bf16.msra.mxu0 0
        %2869 = vmatprep.subr.bf16.mxu0 0
        %2870 = vmatpush1.bf16.msra.mxu0 0
        %2871 = vmatprep.subr.bf16.mxu0 0
        %2872 = vmatpush1.bf16.msra.mxu0 0
        %2873 = vmatprep.subr.bf16.mxu0 0
        %2874 = vmatpush1.bf16.msra.mxu0 0
        %2875 = vmatprep.subr.bf16.mxu0 0
        %2876 = vmatpush1.bf16.msra.mxu0 0
        %2877 = vmatprep.subr.bf16.mxu0 0
        %2878 = vmatpush1.bf16.msra.mxu0 0
        %2879 = vmatprep.subr.bf16.mxu0 0
        %2880 = vmatpush1.bf16.msra.mxu0 0
        %2881 = vmatprep.subr.bf16.mxu0 0
        %2882 = vmatpush1.bf16.msra.mxu0 0
        %2883 = vmatprep.subr.bf16.mxu0 0
        %2884 = vmatpush1.bf16.msra.mxu0 0
        %2885 = vmatprep.subr.bf16.mxu0 0
        %2886 = vmatpush1.bf16.msra.mxu0 0
        %2887 = vmatprep.subr.bf16.mxu0 0
        %2888 = vmatpush1.bf16.msra.mxu0 0
        %2889 = vmatprep.subr.bf16.mxu0 0
        %2890 = vmatpush1.bf16.msra.mxu0 0
        %2891 = vmatprep.subr.bf16.mxu0 0
        %2892 = vmatpush1.bf16.msra.mxu0 0
        %2893 = vmatprep.subr.bf16.mxu0 0
        %2894 = vmatpush1.bf16.msra.mxu0 0
        %2895 = vmatprep.subr.bf16.mxu0 0
        %2896 = vmatpush1.bf16.msra.mxu0 0
        %2897 = vmatprep.mubr.bf16.mxu0 0
        %2898 = vmatmul.mubr.bf16.gmra.mrb[0].mxu0 %v2860
        %v2899 = vpop.f32.mrb[0].mxu0
        %v2900 = vadd.f32 0.0, %v2899
        %v2901 = vpop.f32.mrb[0].mxu0
        %v2902 = vpop.f32.mrb[0].mxu0
        %v2903 = vpop.f32.mrb[0].mxu0
        %2904 = vdwg.mxu0
        %v2905 = vpack.c.bf16 %v2900, %v2900
        %v2907 = vsel %vm698, %v2905, 0
        %2909 = vmatprep.subr.bf16.mxu0 0
        %2910 = vmatpush1.bf16.msra.mxu0 %v2681
        %2911 = vmatprep.subr.bf16.mxu0 0
        %2912 = vmatpush1.bf16.msra.mxu0 0
        %2913 = vmatprep.subr.bf16.mxu0 0
        %2914 = vmatpush1.bf16.msra.mxu0 0
        %2915 = vmatprep.subr.bf16.mxu0 0
        %2916 = vmatpush1.bf16.msra.mxu0 0
        %2917 = vmatprep.subr.bf16.mxu0 0
        %2918 = vmatpush1.bf16.msra.mxu0 0
        %2919 = vmatprep.subr.bf16.mxu0 0
        %2920 = vmatpush1.bf16.msra.mxu0 0
        %2921 = vmatprep.subr.bf16.mxu0 0
        %2922 = vmatpush1.bf16.msra.mxu0 0
        %2923 = vmatprep.subr.bf16.mxu0 0
        %2924 = vmatpush1.bf16.msra.mxu0 0
        %2925 = vmatprep.subr.bf16.mxu0 0
        %2926 = vmatpush1.bf16.msra.mxu0 0
        %2927 = vmatprep.subr.bf16.mxu0 0
        %2928 = vmatpush1.bf16.msra.mxu0 0
        %2929 = vmatprep.subr.bf16.mxu0 0
        %2930 = vmatpush1.bf16.msra.mxu0 0
        %2931 = vmatprep.subr.bf16.mxu0 0
        %2932 = vmatpush1.bf16.msra.mxu0 0
        %2933 = vmatprep.subr.bf16.mxu0 0
        %2934 = vmatpush1.bf16.msra.mxu0 0
        %2935 = vmatprep.subr.bf16.mxu0 0
        %2936 = vmatpush1.bf16.msra.mxu0 0
        %2937 = vmatprep.subr.bf16.mxu0 0
        %2938 = vmatpush1.bf16.msra.mxu0 0
        %2939 = vmatprep.subr.bf16.mxu0 0
        %2940 = vmatpush1.bf16.msra.mxu0 0
        %2941 = vmatprep.mubr.bf16.mxu0 0
        %2942 = vmatmul.mubr.bf16.gmra.mrb[0].mxu0 %v2907
        %v2943 = vpop.f32.mrb[0].mxu0
        %v2944 = vadd.f32 0.0, %v2943
        %v2945 = vpop.f32.mrb[0].mxu0
        %v2946 = vpop.f32.mrb[0].mxu0
        %v2947 = vpop.f32.mrb[0].mxu0
        %2948 = vdwg.mxu0
        %v2950 = vsel %vm698, %v2791, 0
        %2952 = vmatprep.subr.bf16.mxu0 0
        %2953 = vmatpush1.bf16.msra.mxu0 %v2680
        %2954 = vmatprep.subr.bf16.mxu0 0
        %2955 = vmatpush1.bf16.msra.mxu0 0
        %2956 = vmatprep.subr.bf16.mxu0 0
        %2957 = vmatpush1.bf16.msra.mxu0 0
        %2958 = vmatprep.subr.bf16.mxu0 0
        %2959 = vmatpush1.bf16.msra.mxu0 0
        %2960 = vmatprep.subr.bf16.mxu0 0
        %2961 = vmatpush1.bf16.msra.mxu0 0
        %2962 = vmatprep.subr.bf16.mxu0 0
        %2963 = vmatpush1.bf16.msra.mxu0 0
        %2964 = vmatprep.subr.bf16.mxu0 0
        %2965 = vmatpush1.bf16.msra.mxu0 0
        %2966 = vmatprep.subr.bf16.mxu0 0
        %2967 = vmatpush1.bf16.msra.mxu0 0
        %2968 = vmatprep.subr.bf16.mxu0 0
        %2969 = vmatpush1.bf16.msra.mxu0 0
        %2970 = vmatprep.subr.bf16.mxu0 0
        %2971 = vmatpush1.bf16.msra.mxu0 0
        %2972 = vmatprep.subr.bf16.mxu0 0
        %2973 = vmatpush1.bf16.msra.mxu0 0
        %2974 = vmatprep.subr.bf16.mxu0 0
        %2975 = vmatpush1.bf16.msra.mxu0 0
        %2976 = vmatprep.subr.bf16.mxu0 0
        %2977 = vmatpush1.bf16.msra.mxu0 0
        %2978 = vmatprep.subr.bf16.mxu0 0
        %2979 = vmatpush1.bf16.msra.mxu0 0
        %2980 = vmatprep.subr.bf16.mxu0 0
        %2981 = vmatpush1.bf16.msra.mxu0 0
        %2982 = vmatprep.subr.bf16.mxu0 0
        %2983 = vmatpush1.bf16.msra.mxu0 0
        %2984 = vmatprep.mubr.bf16.mxu0 0
        %2985 = vmatmul.mubr.bf16.gmra.mrb[0].mxu0 %v2950
        %v2986 = vpop.f32.mrb[0].mxu0
        %v2987 = vadd.f32 %v2944, %v2986
        %v2988 = vpop.f32.mrb[0].mxu0
        %v2989 = vpop.f32.mrb[0].mxu0
        %v2990 = vpop.f32.mrb[0].mxu0
        %2991 = vdwg.mxu0
        %2992 = vrot.lane.b32.xlu0 %v2684, 96
        %v2993 = vpop.permute.xlu0 %2992
        %2994 = vrot.lane.b32.xlu0 %v2685, 96
        %v2995 = vpop.permute.xlu0 %2994
        %v2997 = vsel %vm698, %v2993, 0
        %v3000 = vsel %vm698, %v2995, 0
        %3002 = vmatprep.subr.bf16.mxu0 0
        %3003 = vmatpush1.bf16.xpose.msra.mxu0 %v3000
        %3004 = vmatprep.subr.bf16.mxu0 0
        %3005 = vmatpush1.bf16.xpose.msra.mxu0 0
        %3006 = vmatprep.subr.bf16.mxu0 0
        %3007 = vmatpush1.bf16.xpose.msra.mxu0 0
        %3008 = vmatprep.subr.bf16.mxu0 0
        %3009 = vmatpush1.bf16.xpose.msra.mxu0 0
        %3010 = vmatprep.subr.bf16.mxu0 0
        %3011 = vmatpush1.bf16.xpose.msra.mxu0 0
        %3012 = vmatprep.subr.bf16.mxu0 0
        %3013 = vmatpush1.bf16.xpose.msra.mxu0 0
        %3014 = vmatprep.subr.bf16.mxu0 0
        %3015 = vmatpush1.bf16.xpose.msra.mxu0 0
        %3016 = vmatprep.subr.bf16.mxu0 0
        %3017 = vmatpush1.bf16.xpose.msra.mxu0 0
        %3018 = vmatprep.subr.bf16.mxu0 0
        %3019 = vmatpush1.bf16.xpose.msra.mxu0 0
        %3020 = vmatprep.subr.bf16.mxu0 0
        %3021 = vmatpush1.bf16.xpose.msra.mxu0 0
        %3022 = vmatprep.subr.bf16.mxu0 0
        %3023 = vmatpush1.bf16.xpose.msra.mxu0 0
        %3024 = vmatprep.subr.bf16.mxu0 0
        %3025 = vmatpush1.bf16.xpose.msra.mxu0 0
        %3026 = vmatprep.subr.bf16.mxu0 0
        %3027 = vmatpush1.bf16.xpose.msra.mxu0 0
        %3028 = vmatprep.subr.bf16.mxu0 0
        %3029 = vmatpush1.bf16.xpose.msra.mxu0 0
        %3030 = vmatprep.subr.bf16.mxu0 0
        %3031 = vmatpush1.bf16.xpose.msra.mxu0 0
        %3032 = vmatprep.subr.bf16.mxu0 0
        %3033 = vmatpush1.bf16.xpose.msra.mxu0 0
        %3034 = vmatprep.mubr.bf16.mxu0 0
        %3035 = vmatmul.mubr.bf16.gmra.mrb[0].mxu0 %v2997
        %v3036 = vpop.f32.mrb[0].mxu0
        %v3037 = vadd.f32 0.0, %v3036
        %v3038 = vpop.f32.mrb[0].mxu0
        %v3039 = vpop.f32.mrb[0].mxu0
        %v3040 = vpop.f32.mrb[0].mxu0
        %3041 = vdwg.mxu0
        %v3042 = vsel %vm745, %v3037, -inf
        %3043 = vmax.xlane.f32.xlu0 %v3042
        %v3044 = vpop.xlane.xlu0 %3043
        %v3045 = vsub.f32 %v3037, %v3044
        %v3046 = vmul.f32 %v3045, 1.442695
        %v3047 = vpow.pop %v3046
        %v3048 = vsel %vm745, %v3047, 0.0
        %3049 = vadd.xlane.f32.xlu0 %v3048
        %v3050 = vpop.xlane.xlu0 %3049
        %v3051 = vrcp.pop %v3050
        %v3052 = vmul.f32 %v3047, %v3051
        %v3053 = vpack.c.bf16 %v3052, %v3052
        %3054 = vrot.lane.b32.xlu0 %v2744, 96
        %v3055 = vpop.permute.xlu0 %3054
        %v3057 = vsel %vm745, %v3053, 0
        %v3060 = vsel %vm762, %v3055, 0
        %3062 = vmatprep.subr.bf16.mxu0 0
        %3063 = vmatpush1.bf16.msra.mxu0 %v3060
        %3064 = vmatprep.subr.bf16.mxu0 0
        %3065 = vmatpush1.bf16.msra.mxu0 0
        %3066 = vmatprep.subr.bf16.mxu0 0
        %3067 = vmatpush1.bf16.msra.mxu0 0
        %3068 = vmatprep.subr.bf16.mxu0 0
        %3069 = vmatpush1.bf16.msra.mxu0 0
        %3070 = vmatprep.subr.bf16.mxu0 0
        %3071 = vmatpush1.bf16.msra.mxu0 0
        %3072 = vmatprep.subr.bf16.mxu0 0
        %3073 = vmatpush1.bf16.msra.mxu0 0
        %3074 = vmatprep.subr.bf16.mxu0 0
        %3075 = vmatpush1.bf16.msra.mxu0 0
        %3076 = vmatprep.subr.bf16.mxu0 0
        %3077 = vmatpush1.bf16.msra.mxu0 0
        %3078 = vmatprep.subr.bf16.mxu0 0
        %3079 = vmatpush1.bf16.msra.mxu0 0
        %3080 = vmatprep.subr.bf16.mxu0 0
        %3081 = vmatpush1.bf16.msra.mxu0 0
        %3082 = vmatprep.subr.bf16.mxu0 0
        %3083 = vmatpush1.bf16.msra.mxu0 0
        %3084 = vmatprep.subr.bf16.mxu0 0
        %3085 = vmatpush1.bf16.msra.mxu0 0
        %3086 = vmatprep.subr.bf16.mxu0 0
        %3087 = vmatpush1.bf16.msra.mxu0 0
        %3088 = vmatprep.subr.bf16.mxu0 0
        %3089 = vmatpush1.bf16.msra.mxu0 0
        %3090 = vmatprep.subr.bf16.mxu0 0
        %3091 = vmatpush1.bf16.msra.mxu0 0
        %3092 = vmatprep.subr.bf16.mxu0 0
        %3093 = vmatpush1.bf16.msra.mxu0 0
        %3094 = vmatprep.mubr.bf16.mxu0 0
        %3095 = vmatmul.mubr.bf16.gmra.mrb[0].mxu0 %v3057
        %v3096 = vpop.f32.mrb[0].mxu0
        %v3097 = vadd.f32 0.0, %v3096
        %v3098 = vpop.f32.mrb[0].mxu0
        %v3099 = vpop.f32.mrb[0].mxu0
        %v3100 = vpop.f32.mrb[0].mxu0
        %3101 = vdwg.mxu0
        %v3102 = vpack.c.bf16 %v3097, %v3097
        %v3104 = vsel %vm698, %v3102, 0
        %3106 = vmatprep.subr.bf16.mxu0 0
        %3107 = vmatpush1.bf16.msra.mxu0 %v2682
        %3108 = vmatprep.subr.bf16.mxu0 0
        %3109 = vmatpush1.bf16.msra.mxu0 0
        %3110 = vmatprep.subr.bf16.mxu0 0
        %3111 = vmatpush1.bf16.msra.mxu0 0
        %3112 = vmatprep.subr.bf16.mxu0 0
        %3113 = vmatpush1.bf16.msra.mxu0 0
        %3114 = vmatprep.subr.bf16.mxu0 0
        %3115 = vmatpush1.bf16.msra.mxu0 0
        %3116 = vmatprep.subr.bf16.mxu0 0
        %3117 = vmatpush1.bf16.msra.mxu0 0
        %3118 = vmatprep.subr.bf16.mxu0 0
        %3119 = vmatpush1.bf16.msra.mxu0 0
        %3120 = vmatprep.subr.bf16.mxu0 0
        %3121 = vmatpush1.bf16.msra.mxu0 0
        %3122 = vmatprep.subr.bf16.mxu0 0
        %3123 = vmatpush1.bf16.msra.mxu0 0
        %3124 = vmatprep.subr.bf16.mxu0 0
        %3125 = vmatpush1.bf16.msra.mxu0 0
        %3126 = vmatprep.subr.bf16.mxu0 0
        %3127 = vmatpush1.bf16.msra.mxu0 0
        %3128 = vmatprep.subr.bf16.mxu0 0
        %3129 = vmatpush1.bf16.msra.mxu0 0
        %3130 = vmatprep.subr.bf16.mxu0 0
        %3131 = vmatpush1.bf16.msra.mxu0 0
        %3132 = vmatprep.subr.bf16.mxu0 0
        %3133 = vmatpush1.bf16.msra.mxu0 0
        %3134 = vmatprep.subr.bf16.mxu0 0
        %3135 = vmatpush1.bf16.msra.mxu0 0
        %3136 = vmatprep.subr.bf16.mxu0 0
        %3137 = vmatpush1.bf16.msra.mxu0 0
        %3138 = vmatprep.mubr.bf16.mxu0 0
        %3139 = vmatmul.mubr.bf16.gmra.mrb[0].mxu0 %v3104
        %v3140 = vpop.f32.mrb[0].mxu0
        %v3141 = vadd.f32 0.0, %v3140
        %v3142 = vpop.f32.mrb[0].mxu0
        %v3143 = vpop.f32.mrb[0].mxu0
        %v3144 = vpop.f32.mrb[0].mxu0
        %3145 = vdwg.mxu0
        %v3146 = vadd.f32 %v2987, %v3141
        %3147 = vrot.lane.b32.xlu0 %v2684, 80
        %v3148 = vpop.permute.xlu0 %3147
        %3149 = vrot.lane.b32.xlu0 %v2685, 80
        %v3150 = vpop.permute.xlu0 %3149
        %v3152 = vsel %vm698, %v3148, 0
        %v3155 = vsel %vm698, %v3150, 0
        %3157 = vmatprep.subr.bf16.mxu0 0
        %3158 = vmatpush1.bf16.xpose.msra.mxu0 %v3155
        %3159 = vmatprep.subr.bf16.mxu0 0
        %3160 = vmatpush1.bf16.xpose.msra.mxu0 0
        %3161 = vmatprep.subr.bf16.mxu0 0
        %3162 = vmatpush1.bf16.xpose.msra.mxu0 0
        %3163 = vmatprep.subr.bf16.mxu0 0
        %3164 = vmatpush1.bf16.xpose.msra.mxu0 0
        %3165 = vmatprep.subr.bf16.mxu0 0
        %3166 = vmatpush1.bf16.xpose.msra.mxu0 0
        %3167 = vmatprep.subr.bf16.mxu0 0
        %3168 = vmatpush1.bf16.xpose.msra.mxu0 0
        %3169 = vmatprep.subr.bf16.mxu0 0
        %3170 = vmatpush1.bf16.xpose.msra.mxu0 0
        %3171 = vmatprep.subr.bf16.mxu0 0
        %3172 = vmatpush1.bf16.xpose.msra.mxu0 0
        %3173 = vmatprep.subr.bf16.mxu0 0
        %3174 = vmatpush1.bf16.xpose.msra.mxu0 0
        %3175 = vmatprep.subr.bf16.mxu0 0
        %3176 = vmatpush1.bf16.xpose.msra.mxu0 0
        %3177 = vmatprep.subr.bf16.mxu0 0
        %3178 = vmatpush1.bf16.xpose.msra.mxu0 0
        %3179 = vmatprep.subr.bf16.mxu0 0
        %3180 = vmatpush1.bf16.xpose.msra.mxu0 0
        %3181 = vmatprep.subr.bf16.mxu0 0
        %3182 = vmatpush1.bf16.xpose.msra.mxu0 0
        %3183 = vmatprep.subr.bf16.mxu0 0
        %3184 = vmatpush1.bf16.xpose.msra.mxu0 0
        %3185 = vmatprep.subr.bf16.mxu0 0
        %3186 = vmatpush1.bf16.xpose.msra.mxu0 0
        %3187 = vmatprep.subr.bf16.mxu0 0
        %3188 = vmatpush1.bf16.xpose.msra.mxu0 0
        %3189 = vmatprep.mubr.bf16.mxu0 0
        %3190 = vmatmul.mubr.bf16.gmra.mrb[0].mxu0 %v3152
        %v3191 = vpop.f32.mrb[0].mxu0
        %v3192 = vadd.f32 0.0, %v3191
        %v3193 = vpop.f32.mrb[0].mxu0
        %v3194 = vpop.f32.mrb[0].mxu0
        %v3195 = vpop.f32.mrb[0].mxu0
        %3196 = vdwg.mxu0
        %v3197 = vsel %vm745, %v3192, -inf
        %3198 = vmax.xlane.f32.xlu0 %v3197
        %v3199 = vpop.xlane.xlu0 %3198
        %v3200 = vsub.f32 %v3192, %v3199
        %v3201 = vmul.f32 %v3200, 1.442695
        %v3202 = vpow.pop %v3201
        %v3203 = vsel %vm745, %v3202, 0.0
        %3204 = vadd.xlane.f32.xlu0 %v3203
        %v3205 = vpop.xlane.xlu0 %3204
        %v3206 = vrcp.pop %v3205
        %v3207 = vmul.f32 %v3202, %v3206
        %v3208 = vpack.c.bf16 %v3207, %v3207
        %3209 = vrot.lane.b32.xlu0 %v2744, 80
        %v3210 = vpop.permute.xlu0 %3209
        %v3212 = vsel %vm745, %v3208, 0
        %v3215 = vsel %vm762, %v3210, 0
        %3217 = vmatprep.subr.bf16.mxu0 0
        %3218 = vmatpush1.bf16.msra.mxu0 %v3215
        %3219 = vmatprep.subr.bf16.mxu0 0
        %3220 = vmatpush1.bf16.msra.mxu0 0
        %3221 = vmatprep.subr.bf16.mxu0 0
        %3222 = vmatpush1.bf16.msra.mxu0 0
        %3223 = vmatprep.subr.bf16.mxu0 0
        %3224 = vmatpush1.bf16.msra.mxu0 0
        %3225 = vmatprep.subr.bf16.mxu0 0
        %3226 = vmatpush1.bf16.msra.mxu0 0
        %3227 = vmatprep.subr.bf16.mxu0 0
        %3228 = vmatpush1.bf16.msra.mxu0 0
        %3229 = vmatprep.subr.bf16.mxu0 0
        %3230 = vmatpush1.bf16.msra.mxu0 0
        %3231 = vmatprep.subr.bf16.mxu0 0
        %3232 = vmatpush1.bf16.msra.mxu0 0
        %3233 = vmatprep.subr.bf16.mxu0 0
        %3234 = vmatpush1.bf16.msra.mxu0 0
        %3235 = vmatprep.subr.bf16.mxu0 0
        %3236 = vmatpush1.bf16.msra.mxu0 0
        %3237 = vmatprep.subr.bf16.mxu0 0
        %3238 = vmatpush1.bf16.msra.mxu0 0
        %3239 = vmatprep.subr.bf16.mxu0 0
        %3240 = vmatpush1.bf16.msra.mxu0 0
        %3241 = vmatprep.subr.bf16.mxu0 0
        %3242 = vmatpush1.bf16.msra.mxu0 0
        %3243 = vmatprep.subr.bf16.mxu0 0
        %3244 = vmatpush1.bf16.msra.mxu0 0
        %3245 = vmatprep.subr.bf16.mxu0 0
        %3246 = vmatpush1.bf16.msra.mxu0 0
        %3247 = vmatprep.subr.bf16.mxu0 0
        %3248 = vmatpush1.bf16.msra.mxu0 0
        %3249 = vmatprep.mubr.bf16.mxu0 0
        %3250 = vmatmul.mubr.bf16.gmra.mrb[0].mxu0 %v3212
        %v3251 = vpop.f32.mrb[0].mxu0
        %v3252 = vadd.f32 0.0, %v3251
        %v3253 = vpop.f32.mrb[0].mxu0
        %v3254 = vpop.f32.mrb[0].mxu0
        %v3255 = vpop.f32.mrb[0].mxu0
        %3256 = vdwg.mxu0
        %v3257 = vpack.c.bf16 %v3252, %v3252
        %v3259 = vsel %vm698, %v3257, 0
        %3261 = vmatprep.subr.bf16.mxu0 0
        %3262 = vmatpush1.bf16.msra.mxu0 %v2683
        %3263 = vmatprep.subr.bf16.mxu0 0
        %3264 = vmatpush1.bf16.msra.mxu0 0
        %3265 = vmatprep.subr.bf16.mxu0 0
        %3266 = vmatpush1.bf16.msra.mxu0 0
        %3267 = vmatprep.subr.bf16.mxu0 0
        %3268 = vmatpush1.bf16.msra.mxu0 0
        %3269 = vmatprep.subr.bf16.mxu0 0
        %3270 = vmatpush1.bf16.msra.mxu0 0
        %3271 = vmatprep.subr.bf16.mxu0 0
        %3272 = vmatpush1.bf16.msra.mxu0 0
        %3273 = vmatprep.subr.bf16.mxu0 0
        %3274 = vmatpush1.bf16.msra.mxu0 0
        %3275 = vmatprep.subr.bf16.mxu0 0
        %3276 = vmatpush1.bf16.msra.mxu0 0
        %3277 = vmatprep.subr.bf16.mxu0 0
        %3278 = vmatpush1.bf16.msra.mxu0 0
        %3279 = vmatprep.subr.bf16.mxu0 0
        %3280 = vmatpush1.bf16.msra.mxu0 0
        %3281 = vmatprep.subr.bf16.mxu0 0
        %3282 = vmatpush1.bf16.msra.mxu0 0
        %3283 = vmatprep.subr.bf16.mxu0 0
        %3284 = vmatpush1.bf16.msra.mxu0 0
        %3285 = vmatprep.subr.bf16.mxu0 0
        %3286 = vmatpush1.bf16.msra.mxu0 0
        %3287 = vmatprep.subr.bf16.mxu0 0
        %3288 = vmatpush1.bf16.msra.mxu0 0
        %3289 = vmatprep.subr.bf16.mxu0 0
        %3290 = vmatpush1.bf16.msra.mxu0 0
        %3291 = vmatprep.subr.bf16.mxu0 0
        %3292 = vmatpush1.bf16.msra.mxu0 0
        %3293 = vmatprep.mubr.bf16.mxu0 0
        %3294 = vmatmul.mubr.bf16.gmra.mrb[0].mxu0 %v3259
        %v3295 = vpop.f32.mrb[0].mxu0
        %v3296 = vadd.f32 0.0, %v3295
        %v3297 = vpop.f32.mrb[0].mxu0
        %v3298 = vpop.f32.mrb[0].mxu0
        %v3299 = vpop.f32.mrb[0].mxu0
        %3300 = vdwg.mxu0
        %v3301 = vadd.f32 %v3146, %v3296
        %v3302 = vld [vmem:[%s3 + $0x1c] sm:$0x1]
        %v3303 = vlaneseq
        %v3304 = vshrl.u32 %v3303, 7
        %v3305 = vsub.s32 0, %v3304
        %v3306 = vrot.slane %v3302, %v3305
        %v3307 = vadd.f32 %v3301, %v3306
        %v3308 = vadd.f32 %v2492, %v3307
        %v3309 = vsel %vm281, %v3308, 0.0
        %3310 = vadd.xlane.f32.xlu0 %v3309
        %v3311 = vpop.xlane.xlu0 %3310
        %v3312 = vmul.f32 %v3311, %v1327
        %v3313 = vsub.f32 %v3308, %v3312
        %v3314 = vmul.f32 %v3313, %v3313
        %v3315 = vsel %vm281, %v3314, 0.0
        %3316 = vadd.xlane.f32.xlu0 %v3315
        %v3317 = vpop.xlane.xlu0 %3316
        %v3318 = vmul.f32 %v3317, %v1327
        %v3319 = vadd.f32 %v3318, 1e-05
        %v3320 = vrsqrt.pop %v3319
        %v3321 = vmul.f32 %v3313, %v3320
        %v3322 = vld [vmem:[%s3 + $0x1f] sm:$0x1]
        %v3323 = vlaneseq
        %v3324 = vshrl.u32 %v3323, 7
        %v3325 = vsub.s32 0, %v3324
        %v3326 = vrot.slane %v3322, %v3325
        %v3327 = vmul.f32 %v3321, %v3326
        %v3328 = vld [vmem:[%s3 + $0x20] sm:$0x1]
        %v3329 = vlaneseq
        %v3330 = vshrl.u32 %v3329, 7
        %v3331 = vsub.s32 0, %v3330
        %v3332 = vrot.slane %v3328, %v3331
        %v3333 = vadd.f32 %v3327, %v3332
        %s3334 = scalar_lea.vmem [#allocation7], 1344
        %v3335 = vld [vmem:[%s3334] sm:$0xff]
        %v3336 = vld [vmem:[%s3334 + $0x8] sm:$0xff]
        %v3337 = vld [vmem:[%s3334 + $0x10] sm:$0xff]
        %v3338 = vld [vmem:[%s3334 + $0x18] sm:$0xff]
        %v3339 = vld [vmem:[%s3334 + $0x20] sm:$0xff]
        %v3340 = vld [vmem:[%s3334 + $0x28] sm:$0xff]
        %v3341 = vld [vmem:[%s3334 + $0x30] sm:$0xff]
        %v3342 = vld [vmem:[%s3334 + $0x38] sm:$0xff]
        %v3343 = vpack.c.bf16 %v3336, %v3335
        %v3344 = vpack.c.bf16 %v3338, %v3337
        %v3345 = vpack.c.bf16 %v3340, %v3339
        %v3346 = vpack.c.bf16 %v3342, %v3341
        %v3347 = vpack.c.bf16 %v3333, %v3333
        %v3348 = vld [vmem:[%s3 + $0x1d] sm:$0x1]
        %v3349 = vlaneseq
        %v3350 = vshrl.u32 %v3349, 7
        %v3351 = vsub.s32 0, %v3350
        %v3352 = vrot.slane %v3348, %v3351
        %v3354 = vsel %vm281, %v3347, 0
        %3356 = vmatprep.subr.bf16.mxu0 0
        %3357 = vmatpush1.bf16.msra.mxu0 %v3343
        %3358 = vmatprep.subr.bf16.mxu0 0
        %3359 = vmatpush1.bf16.msra.mxu0 %v3344
        %3360 = vmatprep.subr.bf16.mxu0 0
        %3361 = vmatpush1.bf16.msra.mxu0 %v3345
        %3362 = vmatprep.subr.bf16.mxu0 0
        %3363 = vmatpush1.bf16.msra.mxu0 %v3346
        %3364 = vmatprep.subr.bf16.mxu0 0
        %3365 = vmatpush1.bf16.msra.mxu0 0
        %3366 = vmatprep.subr.bf16.mxu0 0
        %3367 = vmatpush1.bf16.msra.mxu0 0
        %3368 = vmatprep.subr.bf16.mxu0 0
        %3369 = vmatpush1.bf16.msra.mxu0 0
        %3370 = vmatprep.subr.bf16.mxu0 0
        %3371 = vmatpush1.bf16.msra.mxu0 0
        %3372 = vmatprep.subr.bf16.mxu0 0
        %3373 = vmatpush1.bf16.msra.mxu0 0
        %3374 = vmatprep.subr.bf16.mxu0 0
        %3375 = vmatpush1.bf16.msra.mxu0 0
        %3376 = vmatprep.subr.bf16.mxu0 0
        %3377 = vmatpush1.bf16.msra.mxu0 0
        %3378 = vmatprep.subr.bf16.mxu0 0
        %3379 = vmatpush1.bf16.msra.mxu0 0
        %3380 = vmatprep.subr.bf16.mxu0 0
        %3381 = vmatpush1.bf16.msra.mxu0 0
        %3382 = vmatprep.subr.bf16.mxu0 0
        %3383 = vmatpush1.bf16.msra.mxu0 0
        %3384 = vmatprep.subr.bf16.mxu0 0
        %3385 = vmatpush1.bf16.msra.mxu0 0
        %3386 = vmatprep.subr.bf16.mxu0 0
        %3387 = vmatpush1.bf16.msra.mxu0 0
        %3388 = vmatprep.mubr.bf16.mxu0 0
        %3389 = vmatmul.mubr.bf16.gmra.mrb[0].mxu0 %v3354
        %v3390 = vpop.f32.mrb[0].mxu0
        %v3391 = vadd.f32 %v3352, %v3390
        %v3392 = vpop.f32.mrb[0].mxu0
        %v3393 = vpop.f32.mrb[0].mxu0
        %v3394 = vpop.f32.mrb[0].mxu0
        %3395 = vdwg.mxu0
        %v3396 = vmax.f32 %v3391, 0.0
        %s3397 = scalar_lea.vmem [#allocation7], 1408
        %v3398 = vld [vmem:[%s3397] sm:$0xff]
        %v3399 = vld [vmem:[%s3397 + $0x8] sm:$0xff]
        %v3400 = vld [vmem:[%s3397 + $0x10] sm:$0xff]
        %v3401 = vld [vmem:[%s3397 + $0x18] sm:$0xff]
        %v3402 = vld [vmem:[%s3397 + $0x20] sm:$0xff]
        %v3403 = vld [vmem:[%s3397 + $0x28] sm:$0xff]
        %v3404 = vld [vmem:[%s3397 + $0x30] sm:$0xff]
        %v3405 = vld [vmem:[%s3397 + $0x38] sm:$0xff]
        %v3406 = vpack.c.bf16 %v3399, %v3398
        %v3407 = vpack.c.bf16 %v3401, %v3400
        %v3408 = vpack.c.bf16 %v3403, %v3402
        %v3409 = vpack.c.bf16 %v3405, %v3404
        %v3410 = vpack.c.bf16 %v3396, %v3396
        %v3411 = vld [vmem:[%s3 + $0x1e] sm:$0x1]
        %v3412 = vlaneseq
        %v3413 = vshrl.u32 %v3412, 7
        %v3414 = vsub.s32 0, %v3413
        %v3415 = vrot.slane %v3411, %v3414
        %v3417 = vsel %vm281, %v3410, 0
        %3419 = vmatprep.subr.bf16.mxu0 0
        %3420 = vmatpush1.bf16.msra.mxu0 %v3406
        %3421 = vmatprep.subr.bf16.mxu0 0
        %3422 = vmatpush1.bf16.msra.mxu0 %v3407
        %3423 = vmatprep.subr.bf16.mxu0 0
        %3424 = vmatpush1.bf16.msra.mxu0 %v3408
        %3425 = vmatprep.subr.bf16.mxu0 0
        %3426 = vmatpush1.bf16.msra.mxu0 %v3409
        %3427 = vmatprep.subr.bf16.mxu0 0
        %3428 = vmatpush1.bf16.msra.mxu0 0
        %3429 = vmatprep.subr.bf16.mxu0 0
        %3430 = vmatpush1.bf16.msra.mxu0 0
        %3431 = vmatprep.subr.bf16.mxu0 0
        %3432 = vmatpush1.bf16.msra.mxu0 0
        %3433 = vmatprep.subr.bf16.mxu0 0
        %3434 = vmatpush1.bf16.msra.mxu0 0
        %3435 = vmatprep.subr.bf16.mxu0 0
        %3436 = vmatpush1.bf16.msra.mxu0 0
        %3437 = vmatprep.subr.bf16.mxu0 0
        %3438 = vmatpush1.bf16.msra.mxu0 0
        %3439 = vmatprep.subr.bf16.mxu0 0
        %3440 = vmatpush1.bf16.msra.mxu0 0
        %3441 = vmatprep.subr.bf16.mxu0 0
        %3442 = vmatpush1.bf16.msra.mxu0 0
        %3443 = vmatprep.subr.bf16.mxu0 0
        %3444 = vmatpush1.bf16.msra.mxu0 0
        %3445 = vmatprep.subr.bf16.mxu0 0
        %3446 = vmatpush1.bf16.msra.mxu0 0
        %3447 = vmatprep.subr.bf16.mxu0 0
        %3448 = vmatpush1.bf16.msra.mxu0 0
        %3449 = vmatprep.subr.bf16.mxu0 0
        %3450 = vmatpush1.bf16.msra.mxu0 0
        %3451 = vmatprep.mubr.bf16.mxu0 0
        %3452 = vmatmul.mubr.bf16.gmra.mrb[0].mxu0 %v3417
        %v3453 = vpop.f32.mrb[0].mxu0
        %v3454 = vadd.f32 %v3415, %v3453
        %v3455 = vpop.f32.mrb[0].mxu0
        %v3456 = vpop.f32.mrb[0].mxu0
        %v3457 = vpop.f32.mrb[0].mxu0
        %3458 = vdwg.mxu0
        %v3459 = vadd.f32 %v3333, %v3454
        %v3460 = vsel %vm281, %v3459, 0.0
        %3461 = vadd.xlane.f32.xlu0 %v3460
        %v3462 = vpop.xlane.xlu0 %3461
        %v3463 = vmul.f32 %v3462, %v1327
        %v3464 = vsub.f32 %v3459, %v3463
        %v3465 = vmul.f32 %v3464, %v3464
        %v3466 = vsel %vm281, %v3465, 0.0
        %3467 = vadd.xlane.f32.xlu0 %v3466
        %v3468 = vpop.xlane.xlu0 %3467
        %v3469 = vmul.f32 %v3468, %v1327
        %v3470 = vadd.f32 %v3469, 1e-05
        %v3471 = vrsqrt.pop %v3470
        %v3472 = vmul.f32 %v3464, %v3471
        %v3473 = vld [vmem:[%s3 + $0x21] sm:$0x1]
        %v3474 = vlaneseq
        %v3475 = vshrl.u32 %v3474, 7
        %v3476 = vsub.s32 0, %v3475
        %v3477 = vrot.slane %v3473, %v3476
        %v3478 = vmul.f32 %v3472, %v3477
        %v3479 = vld [vmem:[%s3 + $0x22] sm:$0x1]
        %v3480 = vlaneseq
        %v3481 = vshrl.u32 %v3480, 7
        %v3482 = vsub.s32 0, %v3481
        %v3483 = vrot.slane %v3479, %v3482
        %v3484 = vadd.f32 %v3478, %v3483
        %v3485 = vsel %vm281, %v3484, 0.0
        %3486 = vadd.xlane.f32.xlu0 %v3485
        %v3487 = vpop.xlane.xlu0 %3486
        %v3488 = vmul.f32 %v3487, %v1327
        %v3489 = vsub.f32 %v3484, %v3488
        %v3490 = vmul.f32 %v3489, %v3489
        %v3491 = vsel %vm281, %v3490, 0.0
        %3492 = vadd.xlane.f32.xlu0 %v3491
        %v3493 = vpop.xlane.xlu0 %3492
        %v3494 = vmul.f32 %v3493, %v1327
        %v3495 = vadd.f32 %v3494, 1e-05
        %v3496 = vrsqrt.pop %v3495
        %v3497 = vmul.f32 %v3489, %v3496
        %v3498 = vld [vmem:[%s3 + $0x23] sm:$0x1]
        %v3499 = vlaneseq
        %v3500 = vshrl.u32 %v3499, 7
        %v3501 = vsub.s32 0, %v3500
        %v3502 = vrot.slane %v3498, %v3501
        %v3503 = vmul.f32 %v3497, %v3502
        %v3504 = vld [vmem:[%s3 + $0x24] sm:$0x1]
        %v3505 = vlaneseq
        %v3506 = vshrl.u32 %v3505, 7
        %v3507 = vsub.s32 0, %v3506
        %v3508 = vrot.slane %v3504, %v3507
        %v3509 = vadd.f32 %v3503, %v3508
        %s3510 = scalar_lea.vmem [#allocation7], 1472
        %v3511 = vld [vmem:[%s3510] sm:$0xff]
        %v3512 = vld [vmem:[%s3510 + $0x8] sm:$0xff]
        %v3513 = vld [vmem:[%s3510 + $0x10] sm:$0xff]
        %v3514 = vld [vmem:[%s3510 + $0x18] sm:$0xff]
        %v3515 = vld [vmem:[%s3510 + $0x20] sm:$0xff]
        %v3516 = vld [vmem:[%s3510 + $0x28] sm:$0xff]
        %v3517 = vld [vmem:[%s3510 + $0x30] sm:$0xff]
        %v3518 = vld [vmem:[%s3510 + $0x38] sm:$0xff]
        %v3519 = vpack.c.bf16 %v3512, %v3511
        %v3520 = vpack.c.bf16 %v3514, %v3513
        %v3521 = vpack.c.bf16 %v3516, %v3515
        %v3522 = vpack.c.bf16 %v3518, %v3517
        %v3523 = vpack.c.bf16 %v500, %v500
        %v3524 = vld [vmem:[%s3 + $0x25] sm:$0x1]
        %v3526 = vsel %vm281, %v3523, 0
        %3528 = vmatprep.subr.bf16.mxu0 0
        %3529 = vmatpush1.bf16.msra.mxu0 %v3519
        %3530 = vmatprep.subr.bf16.mxu0 0
        %3531 = vmatpush1.bf16.msra.mxu0 %v3520
        %3532 = vmatprep.subr.bf16.mxu0 0
        %3533 = vmatpush1.bf16.msra.mxu0 %v3521
        %3534 = vmatprep.subr.bf16.mxu0 0
        %3535 = vmatpush1.bf16.msra.mxu0 %v3522
        %3536 = vmatprep.subr.bf16.mxu0 0
        %3537 = vmatpush1.bf16.msra.mxu0 0
        %3538 = vmatprep.subr.bf16.mxu0 0
        %3539 = vmatpush1.bf16.msra.mxu0 0
        %3540 = vmatprep.subr.bf16.mxu0 0
        %3541 = vmatpush1.bf16.msra.mxu0 0
        %3542 = vmatprep.subr.bf16.mxu0 0
        %3543 = vmatpush1.bf16.msra.mxu0 0
        %3544 = vmatprep.subr.bf16.mxu0 0
        %3545 = vmatpush1.bf16.msra.mxu0 0
        %3546 = vmatprep.subr.bf16.mxu0 0
        %3547 = vmatpush1.bf16.msra.mxu0 0
        %3548 = vmatprep.subr.bf16.mxu0 0
        %3549 = vmatpush1.bf16.msra.mxu0 0
        %3550 = vmatprep.subr.bf16.mxu0 0
        %3551 = vmatpush1.bf16.msra.mxu0 0
        %3552 = vmatprep.subr.bf16.mxu0 0
        %3553 = vmatpush1.bf16.msra.mxu0 0
        %3554 = vmatprep.subr.bf16.mxu0 0
        %3555 = vmatpush1.bf16.msra.mxu0 0
        %3556 = vmatprep.subr.bf16.mxu0 0
        %3557 = vmatpush1.bf16.msra.mxu0 0
        %3558 = vmatprep.subr.bf16.mxu0 0
        %3559 = vmatpush1.bf16.msra.mxu0 0
        %3560 = vmatprep.mubr.bf16.mxu0 0
        %3561 = vmatmul.mubr.bf16.gmra.mrb[0].mxu0 %v3526
        %v3562 = vpop.f32.mrb[0].mxu0
        %v3563 = vadd.f32 %v3524, %v3562
        %v3564 = vpop.f32.mrb[0].mxu0
        %v3565 = vpop.f32.mrb[0].mxu0
        %v3566 = vpop.f32.mrb[0].mxu0
        %3567 = vdwg.mxu0
        %s3568 = scalar_lea.vmem [#allocation7], 1536
        %v3569 = vld [vmem:[%s3568] sm:$0xff]
        %v3570 = vld [vmem:[%s3568 + $0x8] sm:$0xff]
        %v3571 = vld [vmem:[%s3568 + $0x10] sm:$0xff]
        %v3572 = vld [vmem:[%s3568 + $0x18] sm:$0xff]
        %v3573 = vld [vmem:[%s3568 + $0x20] sm:$0xff]
        %v3574 = vld [vmem:[%s3568 + $0x28] sm:$0xff]
        %v3575 = vld [vmem:[%s3568 + $0x30] sm:$0xff]
        %v3576 = vld [vmem:[%s3568 + $0x38] sm:$0xff]
        %v3577 = vpack.c.bf16 %v3570, %v3569
        %v3578 = vpack.c.bf16 %v3572, %v3571
        %v3579 = vpack.c.bf16 %v3574, %v3573
        %v3580 = vpack.c.bf16 %v3576, %v3575
        %v3581 = vpack.c.bf16 %v3563, %v3563
        %v3582 = vld [vmem:[%s3 + $0x26] sm:$0x1]
        %v3584 = vsel %vm281, %v3581, 0
        %3586 = vmatprep.subr.bf16.mxu0 0
        %3587 = vmatpush1.bf16.msra.mxu0 %v3577
        %3588 = vmatprep.subr.bf16.mxu0 0
        %3589 = vmatpush1.bf16.msra.mxu0 %v3578
        %3590 = vmatprep.subr.bf16.mxu0 0
        %3591 = vmatpush1.bf16.msra.mxu0 %v3579
        %3592 = vmatprep.subr.bf16.mxu0 0
        %3593 = vmatpush1.bf16.msra.mxu0 %v3580
        %3594 = vmatprep.subr.bf16.mxu0 0
        %3595 = vmatpush1.bf16.msra.mxu0 0
        %3596 = vmatprep.subr.bf16.mxu0 0
        %3597 = vmatpush1.bf16.msra.mxu0 0
        %3598 = vmatprep.subr.bf16.mxu0 0
        %3599 = vmatpush1.bf16.msra.mxu0 0
        %3600 = vmatprep.subr.bf16.mxu0 0
        %3601 = vmatpush1.bf16.msra.mxu0 0
        %3602 = vmatprep.subr.bf16.mxu0 0
        %3603 = vmatpush1.bf16.msra.mxu0 0
        %3604 = vmatprep.subr.bf16.mxu0 0
        %3605 = vmatpush1.bf16.msra.mxu0 0
        %3606 = vmatprep.subr.bf16.mxu0 0
        %3607 = vmatpush1.bf16.msra.mxu0 0
        %3608 = vmatprep.subr.bf16.mxu0 0
        %3609 = vmatpush1.bf16.msra.mxu0 0
        %3610 = vmatprep.subr.bf16.mxu0 0
        %3611 = vmatpush1.bf16.msra.mxu0 0
        %3612 = vmatprep.subr.bf16.mxu0 0
        %3613 = vmatpush1.bf16.msra.mxu0 0
        %3614 = vmatprep.subr.bf16.mxu0 0
        %3615 = vmatpush1.bf16.msra.mxu0 0
        %3616 = vmatprep.subr.bf16.mxu0 0
        %3617 = vmatpush1.bf16.msra.mxu0 0
        %3618 = vmatprep.mubr.bf16.mxu0 0
        %3619 = vmatmul.mubr.bf16.gmra.mrb[0].mxu0 %v3584
        %v3620 = vpop.f32.mrb[0].mxu0
        %v3621 = vadd.f32 %v3582, %v3620
        %v3622 = vpop.f32.mrb[0].mxu0
        %v3623 = vpop.f32.mrb[0].mxu0
        %v3624 = vpop.f32.mrb[0].mxu0
        %3625 = vdwg.mxu0
        %v3626 = vadd.f32 %v500, %v3621
        %vm3627 = vcmask 516096
        %v3628 = vsel %vm3627, %v3626, 0.0
        %3629 = vadd.xlane.f32.xlu0 %v3628
        %v3630 = vpop.xlane.xlu0 %3629
        %v3631 = vmul.f32 %v3630, %v1327
        %v3632 = vsub.f32 %v3626, %v3631
        %v3633 = vmul.f32 %v3632, %v3632
        %v3634 = vsel %vm3627, %v3633, 0.0
        %3635 = vadd.xlane.f32.xlu0 %v3634
        %v3636 = vpop.xlane.xlu0 %3635
        %v3637 = vmul.f32 %v3636, %v1327
        %v3638 = vadd.f32 %v3637, 1e-05
        %v3639 = vrsqrt.pop %v3638
        %v3640 = vmul.f32 %v3632, %v3639
        %v3641 = vld [vmem:[%s3 + $0x2d] sm:$0x1]
        %v3642 = vmul.f32 %v3640, %v3641
        %v3643 = vld [vmem:[%s3 + $0x2e] sm:$0x1]
        %v3644 = vadd.f32 %v3642, %v3643
        %s3645 = scalar_lea.vmem [#allocation7], 1600
        %v3646 = vld [vmem:[%s3645] sm:$0xff]
        %v3647 = vld [vmem:[%s3645 + $0x8] sm:$0xff]
        %v3648 = vld [vmem:[%s3645 + $0x10] sm:$0xff]
        %v3649 = vld [vmem:[%s3645 + $0x18] sm:$0xff]
        %v3650 = vld [vmem:[%s3645 + $0x20] sm:$0xff]
        %v3651 = vld [vmem:[%s3645 + $0x28] sm:$0xff]
        %v3652 = vld [vmem:[%s3645 + $0x30] sm:$0xff]
        %v3653 = vld [vmem:[%s3645 + $0x38] sm:$0xff]
        %v3654 = vpack.c.bf16 %v3647, %v3646
        %v3655 = vpack.c.bf16 %v3649, %v3648
        %v3656 = vpack.c.bf16 %v3651, %v3650
        %v3657 = vpack.c.bf16 %v3653, %v3652
        %v3658 = vpack.c.bf16 %v3644, %v3644
        %v3659 = vld [vmem:[%s3 + $0x27] sm:$0x1]
        %v3661 = vsel %vm281, %v3658, 0
        %3663 = vmatprep.subr.bf16.mxu0 0
        %3664 = vmatpush1.bf16.msra.mxu0 %v3654
        %3665 = vmatprep.subr.bf16.mxu0 0
        %3666 = vmatpush1.bf16.msra.mxu0 %v3655
        %3667 = vmatprep.subr.bf16.mxu0 0
        %3668 = vmatpush1.bf16.msra.mxu0 %v3656
        %3669 = vmatprep.subr.bf16.mxu0 0
        %3670 = vmatpush1.bf16.msra.mxu0 %v3657
        %3671 = vmatprep.subr.bf16.mxu0 0
        %3672 = vmatpush1.bf16.msra.mxu0 0
        %3673 = vmatprep.subr.bf16.mxu0 0
        %3674 = vmatpush1.bf16.msra.mxu0 0
        %3675 = vmatprep.subr.bf16.mxu0 0
        %3676 = vmatpush1.bf16.msra.mxu0 0
        %3677 = vmatprep.subr.bf16.mxu0 0
        %3678 = vmatpush1.bf16.msra.mxu0 0
        %3679 = vmatprep.subr.bf16.mxu0 0
        %3680 = vmatpush1.bf16.msra.mxu0 0
        %3681 = vmatprep.subr.bf16.mxu0 0
        %3682 = vmatpush1.bf16.msra.mxu0 0
        %3683 = vmatprep.subr.bf16.mxu0 0
        %3684 = vmatpush1.bf16.msra.mxu0 0
        %3685 = vmatprep.subr.bf16.mxu0 0
        %3686 = vmatpush1.bf16.msra.mxu0 0
        %3687 = vmatprep.subr.bf16.mxu0 0
        %3688 = vmatpush1.bf16.msra.mxu0 0
        %3689 = vmatprep.subr.bf16.mxu0 0
        %3690 = vmatpush1.bf16.msra.mxu0 0
        %3691 = vmatprep.subr.bf16.mxu0 0
        %3692 = vmatpush1.bf16.msra.mxu0 0
        %3693 = vmatprep.subr.bf16.mxu0 0
        %3694 = vmatpush1.bf16.msra.mxu0 0
        %3695 = vmatprep.mubr.bf16.mxu0 0
        %3696 = vmatmul.mubr.bf16.gmra.mrb[0].mxu0 %v3661
        %v3697 = vpop.f32.mrb[0].mxu0
        %v3698 = vadd.f32 %v3659, %v3697
        %v3699 = vpop.f32.mrb[0].mxu0
        %v3700 = vpop.f32.mrb[0].mxu0
        %v3701 = vpop.f32.mrb[0].mxu0
        %3702 = vdwg.mxu0
        %s3703 = scalar_lea.vmem [#allocation7], 1664
        %v3704 = vld [vmem:[%s3703] sm:$0xff]
        %v3705 = vld [vmem:[%s3703 + $0x8] sm:$0xff]
        %v3706 = vld [vmem:[%s3703 + $0x10] sm:$0xff]
        %v3707 = vld [vmem:[%s3703 + $0x18] sm:$0xff]
        %v3708 = vld [vmem:[%s3703 + $0x20] sm:$0xff]
        %v3709 = vld [vmem:[%s3703 + $0x28] sm:$0xff]
        %v3710 = vld [vmem:[%s3703 + $0x30] sm:$0xff]
        %v3711 = vld [vmem:[%s3703 + $0x38] sm:$0xff]
        %v3712 = vpack.c.bf16 %v3705, %v3704
        %v3713 = vpack.c.bf16 %v3707, %v3706
        %v3714 = vpack.c.bf16 %v3709, %v3708
        %v3715 = vpack.c.bf16 %v3711, %v3710
        %v3716 = vpack.c.bf16 %v3509, %v3509
        %v3717 = vld [vmem:[%s3 + $0x28] sm:$0x1]
        %v3718 = vlaneseq
        %v3719 = vshrl.u32 %v3718, 7
        %v3720 = vsub.s32 0, %v3719
        %v3721 = vrot.slane %v3717, %v3720
        %v3723 = vsel %vm281, %v3716, 0
        %3725 = vmatprep.subr.bf16.mxu0 0
        %3726 = vmatpush1.bf16.msra.mxu0 %v3712
        %3727 = vmatprep.subr.bf16.mxu0 0
        %3728 = vmatpush1.bf16.msra.mxu0 %v3713
        %3729 = vmatprep.subr.bf16.mxu0 0
        %3730 = vmatpush1.bf16.msra.mxu0 %v3714
        %3731 = vmatprep.subr.bf16.mxu0 0
        %3732 = vmatpush1.bf16.msra.mxu0 %v3715
        %3733 = vmatprep.subr.bf16.mxu0 0
        %3734 = vmatpush1.bf16.msra.mxu0 0
        %3735 = vmatprep.subr.bf16.mxu0 0
        %3736 = vmatpush1.bf16.msra.mxu0 0
        %3737 = vmatprep.subr.bf16.mxu0 0
        %3738 = vmatpush1.bf16.msra.mxu0 0
        %3739 = vmatprep.subr.bf16.mxu0 0
        %3740 = vmatpush1.bf16.msra.mxu0 0
        %3741 = vmatprep.subr.bf16.mxu0 0
        %3742 = vmatpush1.bf16.msra.mxu0 0
        %3743 = vmatprep.subr.bf16.mxu0 0
        %3744 = vmatpush1.bf16.msra.mxu0 0
        %3745 = vmatprep.subr.bf16.mxu0 0
        %3746 = vmatpush1.bf16.msra.mxu0 0
        %3747 = vmatprep.subr.bf16.mxu0 0
        %3748 = vmatpush1.bf16.msra.mxu0 0
        %3749 = vmatprep.subr.bf16.mxu0 0
        %3750 = vmatpush1.bf16.msra.mxu0 0
        %3751 = vmatprep.subr.bf16.mxu0 0
        %3752 = vmatpush1.bf16.msra.mxu0 0
        %3753 = vmatprep.subr.bf16.mxu0 0
        %3754 = vmatpush1.bf16.msra.mxu0 0
        %3755 = vmatprep.subr.bf16.mxu0 0
        %3756 = vmatpush1.bf16.msra.mxu0 0
        %3757 = vmatprep.mubr.bf16.mxu0 0
        %3758 = vmatmul.mubr.bf16.gmra.mrb[0].mxu0 %v3723
        %v3759 = vpop.f32.mrb[0].mxu0
        %v3760 = vadd.f32 %v3721, %v3759
        %v3761 = vpop.f32.mrb[0].mxu0
        %v3762 = vpop.f32.mrb[0].mxu0
        %v3763 = vpop.f32.mrb[0].mxu0
        %3764 = vdwg.mxu0
        %s3765 = scalar_lea.vmem [#allocation7], 1728
        %v3766 = vld [vmem:[%s3765] sm:$0xff]
        %v3767 = vld [vmem:[%s3765 + $0x8] sm:$0xff]
        %v3768 = vld [vmem:[%s3765 + $0x10] sm:$0xff]
        %v3769 = vld [vmem:[%s3765 + $0x18] sm:$0xff]
        %v3770 = vld [vmem:[%s3765 + $0x20] sm:$0xff]
        %v3771 = vld [vmem:[%s3765 + $0x28] sm:$0xff]
        %v3772 = vld [vmem:[%s3765 + $0x30] sm:$0xff]
        %v3773 = vld [vmem:[%s3765 + $0x38] sm:$0xff]
        %v3774 = vpack.c.bf16 %v3767, %v3766
        %v3775 = vpack.c.bf16 %v3769, %v3768
        %v3776 = vpack.c.bf16 %v3771, %v3770
        %v3777 = vpack.c.bf16 %v3773, %v3772
        %v3778 = vld [vmem:[%s3 + $0x29] sm:$0x1]
        %v3779 = vlaneseq
        %v3780 = vshrl.u32 %v3779, 7
        %v3781 = vsub.s32 0, %v3780
        %v3782 = vrot.slane %v3778, %v3781
        %3783 = vmatprep.subr.bf16.mxu0 0
        %3784 = vmatpush1.bf16.msra.mxu0 %v3774
        %3785 = vmatprep.subr.bf16.mxu0 0
        %3786 = vmatpush1.bf16.msra.mxu0 %v3775
        %3787 = vmatprep.subr.bf16.mxu0 0
        %3788 = vmatpush1.bf16.msra.mxu0 %v3776
        %3789 = vmatprep.subr.bf16.mxu0 0
        %3790 = vmatpush1.bf16.msra.mxu0 %v3777
        %3791 = vmatprep.subr.bf16.mxu0 0
        %3792 = vmatpush1.bf16.msra.mxu0 0
        %3793 = vmatprep.subr.bf16.mxu0 0
        %3794 = vmatpush1.bf16.msra.mxu0 0
        %3795 = vmatprep.subr.bf16.mxu0 0
        %3796 = vmatpush1.bf16.msra.mxu0 0
        %3797 = vmatprep.subr.bf16.mxu0 0
        %3798 = vmatpush1.bf16.msra.mxu0 0
        %3799 = vmatprep.subr.bf16.mxu0 0
        %3800 = vmatpush1.bf16.msra.mxu0 0
        %3801 = vmatprep.subr.bf16.mxu0 0
        %3802 = vmatpush1.bf16.msra.mxu0 0
        %3803 = vmatprep.subr.bf16.mxu0 0
        %3804 = vmatpush1.bf16.msra.mxu0 0
        %3805 = vmatprep.subr.bf16.mxu0 0
        %3806 = vmatpush1.bf16.msra.mxu0 0
        %3807 = vmatprep.subr.bf16.mxu0 0
        %3808 = vmatpush1.bf16.msra.mxu0 0
        %3809 = vmatprep.subr.bf16.mxu0 0
        %3810 = vmatpush1.bf16.msra.mxu0 0
        %3811 = vmatprep.subr.bf16.mxu0 0
        %3812 = vmatpush1.bf16.msra.mxu0 0
        %3813 = vmatprep.subr.bf16.mxu0 0
        %3814 = vmatpush1.bf16.msra.mxu0 0
        %3815 = vmatprep.mubr.bf16.mxu0 0
        %3816 = vmatmul.mubr.bf16.gmra.mrb[0].mxu0 %v3723
        %v3817 = vpop.f32.mrb[0].mxu0
        %v3818 = vadd.f32 %v3782, %v3817
        %v3819 = vpop.f32.mrb[0].mxu0
        %v3820 = vpop.f32.mrb[0].mxu0
        %v3821 = vpop.f32.mrb[0].mxu0
        %3822 = vdwg.mxu0
        %s3823 = scalar_lea.vmem [#allocation7], 1792
        %v3824 = vld [vmem:[%s3823] sm:$0xff]
        %v3825 = vld [vmem:[%s3823 + $0x8] sm:$0xff]
        %v3826 = vld [vmem:[%s3823 + $0x10] sm:$0xff]
        %v3827 = vld [vmem:[%s3823 + $0x18] sm:$0xff]
        %v3828 = vld [vmem:[%s3823 + $0x20] sm:$0xff]
        %v3829 = vld [vmem:[%s3823 + $0x28] sm:$0xff]
        %v3830 = vld [vmem:[%s3823 + $0x30] sm:$0xff]
        %v3831 = vld [vmem:[%s3823 + $0x38] sm:$0xff]
        %v3832 = vpack.c.bf16 %v3825, %v3824
        %v3833 = vpack.c.bf16 %v3827, %v3826
        %v3834 = vpack.c.bf16 %v3829, %v3828
        %v3835 = vpack.c.bf16 %v3831, %v3830
        %v3836 = vpack.c.bf16 %v3698, %v3698
        %v3837 = vpack.c.bf16 %v3760, %v3760
        %v3839 = vsel %vm698, %v3836, 0
        %v3842 = vsel %vm698, %v3837, 0
        %3844 = vmatprep.subr.bf16.mxu0 0
        %3845 = vmatpush1.bf16.xpose.msra.mxu0 %v3842
        %3846 = vmatprep.subr.bf16.mxu0 0
        %3847 = vmatpush1.bf16.xpose.msra.mxu0 0
        %3848 = vmatprep.subr.bf16.mxu0 0
        %3849 = vmatpush1.bf16.xpose.msra.mxu0 0
        %3850 = vmatprep.subr.bf16.mxu0 0
        %3851 = vmatpush1.bf16.xpose.msra.mxu0 0
        %3852 = vmatprep.subr.bf16.mxu0 0
        %3853 = vmatpush1.bf16.xpose.msra.mxu0 0
        %3854 = vmatprep.subr.bf16.mxu0 0
        %3855 = vmatpush1.bf16.xpose.msra.mxu0 0
        %3856 = vmatprep.subr.bf16.mxu0 0
        %3857 = vmatpush1.bf16.xpose.msra.mxu0 0
        %3858 = vmatprep.subr.bf16.mxu0 0
        %3859 = vmatpush1.bf16.xpose.msra.mxu0 0
        %3860 = vmatprep.subr.bf16.mxu0 0
        %3861 = vmatpush1.bf16.xpose.msra.mxu0 0
        %3862 = vmatprep.subr.bf16.mxu0 0
        %3863 = vmatpush1.bf16.xpose.msra.mxu0 0
        %3864 = vmatprep.subr.bf16.mxu0 0
        %3865 = vmatpush1.bf16.xpose.msra.mxu0 0
        %3866 = vmatprep.subr.bf16.mxu0 0
        %3867 = vmatpush1.bf16.xpose.msra.mxu0 0
        %3868 = vmatprep.subr.bf16.mxu0 0
        %3869 = vmatpush1.bf16.xpose.msra.mxu0 0
        %3870 = vmatprep.subr.bf16.mxu0 0
        %3871 = vmatpush1.bf16.xpose.msra.mxu0 0
        %3872 = vmatprep.subr.bf16.mxu0 0
        %3873 = vmatpush1.bf16.xpose.msra.mxu0 0
        %3874 = vmatprep.subr.bf16.mxu0 0
        %3875 = vmatpush1.bf16.xpose.msra.mxu0 0
        %3876 = vmatprep.mubr.bf16.mxu0 0
        %3877 = vmatmul.mubr.bf16.gmra.mrb[0].mxu0 %v3839
        %v3878 = vpop.f32.mrb[0].mxu0
        %v3879 = vadd.f32 0.0, %v3878
        %v3880 = vpop.f32.mrb[0].mxu0
        %v3881 = vpop.f32.mrb[0].mxu0
        %v3882 = vpop.f32.mrb[0].mxu0
        %3883 = vdwg.mxu0
        %vm3884 = vcmask 57344
        %v3885 = vsel %vm3884, %v3879, -inf
        %3886 = vmax.xlane.f32.xlu0 %v3885
        %v3887 = vpop.xlane.xlu0 %3886
        %v3888 = vsub.f32 %v3879, %v3887
        %v3889 = vmul.f32 %v3888, 1.442695
        %v3890 = vpow.pop %v3889
        %v3891 = vsel %vm3884, %v3890, 0.0
        %3892 = vadd.xlane.f32.xlu0 %v3891
        %v3893 = vpop.xlane.xlu0 %3892
        %v3894 = vrcp.pop %v3893
        %v3895 = vmul.f32 %v3890, %v3894
        %v3896 = vpack.c.bf16 %v3895, %v3895
        %v3897 = vpack.c.bf16 %v3818, %v3818
        %v3899 = vsel %vm745, %v3896, 0
        %v3902 = vsel %vm762, %v3897, 0
        %3904 = vmatprep.subr.bf16.mxu0 0
        %3905 = vmatpush1.bf16.msra.mxu0 %v3902
        %3906 = vmatprep.subr.bf16.mxu0 0
        %3907 = vmatpush1.bf16.msra.mxu0 0
        %3908 = vmatprep.subr.bf16.mxu0 0
        %3909 = vmatpush1.bf16.msra.mxu0 0
        %3910 = vmatprep.subr.bf16.mxu0 0
        %3911 = vmatpush1.bf16.msra.mxu0 0
        %3912 = vmatprep.subr.bf16.mxu0 0
        %3913 = vmatpush1.bf16.msra.mxu0 0
        %3914 = vmatprep.subr.bf16.mxu0 0
        %3915 = vmatpush1.bf16.msra.mxu0 0
        %3916 = vmatprep.subr.bf16.mxu0 0
        %3917 = vmatpush1.bf16.msra.mxu0 0
        %3918 = vmatprep.subr.bf16.mxu0 0
        %3919 = vmatpush1.bf16.msra.mxu0 0
        %3920 = vmatprep.subr.bf16.mxu0 0
        %3921 = vmatpush1.bf16.msra.mxu0 0
        %3922 = vmatprep.subr.bf16.mxu0 0
        %3923 = vmatpush1.bf16.msra.mxu0 0
        %3924 = vmatprep.subr.bf16.mxu0 0
        %3925 = vmatpush1.bf16.msra.mxu0 0
        %3926 = vmatprep.subr.bf16.mxu0 0
        %3927 = vmatpush1.bf16.msra.mxu0 0
        %3928 = vmatprep.subr.bf16.mxu0 0
        %3929 = vmatpush1.bf16.msra.mxu0 0
        %3930 = vmatprep.subr.bf16.mxu0 0
        %3931 = vmatpush1.bf16.msra.mxu0 0
        %3932 = vmatprep.subr.bf16.mxu0 0
        %3933 = vmatpush1.bf16.msra.mxu0 0
        %3934 = vmatprep.subr.bf16.mxu0 0
        %3935 = vmatpush1.bf16.msra.mxu0 0
        %3936 = vmatprep.mubr.bf16.mxu0 0
        %3937 = vmatmul.mubr.bf16.gmra.mrb[0].mxu0 %v3899
        %v3938 = vpop.f32.mrb[0].mxu0
        %v3939 = vadd.f32 0.0, %v3938
        %v3940 = vpop.f32.mrb[0].mxu0
        %v3941 = vpop.f32.mrb[0].mxu0
        %v3942 = vpop.f32.mrb[0].mxu0
        %3943 = vdwg.mxu0
        %v3944 = vpack.c.bf16 %v3939, %v3939
        %3946 = vrot.lane.b32.xlu0 %v3836, 112
        %v3947 = vpop.permute.xlu0 %3946
        %3949 = vrot.lane.b32.xlu0 %v3837, 112
        %v3950 = vpop.permute.xlu0 %3949
        %v3952 = vsel %vm698, %v3947, 0
        %v3955 = vsel %vm698, %v3950, 0
        %3957 = vmatprep.subr.bf16.mxu0 0
        %3958 = vmatpush1.bf16.xpose.msra.mxu0 %v3955
        %3959 = vmatprep.subr.bf16.mxu0 0
        %3960 = vmatpush1.bf16.xpose.msra.mxu0 0
        %3961 = vmatprep.subr.bf16.mxu0 0
        %3962 = vmatpush1.bf16.xpose.msra.mxu0 0
        %3963 = vmatprep.subr.bf16.mxu0 0
        %3964 = vmatpush1.bf16.xpose.msra.mxu0 0
        %3965 = vmatprep.subr.bf16.mxu0 0
        %3966 = vmatpush1.bf16.xpose.msra.mxu0 0
        %3967 = vmatprep.subr.bf16.mxu0 0
        %3968 = vmatpush1.bf16.xpose.msra.mxu0 0
        %3969 = vmatprep.subr.bf16.mxu0 0
        %3970 = vmatpush1.bf16.xpose.msra.mxu0 0
        %3971 = vmatprep.subr.bf16.mxu0 0
        %3972 = vmatpush1.bf16.xpose.msra.mxu0 0
        %3973 = vmatprep.subr.bf16.mxu0 0
        %3974 = vmatpush1.bf16.xpose.msra.mxu0 0
        %3975 = vmatprep.subr.bf16.mxu0 0
        %3976 = vmatpush1.bf16.xpose.msra.mxu0 0
        %3977 = vmatprep.subr.bf16.mxu0 0
        %3978 = vmatpush1.bf16.xpose.msra.mxu0 0
        %3979 = vmatprep.subr.bf16.mxu0 0
        %3980 = vmatpush1.bf16.xpose.msra.mxu0 0
        %3981 = vmatprep.subr.bf16.mxu0 0
        %3982 = vmatpush1.bf16.xpose.msra.mxu0 0
        %3983 = vmatprep.subr.bf16.mxu0 0
        %3984 = vmatpush1.bf16.xpose.msra.mxu0 0
        %3985 = vmatprep.subr.bf16.mxu0 0
        %3986 = vmatpush1.bf16.xpose.msra.mxu0 0
        %3987 = vmatprep.subr.bf16.mxu0 0
        %3988 = vmatpush1.bf16.xpose.msra.mxu0 0
        %3989 = vmatprep.mubr.bf16.mxu0 0
        %3990 = vmatmul.mubr.bf16.gmra.mrb[0].mxu0 %v3952
        %v3991 = vpop.f32.mrb[0].mxu0
        %v3992 = vadd.f32 0.0, %v3991
        %v3993 = vpop.f32.mrb[0].mxu0
        %v3994 = vpop.f32.mrb[0].mxu0
        %v3995 = vpop.f32.mrb[0].mxu0
        %3996 = vdwg.mxu0
        %v3997 = vsel %vm3884, %v3992, -inf
        %3998 = vmax.xlane.f32.xlu0 %v3997
        %v3999 = vpop.xlane.xlu0 %3998
        %v4000 = vsub.f32 %v3992, %v3999
        %v4001 = vmul.f32 %v4000, 1.442695
        %v4002 = vpow.pop %v4001
        %v4003 = vsel %vm3884, %v4002, 0.0
        %4004 = vadd.xlane.f32.xlu0 %v4003
        %v4005 = vpop.xlane.xlu0 %4004
        %v4006 = vrcp.pop %v4005
        %v4007 = vmul.f32 %v4002, %v4006
        %v4008 = vpack.c.bf16 %v4007, %v4007
        %4010 = vrot.lane.b32.xlu0 %v3897, 112
        %v4011 = vpop.permute.xlu0 %4010
        %v4013 = vsel %vm745, %v4008, 0
        %v4016 = vsel %vm762, %v4011, 0
        %4018 = vmatprep.subr.bf16.mxu0 0
        %4019 = vmatpush1.bf16.msra.mxu0 %v4016
        %4020 = vmatprep.subr.bf16.mxu0 0
        %4021 = vmatpush1.bf16.msra.mxu0 0
        %4022 = vmatprep.subr.bf16.mxu0 0
        %4023 = vmatpush1.bf16.msra.mxu0 0
        %4024 = vmatprep.subr.bf16.mxu0 0
        %4025 = vmatpush1.bf16.msra.mxu0 0
        %4026 = vmatprep.subr.bf16.mxu0 0
        %4027 = vmatpush1.bf16.msra.mxu0 0
        %4028 = vmatprep.subr.bf16.mxu0 0
        %4029 = vmatpush1.bf16.msra.mxu0 0
        %4030 = vmatprep.subr.bf16.mxu0 0
        %4031 = vmatpush1.bf16.msra.mxu0 0
        %4032 = vmatprep.subr.bf16.mxu0 0
        %4033 = vmatpush1.bf16.msra.mxu0 0
        %4034 = vmatprep.subr.bf16.mxu0 0
        %4035 = vmatpush1.bf16.msra.mxu0 0
        %4036 = vmatprep.subr.bf16.mxu0 0
        %4037 = vmatpush1.bf16.msra.mxu0 0
        %4038 = vmatprep.subr.bf16.mxu0 0
        %4039 = vmatpush1.bf16.msra.mxu0 0
        %4040 = vmatprep.subr.bf16.mxu0 0
        %4041 = vmatpush1.bf16.msra.mxu0 0
        %4042 = vmatprep.subr.bf16.mxu0 0
        %4043 = vmatpush1.bf16.msra.mxu0 0
        %4044 = vmatprep.subr.bf16.mxu0 0
        %4045 = vmatpush1.bf16.msra.mxu0 0
        %4046 = vmatprep.subr.bf16.mxu0 0
        %4047 = vmatpush1.bf16.msra.mxu0 0
        %4048 = vmatprep.subr.bf16.mxu0 0
        %4049 = vmatpush1.bf16.msra.mxu0 0
        %4050 = vmatprep.mubr.bf16.mxu0 0
        %4051 = vmatmul.mubr.bf16.gmra.mrb[0].mxu0 %v4013
        %v4052 = vpop.f32.mrb[0].mxu0
        %v4053 = vadd.f32 0.0, %v4052
        %v4054 = vpop.f32.mrb[0].mxu0
        %v4055 = vpop.f32.mrb[0].mxu0
        %v4056 = vpop.f32.mrb[0].mxu0
        %4057 = vdwg.mxu0
        %v4058 = vpack.c.bf16 %v4053, %v4053
        %v4060 = vsel %vm698, %v4058, 0
        %4062 = vmatprep.subr.bf16.mxu0 0
        %4063 = vmatpush1.bf16.msra.mxu0 %v3833
        %4064 = vmatprep.subr.bf16.mxu0 0
        %4065 = vmatpush1.bf16.msra.mxu0 0
        %4066 = vmatprep.subr.bf16.mxu0 0
        %4067 = vmatpush1.bf16.msra.mxu0 0
        %4068 = vmatprep.subr.bf16.mxu0 0
        %4069 = vmatpush1.bf16.msra.mxu0 0
        %4070 = vmatprep.subr.bf16.mxu0 0
        %4071 = vmatpush1.bf16.msra.mxu0 0
        %4072 = vmatprep.subr.bf16.mxu0 0
        %4073 = vmatpush1.bf16.msra.mxu0 0
        %4074 = vmatprep.subr.bf16.mxu0 0
        %4075 = vmatpush1.bf16.msra.mxu0 0
        %4076 = vmatprep.subr.bf16.mxu0 0
        %4077 = vmatpush1.bf16.msra.mxu0 0
        %4078 = vmatprep.subr.bf16.mxu0 0
        %4079 = vmatpush1.bf16.msra.mxu0 0
        %4080 = vmatprep.subr.bf16.mxu0 0
        %4081 = vmatpush1.bf16.msra.mxu0 0
        %4082 = vmatprep.subr.bf16.mxu0 0
        %4083 = vmatpush1.bf16.msra.mxu0 0
        %4084 = vmatprep.subr.bf16.mxu0 0
        %4085 = vmatpush1.bf16.msra.mxu0 0
        %4086 = vmatprep.subr.bf16.mxu0 0
        %4087 = vmatpush1.bf16.msra.mxu0 0
        %4088 = vmatprep.subr.bf16.mxu0 0
        %4089 = vmatpush1.bf16.msra.mxu0 0
        %4090 = vmatprep.subr.bf16.mxu0 0
        %4091 = vmatpush1.bf16.msra.mxu0 0
        %4092 = vmatprep.subr.bf16.mxu0 0
        %4093 = vmatpush1.bf16.msra.mxu0 0
        %4094 = vmatprep.mubr.bf16.mxu0 0
        %4095 = vmatmul.mubr.bf16.gmra.mrb[0].mxu0 %v4060
        %v4096 = vpop.f32.mrb[0].mxu0
        %v4097 = vadd.f32 0.0, %v4096
        %v4098 = vpop.f32.mrb[0].mxu0
        %v4099 = vpop.f32.mrb[0].mxu0
        %v4100 = vpop.f32.mrb[0].mxu0
        %4101 = vdwg.mxu0
        %v4103 = vsel %vm698, %v3944, 0
        %4105 = vmatprep.subr.bf16.mxu0 0
        %4106 = vmatpush1.bf16.msra.mxu0 %v3832
        %4107 = vmatprep.subr.bf16.mxu0 0
        %4108 = vmatpush1.bf16.msra.mxu0 0
        %4109 = vmatprep.subr.bf16.mxu0 0
        %4110 = vmatpush1.bf16.msra.mxu0 0
        %4111 = vmatprep.subr.bf16.mxu0 0
        %4112 = vmatpush1.bf16.msra.mxu0 0
        %4113 = vmatprep.subr.bf16.mxu0 0
        %4114 = vmatpush1.bf16.msra.mxu0 0
        %4115 = vmatprep.subr.bf16.mxu0 0
        %4116 = vmatpush1.bf16.msra.mxu0 0
        %4117 = vmatprep.subr.bf16.mxu0 0
        %4118 = vmatpush1.bf16.msra.mxu0 0
        %4119 = vmatprep.subr.bf16.mxu0 0
        %4120 = vmatpush1.bf16.msra.mxu0 0
        %4121 = vmatprep.subr.bf16.mxu0 0
        %4122 = vmatpush1.bf16.msra.mxu0 0
        %4123 = vmatprep.subr.bf16.mxu0 0
        %4124 = vmatpush1.bf16.msra.mxu0 0
        %4125 = vmatprep.subr.bf16.mxu0 0
        %4126 = vmatpush1.bf16.msra.mxu0 0
        %4127 = vmatprep.subr.bf16.mxu0 0
        %4128 = vmatpush1.bf16.msra.mxu0 0
        %4129 = vmatprep.subr.bf16.mxu0 0
        %4130 = vmatpush1.bf16.msra.mxu0 0
        %4131 = vmatprep.subr.bf16.mxu0 0
        %4132 = vmatpush1.bf16.msra.mxu0 0
        %4133 = vmatprep.subr.bf16.mxu0 0
        %4134 = vmatpush1.bf16.msra.mxu0 0
        %4135 = vmatprep.subr.bf16.mxu0 0
        %4136 = vmatpush1.bf16.msra.mxu0 0
        %4137 = vmatprep.mubr.bf16.mxu0 0
        %4138 = vmatmul.mubr.bf16.gmra.mrb[0].mxu0 %v4103
        %v4139 = vpop.f32.mrb[0].mxu0
        %v4140 = vadd.f32 %v4097, %v4139
        %v4141 = vpop.f32.mrb[0].mxu0
        %v4142 = vpop.f32.mrb[0].mxu0
        %v4143 = vpop.f32.mrb[0].mxu0
        %4144 = vdwg.mxu0
        %4145 = vrot.lane.b32.xlu0 %v3836, 96
        %v4146 = vpop.permute.xlu0 %4145
        %4147 = vrot.lane.b32.xlu0 %v3837, 96
        %v4148 = vpop.permute.xlu0 %4147
        %v4150 = vsel %vm698, %v4146, 0
        %v4153 = vsel %vm698, %v4148, 0
        %4155 = vmatprep.subr.bf16.mxu0 0
        %4156 = vmatpush1.bf16.xpose.msra.mxu0 %v4153
        %4157 = vmatprep.subr.bf16.mxu0 0
        %4158 = vmatpush1.bf16.xpose.msra.mxu0 0
        %4159 = vmatprep.subr.bf16.mxu0 0
        %4160 = vmatpush1.bf16.xpose.msra.mxu0 0
        %4161 = vmatprep.subr.bf16.mxu0 0
        %4162 = vmatpush1.bf16.xpose.msra.mxu0 0
        %4163 = vmatprep.subr.bf16.mxu0 0
        %4164 = vmatpush1.bf16.xpose.msra.mxu0 0
        %4165 = vmatprep.subr.bf16.mxu0 0
        %4166 = vmatpush1.bf16.xpose.msra.mxu0 0
        %4167 = vmatprep.subr.bf16.mxu0 0
        %4168 = vmatpush1.bf16.xpose.msra.mxu0 0
        %4169 = vmatprep.subr.bf16.mxu0 0
        %4170 = vmatpush1.bf16.xpose.msra.mxu0 0
        %4171 = vmatprep.subr.bf16.mxu0 0
        %4172 = vmatpush1.bf16.xpose.msra.mxu0 0
        %4173 = vmatprep.subr.bf16.mxu0 0
        %4174 = vmatpush1.bf16.xpose.msra.mxu0 0
        %4175 = vmatprep.subr.bf16.mxu0 0
        %4176 = vmatpush1.bf16.xpose.msra.mxu0 0
        %4177 = vmatprep.subr.bf16.mxu0 0
        %4178 = vmatpush1.bf16.xpose.msra.mxu0 0
        %4179 = vmatprep.subr.bf16.mxu0 0
        %4180 = vmatpush1.bf16.xpose.msra.mxu0 0
        %4181 = vmatprep.subr.bf16.mxu0 0
        %4182 = vmatpush1.bf16.xpose.msra.mxu0 0
        %4183 = vmatprep.subr.bf16.mxu0 0
        %4184 = vmatpush1.bf16.xpose.msra.mxu0 0
        %4185 = vmatprep.subr.bf16.mxu0 0
        %4186 = vmatpush1.bf16.xpose.msra.mxu0 0
        %4187 = vmatprep.mubr.bf16.mxu0 0
        %4188 = vmatmul.mubr.bf16.gmra.mrb[0].mxu0 %v4150
        %v4189 = vpop.f32.mrb[0].mxu0
        %v4190 = vadd.f32 0.0, %v4189
        %v4191 = vpop.f32.mrb[0].mxu0
        %v4192 = vpop.f32.mrb[0].mxu0
        %v4193 = vpop.f32.mrb[0].mxu0
        %4194 = vdwg.mxu0
        %v4195 = vsel %vm3884, %v4190, -inf
        %4196 = vmax.xlane.f32.xlu0 %v4195
        %v4197 = vpop.xlane.xlu0 %4196
        %v4198 = vsub.f32 %v4190, %v4197
        %v4199 = vmul.f32 %v4198, 1.442695
        %v4200 = vpow.pop %v4199
        %v4201 = vsel %vm3884, %v4200, 0.0
        %4202 = vadd.xlane.f32.xlu0 %v4201
        %v4203 = vpop.xlane.xlu0 %4202
        %v4204 = vrcp.pop %v4203
        %v4205 = vmul.f32 %v4200, %v4204
        %v4206 = vpack.c.bf16 %v4205, %v4205
        %4207 = vrot.lane.b32.xlu0 %v3897, 96
        %v4208 = vpop.permute.xlu0 %4207
        %v4210 = vsel %vm745, %v4206, 0
        %v4213 = vsel %vm762, %v4208, 0
        %4215 = vmatprep.subr.bf16.mxu0 0
        %4216 = vmatpush1.bf16.msra.mxu0 %v4213
        %4217 = vmatprep.subr.bf16.mxu0 0
        %4218 = vmatpush1.bf16.msra.mxu0 0
        %4219 = vmatprep.subr.bf16.mxu0 0
        %4220 = vmatpush1.bf16.msra.mxu0 0
        %4221 = vmatprep.subr.bf16.mxu0 0
        %4222 = vmatpush1.bf16.msra.mxu0 0
        %4223 = vmatprep.subr.bf16.mxu0 0
        %4224 = vmatpush1.bf16.msra.mxu0 0
        %4225 = vmatprep.subr.bf16.mxu0 0
        %4226 = vmatpush1.bf16.msra.mxu0 0
        %4227 = vmatprep.subr.bf16.mxu0 0
        %4228 = vmatpush1.bf16.msra.mxu0 0
        %4229 = vmatprep.subr.bf16.mxu0 0
        %4230 = vmatpush1.bf16.msra.mxu0 0
        %4231 = vmatprep.subr.bf16.mxu0 0
        %4232 = vmatpush1.bf16.msra.mxu0 0
        %4233 = vmatprep.subr.bf16.mxu0 0
        %4234 = vmatpush1.bf16.msra.mxu0 0
        %4235 = vmatprep.subr.bf16.mxu0 0
        %4236 = vmatpush1.bf16.msra.mxu0 0
        %4237 = vmatprep.subr.bf16.mxu0 0
        %4238 = vmatpush1.bf16.msra.mxu0 0
        %4239 = vmatprep.subr.bf16.mxu0 0
        %4240 = vmatpush1.bf16.msra.mxu0 0
        %4241 = vmatprep.subr.bf16.mxu0 0
        %4242 = vmatpush1.bf16.msra.mxu0 0
        %4243 = vmatprep.subr.bf16.mxu0 0
        %4244 = vmatpush1.bf16.msra.mxu0 0
        %4245 = vmatprep.subr.bf16.mxu0 0
        %4246 = vmatpush1.bf16.msra.mxu0 0
        %4247 = vmatprep.mubr.bf16.mxu0 0
        %4248 = vmatmul.mubr.bf16.gmra.mrb[0].mxu0 %v4210
        %v4249 = vpop.f32.mrb[0].mxu0
        %v4250 = vadd.f32 0.0, %v4249
        %v4251 = vpop.f32.mrb[0].mxu0
        %v4252 = vpop.f32.mrb[0].mxu0
        %v4253 = vpop.f32.mrb[0].mxu0
        %4254 = vdwg.mxu0
        %v4255 = vpack.c.bf16 %v4250, %v4250
        %v4257 = vsel %vm698, %v4255, 0
        %4259 = vmatprep.subr.bf16.mxu0 0
        %4260 = vmatpush1.bf16.msra.mxu0 %v3834
        %4261 = vmatprep.subr.bf16.mxu0 0
        %4262 = vmatpush1.bf16.msra.mxu0 0
        %4263 = vmatprep.subr.bf16.mxu0 0
        %4264 = vmatpush1.bf16.msra.mxu0 0
        %4265 = vmatprep.subr.bf16.mxu0 0
        %4266 = vmatpush1.bf16.msra.mxu0 0
        %4267 = vmatprep.subr.bf16.mxu0 0
        %4268 = vmatpush1.bf16.msra.mxu0 0
        %4269 = vmatprep.subr.bf16.mxu0 0
        %4270 = vmatpush1.bf16.msra.mxu0 0
        %4271 = vmatprep.subr.bf16.mxu0 0
        %4272 = vmatpush1.bf16.msra.mxu0 0
        %4273 = vmatprep.subr.bf16.mxu0 0
        %4274 = vmatpush1.bf16.msra.mxu0 0
        %4275 = vmatprep.subr.bf16.mxu0 0
        %4276 = vmatpush1.bf16.msra.mxu0 0
        %4277 = vmatprep.subr.bf16.mxu0 0
        %4278 = vmatpush1.bf16.msra.mxu0 0
        %4279 = vmatprep.subr.bf16.mxu0 0
        %4280 = vmatpush1.bf16.msra.mxu0 0
        %4281 = vmatprep.subr.bf16.mxu0 0
        %4282 = vmatpush1.bf16.msra.mxu0 0
        %4283 = vmatprep.subr.bf16.mxu0 0
        %4284 = vmatpush1.bf16.msra.mxu0 0
        %4285 = vmatprep.subr.bf16.mxu0 0
        %4286 = vmatpush1.bf16.msra.mxu0 0
        %4287 = vmatprep.subr.bf16.mxu0 0
        %4288 = vmatpush1.bf16.msra.mxu0 0
        %4289 = vmatprep.subr.bf16.mxu0 0
        %4290 = vmatpush1.bf16.msra.mxu0 0
        %4291 = vmatprep.mubr.bf16.mxu0 0
        %4292 = vmatmul.mubr.bf16.gmra.mrb[0].mxu0 %v4257
        %v4293 = vpop.f32.mrb[0].mxu0
        %v4294 = vadd.f32 0.0, %v4293
        %v4295 = vpop.f32.mrb[0].mxu0
        %v4296 = vpop.f32.mrb[0].mxu0
        %v4297 = vpop.f32.mrb[0].mxu0
        %4298 = vdwg.mxu0
        %v4299 = vadd.f32 %v4140, %v4294
        %4300 = vrot.lane.b32.xlu0 %v3836, 80
        %v4301 = vpop.permute.xlu0 %4300
        %4302 = vrot.lane.b32.xlu0 %v3837, 80
        %v4303 = vpop.permute.xlu0 %4302
        %v4305 = vsel %vm698, %v4301, 0
        %v4308 = vsel %vm698, %v4303, 0
        %4310 = vmatprep.subr.bf16.mxu0 0
        %4311 = vmatpush1.bf16.xpose.msra.mxu0 %v4308
        %4312 = vmatprep.subr.bf16.mxu0 0
        %4313 = vmatpush1.bf16.xpose.msra.mxu0 0
        %4314 = vmatprep.subr.bf16.mxu0 0
        %4315 = vmatpush1.bf16.xpose.msra.mxu0 0
        %4316 = vmatprep.subr.bf16.mxu0 0
        %4317 = vmatpush1.bf16.xpose.msra.mxu0 0
        %4318 = vmatprep.subr.bf16.mxu0 0
        %4319 = vmatpush1.bf16.xpose.msra.mxu0 0
        %4320 = vmatprep.subr.bf16.mxu0 0
        %4321 = vmatpush1.bf16.xpose.msra.mxu0 0
        %4322 = vmatprep.subr.bf16.mxu0 0
        %4323 = vmatpush1.bf16.xpose.msra.mxu0 0
        %4324 = vmatprep.subr.bf16.mxu0 0
        %4325 = vmatpush1.bf16.xpose.msra.mxu0 0
        %4326 = vmatprep.subr.bf16.mxu0 0
        %4327 = vmatpush1.bf16.xpose.msra.mxu0 0
        %4328 = vmatprep.subr.bf16.mxu0 0
        %4329 = vmatpush1.bf16.xpose.msra.mxu0 0
        %4330 = vmatprep.subr.bf16.mxu0 0
        %4331 = vmatpush1.bf16.xpose.msra.mxu0 0
        %4332 = vmatprep.subr.bf16.mxu0 0
        %4333 = vmatpush1.bf16.xpose.msra.mxu0 0
        %4334 = vmatprep.subr.bf16.mxu0 0
        %4335 = vmatpush1.bf16.xpose.msra.mxu0 0
        %4336 = vmatprep.subr.bf16.mxu0 0
        %4337 = vmatpush1.bf16.xpose.msra.mxu0 0
        %4338 = vmatprep.subr.bf16.mxu0 0
        %4339 = vmatpush1.bf16.xpose.msra.mxu0 0
        %4340 = vmatprep.subr.bf16.mxu0 0
        %4341 = vmatpush1.bf16.xpose.msra.mxu0 0
        %4342 = vmatprep.mubr.bf16.mxu0 0
        %4343 = vmatmul.mubr.bf16.gmra.mrb[0].mxu0 %v4305
        %v4344 = vpop.f32.mrb[0].mxu0
        %v4345 = vadd.f32 0.0, %v4344
        %v4346 = vpop.f32.mrb[0].mxu0
        %v4347 = vpop.f32.mrb[0].mxu0
        %v4348 = vpop.f32.mrb[0].mxu0
        %4349 = vdwg.mxu0
        %v4350 = vsel %vm3884, %v4345, -inf
        %4351 = vmax.xlane.f32.xlu0 %v4350
        %v4352 = vpop.xlane.xlu0 %4351
        %v4353 = vsub.f32 %v4345, %v4352
        %v4354 = vmul.f32 %v4353, 1.442695
        %v4355 = vpow.pop %v4354
        %v4356 = vsel %vm3884, %v4355, 0.0
        %4357 = vadd.xlane.f32.xlu0 %v4356
        %v4358 = vpop.xlane.xlu0 %4357
        %v4359 = vrcp.pop %v4358
        %v4360 = vmul.f32 %v4355, %v4359
        %v4361 = vpack.c.bf16 %v4360, %v4360
        %4362 = vrot.lane.b32.xlu0 %v3897, 80
        %v4363 = vpop.permute.xlu0 %4362
        %v4365 = vsel %vm745, %v4361, 0
        %v4368 = vsel %vm762, %v4363, 0
        %4370 = vmatprep.subr.bf16.mxu0 0
        %4371 = vmatpush1.bf16.msra.mxu0 %v4368
        %4372 = vmatprep.subr.bf16.mxu0 0
        %4373 = vmatpush1.bf16.msra.mxu0 0
        %4374 = vmatprep.subr.bf16.mxu0 0
        %4375 = vmatpush1.bf16.msra.mxu0 0
        %4376 = vmatprep.subr.bf16.mxu0 0
        %4377 = vmatpush1.bf16.msra.mxu0 0
        %4378 = vmatprep.subr.bf16.mxu0 0
        %4379 = vmatpush1.bf16.msra.mxu0 0
        %4380 = vmatprep.subr.bf16.mxu0 0
        %4381 = vmatpush1.bf16.msra.mxu0 0
        %4382 = vmatprep.subr.bf16.mxu0 0
        %4383 = vmatpush1.bf16.msra.mxu0 0
        %4384 = vmatprep.subr.bf16.mxu0 0
        %4385 = vmatpush1.bf16.msra.mxu0 0
        %4386 = vmatprep.subr.bf16.mxu0 0
        %4387 = vmatpush1.bf16.msra.mxu0 0
        %4388 = vmatprep.subr.bf16.mxu0 0
        %4389 = vmatpush1.bf16.msra.mxu0 0
        %4390 = vmatprep.subr.bf16.mxu0 0
        %4391 = vmatpush1.bf16.msra.mxu0 0
        %4392 = vmatprep.subr.bf16.mxu0 0
        %4393 = vmatpush1.bf16.msra.mxu0 0
        %4394 = vmatprep.subr.bf16.mxu0 0
        %4395 = vmatpush1.bf16.msra.mxu0 0
        %4396 = vmatprep.subr.bf16.mxu0 0
        %4397 = vmatpush1.bf16.msra.mxu0 0
        %4398 = vmatprep.subr.bf16.mxu0 0
        %4399 = vmatpush1.bf16.msra.mxu0 0
        %4400 = vmatprep.subr.bf16.mxu0 0
        %4401 = vmatpush1.bf16.msra.mxu0 0
        %4402 = vmatprep.mubr.bf16.mxu0 0
        %4403 = vmatmul.mubr.bf16.gmra.mrb[0].mxu0 %v4365
        %v4404 = vpop.f32.mrb[0].mxu0
        %v4405 = vadd.f32 0.0, %v4404
        %v4406 = vpop.f32.mrb[0].mxu0
        %v4407 = vpop.f32.mrb[0].mxu0
        %v4408 = vpop.f32.mrb[0].mxu0
        %4409 = vdwg.mxu0
        %v4410 = vpack.c.bf16 %v4405, %v4405
        %v4412 = vsel %vm698, %v4410, 0
        %4414 = vmatprep.subr.bf16.mxu0 0
        %4415 = vmatpush1.bf16.msra.mxu0 %v3835
        %4416 = vmatprep.subr.bf16.mxu0 0
        %4417 = vmatpush1.bf16.msra.mxu0 0
        %4418 = vmatprep.subr.bf16.mxu0 0
        %4419 = vmatpush1.bf16.msra.mxu0 0
        %4420 = vmatprep.subr.bf16.mxu0 0
        %4421 = vmatpush1.bf16.msra.mxu0 0
        %4422 = vmatprep.subr.bf16.mxu0 0
        %4423 = vmatpush1.bf16.msra.mxu0 0
        %4424 = vmatprep.subr.bf16.mxu0 0
        %4425 = vmatpush1.bf16.msra.mxu0 0
        %4426 = vmatprep.subr.bf16.mxu0 0
        %4427 = vmatpush1.bf16.msra.mxu0 0
        %4428 = vmatprep.subr.bf16.mxu0 0
        %4429 = vmatpush1.bf16.msra.mxu0 0
        %4430 = vmatprep.subr.bf16.mxu0 0
        %4431 = vmatpush1.bf16.msra.mxu0 0
        %4432 = vmatprep.subr.bf16.mxu0 0
        %4433 = vmatpush1.bf16.msra.mxu0 0
        %4434 = vmatprep.subr.bf16.mxu0 0
        %4435 = vmatpush1.bf16.msra.mxu0 0
        %4436 = vmatprep.subr.bf16.mxu0 0
        %4437 = vmatpush1.bf16.msra.mxu0 0
        %4438 = vmatprep.subr.bf16.mxu0 0
        %4439 = vmatpush1.bf16.msra.mxu0 0
        %4440 = vmatprep.subr.bf16.mxu0 0
        %4441 = vmatpush1.bf16.msra.mxu0 0
        %4442 = vmatprep.subr.bf16.mxu0 0
        %4443 = vmatpush1.bf16.msra.mxu0 0
        %4444 = vmatprep.subr.bf16.mxu0 0
        %4445 = vmatpush1.bf16.msra.mxu0 0
        %4446 = vmatprep.mubr.bf16.mxu0 0
        %4447 = vmatmul.mubr.bf16.gmra.mrb[0].mxu0 %v4412
        %v4448 = vpop.f32.mrb[0].mxu0
        %v4449 = vadd.f32 0.0, %v4448
        %v4450 = vpop.f32.mrb[0].mxu0
        %v4451 = vpop.f32.mrb[0].mxu0
        %v4452 = vpop.f32.mrb[0].mxu0
        %4453 = vdwg.mxu0
        %v4454 = vadd.f32 %v4299, %v4449
        %v4455 = vld [vmem:[%s3 + $0x2a] sm:$0x1]
        %v4456 = vadd.f32 %v4454, %v4455
        %v4457 = vadd.f32 %v3644, %v4456
        %v4458 = vsel %vm3627, %v4457, 0.0
        %4459 = vadd.xlane.f32.xlu0 %v4458
        %v4460 = vpop.xlane.xlu0 %4459
        %v4461 = vmul.f32 %v4460, %v1327
        %v4462 = vsub.f32 %v4457, %v4461
        %v4463 = vmul.f32 %v4462, %v4462
        %v4464 = vsel %vm3627, %v4463, 0.0
        %4465 = vadd.xlane.f32.xlu0 %v4464
        %v4466 = vpop.xlane.xlu0 %4465
        %v4467 = vmul.f32 %v4466, %v1327
        %v4468 = vadd.f32 %v4467, 1e-05
        %v4469 = vrsqrt.pop %v4468
        %v4470 = vmul.f32 %v4462, %v4469
        %v4471 = vld [vmem:[%s3 + $0x2f] sm:$0x1]
        %v4472 = vmul.f32 %v4470, %v4471
        %v4473 = vld [vmem:[%s3 + $0x30] sm:$0x1]
        %v4474 = vadd.f32 %v4472, %v4473
        %s4475 = scalar_lea.vmem [#allocation7], 1856
        %v4476 = vld [vmem:[%s4475] sm:$0xff]
        %v4477 = vld [vmem:[%s4475 + $0x8] sm:$0xff]
        %v4478 = vld [vmem:[%s4475 + $0x10] sm:$0xff]
        %v4479 = vld [vmem:[%s4475 + $0x18] sm:$0xff]
        %v4480 = vld [vmem:[%s4475 + $0x20] sm:$0xff]
        %v4481 = vld [vmem:[%s4475 + $0x28] sm:$0xff]
        %v4482 = vld [vmem:[%s4475 + $0x30] sm:$0xff]
        %v4483 = vld [vmem:[%s4475 + $0x38] sm:$0xff]
        %v4484 = vpack.c.bf16 %v4477, %v4476
        %v4485 = vpack.c.bf16 %v4479, %v4478
        %v4486 = vpack.c.bf16 %v4481, %v4480
        %v4487 = vpack.c.bf16 %v4483, %v4482
        %v4488 = vpack.c.bf16 %v4474, %v4474
        %v4489 = vld [vmem:[%s3 + $0x2b] sm:$0x1]
        %v4491 = vsel %vm281, %v4488, 0
        %4493 = vmatprep.subr.bf16.mxu0 0
        %4494 = vmatpush1.bf16.msra.mxu0 %v4484
        %4495 = vmatprep.subr.bf16.mxu0 0
        %4496 = vmatpush1.bf16.msra.mxu0 %v4485
        %4497 = vmatprep.subr.bf16.mxu0 0
        %4498 = vmatpush1.bf16.msra.mxu0 %v4486
        %4499 = vmatprep.subr.bf16.mxu0 0
        %4500 = vmatpush1.bf16.msra.mxu0 %v4487
        %4501 = vmatprep.subr.bf16.mxu0 0
        %4502 = vmatpush1.bf16.msra.mxu0 0
        %4503 = vmatprep.subr.bf16.mxu0 0
        %4504 = vmatpush1.bf16.msra.mxu0 0
        %4505 = vmatprep.subr.bf16.mxu0 0
        %4506 = vmatpush1.bf16.msra.mxu0 0
        %4507 = vmatprep.subr.bf16.mxu0 0
        %4508 = vmatpush1.bf16.msra.mxu0 0
        %4509 = vmatprep.subr.bf16.mxu0 0
        %4510 = vmatpush1.bf16.msra.mxu0 0
        %4511 = vmatprep.subr.bf16.mxu0 0
        %4512 = vmatpush1.bf16.msra.mxu0 0
        %4513 = vmatprep.subr.bf16.mxu0 0
        %4514 = vmatpush1.bf16.msra.mxu0 0
        %4515 = vmatprep.subr.bf16.mxu0 0
        %4516 = vmatpush1.bf16.msra.mxu0 0
        %4517 = vmatprep.subr.bf16.mxu0 0
        %4518 = vmatpush1.bf16.msra.mxu0 0
        %4519 = vmatprep.subr.bf16.mxu0 0
        %4520 = vmatpush1.bf16.msra.mxu0 0
        %4521 = vmatprep.subr.bf16.mxu0 0
        %4522 = vmatpush1.bf16.msra.mxu0 0
        %4523 = vmatprep.subr.bf16.mxu0 0
        %4524 = vmatpush1.bf16.msra.mxu0 0
        %4525 = vmatprep.mubr.bf16.mxu0 0
        %4526 = vmatmul.mubr.bf16.gmra.mrb[0].mxu0 %v4491
        %v4527 = vpop.f32.mrb[0].mxu0
        %v4528 = vadd.f32 %v4489, %v4527
        %v4529 = vpop.f32.mrb[0].mxu0
        %v4530 = vpop.f32.mrb[0].mxu0
        %v4531 = vpop.f32.mrb[0].mxu0
        %4532 = vdwg.mxu0
        %v4533 = vmax.f32 %v4528, 0.0
        %s4534 = scalar_lea.vmem [#allocation7], 1920
        %v4535 = vld [vmem:[%s4534] sm:$0xff]
        %v4536 = vld [vmem:[%s4534 + $0x8] sm:$0xff]
        %v4537 = vld [vmem:[%s4534 + $0x10] sm:$0xff]
        %v4538 = vld [vmem:[%s4534 + $0x18] sm:$0xff]
        %v4539 = vld [vmem:[%s4534 + $0x20] sm:$0xff]
        %v4540 = vld [vmem:[%s4534 + $0x28] sm:$0xff]
        %v4541 = vld [vmem:[%s4534 + $0x30] sm:$0xff]
        %v4542 = vld [vmem:[%s4534 + $0x38] sm:$0xff]
        %v4543 = vpack.c.bf16 %v4536, %v4535
        %v4544 = vpack.c.bf16 %v4538, %v4537
        %v4545 = vpack.c.bf16 %v4540, %v4539
        %v4546 = vpack.c.bf16 %v4542, %v4541
        %v4547 = vpack.c.bf16 %v4533, %v4533
        %v4548 = vld [vmem:[%s3 + $0x2c] sm:$0x1]
        %v4550 = vsel %vm281, %v4547, 0
        %4552 = vmatprep.subr.bf16.mxu0 0
        %4553 = vmatpush1.bf16.msra.mxu0 %v4543
        %4554 = vmatprep.subr.bf16.mxu0 0
        %4555 = vmatpush1.bf16.msra.mxu0 %v4544
        %4556 = vmatprep.subr.bf16.mxu0 0
        %4557 = vmatpush1.bf16.msra.mxu0 %v4545
        %4558 = vmatprep.subr.bf16.mxu0 0
        %4559 = vmatpush1.bf16.msra.mxu0 %v4546
        %4560 = vmatprep.subr.bf16.mxu0 0
        %4561 = vmatpush1.bf16.msra.mxu0 0
        %4562 = vmatprep.subr.bf16.mxu0 0
        %4563 = vmatpush1.bf16.msra.mxu0 0
        %4564 = vmatprep.subr.bf16.mxu0 0
        %4565 = vmatpush1.bf16.msra.mxu0 0
        %4566 = vmatprep.subr.bf16.mxu0 0
        %4567 = vmatpush1.bf16.msra.mxu0 0
        %4568 = vmatprep.subr.bf16.mxu0 0
        %4569 = vmatpush1.bf16.msra.mxu0 0
        %4570 = vmatprep.subr.bf16.mxu0 0
        %4571 = vmatpush1.bf16.msra.mxu0 0
        %4572 = vmatprep.subr.bf16.mxu0 0
        %4573 = vmatpush1.bf16.msra.mxu0 0
        %4574 = vmatprep.subr.bf16.mxu0 0
        %4575 = vmatpush1.bf16.msra.mxu0 0
        %4576 = vmatprep.subr.bf16.mxu0 0
        %4577 = vmatpush1.bf16.msra.mxu0 0
        %4578 = vmatprep.subr.bf16.mxu0 0
        %4579 = vmatpush1.bf16.msra.mxu0 0
        %4580 = vmatprep.subr.bf16.mxu0 0
        %4581 = vmatpush1.bf16.msra.mxu0 0
        %4582 = vmatprep.subr.bf16.mxu0 0
        %4583 = vmatpush1.bf16.msra.mxu0 0
        %4584 = vmatprep.mubr.bf16.mxu0 0
        %4585 = vmatmul.mubr.bf16.gmra.mrb[0].mxu0 %v4550
        %v4586 = vpop.f32.mrb[0].mxu0
        %v4587 = vadd.f32 %v4548, %v4586
        %v4588 = vpop.f32.mrb[0].mxu0
        %v4589 = vpop.f32.mrb[0].mxu0
        %v4590 = vpop.f32.mrb[0].mxu0
        %4591 = vdwg.mxu0
        %v4592 = vadd.f32 %v4474, %v4587
        %v4593 = vsel %vm3627, %v4592, 0.0
        %4594 = vadd.xlane.f32.xlu0 %v4593
        %v4595 = vpop.xlane.xlu0 %4594
        %v4596 = vmul.f32 %v4595, %v1327
        %v4597 = vsub.f32 %v4592, %v4596
        %v4598 = vmul.f32 %v4597, %v4597
        %v4599 = vsel %vm3627, %v4598, 0.0
        %4600 = vadd.xlane.f32.xlu0 %v4599
        %v4601 = vpop.xlane.xlu0 %4600
        %v4602 = vmul.f32 %v4601, %v1327
        %v4603 = vadd.f32 %v4602, 1e-05
        %v4604 = vrsqrt.pop %v4603
        %v4605 = vmul.f32 %v4597, %v4604
        %v4606 = vld [vmem:[%s3 + $0x31] sm:$0x1]
        %v4607 = vmul.f32 %v4605, %v4606
        %v4608 = vld [vmem:[%s3 + $0x32] sm:$0x1]
        %v4609 = vadd.f32 %v4607, %v4608
        %s4610 = scalar_lea.vmem [#allocation7], 1984
        %v4611 = vld [vmem:[%s4610] sm:$0xff]
        %v4612 = vld [vmem:[%s4610 + $0x8] sm:$0xff]
        %v4613 = vld [vmem:[%s4610 + $0x10] sm:$0xff]
        %v4614 = vld [vmem:[%s4610 + $0x18] sm:$0xff]
        %v4615 = vld [vmem:[%s4610 + $0x20] sm:$0xff]
        %v4616 = vld [vmem:[%s4610 + $0x28] sm:$0xff]
        %v4617 = vld [vmem:[%s4610 + $0x30] sm:$0xff]
        %v4618 = vld [vmem:[%s4610 + $0x38] sm:$0xff]
        %v4619 = vpack.c.bf16 %v4612, %v4611
        %v4620 = vpack.c.bf16 %v4614, %v4613
        %v4621 = vpack.c.bf16 %v4616, %v4615
        %v4622 = vpack.c.bf16 %v4618, %v4617
        %v4623 = vpack.c.bf16 %v4609, %v4609
        %v4624 = vld [vmem:[%s3 + $0x33] sm:$0x1]
        %v4626 = vsel %vm281, %v4623, 0
        %4628 = vmatprep.subr.bf16.mxu0 0
        %4629 = vmatpush1.bf16.msra.mxu0 %v4619
        %4630 = vmatprep.subr.bf16.mxu0 0
        %4631 = vmatpush1.bf16.msra.mxu0 %v4620
        %4632 = vmatprep.subr.bf16.mxu0 0
        %4633 = vmatpush1.bf16.msra.mxu0 %v4621
        %4634 = vmatprep.subr.bf16.mxu0 0
        %4635 = vmatpush1.bf16.msra.mxu0 %v4622
        %4636 = vmatprep.subr.bf16.mxu0 0
        %4637 = vmatpush1.bf16.msra.mxu0 0
        %4638 = vmatprep.subr.bf16.mxu0 0
        %4639 = vmatpush1.bf16.msra.mxu0 0
        %4640 = vmatprep.subr.bf16.mxu0 0
        %4641 = vmatpush1.bf16.msra.mxu0 0
        %4642 = vmatprep.subr.bf16.mxu0 0
        %4643 = vmatpush1.bf16.msra.mxu0 0
        %4644 = vmatprep.subr.bf16.mxu0 0
        %4645 = vmatpush1.bf16.msra.mxu0 0
        %4646 = vmatprep.subr.bf16.mxu0 0
        %4647 = vmatpush1.bf16.msra.mxu0 0
        %4648 = vmatprep.subr.bf16.mxu0 0
        %4649 = vmatpush1.bf16.msra.mxu0 0
        %4650 = vmatprep.subr.bf16.mxu0 0
        %4651 = vmatpush1.bf16.msra.mxu0 0
        %4652 = vmatprep.subr.bf16.mxu0 0
        %4653 = vmatpush1.bf16.msra.mxu0 0
        %4654 = vmatprep.subr.bf16.mxu0 0
        %4655 = vmatpush1.bf16.msra.mxu0 0
        %4656 = vmatprep.subr.bf16.mxu0 0
        %4657 = vmatpush1.bf16.msra.mxu0 0
        %4658 = vmatprep.subr.bf16.mxu0 0
        %4659 = vmatpush1.bf16.msra.mxu0 0
        %4660 = vmatprep.mubr.bf16.mxu0 0
        %4661 = vmatmul.mubr.bf16.gmra.mrb[0].mxu0 %v4626
        %v4662 = vpop.f32.mrb[0].mxu0
        %v4663 = vadd.f32 %v4624, %v4662
        %v4664 = vpop.f32.mrb[0].mxu0
        %v4665 = vpop.f32.mrb[0].mxu0
        %v4666 = vpop.f32.mrb[0].mxu0
        %4667 = vdwg.mxu0
        %s4668 = scalar_lea.vmem [#allocation7], 2048
        %v4669 = vld [vmem:[%s4668] sm:$0xff]
        %v4670 = vld [vmem:[%s4668 + $0x8] sm:$0xff]
        %v4671 = vld [vmem:[%s4668 + $0x10] sm:$0xff]
        %v4672 = vld [vmem:[%s4668 + $0x18] sm:$0xff]
        %v4673 = vld [vmem:[%s4668 + $0x20] sm:$0xff]
        %v4674 = vld [vmem:[%s4668 + $0x28] sm:$0xff]
        %v4675 = vld [vmem:[%s4668 + $0x30] sm:$0xff]
        %v4676 = vld [vmem:[%s4668 + $0x38] sm:$0xff]
        %v4677 = vpack.c.bf16 %v4670, %v4669
        %v4678 = vpack.c.bf16 %v4672, %v4671
        %v4679 = vpack.c.bf16 %v4674, %v4673
        %v4680 = vpack.c.bf16 %v4676, %v4675
        %v4681 = vpack.c.bf16 %v4663, %v4663
        %v4682 = vld [vmem:[%s3 + $0x34] sm:$0x1]
        %v4684 = vsel %vm281, %v4681, 0
        %4686 = vmatprep.subr.bf16.mxu0 0
        %4687 = vmatpush1.bf16.msra.mxu0 %v4677
        %4688 = vmatprep.subr.bf16.mxu0 0
        %4689 = vmatpush1.bf16.msra.mxu0 %v4678
        %4690 = vmatprep.subr.bf16.mxu0 0
        %4691 = vmatpush1.bf16.msra.mxu0 %v4679
        %4692 = vmatprep.subr.bf16.mxu0 0
        %4693 = vmatpush1.bf16.msra.mxu0 %v4680
        %4694 = vmatprep.subr.bf16.mxu0 0
        %4695 = vmatpush1.bf16.msra.mxu0 0
        %4696 = vmatprep.subr.bf16.mxu0 0
        %4697 = vmatpush1.bf16.msra.mxu0 0
        %4698 = vmatprep.subr.bf16.mxu0 0
        %4699 = vmatpush1.bf16.msra.mxu0 0
        %4700 = vmatprep.subr.bf16.mxu0 0
        %4701 = vmatpush1.bf16.msra.mxu0 0
        %4702 = vmatprep.subr.bf16.mxu0 0
        %4703 = vmatpush1.bf16.msra.mxu0 0
        %4704 = vmatprep.subr.bf16.mxu0 0
        %4705 = vmatpush1.bf16.msra.mxu0 0
        %4706 = vmatprep.subr.bf16.mxu0 0
        %4707 = vmatpush1.bf16.msra.mxu0 0
        %4708 = vmatprep.subr.bf16.mxu0 0
        %4709 = vmatpush1.bf16.msra.mxu0 0
        %4710 = vmatprep.subr.bf16.mxu0 0
        %4711 = vmatpush1.bf16.msra.mxu0 0
        %4712 = vmatprep.subr.bf16.mxu0 0
        %4713 = vmatpush1.bf16.msra.mxu0 0
        %4714 = vmatprep.subr.bf16.mxu0 0
        %4715 = vmatpush1.bf16.msra.mxu0 0
        %4716 = vmatprep.subr.bf16.mxu0 0
        %4717 = vmatpush1.bf16.msra.mxu0 0
        %4718 = vmatprep.mubr.bf16.mxu0 0
        %4719 = vmatmul.mubr.bf16.gmra.mrb[0].mxu0 %v4684
        %v4720 = vpop.f32.mrb[0].mxu0
        %v4721 = vadd.f32 %v4682, %v4720
        %v4722 = vpop.f32.mrb[0].mxu0
        %v4723 = vpop.f32.mrb[0].mxu0
        %v4724 = vpop.f32.mrb[0].mxu0
        %4725 = vdwg.mxu0
        %v4726 = vadd.f32 %v4609, %v4721
        %v4727 = vsel %vm3627, %v4726, 0.0
        %4728 = vadd.xlane.f32.xlu0 %v4727
        %v4729 = vpop.xlane.xlu0 %4728
        %v4730 = vmul.f32 %v4729, %v1327
        %v4731 = vsub.f32 %v4726, %v4730
        %v4732 = vmul.f32 %v4731, %v4731
        %v4733 = vsel %vm3627, %v4732, 0.0
        %4734 = vadd.xlane.f32.xlu0 %v4733
        %v4735 = vpop.xlane.xlu0 %4734
        %v4736 = vmul.f32 %v4735, %v1327
        %v4737 = vadd.f32 %v4736, 1e-05
        %v4738 = vrsqrt.pop %v4737
        %v4739 = vmul.f32 %v4731, %v4738
        %v4740 = vld [vmem:[%s3 + $0x3b] sm:$0x1]
        %v4741 = vmul.f32 %v4739, %v4740
        %v4742 = vld [vmem:[%s3 + $0x3c] sm:$0x1]
        %v4743 = vadd.f32 %v4741, %v4742
        %s4744 = scalar_lea.vmem [#allocation7], 2112
        %v4745 = vld [vmem:[%s4744] sm:$0xff]
        %v4746 = vld [vmem:[%s4744 + $0x8] sm:$0xff]
        %v4747 = vld [vmem:[%s4744 + $0x10] sm:$0xff]
        %v4748 = vld [vmem:[%s4744 + $0x18] sm:$0xff]
        %v4749 = vld [vmem:[%s4744 + $0x20] sm:$0xff]
        %v4750 = vld [vmem:[%s4744 + $0x28] sm:$0xff]
        %v4751 = vld [vmem:[%s4744 + $0x30] sm:$0xff]
        %v4752 = vld [vmem:[%s4744 + $0x38] sm:$0xff]
        %v4753 = vpack.c.bf16 %v4746, %v4745
        %v4754 = vpack.c.bf16 %v4748, %v4747
        %v4755 = vpack.c.bf16 %v4750, %v4749
        %v4756 = vpack.c.bf16 %v4752, %v4751
        %v4757 = vpack.c.bf16 %v4743, %v4743
        %v4758 = vld [vmem:[%s3 + $0x35] sm:$0x1]
        %v4760 = vsel %vm281, %v4757, 0
        %4762 = vmatprep.subr.bf16.mxu0 0
        %4763 = vmatpush1.bf16.msra.mxu0 %v4753
        %4764 = vmatprep.subr.bf16.mxu0 0
        %4765 = vmatpush1.bf16.msra.mxu0 %v4754
        %4766 = vmatprep.subr.bf16.mxu0 0
        %4767 = vmatpush1.bf16.msra.mxu0 %v4755
        %4768 = vmatprep.subr.bf16.mxu0 0
        %4769 = vmatpush1.bf16.msra.mxu0 %v4756
        %4770 = vmatprep.subr.bf16.mxu0 0
        %4771 = vmatpush1.bf16.msra.mxu0 0
        %4772 = vmatprep.subr.bf16.mxu0 0
        %4773 = vmatpush1.bf16.msra.mxu0 0
        %4774 = vmatprep.subr.bf16.mxu0 0
        %4775 = vmatpush1.bf16.msra.mxu0 0
        %4776 = vmatprep.subr.bf16.mxu0 0
        %4777 = vmatpush1.bf16.msra.mxu0 0
        %4778 = vmatprep.subr.bf16.mxu0 0
        %4779 = vmatpush1.bf16.msra.mxu0 0
        %4780 = vmatprep.subr.bf16.mxu0 0
        %4781 = vmatpush1.bf16.msra.mxu0 0
        %4782 = vmatprep.subr.bf16.mxu0 0
        %4783 = vmatpush1.bf16.msra.mxu0 0
        %4784 = vmatprep.subr.bf16.mxu0 0
        %4785 = vmatpush1.bf16.msra.mxu0 0
        %4786 = vmatprep.subr.bf16.mxu0 0
        %4787 = vmatpush1.bf16.msra.mxu0 0
        %4788 = vmatprep.subr.bf16.mxu0 0
        %4789 = vmatpush1.bf16.msra.mxu0 0
        %4790 = vmatprep.subr.bf16.mxu0 0
        %4791 = vmatpush1.bf16.msra.mxu0 0
        %4792 = vmatprep.subr.bf16.mxu0 0
        %4793 = vmatpush1.bf16.msra.mxu0 0
        %4794 = vmatprep.mubr.bf16.mxu0 0
        %4795 = vmatmul.mubr.bf16.gmra.mrb[0].mxu0 %v4760
        %v4796 = vpop.f32.mrb[0].mxu0
        %v4797 = vadd.f32 %v4758, %v4796
        %v4798 = vpop.f32.mrb[0].mxu0
        %v4799 = vpop.f32.mrb[0].mxu0
        %v4800 = vpop.f32.mrb[0].mxu0
        %4801 = vdwg.mxu0
        %s4802 = scalar_lea.vmem [#allocation7], 2176
        %v4803 = vld [vmem:[%s4802] sm:$0xff]
        %v4804 = vld [vmem:[%s4802 + $0x8] sm:$0xff]
        %v4805 = vld [vmem:[%s4802 + $0x10] sm:$0xff]
        %v4806 = vld [vmem:[%s4802 + $0x18] sm:$0xff]
        %v4807 = vld [vmem:[%s4802 + $0x20] sm:$0xff]
        %v4808 = vld [vmem:[%s4802 + $0x28] sm:$0xff]
        %v4809 = vld [vmem:[%s4802 + $0x30] sm:$0xff]
        %v4810 = vld [vmem:[%s4802 + $0x38] sm:$0xff]
        %v4811 = vpack.c.bf16 %v4804, %v4803
        %v4812 = vpack.c.bf16 %v4806, %v4805
        %v4813 = vpack.c.bf16 %v4808, %v4807
        %v4814 = vpack.c.bf16 %v4810, %v4809
        %v4815 = vld [vmem:[%s3 + $0x36] sm:$0x1]
        %v4816 = vlaneseq
        %v4817 = vshrl.u32 %v4816, 7
        %v4818 = vsub.s32 0, %v4817
        %v4819 = vrot.slane %v4815, %v4818
        %4820 = vmatprep.subr.bf16.mxu0 0
        %4821 = vmatpush1.bf16.msra.mxu0 %v4811
        %4822 = vmatprep.subr.bf16.mxu0 0
        %4823 = vmatpush1.bf16.msra.mxu0 %v4812
        %4824 = vmatprep.subr.bf16.mxu0 0
        %4825 = vmatpush1.bf16.msra.mxu0 %v4813
        %4826 = vmatprep.subr.bf16.mxu0 0
        %4827 = vmatpush1.bf16.msra.mxu0 %v4814
        %4828 = vmatprep.subr.bf16.mxu0 0
        %4829 = vmatpush1.bf16.msra.mxu0 0
        %4830 = vmatprep.subr.bf16.mxu0 0
        %4831 = vmatpush1.bf16.msra.mxu0 0
        %4832 = vmatprep.subr.bf16.mxu0 0
        %4833 = vmatpush1.bf16.msra.mxu0 0
        %4834 = vmatprep.subr.bf16.mxu0 0
        %4835 = vmatpush1.bf16.msra.mxu0 0
        %4836 = vmatprep.subr.bf16.mxu0 0
        %4837 = vmatpush1.bf16.msra.mxu0 0
        %4838 = vmatprep.subr.bf16.mxu0 0
        %4839 = vmatpush1.bf16.msra.mxu0 0
        %4840 = vmatprep.subr.bf16.mxu0 0
        %4841 = vmatpush1.bf16.msra.mxu0 0
        %4842 = vmatprep.subr.bf16.mxu0 0
        %4843 = vmatpush1.bf16.msra.mxu0 0
        %4844 = vmatprep.subr.bf16.mxu0 0
        %4845 = vmatpush1.bf16.msra.mxu0 0
        %4846 = vmatprep.subr.bf16.mxu0 0
        %4847 = vmatpush1.bf16.msra.mxu0 0
        %4848 = vmatprep.subr.bf16.mxu0 0
        %4849 = vmatpush1.bf16.msra.mxu0 0
        %4850 = vmatprep.subr.bf16.mxu0 0
        %4851 = vmatpush1.bf16.msra.mxu0 0
        %4852 = vmatprep.mubr.bf16.mxu0 0
        %4853 = vmatmul.mubr.bf16.gmra.mrb[0].mxu0 %v3723
        %v4854 = vpop.f32.mrb[0].mxu0
        %v4855 = vadd.f32 %v4819, %v4854
        %v4856 = vpop.f32.mrb[0].mxu0
        %v4857 = vpop.f32.mrb[0].mxu0
        %v4858 = vpop.f32.mrb[0].mxu0
        %4859 = vdwg.mxu0
        %s4860 = scalar_lea.vmem [#allocation7], 2240
        %v4861 = vld [vmem:[%s4860] sm:$0xff]
        %v4862 = vld [vmem:[%s4860 + $0x8] sm:$0xff]
        %v4863 = vld [vmem:[%s4860 + $0x10] sm:$0xff]
        %v4864 = vld [vmem:[%s4860 + $0x18] sm:$0xff]
        %v4865 = vld [vmem:[%s4860 + $0x20] sm:$0xff]
        %v4866 = vld [vmem:[%s4860 + $0x28] sm:$0xff]
        %v4867 = vld [vmem:[%s4860 + $0x30] sm:$0xff]
        %v4868 = vld [vmem:[%s4860 + $0x38] sm:$0xff]
        %v4869 = vpack.c.bf16 %v4862, %v4861
        %v4870 = vpack.c.bf16 %v4864, %v4863
        %v4871 = vpack.c.bf16 %v4866, %v4865
        %v4872 = vpack.c.bf16 %v4868, %v4867
        %v4873 = vld [vmem:[%s3 + $0x37] sm:$0x1]
        %v4874 = vlaneseq
        %v4875 = vshrl.u32 %v4874, 7
        %v4876 = vsub.s32 0, %v4875
        %v4877 = vrot.slane %v4873, %v4876
        %4878 = vmatprep.subr.bf16.mxu0 0
        %4879 = vmatpush1.bf16.msra.mxu0 %v4869
        %4880 = vmatprep.subr.bf16.mxu0 0
        %4881 = vmatpush1.bf16.msra.mxu0 %v4870
        %4882 = vmatprep.subr.bf16.mxu0 0
        %4883 = vmatpush1.bf16.msra.mxu0 %v4871
        %4884 = vmatprep.subr.bf16.mxu0 0
        %4885 = vmatpush1.bf16.msra.mxu0 %v4872
        %4886 = vmatprep.subr.bf16.mxu0 0
        %4887 = vmatpush1.bf16.msra.mxu0 0
        %4888 = vmatprep.subr.bf16.mxu0 0
        %4889 = vmatpush1.bf16.msra.mxu0 0
        %4890 = vmatprep.subr.bf16.mxu0 0
        %4891 = vmatpush1.bf16.msra.mxu0 0
        %4892 = vmatprep.subr.bf16.mxu0 0
        %4893 = vmatpush1.bf16.msra.mxu0 0
        %4894 = vmatprep.subr.bf16.mxu0 0
        %4895 = vmatpush1.bf16.msra.mxu0 0
        %4896 = vmatprep.subr.bf16.mxu0 0
        %4897 = vmatpush1.bf16.msra.mxu0 0
        %4898 = vmatprep.subr.bf16.mxu0 0
        %4899 = vmatpush1.bf16.msra.mxu0 0
        %4900 = vmatprep.subr.bf16.mxu0 0
        %4901 = vmatpush1.bf16.msra.mxu0 0
        %4902 = vmatprep.subr.bf16.mxu0 0
        %4903 = vmatpush1.bf16.msra.mxu0 0
        %4904 = vmatprep.subr.bf16.mxu0 0
        %4905 = vmatpush1.bf16.msra.mxu0 0
        %4906 = vmatprep.subr.bf16.mxu0 0
        %4907 = vmatpush1.bf16.msra.mxu0 0
        %4908 = vmatprep.subr.bf16.mxu0 0
        %4909 = vmatpush1.bf16.msra.mxu0 0
        %4910 = vmatprep.mubr.bf16.mxu0 0
        %4911 = vmatmul.mubr.bf16.gmra.mrb[0].mxu0 %v3723
        %v4912 = vpop.f32.mrb[0].mxu0
        %v4913 = vadd.f32 %v4877, %v4912
        %v4914 = vpop.f32.mrb[0].mxu0
        %v4915 = vpop.f32.mrb[0].mxu0
        %v4916 = vpop.f32.mrb[0].mxu0
        %4917 = vdwg.mxu0
        %s4918 = scalar_lea.vmem [#allocation7], 2304
        %v4919 = vld [vmem:[%s4918] sm:$0xff]
        %v4920 = vld [vmem:[%s4918 + $0x8] sm:$0xff]
        %v4921 = vld [vmem:[%s4918 + $0x10] sm:$0xff]
        %v4922 = vld [vmem:[%s4918 + $0x18] sm:$0xff]
        %v4923 = vld [vmem:[%s4918 + $0x20] sm:$0xff]
        %v4924 = vld [vmem:[%s4918 + $0x28] sm:$0xff]
        %v4925 = vld [vmem:[%s4918 + $0x30] sm:$0xff]
        %v4926 = vld [vmem:[%s4918 + $0x38] sm:$0xff]
        %v4927 = vpack.c.bf16 %v4920, %v4919
        %v4928 = vpack.c.bf16 %v4922, %v4921
        %v4929 = vpack.c.bf16 %v4924, %v4923
        %v4930 = vpack.c.bf16 %v4926, %v4925
        %v4931 = vpack.c.bf16 %v4797, %v4797
        %v4932 = vpack.c.bf16 %v4855, %v4855
        %v4934 = vsel %vm698, %v4931, 0
        %v4937 = vsel %vm698, %v4932, 0
        %4939 = vmatprep.subr.bf16.mxu0 0
        %4940 = vmatpush1.bf16.xpose.msra.mxu0 %v4937
        %4941 = vmatprep.subr.bf16.mxu0 0
        %4942 = vmatpush1.bf16.xpose.msra.mxu0 0
        %4943 = vmatprep.subr.bf16.mxu0 0
        %4944 = vmatpush1.bf16.xpose.msra.mxu0 0
        %4945 = vmatprep.subr.bf16.mxu0 0
        %4946 = vmatpush1.bf16.xpose.msra.mxu0 0
        %4947 = vmatprep.subr.bf16.mxu0 0
        %4948 = vmatpush1.bf16.xpose.msra.mxu0 0
        %4949 = vmatprep.subr.bf16.mxu0 0
        %4950 = vmatpush1.bf16.xpose.msra.mxu0 0
        %4951 = vmatprep.subr.bf16.mxu0 0
        %4952 = vmatpush1.bf16.xpose.msra.mxu0 0
        %4953 = vmatprep.subr.bf16.mxu0 0
        %4954 = vmatpush1.bf16.xpose.msra.mxu0 0
        %4955 = vmatprep.subr.bf16.mxu0 0
        %4956 = vmatpush1.bf16.xpose.msra.mxu0 0
        %4957 = vmatprep.subr.bf16.mxu0 0
        %4958 = vmatpush1.bf16.xpose.msra.mxu0 0
        %4959 = vmatprep.subr.bf16.mxu0 0
        %4960 = vmatpush1.bf16.xpose.msra.mxu0 0
        %4961 = vmatprep.subr.bf16.mxu0 0
        %4962 = vmatpush1.bf16.xpose.msra.mxu0 0
        %4963 = vmatprep.subr.bf16.mxu0 0
        %4964 = vmatpush1.bf16.xpose.msra.mxu0 0
        %4965 = vmatprep.subr.bf16.mxu0 0
        %4966 = vmatpush1.bf16.xpose.msra.mxu0 0
        %4967 = vmatprep.subr.bf16.mxu0 0
        %4968 = vmatpush1.bf16.xpose.msra.mxu0 0
        %4969 = vmatprep.subr.bf16.mxu0 0
        %4970 = vmatpush1.bf16.xpose.msra.mxu0 0
        %4971 = vmatprep.mubr.bf16.mxu0 0
        %4972 = vmatmul.mubr.bf16.gmra.mrb[0].mxu0 %v4934
        %v4973 = vpop.f32.mrb[0].mxu0
        %v4974 = vadd.f32 0.0, %v4973
        %v4975 = vpop.f32.mrb[0].mxu0
        %v4976 = vpop.f32.mrb[0].mxu0
        %v4977 = vpop.f32.mrb[0].mxu0
        %4978 = vdwg.mxu0
        %v4979 = vsel %vm3884, %v4974, -inf
        %4980 = vmax.xlane.f32.xlu0 %v4979
        %v4981 = vpop.xlane.xlu0 %4980
        %v4982 = vsub.f32 %v4974, %v4981
        %v4983 = vmul.f32 %v4982, 1.442695
        %v4984 = vpow.pop %v4983
        %v4985 = vsel %vm3884, %v4984, 0.0
        %4986 = vadd.xlane.f32.xlu0 %v4985
        %v4987 = vpop.xlane.xlu0 %4986
        %v4988 = vrcp.pop %v4987
        %v4989 = vmul.f32 %v4984, %v4988
        %v4990 = vpack.c.bf16 %v4989, %v4989
        %v4991 = vpack.c.bf16 %v4913, %v4913
        %v4993 = vsel %vm745, %v4990, 0
        %v4996 = vsel %vm762, %v4991, 0
        %4998 = vmatprep.subr.bf16.mxu0 0
        %4999 = vmatpush1.bf16.msra.mxu0 %v4996
        %5000 = vmatprep.subr.bf16.mxu0 0
        %5001 = vmatpush1.bf16.msra.mxu0 0
        %5002 = vmatprep.subr.bf16.mxu0 0
        %5003 = vmatpush1.bf16.msra.mxu0 0
        %5004 = vmatprep.subr.bf16.mxu0 0
        %5005 = vmatpush1.bf16.msra.mxu0 0
        %5006 = vmatprep.subr.bf16.mxu0 0
        %5007 = vmatpush1.bf16.msra.mxu0 0
        %5008 = vmatprep.subr.bf16.mxu0 0
        %5009 = vmatpush1.bf16.msra.mxu0 0
        %5010 = vmatprep.subr.bf16.mxu0 0
        %5011 = vmatpush1.bf16.msra.mxu0 0
        %5012 = vmatprep.subr.bf16.mxu0 0
        %5013 = vmatpush1.bf16.msra.mxu0 0
        %5014 = vmatprep.subr.bf16.mxu0 0
        %5015 = vmatpush1.bf16.msra.mxu0 0
        %5016 = vmatprep.subr.bf16.mxu0 0
        %5017 = vmatpush1.bf16.msra.mxu0 0
        %5018 = vmatprep.subr.bf16.mxu0 0
        %5019 = vmatpush1.bf16.msra.mxu0 0
        %5020 = vmatprep.subr.bf16.mxu0 0
        %5021 = vmatpush1.bf16.msra.mxu0 0
        %5022 = vmatprep.subr.bf16.mxu0 0
        %5023 = vmatpush1.bf16.msra.mxu0 0
        %5024 = vmatprep.subr.bf16.mxu0 0
        %5025 = vmatpush1.bf16.msra.mxu0 0
        %5026 = vmatprep.subr.bf16.mxu0 0
        %5027 = vmatpush1.bf16.msra.mxu0 0
        %5028 = vmatprep.subr.bf16.mxu0 0
        %5029 = vmatpush1.bf16.msra.mxu0 0
        %5030 = vmatprep.mubr.bf16.mxu0 0
        %5031 = vmatmul.mubr.bf16.gmra.mrb[0].mxu0 %v4993
        %v5032 = vpop.f32.mrb[0].mxu0
        %v5033 = vadd.f32 0.0, %v5032
        %v5034 = vpop.f32.mrb[0].mxu0
        %v5035 = vpop.f32.mrb[0].mxu0
        %v5036 = vpop.f32.mrb[0].mxu0
        %5037 = vdwg.mxu0
        %v5038 = vpack.c.bf16 %v5033, %v5033
        %5040 = vrot.lane.b32.xlu0 %v4931, 112
        %v5041 = vpop.permute.xlu0 %5040
        %5043 = vrot.lane.b32.xlu0 %v4932, 112
        %v5044 = vpop.permute.xlu0 %5043
        %v5046 = vsel %vm698, %v5041, 0
        %v5049 = vsel %vm698, %v5044, 0
        %5051 = vmatprep.subr.bf16.mxu0 0
        %5052 = vmatpush1.bf16.xpose.msra.mxu0 %v5049
        %5053 = vmatprep.subr.bf16.mxu0 0
        %5054 = vmatpush1.bf16.xpose.msra.mxu0 0
        %5055 = vmatprep.subr.bf16.mxu0 0
        %5056 = vmatpush1.bf16.xpose.msra.mxu0 0
        %5057 = vmatprep.subr.bf16.mxu0 0
        %5058 = vmatpush1.bf16.xpose.msra.mxu0 0
        %5059 = vmatprep.subr.bf16.mxu0 0
        %5060 = vmatpush1.bf16.xpose.msra.mxu0 0
        %5061 = vmatprep.subr.bf16.mxu0 0
        %5062 = vmatpush1.bf16.xpose.msra.mxu0 0
        %5063 = vmatprep.subr.bf16.mxu0 0
        %5064 = vmatpush1.bf16.xpose.msra.mxu0 0
        %5065 = vmatprep.subr.bf16.mxu0 0
        %5066 = vmatpush1.bf16.xpose.msra.mxu0 0
        %5067 = vmatprep.subr.bf16.mxu0 0
        %5068 = vmatpush1.bf16.xpose.msra.mxu0 0
        %5069 = vmatprep.subr.bf16.mxu0 0
        %5070 = vmatpush1.bf16.xpose.msra.mxu0 0
        %5071 = vmatprep.subr.bf16.mxu0 0
        %5072 = vmatpush1.bf16.xpose.msra.mxu0 0
        %5073 = vmatprep.subr.bf16.mxu0 0
        %5074 = vmatpush1.bf16.xpose.msra.mxu0 0
        %5075 = vmatprep.subr.bf16.mxu0 0
        %5076 = vmatpush1.bf16.xpose.msra.mxu0 0
        %5077 = vmatprep.subr.bf16.mxu0 0
        %5078 = vmatpush1.bf16.xpose.msra.mxu0 0
        %5079 = vmatprep.subr.bf16.mxu0 0
        %5080 = vmatpush1.bf16.xpose.msra.mxu0 0
        %5081 = vmatprep.subr.bf16.mxu0 0
        %5082 = vmatpush1.bf16.xpose.msra.mxu0 0
        %5083 = vmatprep.mubr.bf16.mxu0 0
        %5084 = vmatmul.mubr.bf16.gmra.mrb[0].mxu0 %v5046
        %v5085 = vpop.f32.mrb[0].mxu0
        %v5086 = vadd.f32 0.0, %v5085
        %v5087 = vpop.f32.mrb[0].mxu0
        %v5088 = vpop.f32.mrb[0].mxu0
        %v5089 = vpop.f32.mrb[0].mxu0
        %5090 = vdwg.mxu0
        %v5091 = vsel %vm3884, %v5086, -inf
        %5092 = vmax.xlane.f32.xlu0 %v5091
        %v5093 = vpop.xlane.xlu0 %5092
        %v5094 = vsub.f32 %v5086, %v5093
        %v5095 = vmul.f32 %v5094, 1.442695
        %v5096 = vpow.pop %v5095
        %v5097 = vsel %vm3884, %v5096, 0.0
        %5098 = vadd.xlane.f32.xlu0 %v5097
        %v5099 = vpop.xlane.xlu0 %5098
        %v5100 = vrcp.pop %v5099
        %v5101 = vmul.f32 %v5096, %v5100
        %v5102 = vpack.c.bf16 %v5101, %v5101
        %5104 = vrot.lane.b32.xlu0 %v4991, 112
        %v5105 = vpop.permute.xlu0 %5104
        %v5107 = vsel %vm745, %v5102, 0
        %v5110 = vsel %vm762, %v5105, 0
        %5112 = vmatprep.subr.bf16.mxu0 0
        %5113 = vmatpush1.bf16.msra.mxu0 %v5110
        %5114 = vmatprep.subr.bf16.mxu0 0
        %5115 = vmatpush1.bf16.msra.mxu0 0
        %5116 = vmatprep.subr.bf16.mxu0 0
        %5117 = vmatpush1.bf16.msra.mxu0 0
        %5118 = vmatprep.subr.bf16.mxu0 0
        %5119 = vmatpush1.bf16.msra.mxu0 0
        %5120 = vmatprep.subr.bf16.mxu0 0
        %5121 = vmatpush1.bf16.msra.mxu0 0
        %5122 = vmatprep.subr.bf16.mxu0 0
        %5123 = vmatpush1.bf16.msra.mxu0 0
        %5124 = vmatprep.subr.bf16.mxu0 0
        %5125 = vmatpush1.bf16.msra.mxu0 0
        %5126 = vmatprep.subr.bf16.mxu0 0
        %5127 = vmatpush1.bf16.msra.mxu0 0
        %5128 = vmatprep.subr.bf16.mxu0 0
        %5129 = vmatpush1.bf16.msra.mxu0 0
        %5130 = vmatprep.subr.bf16.mxu0 0
        %5131 = vmatpush1.bf16.msra.mxu0 0
        %5132 = vmatprep.subr.bf16.mxu0 0
        %5133 = vmatpush1.bf16.msra.mxu0 0
        %5134 = vmatprep.subr.bf16.mxu0 0
        %5135 = vmatpush1.bf16.msra.mxu0 0
        %5136 = vmatprep.subr.bf16.mxu0 0
        %5137 = vmatpush1.bf16.msra.mxu0 0
        %5138 = vmatprep.subr.bf16.mxu0 0
        %5139 = vmatpush1.bf16.msra.mxu0 0
        %5140 = vmatprep.subr.bf16.mxu0 0
        %5141 = vmatpush1.bf16.msra.mxu0 0
        %5142 = vmatprep.subr.bf16.mxu0 0
        %5143 = vmatpush1.bf16.msra.mxu0 0
        %5144 = vmatprep.mubr.bf16.mxu0 0
        %5145 = vmatmul.mubr.bf16.gmra.mrb[0].mxu0 %v5107
        %v5146 = vpop.f32.mrb[0].mxu0
        %v5147 = vadd.f32 0.0, %v5146
        %v5148 = vpop.f32.mrb[0].mxu0
        %v5149 = vpop.f32.mrb[0].mxu0
        %v5150 = vpop.f32.mrb[0].mxu0
        %5151 = vdwg.mxu0
        %v5152 = vpack.c.bf16 %v5147, %v5147
        %v5154 = vsel %vm698, %v5152, 0
        %5156 = vmatprep.subr.bf16.mxu0 0
        %5157 = vmatpush1.bf16.msra.mxu0 %v4928
        %5158 = vmatprep.subr.bf16.mxu0 0
        %5159 = vmatpush1.bf16.msra.mxu0 0
        %5160 = vmatprep.subr.bf16.mxu0 0
        %5161 = vmatpush1.bf16.msra.mxu0 0
        %5162 = vmatprep.subr.bf16.mxu0 0
        %5163 = vmatpush1.bf16.msra.mxu0 0
        %5164 = vmatprep.subr.bf16.mxu0 0
        %5165 = vmatpush1.bf16.msra.mxu0 0
        %5166 = vmatprep.subr.bf16.mxu0 0
        %5167 = vmatpush1.bf16.msra.mxu0 0
        %5168 = vmatprep.subr.bf16.mxu0 0
        %5169 = vmatpush1.bf16.msra.mxu0 0
        %5170 = vmatprep.subr.bf16.mxu0 0
        %5171 = vmatpush1.bf16.msra.mxu0 0
        %5172 = vmatprep.subr.bf16.mxu0 0
        %5173 = vmatpush1.bf16.msra.mxu0 0
        %5174 = vmatprep.subr.bf16.mxu0 0
        %5175 = vmatpush1.bf16.msra.mxu0 0
        %5176 = vmatprep.subr.bf16.mxu0 0
        %5177 = vmatpush1.bf16.msra.mxu0 0
        %5178 = vmatprep.subr.bf16.mxu0 0
        %5179 = vmatpush1.bf16.msra.mxu0 0
        %5180 = vmatprep.subr.bf16.mxu0 0
        %5181 = vmatpush1.bf16.msra.mxu0 0
        %5182 = vmatprep.subr.bf16.mxu0 0
        %5183 = vmatpush1.bf16.msra.mxu0 0
        %5184 = vmatprep.subr.bf16.mxu0 0
        %5185 = vmatpush1.bf16.msra.mxu0 0
        %5186 = vmatprep.subr.bf16.mxu0 0
        %5187 = vmatpush1.bf16.msra.mxu0 0
        %5188 = vmatprep.mubr.bf16.mxu0 0
        %5189 = vmatmul.mubr.bf16.gmra.mrb[0].mxu0 %v5154
        %v5190 = vpop.f32.mrb[0].mxu0
        %v5191 = vadd.f32 0.0, %v5190
        %v5192 = vpop.f32.mrb[0].mxu0
        %v5193 = vpop.f32.mrb[0].mxu0
        %v5194 = vpop.f32.mrb[0].mxu0
        %5195 = vdwg.mxu0
        %v5197 = vsel %vm698, %v5038, 0
        %5199 = vmatprep.subr.bf16.mxu0 0
        %5200 = vmatpush1.bf16.msra.mxu0 %v4927
        %5201 = vmatprep.subr.bf16.mxu0 0
        %5202 = vmatpush1.bf16.msra.mxu0 0
        %5203 = vmatprep.subr.bf16.mxu0 0
        %5204 = vmatpush1.bf16.msra.mxu0 0
        %5205 = vmatprep.subr.bf16.mxu0 0
        %5206 = vmatpush1.bf16.msra.mxu0 0
        %5207 = vmatprep.subr.bf16.mxu0 0
        %5208 = vmatpush1.bf16.msra.mxu0 0
        %5209 = vmatprep.subr.bf16.mxu0 0
        %5210 = vmatpush1.bf16.msra.mxu0 0
        %5211 = vmatprep.subr.bf16.mxu0 0
        %5212 = vmatpush1.bf16.msra.mxu0 0
        %5213 = vmatprep.subr.bf16.mxu0 0
        %5214 = vmatpush1.bf16.msra.mxu0 0
        %5215 = vmatprep.subr.bf16.mxu0 0
        %5216 = vmatpush1.bf16.msra.mxu0 0
        %5217 = vmatprep.subr.bf16.mxu0 0
        %5218 = vmatpush1.bf16.msra.mxu0 0
        %5219 = vmatprep.subr.bf16.mxu0 0
        %5220 = vmatpush1.bf16.msra.mxu0 0
        %5221 = vmatprep.subr.bf16.mxu0 0
        %5222 = vmatpush1.bf16.msra.mxu0 0
        %5223 = vmatprep.subr.bf16.mxu0 0
        %5224 = vmatpush1.bf16.msra.mxu0 0
        %5225 = vmatprep.subr.bf16.mxu0 0
        %5226 = vmatpush1.bf16.msra.mxu0 0
        %5227 = vmatprep.subr.bf16.mxu0 0
        %5228 = vmatpush1.bf16.msra.mxu0 0
        %5229 = vmatprep.subr.bf16.mxu0 0
        %5230 = vmatpush1.bf16.msra.mxu0 0
        %5231 = vmatprep.mubr.bf16.mxu0 0
        %5232 = vmatmul.mubr.bf16.gmra.mrb[0].mxu0 %v5197
        %v5233 = vpop.f32.mrb[0].mxu0
        %v5234 = vadd.f32 %v5191, %v5233
        %v5235 = vpop.f32.mrb[0].mxu0
        %v5236 = vpop.f32.mrb[0].mxu0
        %v5237 = vpop.f32.mrb[0].mxu0
        %5238 = vdwg.mxu0
        %5239 = vrot.lane.b32.xlu0 %v4931, 96
        %v5240 = vpop.permute.xlu0 %5239
        %5241 = vrot.lane.b32.xlu0 %v4932, 96
        %v5242 = vpop.permute.xlu0 %5241
        %v5244 = vsel %vm698, %v5240, 0
        %v5247 = vsel %vm698, %v5242, 0
        %5249 = vmatprep.subr.bf16.mxu0 0
        %5250 = vmatpush1.bf16.xpose.msra.mxu0 %v5247
        %5251 = vmatprep.subr.bf16.mxu0 0
        %5252 = vmatpush1.bf16.xpose.msra.mxu0 0
        %5253 = vmatprep.subr.bf16.mxu0 0
        %5254 = vmatpush1.bf16.xpose.msra.mxu0 0
        %5255 = vmatprep.subr.bf16.mxu0 0
        %5256 = vmatpush1.bf16.xpose.msra.mxu0 0
        %5257 = vmatprep.subr.bf16.mxu0 0
        %5258 = vmatpush1.bf16.xpose.msra.mxu0 0
        %5259 = vmatprep.subr.bf16.mxu0 0
        %5260 = vmatpush1.bf16.xpose.msra.mxu0 0
        %5261 = vmatprep.subr.bf16.mxu0 0
        %5262 = vmatpush1.bf16.xpose.msra.mxu0 0
        %5263 = vmatprep.subr.bf16.mxu0 0
        %5264 = vmatpush1.bf16.xpose.msra.mxu0 0
        %5265 = vmatprep.subr.bf16.mxu0 0
        %5266 = vmatpush1.bf16.xpose.msra.mxu0 0
        %5267 = vmatprep.subr.bf16.mxu0 0
        %5268 = vmatpush1.bf16.xpose.msra.mxu0 0
        %5269 = vmatprep.subr.bf16.mxu0 0
        %5270 = vmatpush1.bf16.xpose.msra.mxu0 0
        %5271 = vmatprep.subr.bf16.mxu0 0
        %5272 = vmatpush1.bf16.xpose.msra.mxu0 0
        %5273 = vmatprep.subr.bf16.mxu0 0
        %5274 = vmatpush1.bf16.xpose.msra.mxu0 0
        %5275 = vmatprep.subr.bf16.mxu0 0
        %5276 = vmatpush1.bf16.xpose.msra.mxu0 0
        %5277 = vmatprep.subr.bf16.mxu0 0
        %5278 = vmatpush1.bf16.xpose.msra.mxu0 0
        %5279 = vmatprep.subr.bf16.mxu0 0
        %5280 = vmatpush1.bf16.xpose.msra.mxu0 0
        %5281 = vmatprep.mubr.bf16.mxu0 0
        %5282 = vmatmul.mubr.bf16.gmra.mrb[0].mxu0 %v5244
        %v5283 = vpop.f32.mrb[0].mxu0
        %v5284 = vadd.f32 0.0, %v5283
        %v5285 = vpop.f32.mrb[0].mxu0
        %v5286 = vpop.f32.mrb[0].mxu0
        %v5287 = vpop.f32.mrb[0].mxu0
        %5288 = vdwg.mxu0
        %v5289 = vsel %vm3884, %v5284, -inf
        %5290 = vmax.xlane.f32.xlu0 %v5289
        %v5291 = vpop.xlane.xlu0 %5290
        %v5292 = vsub.f32 %v5284, %v5291
        %v5293 = vmul.f32 %v5292, 1.442695
        %v5294 = vpow.pop %v5293
        %v5295 = vsel %vm3884, %v5294, 0.0
        %5296 = vadd.xlane.f32.xlu0 %v5295
        %v5297 = vpop.xlane.xlu0 %5296
        %v5298 = vrcp.pop %v5297
        %v5299 = vmul.f32 %v5294, %v5298
        %v5300 = vpack.c.bf16 %v5299, %v5299
        %5301 = vrot.lane.b32.xlu0 %v4991, 96
        %v5302 = vpop.permute.xlu0 %5301
        %v5304 = vsel %vm745, %v5300, 0
        %v5307 = vsel %vm762, %v5302, 0
        %5309 = vmatprep.subr.bf16.mxu0 0
        %5310 = vmatpush1.bf16.msra.mxu0 %v5307
        %5311 = vmatprep.subr.bf16.mxu0 0
        %5312 = vmatpush1.bf16.msra.mxu0 0
        %5313 = vmatprep.subr.bf16.mxu0 0
        %5314 = vmatpush1.bf16.msra.mxu0 0
        %5315 = vmatprep.subr.bf16.mxu0 0
        %5316 = vmatpush1.bf16.msra.mxu0 0
        %5317 = vmatprep.subr.bf16.mxu0 0
        %5318 = vmatpush1.bf16.msra.mxu0 0
        %5319 = vmatprep.subr.bf16.mxu0 0
        %5320 = vmatpush1.bf16.msra.mxu0 0
        %5321 = vmatprep.subr.bf16.mxu0 0
        %5322 = vmatpush1.bf16.msra.mxu0 0
        %5323 = vmatprep.subr.bf16.mxu0 0
        %5324 = vmatpush1.bf16.msra.mxu0 0
        %5325 = vmatprep.subr.bf16.mxu0 0
        %5326 = vmatpush1.bf16.msra.mxu0 0
        %5327 = vmatprep.subr.bf16.mxu0 0
        %5328 = vmatpush1.bf16.msra.mxu0 0
        %5329 = vmatprep.subr.bf16.mxu0 0
        %5330 = vmatpush1.bf16.msra.mxu0 0
        %5331 = vmatprep.subr.bf16.mxu0 0
        %5332 = vmatpush1.bf16.msra.mxu0 0
        %5333 = vmatprep.subr.bf16.mxu0 0
        %5334 = vmatpush1.bf16.msra.mxu0 0
        %5335 = vmatprep.subr.bf16.mxu0 0
        %5336 = vmatpush1.bf16.msra.mxu0 0
        %5337 = vmatprep.subr.bf16.mxu0 0
        %5338 = vmatpush1.bf16.msra.mxu0 0
        %5339 = vmatprep.subr.bf16.mxu0 0
        %5340 = vmatpush1.bf16.msra.mxu0 0
        %5341 = vmatprep.mubr.bf16.mxu0 0
        %5342 = vmatmul.mubr.bf16.gmra.mrb[0].mxu0 %v5304
        %v5343 = vpop.f32.mrb[0].mxu0
        %v5344 = vadd.f32 0.0, %v5343
        %v5345 = vpop.f32.mrb[0].mxu0
        %v5346 = vpop.f32.mrb[0].mxu0
        %v5347 = vpop.f32.mrb[0].mxu0
        %5348 = vdwg.mxu0
        %v5349 = vpack.c.bf16 %v5344, %v5344
        %v5351 = vsel %vm698, %v5349, 0
        %5353 = vmatprep.subr.bf16.mxu0 0
        %5354 = vmatpush1.bf16.msra.mxu0 %v4929
        %5355 = vmatprep.subr.bf16.mxu0 0
        %5356 = vmatpush1.bf16.msra.mxu0 0
        %5357 = vmatprep.subr.bf16.mxu0 0
        %5358 = vmatpush1.bf16.msra.mxu0 0
        %5359 = vmatprep.subr.bf16.mxu0 0
        %5360 = vmatpush1.bf16.msra.mxu0 0
        %5361 = vmatprep.subr.bf16.mxu0 0
        %5362 = vmatpush1.bf16.msra.mxu0 0
        %5363 = vmatprep.subr.bf16.mxu0 0
        %5364 = vmatpush1.bf16.msra.mxu0 0
        %5365 = vmatprep.subr.bf16.mxu0 0
        %5366 = vmatpush1.bf16.msra.mxu0 0
        %5367 = vmatprep.subr.bf16.mxu0 0
        %5368 = vmatpush1.bf16.msra.mxu0 0
        %5369 = vmatprep.subr.bf16.mxu0 0
        %5370 = vmatpush1.bf16.msra.mxu0 0
        %5371 = vmatprep.subr.bf16.mxu0 0
        %5372 = vmatpush1.bf16.msra.mxu0 0
        %5373 = vmatprep.subr.bf16.mxu0 0
        %5374 = vmatpush1.bf16.msra.mxu0 0
        %5375 = vmatprep.subr.bf16.mxu0 0
        %5376 = vmatpush1.bf16.msra.mxu0 0
        %5377 = vmatprep.subr.bf16.mxu0 0
        %5378 = vmatpush1.bf16.msra.mxu0 0
        %5379 = vmatprep.subr.bf16.mxu0 0
        %5380 = vmatpush1.bf16.msra.mxu0 0
        %5381 = vmatprep.subr.bf16.mxu0 0
        %5382 = vmatpush1.bf16.msra.mxu0 0
        %5383 = vmatprep.subr.bf16.mxu0 0
        %5384 = vmatpush1.bf16.msra.mxu0 0
        %5385 = vmatprep.mubr.bf16.mxu0 0
        %5386 = vmatmul.mubr.bf16.gmra.mrb[0].mxu0 %v5351
        %v5387 = vpop.f32.mrb[0].mxu0
        %v5388 = vadd.f32 0.0, %v5387
        %v5389 = vpop.f32.mrb[0].mxu0
        %v5390 = vpop.f32.mrb[0].mxu0
        %v5391 = vpop.f32.mrb[0].mxu0
        %5392 = vdwg.mxu0
        %v5393 = vadd.f32 %v5234, %v5388
        %5394 = vrot.lane.b32.xlu0 %v4931, 80
        %v5395 = vpop.permute.xlu0 %5394
        %5396 = vrot.lane.b32.xlu0 %v4932, 80
        %v5397 = vpop.permute.xlu0 %5396
        %v5399 = vsel %vm698, %v5395, 0
        %v5402 = vsel %vm698, %v5397, 0
        %5404 = vmatprep.subr.bf16.mxu0 0
        %5405 = vmatpush1.bf16.xpose.msra.mxu0 %v5402
        %5406 = vmatprep.subr.bf16.mxu0 0
        %5407 = vmatpush1.bf16.xpose.msra.mxu0 0
        %5408 = vmatprep.subr.bf16.mxu0 0
        %5409 = vmatpush1.bf16.xpose.msra.mxu0 0
        %5410 = vmatprep.subr.bf16.mxu0 0
        %5411 = vmatpush1.bf16.xpose.msra.mxu0 0
        %5412 = vmatprep.subr.bf16.mxu0 0
        %5413 = vmatpush1.bf16.xpose.msra.mxu0 0
        %5414 = vmatprep.subr.bf16.mxu0 0
        %5415 = vmatpush1.bf16.xpose.msra.mxu0 0
        %5416 = vmatprep.subr.bf16.mxu0 0
        %5417 = vmatpush1.bf16.xpose.msra.mxu0 0
        %5418 = vmatprep.subr.bf16.mxu0 0
        %5419 = vmatpush1.bf16.xpose.msra.mxu0 0
        %5420 = vmatprep.subr.bf16.mxu0 0
        %5421 = vmatpush1.bf16.xpose.msra.mxu0 0
        %5422 = vmatprep.subr.bf16.mxu0 0
        %5423 = vmatpush1.bf16.xpose.msra.mxu0 0
        %5424 = vmatprep.subr.bf16.mxu0 0
        %5425 = vmatpush1.bf16.xpose.msra.mxu0 0
        %5426 = vmatprep.subr.bf16.mxu0 0
        %5427 = vmatpush1.bf16.xpose.msra.mxu0 0
        %5428 = vmatprep.subr.bf16.mxu0 0
        %5429 = vmatpush1.bf16.xpose.msra.mxu0 0
        %5430 = vmatprep.subr.bf16.mxu0 0
        %5431 = vmatpush1.bf16.xpose.msra.mxu0 0
        %5432 = vmatprep.subr.bf16.mxu0 0
        %5433 = vmatpush1.bf16.xpose.msra.mxu0 0
        %5434 = vmatprep.subr.bf16.mxu0 0
        %5435 = vmatpush1.bf16.xpose.msra.mxu0 0
        %5436 = vmatprep.mubr.bf16.mxu0 0
        %5437 = vmatmul.mubr.bf16.gmra.mrb[0].mxu0 %v5399
        %v5438 = vpop.f32.mrb[0].mxu0
        %v5439 = vadd.f32 0.0, %v5438
        %v5440 = vpop.f32.mrb[0].mxu0
        %v5441 = vpop.f32.mrb[0].mxu0
        %v5442 = vpop.f32.mrb[0].mxu0
        %5443 = vdwg.mxu0
        %v5444 = vsel %vm3884, %v5439, -inf
        %5445 = vmax.xlane.f32.xlu0 %v5444
        %v5446 = vpop.xlane.xlu0 %5445
        %v5447 = vsub.f32 %v5439, %v5446
        %v5448 = vmul.f32 %v5447, 1.442695
        %v5449 = vpow.pop %v5448
        %v5450 = vsel %vm3884, %v5449, 0.0
        %5451 = vadd.xlane.f32.xlu0 %v5450
        %v5452 = vpop.xlane.xlu0 %5451
        %v5453 = vrcp.pop %v5452
        %v5454 = vmul.f32 %v5449, %v5453
        %v5455 = vpack.c.bf16 %v5454, %v5454
        %5456 = vrot.lane.b32.xlu0 %v4991, 80
        %v5457 = vpop.permute.xlu0 %5456
        %v5459 = vsel %vm745, %v5455, 0
        %v5462 = vsel %vm762, %v5457, 0
        %5464 = vmatprep.subr.bf16.mxu0 0
        %5465 = vmatpush1.bf16.msra.mxu0 %v5462
        %5466 = vmatprep.subr.bf16.mxu0 0
        %5467 = vmatpush1.bf16.msra.mxu0 0
        %5468 = vmatprep.subr.bf16.mxu0 0
        %5469 = vmatpush1.bf16.msra.mxu0 0
        %5470 = vmatprep.subr.bf16.mxu0 0
        %5471 = vmatpush1.bf16.msra.mxu0 0
        %5472 = vmatprep.subr.bf16.mxu0 0
        %5473 = vmatpush1.bf16.msra.mxu0 0
        %5474 = vmatprep.subr.bf16.mxu0 0
        %5475 = vmatpush1.bf16.msra.mxu0 0
        %5476 = vmatprep.subr.bf16.mxu0 0
        %5477 = vmatpush1.bf16.msra.mxu0 0
        %5478 = vmatprep.subr.bf16.mxu0 0
        %5479 = vmatpush1.bf16.msra.mxu0 0
        %5480 = vmatprep.subr.bf16.mxu0 0
        %5481 = vmatpush1.bf16.msra.mxu0 0
        %5482 = vmatprep.subr.bf16.mxu0 0
        %5483 = vmatpush1.bf16.msra.mxu0 0
        %5484 = vmatprep.subr.bf16.mxu0 0
        %5485 = vmatpush1.bf16.msra.mxu0 0
        %5486 = vmatprep.subr.bf16.mxu0 0
        %5487 = vmatpush1.bf16.msra.mxu0 0
        %5488 = vmatprep.subr.bf16.mxu0 0
        %5489 = vmatpush1.bf16.msra.mxu0 0
        %5490 = vmatprep.subr.bf16.mxu0 0
        %5491 = vmatpush1.bf16.msra.mxu0 0
        %5492 = vmatprep.subr.bf16.mxu0 0
        %5493 = vmatpush1.bf16.msra.mxu0 0
        %5494 = vmatprep.subr.bf16.mxu0 0
        %5495 = vmatpush1.bf16.msra.mxu0 0
        %5496 = vmatprep.mubr.bf16.mxu0 0
        %5497 = vmatmul.mubr.bf16.gmra.mrb[0].mxu0 %v5459
        %v5498 = vpop.f32.mrb[0].mxu0
        %v5499 = vadd.f32 0.0, %v5498
        %v5500 = vpop.f32.mrb[0].mxu0
        %v5501 = vpop.f32.mrb[0].mxu0
        %v5502 = vpop.f32.mrb[0].mxu0
        %5503 = vdwg.mxu0
        %v5504 = vpack.c.bf16 %v5499, %v5499
        %v5506 = vsel %vm698, %v5504, 0
        %5508 = vmatprep.subr.bf16.mxu0 0
        %5509 = vmatpush1.bf16.msra.mxu0 %v4930
        %5510 = vmatprep.subr.bf16.mxu0 0
        %5511 = vmatpush1.bf16.msra.mxu0 0
        %5512 = vmatprep.subr.bf16.mxu0 0
        %5513 = vmatpush1.bf16.msra.mxu0 0
        %5514 = vmatprep.subr.bf16.mxu0 0
        %5515 = vmatpush1.bf16.msra.mxu0 0
        %5516 = vmatprep.subr.bf16.mxu0 0
        %5517 = vmatpush1.bf16.msra.mxu0 0
        %5518 = vmatprep.subr.bf16.mxu0 0
        %5519 = vmatpush1.bf16.msra.mxu0 0
        %5520 = vmatprep.subr.bf16.mxu0 0
        %5521 = vmatpush1.bf16.msra.mxu0 0
        %5522 = vmatprep.subr.bf16.mxu0 0
        %5523 = vmatpush1.bf16.msra.mxu0 0
        %5524 = vmatprep.subr.bf16.mxu0 0
        %5525 = vmatpush1.bf16.msra.mxu0 0
        %5526 = vmatprep.subr.bf16.mxu0 0
        %5527 = vmatpush1.bf16.msra.mxu0 0
        %5528 = vmatprep.subr.bf16.mxu0 0
        %5529 = vmatpush1.bf16.msra.mxu0 0
        %5530 = vmatprep.subr.bf16.mxu0 0
        %5531 = vmatpush1.bf16.msra.mxu0 0
        %5532 = vmatprep.subr.bf16.mxu0 0
        %5533 = vmatpush1.bf16.msra.mxu0 0
        %5534 = vmatprep.subr.bf16.mxu0 0
        %5535 = vmatpush1.bf16.msra.mxu0 0
        %5536 = vmatprep.subr.bf16.mxu0 0
        %5537 = vmatpush1.bf16.msra.mxu0 0
        %5538 = vmatprep.subr.bf16.mxu0 0
        %5539 = vmatpush1.bf16.msra.mxu0 0
        %5540 = vmatprep.mubr.bf16.mxu0 0
        %5541 = vmatmul.mubr.bf16.gmra.mrb[0].mxu0 %v5506
        %v5542 = vpop.f32.mrb[0].mxu0
        %v5543 = vadd.f32 0.0, %v5542
        %v5544 = vpop.f32.mrb[0].mxu0
        %v5545 = vpop.f32.mrb[0].mxu0
        %v5546 = vpop.f32.mrb[0].mxu0
        %5547 = vdwg.mxu0
        %v5548 = vadd.f32 %v5393, %v5543
        %v5549 = vld [vmem:[%s3 + $0x38] sm:$0x1]
        %v5550 = vadd.f32 %v5548, %v5549
        %v5551 = vadd.f32 %v4743, %v5550
        %v5552 = vsel %vm3627, %v5551, 0.0
        %5553 = vadd.xlane.f32.xlu0 %v5552
        %v5554 = vpop.xlane.xlu0 %5553
        %v5555 = vmul.f32 %v5554, %v1327
        %v5556 = vsub.f32 %v5551, %v5555
        %v5557 = vmul.f32 %v5556, %v5556
        %v5558 = vsel %vm3627, %v5557, 0.0
        %5559 = vadd.xlane.f32.xlu0 %v5558
        %v5560 = vpop.xlane.xlu0 %5559
        %v5561 = vmul.f32 %v5560, %v1327
        %v5562 = vadd.f32 %v5561, 1e-05
        %v5563 = vrsqrt.pop %v5562
        %v5564 = vmul.f32 %v5556, %v5563
        %v5565 = vld [vmem:[%s3 + $0x3d] sm:$0x1]
        %v5566 = vmul.f32 %v5564, %v5565
        %v5567 = vld [vmem:[%s3 + $0x3e] sm:$0x1]
        %v5568 = vadd.f32 %v5566, %v5567
        %s5569 = scalar_lea.vmem [#allocation7], 2368
        %v5570 = vld [vmem:[%s5569] sm:$0xff]
        %v5571 = vld [vmem:[%s5569 + $0x8] sm:$0xff]
        %v5572 = vld [vmem:[%s5569 + $0x10] sm:$0xff]
        %v5573 = vld [vmem:[%s5569 + $0x18] sm:$0xff]
        %v5574 = vld [vmem:[%s5569 + $0x20] sm:$0xff]
        %v5575 = vld [vmem:[%s5569 + $0x28] sm:$0xff]
        %v5576 = vld [vmem:[%s5569 + $0x30] sm:$0xff]
        %v5577 = vld [vmem:[%s5569 + $0x38] sm:$0xff]
        %v5578 = vpack.c.bf16 %v5571, %v5570
        %v5579 = vpack.c.bf16 %v5573, %v5572
        %v5580 = vpack.c.bf16 %v5575, %v5574
        %v5581 = vpack.c.bf16 %v5577, %v5576
        %v5582 = vpack.c.bf16 %v5568, %v5568
        %v5583 = vld [vmem:[%s3 + $0x39] sm:$0x1]
        %v5585 = vsel %vm281, %v5582, 0
        %5587 = vmatprep.subr.bf16.mxu0 0
        %5588 = vmatpush1.bf16.msra.mxu0 %v5578
        %5589 = vmatprep.subr.bf16.mxu0 0
        %5590 = vmatpush1.bf16.msra.mxu0 %v5579
        %5591 = vmatprep.subr.bf16.mxu0 0
        %5592 = vmatpush1.bf16.msra.mxu0 %v5580
        %5593 = vmatprep.subr.bf16.mxu0 0
        %5594 = vmatpush1.bf16.msra.mxu0 %v5581
        %5595 = vmatprep.subr.bf16.mxu0 0
        %5596 = vmatpush1.bf16.msra.mxu0 0
        %5597 = vmatprep.subr.bf16.mxu0 0
        %5598 = vmatpush1.bf16.msra.mxu0 0
        %5599 = vmatprep.subr.bf16.mxu0 0
        %5600 = vmatpush1.bf16.msra.mxu0 0
        %5601 = vmatprep.subr.bf16.mxu0 0
        %5602 = vmatpush1.bf16.msra.mxu0 0
        %5603 = vmatprep.subr.bf16.mxu0 0
        %5604 = vmatpush1.bf16.msra.mxu0 0
        %5605 = vmatprep.subr.bf16.mxu0 0
        %5606 = vmatpush1.bf16.msra.mxu0 0
        %5607 = vmatprep.subr.bf16.mxu0 0
        %5608 = vmatpush1.bf16.msra.mxu0 0
        %5609 = vmatprep.subr.bf16.mxu0 0
        %5610 = vmatpush1.bf16.msra.mxu0 0
        %5611 = vmatprep.subr.bf16.mxu0 0
        %5612 = vmatpush1.bf16.msra.mxu0 0
        %5613 = vmatprep.subr.bf16.mxu0 0
        %5614 = vmatpush1.bf16.msra.mxu0 0
        %5615 = vmatprep.subr.bf16.mxu0 0
        %5616 = vmatpush1.bf16.msra.mxu0 0
        %5617 = vmatprep.subr.bf16.mxu0 0
        %5618 = vmatpush1.bf16.msra.mxu0 0
        %5619 = vmatprep.mubr.bf16.mxu0 0
        %5620 = vmatmul.mubr.bf16.gmra.mrb[0].mxu0 %v5585
        %v5621 = vpop.f32.mrb[0].mxu0
        %v5622 = vadd.f32 %v5583, %v5621
        %v5623 = vpop.f32.mrb[0].mxu0
        %v5624 = vpop.f32.mrb[0].mxu0
        %v5625 = vpop.f32.mrb[0].mxu0
        %5626 = vdwg.mxu0
        %v5627 = vmax.f32 %v5622, 0.0
        %s5628 = scalar_lea.vmem [#allocation7], 2432
        %v5629 = vld [vmem:[%s5628] sm:$0xff]
        %v5630 = vld [vmem:[%s5628 + $0x8] sm:$0xff]
        %v5631 = vld [vmem:[%s5628 + $0x10] sm:$0xff]
        %v5632 = vld [vmem:[%s5628 + $0x18] sm:$0xff]
        %v5633 = vld [vmem:[%s5628 + $0x20] sm:$0xff]
        %v5634 = vld [vmem:[%s5628 + $0x28] sm:$0xff]
        %v5635 = vld [vmem:[%s5628 + $0x30] sm:$0xff]
        %v5636 = vld [vmem:[%s5628 + $0x38] sm:$0xff]
        %v5637 = vpack.c.bf16 %v5630, %v5629
        %v5638 = vpack.c.bf16 %v5632, %v5631
        %v5639 = vpack.c.bf16 %v5634, %v5633
        %v5640 = vpack.c.bf16 %v5636, %v5635
        %v5641 = vpack.c.bf16 %v5627, %v5627
        %v5642 = vld [vmem:[%s3 + $0x3a] sm:$0x1]
        %v5644 = vsel %vm281, %v5641, 0
        %5646 = vmatprep.subr.bf16.mxu0 0
        %5647 = vmatpush1.bf16.msra.mxu0 %v5637
        %5648 = vmatprep.subr.bf16.mxu0 0
        %5649 = vmatpush1.bf16.msra.mxu0 %v5638
        %5650 = vmatprep.subr.bf16.mxu0 0
        %5651 = vmatpush1.bf16.msra.mxu0 %v5639
        %5652 = vmatprep.subr.bf16.mxu0 0
        %5653 = vmatpush1.bf16.msra.mxu0 %v5640
        %5654 = vmatprep.subr.bf16.mxu0 0
        %5655 = vmatpush1.bf16.msra.mxu0 0
        %5656 = vmatprep.subr.bf16.mxu0 0
        %5657 = vmatpush1.bf16.msra.mxu0 0
        %5658 = vmatprep.subr.bf16.mxu0 0
        %5659 = vmatpush1.bf16.msra.mxu0 0
        %5660 = vmatprep.subr.bf16.mxu0 0
        %5661 = vmatpush1.bf16.msra.mxu0 0
        %5662 = vmatprep.subr.bf16.mxu0 0
        %5663 = vmatpush1.bf16.msra.mxu0 0
        %5664 = vmatprep.subr.bf16.mxu0 0
        %5665 = vmatpush1.bf16.msra.mxu0 0
        %5666 = vmatprep.subr.bf16.mxu0 0
        %5667 = vmatpush1.bf16.msra.mxu0 0
        %5668 = vmatprep.subr.bf16.mxu0 0
        %5669 = vmatpush1.bf16.msra.mxu0 0
        %5670 = vmatprep.subr.bf16.mxu0 0
        %5671 = vmatpush1.bf16.msra.mxu0 0
        %5672 = vmatprep.subr.bf16.mxu0 0
        %5673 = vmatpush1.bf16.msra.mxu0 0
        %5674 = vmatprep.subr.bf16.mxu0 0
        %5675 = vmatpush1.bf16.msra.mxu0 0
        %5676 = vmatprep.subr.bf16.mxu0 0
        %5677 = vmatpush1.bf16.msra.mxu0 0
        %5678 = vmatprep.mubr.bf16.mxu0 0
        %5679 = vmatmul.mubr.bf16.gmra.mrb[0].mxu0 %v5644
        %v5680 = vpop.f32.mrb[0].mxu0
        %v5681 = vadd.f32 %v5642, %v5680
        %v5682 = vpop.f32.mrb[0].mxu0
        %v5683 = vpop.f32.mrb[0].mxu0
        %v5684 = vpop.f32.mrb[0].mxu0
        %5685 = vdwg.mxu0
        %v5686 = vadd.f32 %v5568, %v5681
        %v5687 = vsel %vm3627, %v5686, 0.0
        %5688 = vadd.xlane.f32.xlu0 %v5687
        %v5689 = vpop.xlane.xlu0 %5688
        %v5690 = vmul.f32 %v5689, %v1327
        %v5691 = vsub.f32 %v5686, %v5690
        %v5692 = vmul.f32 %v5691, %v5691
        %v5693 = vsel %vm3627, %v5692, 0.0
        %5694 = vadd.xlane.f32.xlu0 %v5693
        %v5695 = vpop.xlane.xlu0 %5694
        %v5696 = vmul.f32 %v5695, %v1327
        %v5697 = vadd.f32 %v5696, 1e-05
        %v5698 = vrsqrt.pop %v5697
        %v5699 = vmul.f32 %v5691, %v5698
        %v5700 = vld [vmem:[%s3 + $0x3f] sm:$0x1]
        %v5701 = vmul.f32 %v5699, %v5700
        %v5702 = vld [vmem:[%s3 + $0x40] sm:$0x1]
        %v5703 = vadd.f32 %v5701, %v5702
        %s5704 = scalar_lea.vmem [#allocation7], 2496
        %v5705 = vld [vmem:[%s5704] sm:$0xff]
        %v5706 = vld [vmem:[%s5704 + $0x8] sm:$0xff]
        %v5707 = vld [vmem:[%s5704 + $0x10] sm:$0xff]
        %v5708 = vld [vmem:[%s5704 + $0x18] sm:$0xff]
        %v5709 = vld [vmem:[%s5704 + $0x20] sm:$0xff]
        %v5710 = vld [vmem:[%s5704 + $0x28] sm:$0xff]
        %v5711 = vld [vmem:[%s5704 + $0x30] sm:$0xff]
        %v5712 = vld [vmem:[%s5704 + $0x38] sm:$0xff]
        %v5713 = vpack.c.bf16 %v5706, %v5705
        %v5714 = vpack.c.bf16 %v5708, %v5707
        %v5715 = vpack.c.bf16 %v5710, %v5709
        %v5716 = vpack.c.bf16 %v5712, %v5711
        %v5717 = vpack.c.bf16 %v5703, %v5703
        %v5718 = vld [vmem:[%s3 + $0x41] sm:$0x1]
        %v5720 = vsel %vm281, %v5717, 0
        %5722 = vmatprep.subr.bf16.mxu0 0
        %5723 = vmatpush1.bf16.msra.mxu0 %v5713
        %5724 = vmatprep.subr.bf16.mxu0 0
        %5725 = vmatpush1.bf16.msra.mxu0 %v5714
        %5726 = vmatprep.subr.bf16.mxu0 0
        %5727 = vmatpush1.bf16.msra.mxu0 %v5715
        %5728 = vmatprep.subr.bf16.mxu0 0
        %5729 = vmatpush1.bf16.msra.mxu0 %v5716
        %5730 = vmatprep.subr.bf16.mxu0 0
        %5731 = vmatpush1.bf16.msra.mxu0 0
        %5732 = vmatprep.subr.bf16.mxu0 0
        %5733 = vmatpush1.bf16.msra.mxu0 0
        %5734 = vmatprep.subr.bf16.mxu0 0
        %5735 = vmatpush1.bf16.msra.mxu0 0
        %5736 = vmatprep.subr.bf16.mxu0 0
        %5737 = vmatpush1.bf16.msra.mxu0 0
        %5738 = vmatprep.subr.bf16.mxu0 0
        %5739 = vmatpush1.bf16.msra.mxu0 0
        %5740 = vmatprep.subr.bf16.mxu0 0
        %5741 = vmatpush1.bf16.msra.mxu0 0
        %5742 = vmatprep.subr.bf16.mxu0 0
        %5743 = vmatpush1.bf16.msra.mxu0 0
        %5744 = vmatprep.subr.bf16.mxu0 0
        %5745 = vmatpush1.bf16.msra.mxu0 0
        %5746 = vmatprep.subr.bf16.mxu0 0
        %5747 = vmatpush1.bf16.msra.mxu0 0
        %5748 = vmatprep.subr.bf16.mxu0 0
        %5749 = vmatpush1.bf16.msra.mxu0 0
        %5750 = vmatprep.subr.bf16.mxu0 0
        %5751 = vmatpush1.bf16.msra.mxu0 0
        %5752 = vmatprep.subr.bf16.mxu0 0
        %5753 = vmatpush1.bf16.msra.mxu0 0
        %5754 = vmatprep.mubr.bf16.mxu0 0
        %5755 = vmatmul.mubr.bf16.gmra.mrb[0].mxu0 %v5720
        %v5756 = vpop.f32.mrb[0].mxu0
        %v5757 = vadd.f32 %v5718, %v5756
        %v5758 = vpop.f32.mrb[0].mxu0
        %v5759 = vpop.f32.mrb[0].mxu0
        %v5760 = vpop.f32.mrb[0].mxu0
        %5761 = vdwg.mxu0
        %s5762 = scalar_lea.vmem [#allocation7], 2560
        %v5763 = vld [vmem:[%s5762] sm:$0xff]
        %v5764 = vld [vmem:[%s5762 + $0x8] sm:$0xff]
        %v5765 = vld [vmem:[%s5762 + $0x10] sm:$0xff]
        %v5766 = vld [vmem:[%s5762 + $0x18] sm:$0xff]
        %v5767 = vld [vmem:[%s5762 + $0x20] sm:$0xff]
        %v5768 = vld [vmem:[%s5762 + $0x28] sm:$0xff]
        %v5769 = vld [vmem:[%s5762 + $0x30] sm:$0xff]
        %v5770 = vld [vmem:[%s5762 + $0x38] sm:$0xff]
        %v5771 = vpack.c.bf16 %v5764, %v5763
        %v5772 = vpack.c.bf16 %v5766, %v5765
        %v5773 = vpack.c.bf16 %v5768, %v5767
        %v5774 = vpack.c.bf16 %v5770, %v5769
        %v5775 = vpack.c.bf16 %v5757, %v5757
        %v5776 = vld [vmem:[%s3 + $0x42] sm:$0x1]
        %v5778 = vsel %vm281, %v5775, 0
        %5780 = vmatprep.subr.bf16.mxu0 0
        %5781 = vmatpush1.bf16.msra.mxu0 %v5771
        %5782 = vmatprep.subr.bf16.mxu0 0
        %5783 = vmatpush1.bf16.msra.mxu0 %v5772
        %5784 = vmatprep.subr.bf16.mxu0 0
        %5785 = vmatpush1.bf16.msra.mxu0 %v5773
        %5786 = vmatprep.subr.bf16.mxu0 0
        %5787 = vmatpush1.bf16.msra.mxu0 %v5774
        %5788 = vmatprep.subr.bf16.mxu0 0
        %5789 = vmatpush1.bf16.msra.mxu0 0
        %5790 = vmatprep.subr.bf16.mxu0 0
        %5791 = vmatpush1.bf16.msra.mxu0 0
        %5792 = vmatprep.subr.bf16.mxu0 0
        %5793 = vmatpush1.bf16.msra.mxu0 0
        %5794 = vmatprep.subr.bf16.mxu0 0
        %5795 = vmatpush1.bf16.msra.mxu0 0
        %5796 = vmatprep.subr.bf16.mxu0 0
        %5797 = vmatpush1.bf16.msra.mxu0 0
        %5798 = vmatprep.subr.bf16.mxu0 0
        %5799 = vmatpush1.bf16.msra.mxu0 0
        %5800 = vmatprep.subr.bf16.mxu0 0
        %5801 = vmatpush1.bf16.msra.mxu0 0
        %5802 = vmatprep.subr.bf16.mxu0 0
        %5803 = vmatpush1.bf16.msra.mxu0 0
        %5804 = vmatprep.subr.bf16.mxu0 0
        %5805 = vmatpush1.bf16.msra.mxu0 0
        %5806 = vmatprep.subr.bf16.mxu0 0
        %5807 = vmatpush1.bf16.msra.mxu0 0
        %5808 = vmatprep.subr.bf16.mxu0 0
        %5809 = vmatpush1.bf16.msra.mxu0 0
        %5810 = vmatprep.subr.bf16.mxu0 0
        %5811 = vmatpush1.bf16.msra.mxu0 0
        %5812 = vmatprep.mubr.bf16.mxu0 0
        %5813 = vmatmul.mubr.bf16.gmra.mrb[0].mxu0 %v5778
        %v5814 = vpop.f32.mrb[0].mxu0
        %v5815 = vadd.f32 %v5776, %v5814
        %v5816 = vpop.f32.mrb[0].mxu0
        %v5817 = vpop.f32.mrb[0].mxu0
        %v5818 = vpop.f32.mrb[0].mxu0
        %5819 = vdwg.mxu0
        %v5820 = vadd.f32 %v5703, %v5815
        %v5821 = vsel %vm3627, %v5820, 0.0
        %5822 = vadd.xlane.f32.xlu0 %v5821
        %v5823 = vpop.xlane.xlu0 %5822
        %v5824 = vmul.f32 %v5823, %v1327
        %v5825 = vsub.f32 %v5820, %v5824
        %v5826 = vmul.f32 %v5825, %v5825
        %v5827 = vsel %vm3627, %v5826, 0.0
        %5828 = vadd.xlane.f32.xlu0 %v5827
        %v5829 = vpop.xlane.xlu0 %5828
        %v5830 = vmul.f32 %v5829, %v1327
        %v5831 = vadd.f32 %v5830, 1e-05
        %v5832 = vrsqrt.pop %v5831
        %v5833 = vmul.f32 %v5825, %v5832
        %v5834 = vld [vmem:[%s3 + $0x49] sm:$0x1]
        %v5835 = vmul.f32 %v5833, %v5834
        %v5836 = vld [vmem:[%s3 + $0x4a] sm:$0x1]
        %v5837 = vadd.f32 %v5835, %v5836
        %s5838 = scalar_lea.vmem [#allocation7], 2624
        %v5839 = vld [vmem:[%s5838] sm:$0xff]
        %v5840 = vld [vmem:[%s5838 + $0x8] sm:$0xff]
        %v5841 = vld [vmem:[%s5838 + $0x10] sm:$0xff]
        %v5842 = vld [vmem:[%s5838 + $0x18] sm:$0xff]
        %v5843 = vld [vmem:[%s5838 + $0x20] sm:$0xff]
        %v5844 = vld [vmem:[%s5838 + $0x28] sm:$0xff]
        %v5845 = vld [vmem:[%s5838 + $0x30] sm:$0xff]
        %v5846 = vld [vmem:[%s5838 + $0x38] sm:$0xff]
        %v5847 = vpack.c.bf16 %v5840, %v5839
        %v5848 = vpack.c.bf16 %v5842, %v5841
        %v5849 = vpack.c.bf16 %v5844, %v5843
        %v5850 = vpack.c.bf16 %v5846, %v5845
        %v5851 = vpack.c.bf16 %v5837, %v5837
        %v5852 = vld [vmem:[%s3 + $0x43] sm:$0x1]
        %v5854 = vsel %vm281, %v5851, 0
        %5856 = vmatprep.subr.bf16.mxu0 0
        %5857 = vmatpush1.bf16.msra.mxu0 %v5847
        %5858 = vmatprep.subr.bf16.mxu0 0
        %5859 = vmatpush1.bf16.msra.mxu0 %v5848
        %5860 = vmatprep.subr.bf16.mxu0 0
        %5861 = vmatpush1.bf16.msra.mxu0 %v5849
        %5862 = vmatprep.subr.bf16.mxu0 0
        %5863 = vmatpush1.bf16.msra.mxu0 %v5850
        %5864 = vmatprep.subr.bf16.mxu0 0
        %5865 = vmatpush1.bf16.msra.mxu0 0
        %5866 = vmatprep.subr.bf16.mxu0 0
        %5867 = vmatpush1.bf16.msra.mxu0 0
        %5868 = vmatprep.subr.bf16.mxu0 0
        %5869 = vmatpush1.bf16.msra.mxu0 0
        %5870 = vmatprep.subr.bf16.mxu0 0
        %5871 = vmatpush1.bf16.msra.mxu0 0
        %5872 = vmatprep.subr.bf16.mxu0 0
        %5873 = vmatpush1.bf16.msra.mxu0 0
        %5874 = vmatprep.subr.bf16.mxu0 0
        %5875 = vmatpush1.bf16.msra.mxu0 0
        %5876 = vmatprep.subr.bf16.mxu0 0
        %5877 = vmatpush1.bf16.msra.mxu0 0
        %5878 = vmatprep.subr.bf16.mxu0 0
        %5879 = vmatpush1.bf16.msra.mxu0 0
        %5880 = vmatprep.subr.bf16.mxu0 0
        %5881 = vmatpush1.bf16.msra.mxu0 0
        %5882 = vmatprep.subr.bf16.mxu0 0
        %5883 = vmatpush1.bf16.msra.mxu0 0
        %5884 = vmatprep.subr.bf16.mxu0 0
        %5885 = vmatpush1.bf16.msra.mxu0 0
        %5886 = vmatprep.subr.bf16.mxu0 0
        %5887 = vmatpush1.bf16.msra.mxu0 0
        %5888 = vmatprep.mubr.bf16.mxu0 0
        %5889 = vmatmul.mubr.bf16.gmra.mrb[0].mxu0 %v5854
        %v5890 = vpop.f32.mrb[0].mxu0
        %v5891 = vadd.f32 %v5852, %v5890
        %v5892 = vpop.f32.mrb[0].mxu0
        %v5893 = vpop.f32.mrb[0].mxu0
        %v5894 = vpop.f32.mrb[0].mxu0
        %5895 = vdwg.mxu0
        %s5896 = scalar_lea.vmem [#allocation7], 2688
        %v5897 = vld [vmem:[%s5896] sm:$0xff]
        %v5898 = vld [vmem:[%s5896 + $0x8] sm:$0xff]
        %v5899 = vld [vmem:[%s5896 + $0x10] sm:$0xff]
        %v5900 = vld [vmem:[%s5896 + $0x18] sm:$0xff]
        %v5901 = vld [vmem:[%s5896 + $0x20] sm:$0xff]
        %v5902 = vld [vmem:[%s5896 + $0x28] sm:$0xff]
        %v5903 = vld [vmem:[%s5896 + $0x30] sm:$0xff]
        %v5904 = vld [vmem:[%s5896 + $0x38] sm:$0xff]
        %v5905 = vpack.c.bf16 %v5898, %v5897
        %v5906 = vpack.c.bf16 %v5900, %v5899
        %v5907 = vpack.c.bf16 %v5902, %v5901
        %v5908 = vpack.c.bf16 %v5904, %v5903
        %v5909 = vld [vmem:[%s3 + $0x44] sm:$0x1]
        %v5910 = vlaneseq
        %v5911 = vshrl.u32 %v5910, 7
        %v5912 = vsub.s32 0, %v5911
        %v5913 = vrot.slane %v5909, %v5912
        %5914 = vmatprep.subr.bf16.mxu0 0
        %5915 = vmatpush1.bf16.msra.mxu0 %v5905
        %5916 = vmatprep.subr.bf16.mxu0 0
        %5917 = vmatpush1.bf16.msra.mxu0 %v5906
        %5918 = vmatprep.subr.bf16.mxu0 0
        %5919 = vmatpush1.bf16.msra.mxu0 %v5907
        %5920 = vmatprep.subr.bf16.mxu0 0
        %5921 = vmatpush1.bf16.msra.mxu0 %v5908
        %5922 = vmatprep.subr.bf16.mxu0 0
        %5923 = vmatpush1.bf16.msra.mxu0 0
        %5924 = vmatprep.subr.bf16.mxu0 0
        %5925 = vmatpush1.bf16.msra.mxu0 0
        %5926 = vmatprep.subr.bf16.mxu0 0
        %5927 = vmatpush1.bf16.msra.mxu0 0
        %5928 = vmatprep.subr.bf16.mxu0 0
        %5929 = vmatpush1.bf16.msra.mxu0 0
        %5930 = vmatprep.subr.bf16.mxu0 0
        %5931 = vmatpush1.bf16.msra.mxu0 0
        %5932 = vmatprep.subr.bf16.mxu0 0
        %5933 = vmatpush1.bf16.msra.mxu0 0
        %5934 = vmatprep.subr.bf16.mxu0 0
        %5935 = vmatpush1.bf16.msra.mxu0 0
        %5936 = vmatprep.subr.bf16.mxu0 0
        %5937 = vmatpush1.bf16.msra.mxu0 0
        %5938 = vmatprep.subr.bf16.mxu0 0
        %5939 = vmatpush1.bf16.msra.mxu0 0
        %5940 = vmatprep.subr.bf16.mxu0 0
        %5941 = vmatpush1.bf16.msra.mxu0 0
        %5942 = vmatprep.subr.bf16.mxu0 0
        %5943 = vmatpush1.bf16.msra.mxu0 0
        %5944 = vmatprep.subr.bf16.mxu0 0
        %5945 = vmatpush1.bf16.msra.mxu0 0
        %5946 = vmatprep.mubr.bf16.mxu0 0
        %5947 = vmatmul.mubr.bf16.gmra.mrb[0].mxu0 %v3723
        %v5948 = vpop.f32.mrb[0].mxu0
        %v5949 = vadd.f32 %v5913, %v5948
        %v5950 = vpop.f32.mrb[0].mxu0
        %v5951 = vpop.f32.mrb[0].mxu0
        %v5952 = vpop.f32.mrb[0].mxu0
        %5953 = vdwg.mxu0
        %s5954 = scalar_lea.vmem [#allocation7], 2752
        %v5955 = vld [vmem:[%s5954] sm:$0xff]
        %v5956 = vld [vmem:[%s5954 + $0x8] sm:$0xff]
        %v5957 = vld [vmem:[%s5954 + $0x10] sm:$0xff]
        %v5958 = vld [vmem:[%s5954 + $0x18] sm:$0xff]
        %v5959 = vld [vmem:[%s5954 + $0x20] sm:$0xff]
        %v5960 = vld [vmem:[%s5954 + $0x28] sm:$0xff]
        %v5961 = vld [vmem:[%s5954 + $0x30] sm:$0xff]
        %v5962 = vld [vmem:[%s5954 + $0x38] sm:$0xff]
        %v5963 = vpack.c.bf16 %v5956, %v5955
        %v5964 = vpack.c.bf16 %v5958, %v5957
        %v5965 = vpack.c.bf16 %v5960, %v5959
        %v5966 = vpack.c.bf16 %v5962, %v5961
        %v5967 = vld [vmem:[%s3 + $0x45] sm:$0x1]
        %v5968 = vlaneseq
        %v5969 = vshrl.u32 %v5968, 7
        %v5970 = vsub.s32 0, %v5969
        %v5971 = vrot.slane %v5967, %v5970
        %5972 = vmatprep.subr.bf16.mxu0 0
        %5973 = vmatpush1.bf16.msra.mxu0 %v5963
        %5974 = vmatprep.subr.bf16.mxu0 0
        %5975 = vmatpush1.bf16.msra.mxu0 %v5964
        %5976 = vmatprep.subr.bf16.mxu0 0
        %5977 = vmatpush1.bf16.msra.mxu0 %v5965
        %5978 = vmatprep.subr.bf16.mxu0 0
        %5979 = vmatpush1.bf16.msra.mxu0 %v5966
        %5980 = vmatprep.subr.bf16.mxu0 0
        %5981 = vmatpush1.bf16.msra.mxu0 0
        %5982 = vmatprep.subr.bf16.mxu0 0
        %5983 = vmatpush1.bf16.msra.mxu0 0
        %5984 = vmatprep.subr.bf16.mxu0 0
        %5985 = vmatpush1.bf16.msra.mxu0 0
        %5986 = vmatprep.subr.bf16.mxu0 0
        %5987 = vmatpush1.bf16.msra.mxu0 0
        %5988 = vmatprep.subr.bf16.mxu0 0
        %5989 = vmatpush1.bf16.msra.mxu0 0
        %5990 = vmatprep.subr.bf16.mxu0 0
        %5991 = vmatpush1.bf16.msra.mxu0 0
        %5992 = vmatprep.subr.bf16.mxu0 0
        %5993 = vmatpush1.bf16.msra.mxu0 0
        %5994 = vmatprep.subr.bf16.mxu0 0
        %5995 = vmatpush1.bf16.msra.mxu0 0
        %5996 = vmatprep.subr.bf16.mxu0 0
        %5997 = vmatpush1.bf16.msra.mxu0 0
        %5998 = vmatprep.subr.bf16.mxu0 0
        %5999 = vmatpush1.bf16.msra.mxu0 0
        %6000 = vmatprep.subr.bf16.mxu0 0
        %6001 = vmatpush1.bf16.msra.mxu0 0
        %6002 = vmatprep.subr.bf16.mxu0 0
        %6003 = vmatpush1.bf16.msra.mxu0 0
        %6004 = vmatprep.mubr.bf16.mxu0 0
        %6005 = vmatmul.mubr.bf16.gmra.mrb[0].mxu0 %v3723
        %v6006 = vpop.f32.mrb[0].mxu0
        %v6007 = vadd.f32 %v5971, %v6006
        %v6008 = vpop.f32.mrb[0].mxu0
        %v6009 = vpop.f32.mrb[0].mxu0
        %v6010 = vpop.f32.mrb[0].mxu0
        %6011 = vdwg.mxu0
        %s6012 = scalar_lea.vmem [#allocation7], 2816
        %v6013 = vld [vmem:[%s6012] sm:$0xff]
        %v6014 = vld [vmem:[%s6012 + $0x8] sm:$0xff]
        %v6015 = vld [vmem:[%s6012 + $0x10] sm:$0xff]
        %v6016 = vld [vmem:[%s6012 + $0x18] sm:$0xff]
        %v6017 = vld [vmem:[%s6012 + $0x20] sm:$0xff]
        %v6018 = vld [vmem:[%s6012 + $0x28] sm:$0xff]
        %v6019 = vld [vmem:[%s6012 + $0x30] sm:$0xff]
        %v6020 = vld [vmem:[%s6012 + $0x38] sm:$0xff]
        %v6021 = vpack.c.bf16 %v6014, %v6013
        %v6022 = vpack.c.bf16 %v6016, %v6015
        %v6023 = vpack.c.bf16 %v6018, %v6017
        %v6024 = vpack.c.bf16 %v6020, %v6019
        %v6025 = vpack.c.bf16 %v5891, %v5891
        %v6026 = vpack.c.bf16 %v5949, %v5949
        %v6028 = vsel %vm698, %v6025, 0
        %v6031 = vsel %vm698, %v6026, 0
        %6033 = vmatprep.subr.bf16.mxu0 0
        %6034 = vmatpush1.bf16.xpose.msra.mxu0 %v6031
        %6035 = vmatprep.subr.bf16.mxu0 0
        %6036 = vmatpush1.bf16.xpose.msra.mxu0 0
        %6037 = vmatprep.subr.bf16.mxu0 0
        %6038 = vmatpush1.bf16.xpose.msra.mxu0 0
        %6039 = vmatprep.subr.bf16.mxu0 0
        %6040 = vmatpush1.bf16.xpose.msra.mxu0 0
        %6041 = vmatprep.subr.bf16.mxu0 0
        %6042 = vmatpush1.bf16.xpose.msra.mxu0 0
        %6043 = vmatprep.subr.bf16.mxu0 0
        %6044 = vmatpush1.bf16.xpose.msra.mxu0 0
        %6045 = vmatprep.subr.bf16.mxu0 0
        %6046 = vmatpush1.bf16.xpose.msra.mxu0 0
        %6047 = vmatprep.subr.bf16.mxu0 0
        %6048 = vmatpush1.bf16.xpose.msra.mxu0 0
        %6049 = vmatprep.subr.bf16.mxu0 0
        %6050 = vmatpush1.bf16.xpose.msra.mxu0 0
        %6051 = vmatprep.subr.bf16.mxu0 0
        %6052 = vmatpush1.bf16.xpose.msra.mxu0 0
        %6053 = vmatprep.subr.bf16.mxu0 0
        %6054 = vmatpush1.bf16.xpose.msra.mxu0 0
        %6055 = vmatprep.subr.bf16.mxu0 0
        %6056 = vmatpush1.bf16.xpose.msra.mxu0 0
        %6057 = vmatprep.subr.bf16.mxu0 0
        %6058 = vmatpush1.bf16.xpose.msra.mxu0 0
        %6059 = vmatprep.subr.bf16.mxu0 0
        %6060 = vmatpush1.bf16.xpose.msra.mxu0 0
        %6061 = vmatprep.subr.bf16.mxu0 0
        %6062 = vmatpush1.bf16.xpose.msra.mxu0 0
        %6063 = vmatprep.subr.bf16.mxu0 0
        %6064 = vmatpush1.bf16.xpose.msra.mxu0 0
        %6065 = vmatprep.mubr.bf16.mxu0 0
        %6066 = vmatmul.mubr.bf16.gmra.mrb[0].mxu0 %v6028
        %v6067 = vpop.f32.mrb[0].mxu0
        %v6068 = vadd.f32 0.0, %v6067
        %v6069 = vpop.f32.mrb[0].mxu0
        %v6070 = vpop.f32.mrb[0].mxu0
        %v6071 = vpop.f32.mrb[0].mxu0
        %6072 = vdwg.mxu0
        %v6073 = vsel %vm3884, %v6068, -inf
        %6074 = vmax.xlane.f32.xlu0 %v6073
        %v6075 = vpop.xlane.xlu0 %6074
        %v6076 = vsub.f32 %v6068, %v6075
        %v6077 = vmul.f32 %v6076, 1.442695
        %v6078 = vpow.pop %v6077
        %v6079 = vsel %vm3884, %v6078, 0.0
        %6080 = vadd.xlane.f32.xlu0 %v6079
        %v6081 = vpop.xlane.xlu0 %6080
        %v6082 = vrcp.pop %v6081
        %v6083 = vmul.f32 %v6078, %v6082
        %v6084 = vpack.c.bf16 %v6083, %v6083
        %v6085 = vpack.c.bf16 %v6007, %v6007
        %v6087 = vsel %vm745, %v6084, 0
        %v6090 = vsel %vm762, %v6085, 0
        %6092 = vmatprep.subr.bf16.mxu0 0
        %6093 = vmatpush1.bf16.msra.mxu0 %v6090
        %6094 = vmatprep.subr.bf16.mxu0 0
        %6095 = vmatpush1.bf16.msra.mxu0 0
        %6096 = vmatprep.subr.bf16.mxu0 0
        %6097 = vmatpush1.bf16.msra.mxu0 0
        %6098 = vmatprep.subr.bf16.mxu0 0
        %6099 = vmatpush1.bf16.msra.mxu0 0
        %6100 = vmatprep.subr.bf16.mxu0 0
        %6101 = vmatpush1.bf16.msra.mxu0 0
        %6102 = vmatprep.subr.bf16.mxu0 0
        %6103 = vmatpush1.bf16.msra.mxu0 0
        %6104 = vmatprep.subr.bf16.mxu0 0
        %6105 = vmatpush1.bf16.msra.mxu0 0
        %6106 = vmatprep.subr.bf16.mxu0 0
        %6107 = vmatpush1.bf16.msra.mxu0 0
        %6108 = vmatprep.subr.bf16.mxu0 0
        %6109 = vmatpush1.bf16.msra.mxu0 0
        %6110 = vmatprep.subr.bf16.mxu0 0
        %6111 = vmatpush1.bf16.msra.mxu0 0
        %6112 = vmatprep.subr.bf16.mxu0 0
        %6113 = vmatpush1.bf16.msra.mxu0 0
        %6114 = vmatprep.subr.bf16.mxu0 0
        %6115 = vmatpush1.bf16.msra.mxu0 0
        %6116 = vmatprep.subr.bf16.mxu0 0
        %6117 = vmatpush1.bf16.msra.mxu0 0
        %6118 = vmatprep.subr.bf16.mxu0 0
        %6119 = vmatpush1.bf16.msra.mxu0 0
        %6120 = vmatprep.subr.bf16.mxu0 0
        %6121 = vmatpush1.bf16.msra.mxu0 0
        %6122 = vmatprep.subr.bf16.mxu0 0
        %6123 = vmatpush1.bf16.msra.mxu0 0
        %6124 = vmatprep.mubr.bf16.mxu0 0
        %6125 = vmatmul.mubr.bf16.gmra.mrb[0].mxu0 %v6087
        %v6126 = vpop.f32.mrb[0].mxu0
        %v6127 = vadd.f32 0.0, %v6126
        %v6128 = vpop.f32.mrb[0].mxu0
        %v6129 = vpop.f32.mrb[0].mxu0
        %v6130 = vpop.f32.mrb[0].mxu0
        %6131 = vdwg.mxu0
        %v6132 = vpack.c.bf16 %v6127, %v6127
        %6134 = vrot.lane.b32.xlu0 %v6025, 112
        %v6135 = vpop.permute.xlu0 %6134
        %6137 = vrot.lane.b32.xlu0 %v6026, 112
        %v6138 = vpop.permute.xlu0 %6137
        %v6140 = vsel %vm698, %v6135, 0
        %v6143 = vsel %vm698, %v6138, 0
        %6145 = vmatprep.subr.bf16.mxu0 0
        %6146 = vmatpush1.bf16.xpose.msra.mxu0 %v6143
        %6147 = vmatprep.subr.bf16.mxu0 0
        %6148 = vmatpush1.bf16.xpose.msra.mxu0 0
        %6149 = vmatprep.subr.bf16.mxu0 0
        %6150 = vmatpush1.bf16.xpose.msra.mxu0 0
        %6151 = vmatprep.subr.bf16.mxu0 0
        %6152 = vmatpush1.bf16.xpose.msra.mxu0 0
        %6153 = vmatprep.subr.bf16.mxu0 0
        %6154 = vmatpush1.bf16.xpose.msra.mxu0 0
        %6155 = vmatprep.subr.bf16.mxu0 0
        %6156 = vmatpush1.bf16.xpose.msra.mxu0 0
        %6157 = vmatprep.subr.bf16.mxu0 0
        %6158 = vmatpush1.bf16.xpose.msra.mxu0 0
        %6159 = vmatprep.subr.bf16.mxu0 0
        %6160 = vmatpush1.bf16.xpose.msra.mxu0 0
        %6161 = vmatprep.subr.bf16.mxu0 0
        %6162 = vmatpush1.bf16.xpose.msra.mxu0 0
        %6163 = vmatprep.subr.bf16.mxu0 0
        %6164 = vmatpush1.bf16.xpose.msra.mxu0 0
        %6165 = vmatprep.subr.bf16.mxu0 0
        %6166 = vmatpush1.bf16.xpose.msra.mxu0 0
        %6167 = vmatprep.subr.bf16.mxu0 0
        %6168 = vmatpush1.bf16.xpose.msra.mxu0 0
        %6169 = vmatprep.subr.bf16.mxu0 0
        %6170 = vmatpush1.bf16.xpose.msra.mxu0 0
        %6171 = vmatprep.subr.bf16.mxu0 0
        %6172 = vmatpush1.bf16.xpose.msra.mxu0 0
        %6173 = vmatprep.subr.bf16.mxu0 0
        %6174 = vmatpush1.bf16.xpose.msra.mxu0 0
        %6175 = vmatprep.subr.bf16.mxu0 0
        %6176 = vmatpush1.bf16.xpose.msra.mxu0 0
        %6177 = vmatprep.mubr.bf16.mxu0 0
        %6178 = vmatmul.mubr.bf16.gmra.mrb[0].mxu0 %v6140
        %v6179 = vpop.f32.mrb[0].mxu0
        %v6180 = vadd.f32 0.0, %v6179
        %v6181 = vpop.f32.mrb[0].mxu0
        %v6182 = vpop.f32.mrb[0].mxu0
        %v6183 = vpop.f32.mrb[0].mxu0
        %6184 = vdwg.mxu0
        %v6185 = vsel %vm3884, %v6180, -inf
        %6186 = vmax.xlane.f32.xlu0 %v6185
        %v6187 = vpop.xlane.xlu0 %6186
        %v6188 = vsub.f32 %v6180, %v6187
        %v6189 = vmul.f32 %v6188, 1.442695
        %v6190 = vpow.pop %v6189
        %v6191 = vsel %vm3884, %v6190, 0.0
        %6192 = vadd.xlane.f32.xlu0 %v6191
        %v6193 = vpop.xlane.xlu0 %6192
        %v6194 = vrcp.pop %v6193
        %v6195 = vmul.f32 %v6190, %v6194
        %v6196 = vpack.c.bf16 %v6195, %v6195
        %6198 = vrot.lane.b32.xlu0 %v6085, 112
        %v6199 = vpop.permute.xlu0 %6198
        %v6201 = vsel %vm745, %v6196, 0
        %v6204 = vsel %vm762, %v6199, 0
        %6206 = vmatprep.subr.bf16.mxu0 0
        %6207 = vmatpush1.bf16.msra.mxu0 %v6204
        %6208 = vmatprep.subr.bf16.mxu0 0
        %6209 = vmatpush1.bf16.msra.mxu0 0
        %6210 = vmatprep.subr.bf16.mxu0 0
        %6211 = vmatpush1.bf16.msra.mxu0 0
        %6212 = vmatprep.subr.bf16.mxu0 0
        %6213 = vmatpush1.bf16.msra.mxu0 0
        %6214 = vmatprep.subr.bf16.mxu0 0
        %6215 = vmatpush1.bf16.msra.mxu0 0
        %6216 = vmatprep.subr.bf16.mxu0 0
        %6217 = vmatpush1.bf16.msra.mxu0 0
        %6218 = vmatprep.subr.bf16.mxu0 0
        %6219 = vmatpush1.bf16.msra.mxu0 0
        %6220 = vmatprep.subr.bf16.mxu0 0
        %6221 = vmatpush1.bf16.msra.mxu0 0
        %6222 = vmatprep.subr.bf16.mxu0 0
        %6223 = vmatpush1.bf16.msra.mxu0 0
        %6224 = vmatprep.subr.bf16.mxu0 0
        %6225 = vmatpush1.bf16.msra.mxu0 0
        %6226 = vmatprep.subr.bf16.mxu0 0
        %6227 = vmatpush1.bf16.msra.mxu0 0
        %6228 = vmatprep.subr.bf16.mxu0 0
        %6229 = vmatpush1.bf16.msra.mxu0 0
        %6230 = vmatprep.subr.bf16.mxu0 0
        %6231 = vmatpush1.bf16.msra.mxu0 0
        %6232 = vmatprep.subr.bf16.mxu0 0
        %6233 = vmatpush1.bf16.msra.mxu0 0
        %6234 = vmatprep.subr.bf16.mxu0 0
        %6235 = vmatpush1.bf16.msra.mxu0 0
        %6236 = vmatprep.subr.bf16.mxu0 0
        %6237 = vmatpush1.bf16.msra.mxu0 0
        %6238 = vmatprep.mubr.bf16.mxu0 0
        %6239 = vmatmul.mubr.bf16.gmra.mrb[0].mxu0 %v6201
        %v6240 = vpop.f32.mrb[0].mxu0
        %v6241 = vadd.f32 0.0, %v6240
        %v6242 = vpop.f32.mrb[0].mxu0
        %v6243 = vpop.f32.mrb[0].mxu0
        %v6244 = vpop.f32.mrb[0].mxu0
        %6245 = vdwg.mxu0
        %v6246 = vpack.c.bf16 %v6241, %v6241
        %v6248 = vsel %vm698, %v6246, 0
        %6250 = vmatprep.subr.bf16.mxu0 0
        %6251 = vmatpush1.bf16.msra.mxu0 %v6022
        %6252 = vmatprep.subr.bf16.mxu0 0
        %6253 = vmatpush1.bf16.msra.mxu0 0
        %6254 = vmatprep.subr.bf16.mxu0 0
        %6255 = vmatpush1.bf16.msra.mxu0 0
        %6256 = vmatprep.subr.bf16.mxu0 0
        %6257 = vmatpush1.bf16.msra.mxu0 0
        %6258 = vmatprep.subr.bf16.mxu0 0
        %6259 = vmatpush1.bf16.msra.mxu0 0
        %6260 = vmatprep.subr.bf16.mxu0 0
        %6261 = vmatpush1.bf16.msra.mxu0 0
        %6262 = vmatprep.subr.bf16.mxu0 0
        %6263 = vmatpush1.bf16.msra.mxu0 0
        %6264 = vmatprep.subr.bf16.mxu0 0
        %6265 = vmatpush1.bf16.msra.mxu0 0
        %6266 = vmatprep.subr.bf16.mxu0 0
        %6267 = vmatpush1.bf16.msra.mxu0 0
        %6268 = vmatprep.subr.bf16.mxu0 0
        %6269 = vmatpush1.bf16.msra.mxu0 0
        %6270 = vmatprep.subr.bf16.mxu0 0
        %6271 = vmatpush1.bf16.msra.mxu0 0
        %6272 = vmatprep.subr.bf16.mxu0 0
        %6273 = vmatpush1.bf16.msra.mxu0 0
        %6274 = vmatprep.subr.bf16.mxu0 0
        %6275 = vmatpush1.bf16.msra.mxu0 0
        %6276 = vmatprep.subr.bf16.mxu0 0
        %6277 = vmatpush1.bf16.msra.mxu0 0
        %6278 = vmatprep.subr.bf16.mxu0 0
        %6279 = vmatpush1.bf16.msra.mxu0 0
        %6280 = vmatprep.subr.bf16.mxu0 0
        %6281 = vmatpush1.bf16.msra.mxu0 0
        %6282 = vmatprep.mubr.bf16.mxu0 0
        %6283 = vmatmul.mubr.bf16.gmra.mrb[0].mxu0 %v6248
        %v6284 = vpop.f32.mrb[0].mxu0
        %v6285 = vadd.f32 0.0, %v6284
        %v6286 = vpop.f32.mrb[0].mxu0
        %v6287 = vpop.f32.mrb[0].mxu0
        %v6288 = vpop.f32.mrb[0].mxu0
        %6289 = vdwg.mxu0
        %v6291 = vsel %vm698, %v6132, 0
        %6293 = vmatprep.subr.bf16.mxu0 0
        %6294 = vmatpush1.bf16.msra.mxu0 %v6021
        %6295 = vmatprep.subr.bf16.mxu0 0
        %6296 = vmatpush1.bf16.msra.mxu0 0
        %6297 = vmatprep.subr.bf16.mxu0 0
        %6298 = vmatpush1.bf16.msra.mxu0 0
        %6299 = vmatprep.subr.bf16.mxu0 0
        %6300 = vmatpush1.bf16.msra.mxu0 0
        %6301 = vmatprep.subr.bf16.mxu0 0
        %6302 = vmatpush1.bf16.msra.mxu0 0
        %6303 = vmatprep.subr.bf16.mxu0 0
        %6304 = vmatpush1.bf16.msra.mxu0 0
        %6305 = vmatprep.subr.bf16.mxu0 0
        %6306 = vmatpush1.bf16.msra.mxu0 0
        %6307 = vmatprep.subr.bf16.mxu0 0
        %6308 = vmatpush1.bf16.msra.mxu0 0
        %6309 = vmatprep.subr.bf16.mxu0 0
        %6310 = vmatpush1.bf16.msra.mxu0 0
        %6311 = vmatprep.subr.bf16.mxu0 0
        %6312 = vmatpush1.bf16.msra.mxu0 0
        %6313 = vmatprep.subr.bf16.mxu0 0
        %6314 = vmatpush1.bf16.msra.mxu0 0
        %6315 = vmatprep.subr.bf16.mxu0 0
        %6316 = vmatpush1.bf16.msra.mxu0 0
        %6317 = vmatprep.subr.bf16.mxu0 0
        %6318 = vmatpush1.bf16.msra.mxu0 0
        %6319 = vmatprep.subr.bf16.mxu0 0
        %6320 = vmatpush1.bf16.msra.mxu0 0
        %6321 = vmatprep.subr.bf16.mxu0 0
        %6322 = vmatpush1.bf16.msra.mxu0 0
        %6323 = vmatprep.subr.bf16.mxu0 0
        %6324 = vmatpush1.bf16.msra.mxu0 0
        %6325 = vmatprep.mubr.bf16.mxu0 0
        %6326 = vmatmul.mubr.bf16.gmra.mrb[0].mxu0 %v6291
        %v6327 = vpop.f32.mrb[0].mxu0
        %v6328 = vadd.f32 %v6285, %v6327
        %v6329 = vpop.f32.mrb[0].mxu0
        %v6330 = vpop.f32.mrb[0].mxu0
        %v6331 = vpop.f32.mrb[0].mxu0
        %6332 = vdwg.mxu0
        %6333 = vrot.lane.b32.xlu0 %v6025, 96
        %v6334 = vpop.permute.xlu0 %6333
        %6335 = vrot.lane.b32.xlu0 %v6026, 96
        %v6336 = vpop.permute.xlu0 %6335
        %v6338 = vsel %vm698, %v6334, 0
        %v6341 = vsel %vm698, %v6336, 0
        %6343 = vmatprep.subr.bf16.mxu0 0
        %6344 = vmatpush1.bf16.xpose.msra.mxu0 %v6341
        %6345 = vmatprep.subr.bf16.mxu0 0
        %6346 = vmatpush1.bf16.xpose.msra.mxu0 0
        %6347 = vmatprep.subr.bf16.mxu0 0
        %6348 = vmatpush1.bf16.xpose.msra.mxu0 0
        %6349 = vmatprep.subr.bf16.mxu0 0
        %6350 = vmatpush1.bf16.xpose.msra.mxu0 0
        %6351 = vmatprep.subr.bf16.mxu0 0
        %6352 = vmatpush1.bf16.xpose.msra.mxu0 0
        %6353 = vmatprep.subr.bf16.mxu0 0
        %6354 = vmatpush1.bf16.xpose.msra.mxu0 0
        %6355 = vmatprep.subr.bf16.mxu0 0
        %6356 = vmatpush1.bf16.xpose.msra.mxu0 0
        %6357 = vmatprep.subr.bf16.mxu0 0
        %6358 = vmatpush1.bf16.xpose.msra.mxu0 0
        %6359 = vmatprep.subr.bf16.mxu0 0
        %6360 = vmatpush1.bf16.xpose.msra.mxu0 0
        %6361 = vmatprep.subr.bf16.mxu0 0
        %6362 = vmatpush1.bf16.xpose.msra.mxu0 0
        %6363 = vmatprep.subr.bf16.mxu0 0
        %6364 = vmatpush1.bf16.xpose.msra.mxu0 0
        %6365 = vmatprep.subr.bf16.mxu0 0
        %6366 = vmatpush1.bf16.xpose.msra.mxu0 0
        %6367 = vmatprep.subr.bf16.mxu0 0
        %6368 = vmatpush1.bf16.xpose.msra.mxu0 0
        %6369 = vmatprep.subr.bf16.mxu0 0
        %6370 = vmatpush1.bf16.xpose.msra.mxu0 0
        %6371 = vmatprep.subr.bf16.mxu0 0
        %6372 = vmatpush1.bf16.xpose.msra.mxu0 0
        %6373 = vmatprep.subr.bf16.mxu0 0
        %6374 = vmatpush1.bf16.xpose.msra.mxu0 0
        %6375 = vmatprep.mubr.bf16.mxu0 0
        %6376 = vmatmul.mubr.bf16.gmra.mrb[0].mxu0 %v6338
        %v6377 = vpop.f32.mrb[0].mxu0
        %v6378 = vadd.f32 0.0, %v6377
        %v6379 = vpop.f32.mrb[0].mxu0
        %v6380 = vpop.f32.mrb[0].mxu0
        %v6381 = vpop.f32.mrb[0].mxu0
        %6382 = vdwg.mxu0
        %v6383 = vsel %vm3884, %v6378, -inf
        %6384 = vmax.xlane.f32.xlu0 %v6383
        %v6385 = vpop.xlane.xlu0 %6384
        %v6386 = vsub.f32 %v6378, %v6385
        %v6387 = vmul.f32 %v6386, 1.442695
        %v6388 = vpow.pop %v6387
        %v6389 = vsel %vm3884, %v6388, 0.0
        %6390 = vadd.xlane.f32.xlu0 %v6389
        %v6391 = vpop.xlane.xlu0 %6390
        %v6392 = vrcp.pop %v6391
        %v6393 = vmul.f32 %v6388, %v6392
        %v6394 = vpack.c.bf16 %v6393, %v6393
        %6395 = vrot.lane.b32.xlu0 %v6085, 96
        %v6396 = vpop.permute.xlu0 %6395
        %v6398 = vsel %vm745, %v6394, 0
        %v6401 = vsel %vm762, %v6396, 0
        %6403 = vmatprep.subr.bf16.mxu0 0
        %6404 = vmatpush1.bf16.msra.mxu0 %v6401
        %6405 = vmatprep.subr.bf16.mxu0 0
        %6406 = vmatpush1.bf16.msra.mxu0 0
        %6407 = vmatprep.subr.bf16.mxu0 0
        %6408 = vmatpush1.bf16.msra.mxu0 0
        %6409 = vmatprep.subr.bf16.mxu0 0
        %6410 = vmatpush1.bf16.msra.mxu0 0
        %6411 = vmatprep.subr.bf16.mxu0 0
        %6412 = vmatpush1.bf16.msra.mxu0 0
        %6413 = vmatprep.subr.bf16.mxu0 0
        %6414 = vmatpush1.bf16.msra.mxu0 0
        %6415 = vmatprep.subr.bf16.mxu0 0
        %6416 = vmatpush1.bf16.msra.mxu0 0
        %6417 = vmatprep.subr.bf16.mxu0 0
        %6418 = vmatpush1.bf16.msra.mxu0 0
        %6419 = vmatprep.subr.bf16.mxu0 0
        %6420 = vmatpush1.bf16.msra.mxu0 0
        %6421 = vmatprep.subr.bf16.mxu0 0
        %6422 = vmatpush1.bf16.msra.mxu0 0
        %6423 = vmatprep.subr.bf16.mxu0 0
        %6424 = vmatpush1.bf16.msra.mxu0 0
        %6425 = vmatprep.subr.bf16.mxu0 0
        %6426 = vmatpush1.bf16.msra.mxu0 0
        %6427 = vmatprep.subr.bf16.mxu0 0
        %6428 = vmatpush1.bf16.msra.mxu0 0
        %6429 = vmatprep.subr.bf16.mxu0 0
        %6430 = vmatpush1.bf16.msra.mxu0 0
        %6431 = vmatprep.subr.bf16.mxu0 0
        %6432 = vmatpush1.bf16.msra.mxu0 0
        %6433 = vmatprep.subr.bf16.mxu0 0
        %6434 = vmatpush1.bf16.msra.mxu0 0
        %6435 = vmatprep.mubr.bf16.mxu0 0
        %6436 = vmatmul.mubr.bf16.gmra.mrb[0].mxu0 %v6398
        %v6437 = vpop.f32.mrb[0].mxu0
        %v6438 = vadd.f32 0.0, %v6437
        %v6439 = vpop.f32.mrb[0].mxu0
        %v6440 = vpop.f32.mrb[0].mxu0
        %v6441 = vpop.f32.mrb[0].mxu0
        %6442 = vdwg.mxu0
        %v6443 = vpack.c.bf16 %v6438, %v6438
        %v6445 = vsel %vm698, %v6443, 0
        %6447 = vmatprep.subr.bf16.mxu0 0
        %6448 = vmatpush1.bf16.msra.mxu0 %v6023
        %6449 = vmatprep.subr.bf16.mxu0 0
        %6450 = vmatpush1.bf16.msra.mxu0 0
        %6451 = vmatprep.subr.bf16.mxu0 0
        %6452 = vmatpush1.bf16.msra.mxu0 0
        %6453 = vmatprep.subr.bf16.mxu0 0
        %6454 = vmatpush1.bf16.msra.mxu0 0
        %6455 = vmatprep.subr.bf16.mxu0 0
        %6456 = vmatpush1.bf16.msra.mxu0 0
        %6457 = vmatprep.subr.bf16.mxu0 0
        %6458 = vmatpush1.bf16.msra.mxu0 0
        %6459 = vmatprep.subr.bf16.mxu0 0
        %6460 = vmatpush1.bf16.msra.mxu0 0
        %6461 = vmatprep.subr.bf16.mxu0 0
        %6462 = vmatpush1.bf16.msra.mxu0 0
        %6463 = vmatprep.subr.bf16.mxu0 0
        %6464 = vmatpush1.bf16.msra.mxu0 0
        %6465 = vmatprep.subr.bf16.mxu0 0
        %6466 = vmatpush1.bf16.msra.mxu0 0
        %6467 = vmatprep.subr.bf16.mxu0 0
        %6468 = vmatpush1.bf16.msra.mxu0 0
        %6469 = vmatprep.subr.bf16.mxu0 0
        %6470 = vmatpush1.bf16.msra.mxu0 0
        %6471 = vmatprep.subr.bf16.mxu0 0
        %6472 = vmatpush1.bf16.msra.mxu0 0
        %6473 = vmatprep.subr.bf16.mxu0 0
        %6474 = vmatpush1.bf16.msra.mxu0 0
        %6475 = vmatprep.subr.bf16.mxu0 0
        %6476 = vmatpush1.bf16.msra.mxu0 0
        %6477 = vmatprep.subr.bf16.mxu0 0
        %6478 = vmatpush1.bf16.msra.mxu0 0
        %6479 = vmatprep.mubr.bf16.mxu0 0
        %6480 = vmatmul.mubr.bf16.gmra.mrb[0].mxu0 %v6445
        %v6481 = vpop.f32.mrb[0].mxu0
        %v6482 = vadd.f32 0.0, %v6481
        %v6483 = vpop.f32.mrb[0].mxu0
        %v6484 = vpop.f32.mrb[0].mxu0
        %v6485 = vpop.f32.mrb[0].mxu0
        %6486 = vdwg.mxu0
        %v6487 = vadd.f32 %v6328, %v6482
        %6488 = vrot.lane.b32.xlu0 %v6025, 80
        %v6489 = vpop.permute.xlu0 %6488
        %6490 = vrot.lane.b32.xlu0 %v6026, 80
        %v6491 = vpop.permute.xlu0 %6490
        %v6493 = vsel %vm698, %v6489, 0
        %v6496 = vsel %vm698, %v6491, 0
        %6498 = vmatprep.subr.bf16.mxu0 0
        %6499 = vmatpush1.bf16.xpose.msra.mxu0 %v6496
        %6500 = vmatprep.subr.bf16.mxu0 0
        %6501 = vmatpush1.bf16.xpose.msra.mxu0 0
        %6502 = vmatprep.subr.bf16.mxu0 0
        %6503 = vmatpush1.bf16.xpose.msra.mxu0 0
        %6504 = vmatprep.subr.bf16.mxu0 0
        %6505 = vmatpush1.bf16.xpose.msra.mxu0 0
        %6506 = vmatprep.subr.bf16.mxu0 0
        %6507 = vmatpush1.bf16.xpose.msra.mxu0 0
        %6508 = vmatprep.subr.bf16.mxu0 0
        %6509 = vmatpush1.bf16.xpose.msra.mxu0 0
        %6510 = vmatprep.subr.bf16.mxu0 0
        %6511 = vmatpush1.bf16.xpose.msra.mxu0 0
        %6512 = vmatprep.subr.bf16.mxu0 0
        %6513 = vmatpush1.bf16.xpose.msra.mxu0 0
        %6514 = vmatprep.subr.bf16.mxu0 0
        %6515 = vmatpush1.bf16.xpose.msra.mxu0 0
        %6516 = vmatprep.subr.bf16.mxu0 0
        %6517 = vmatpush1.bf16.xpose.msra.mxu0 0
        %6518 = vmatprep.subr.bf16.mxu0 0
        %6519 = vmatpush1.bf16.xpose.msra.mxu0 0
        %6520 = vmatprep.subr.bf16.mxu0 0
        %6521 = vmatpush1.bf16.xpose.msra.mxu0 0
        %6522 = vmatprep.subr.bf16.mxu0 0
        %6523 = vmatpush1.bf16.xpose.msra.mxu0 0
        %6524 = vmatprep.subr.bf16.mxu0 0
        %6525 = vmatpush1.bf16.xpose.msra.mxu0 0
        %6526 = vmatprep.subr.bf16.mxu0 0
        %6527 = vmatpush1.bf16.xpose.msra.mxu0 0
        %6528 = vmatprep.subr.bf16.mxu0 0
        %6529 = vmatpush1.bf16.xpose.msra.mxu0 0
        %6530 = vmatprep.mubr.bf16.mxu0 0
        %6531 = vmatmul.mubr.bf16.gmra.mrb[0].mxu0 %v6493
        %v6532 = vpop.f32.mrb[0].mxu0
        %v6533 = vadd.f32 0.0, %v6532
        %v6534 = vpop.f32.mrb[0].mxu0
        %v6535 = vpop.f32.mrb[0].mxu0
        %v6536 = vpop.f32.mrb[0].mxu0
        %6537 = vdwg.mxu0
        %v6538 = vsel %vm3884, %v6533, -inf
        %6539 = vmax.xlane.f32.xlu0 %v6538
        %v6540 = vpop.xlane.xlu0 %6539
        %v6541 = vsub.f32 %v6533, %v6540
        %v6542 = vmul.f32 %v6541, 1.442695
        %v6543 = vpow.pop %v6542
        %v6544 = vsel %vm3884, %v6543, 0.0
        %6545 = vadd.xlane.f32.xlu0 %v6544
        %v6546 = vpop.xlane.xlu0 %6545
        %v6547 = vrcp.pop %v6546
        %v6548 = vmul.f32 %v6543, %v6547
        %v6549 = vpack.c.bf16 %v6548, %v6548
        %6550 = vrot.lane.b32.xlu0 %v6085, 80
        %v6551 = vpop.permute.xlu0 %6550
        %v6553 = vsel %vm745, %v6549, 0
        %v6556 = vsel %vm762, %v6551, 0
        %6558 = vmatprep.subr.bf16.mxu0 0
        %6559 = vmatpush1.bf16.msra.mxu0 %v6556
        %6560 = vmatprep.subr.bf16.mxu0 0
        %6561 = vmatpush1.bf16.msra.mxu0 0
        %6562 = vmatprep.subr.bf16.mxu0 0
        %6563 = vmatpush1.bf16.msra.mxu0 0
        %6564 = vmatprep.subr.bf16.mxu0 0
        %6565 = vmatpush1.bf16.msra.mxu0 0
        %6566 = vmatprep.subr.bf16.mxu0 0
        %6567 = vmatpush1.bf16.msra.mxu0 0
        %6568 = vmatprep.subr.bf16.mxu0 0
        %6569 = vmatpush1.bf16.msra.mxu0 0
        %6570 = vmatprep.subr.bf16.mxu0 0
        %6571 = vmatpush1.bf16.msra.mxu0 0
        %6572 = vmatprep.subr.bf16.mxu0 0
        %6573 = vmatpush1.bf16.msra.mxu0 0
        %6574 = vmatprep.subr.bf16.mxu0 0
        %6575 = vmatpush1.bf16.msra.mxu0 0
        %6576 = vmatprep.subr.bf16.mxu0 0
        %6577 = vmatpush1.bf16.msra.mxu0 0
        %6578 = vmatprep.subr.bf16.mxu0 0
        %6579 = vmatpush1.bf16.msra.mxu0 0
        %6580 = vmatprep.subr.bf16.mxu0 0
        %6581 = vmatpush1.bf16.msra.mxu0 0
        %6582 = vmatprep.subr.bf16.mxu0 0
        %6583 = vmatpush1.bf16.msra.mxu0 0
        %6584 = vmatprep.subr.bf16.mxu0 0
        %6585 = vmatpush1.bf16.msra.mxu0 0
        %6586 = vmatprep.subr.bf16.mxu0 0
        %6587 = vmatpush1.bf16.msra.mxu0 0
        %6588 = vmatprep.subr.bf16.mxu0 0
        %6589 = vmatpush1.bf16.msra.mxu0 0
        %6590 = vmatprep.mubr.bf16.mxu0 0
        %6591 = vmatmul.mubr.bf16.gmra.mrb[0].mxu0 %v6553
        %v6592 = vpop.f32.mrb[0].mxu0
        %v6593 = vadd.f32 0.0, %v6592
        %v6594 = vpop.f32.mrb[0].mxu0
        %v6595 = vpop.f32.mrb[0].mxu0
        %v6596 = vpop.f32.mrb[0].mxu0
        %6597 = vdwg.mxu0
        %v6598 = vpack.c.bf16 %v6593, %v6593
        %v6600 = vsel %vm698, %v6598, 0
        %6602 = vmatprep.subr.bf16.mxu0 0
        %6603 = vmatpush1.bf16.msra.mxu0 %v6024
        %6604 = vmatprep.subr.bf16.mxu0 0
        %6605 = vmatpush1.bf16.msra.mxu0 0
        %6606 = vmatprep.subr.bf16.mxu0 0
        %6607 = vmatpush1.bf16.msra.mxu0 0
        %6608 = vmatprep.subr.bf16.mxu0 0
        %6609 = vmatpush1.bf16.msra.mxu0 0
        %6610 = vmatprep.subr.bf16.mxu0 0
        %6611 = vmatpush1.bf16.msra.mxu0 0
        %6612 = vmatprep.subr.bf16.mxu0 0
        %6613 = vmatpush1.bf16.msra.mxu0 0
        %6614 = vmatprep.subr.bf16.mxu0 0
        %6615 = vmatpush1.bf16.msra.mxu0 0
        %6616 = vmatprep.subr.bf16.mxu0 0
        %6617 = vmatpush1.bf16.msra.mxu0 0
        %6618 = vmatprep.subr.bf16.mxu0 0
        %6619 = vmatpush1.bf16.msra.mxu0 0
        %6620 = vmatprep.subr.bf16.mxu0 0
        %6621 = vmatpush1.bf16.msra.mxu0 0
        %6622 = vmatprep.subr.bf16.mxu0 0
        %6623 = vmatpush1.bf16.msra.mxu0 0
        %6624 = vmatprep.subr.bf16.mxu0 0
        %6625 = vmatpush1.bf16.msra.mxu0 0
        %6626 = vmatprep.subr.bf16.mxu0 0
        %6627 = vmatpush1.bf16.msra.mxu0 0
        %6628 = vmatprep.subr.bf16.mxu0 0
        %6629 = vmatpush1.bf16.msra.mxu0 0
        %6630 = vmatprep.subr.bf16.mxu0 0
        %6631 = vmatpush1.bf16.msra.mxu0 0
        %6632 = vmatprep.subr.bf16.mxu0 0
        %6633 = vmatpush1.bf16.msra.mxu0 0
        %6634 = vmatprep.mubr.bf16.mxu0 0
        %6635 = vmatmul.mubr.bf16.gmra.mrb[0].mxu0 %v6600
        %v6636 = vpop.f32.mrb[0].mxu0
        %v6637 = vadd.f32 0.0, %v6636
        %v6638 = vpop.f32.mrb[0].mxu0
        %v6639 = vpop.f32.mrb[0].mxu0
        %v6640 = vpop.f32.mrb[0].mxu0
        %6641 = vdwg.mxu0
        %v6642 = vadd.f32 %v6487, %v6637
        %v6643 = vld [vmem:[%s3 + $0x46] sm:$0x1]
        %v6644 = vadd.f32 %v6642, %v6643
        %v6645 = vadd.f32 %v5837, %v6644
        %v6646 = vsel %vm3627, %v6645, 0.0
        %6647 = vadd.xlane.f32.xlu0 %v6646
        %v6648 = vpop.xlane.xlu0 %6647
        %v6649 = vmul.f32 %v6648, %v1327
        %v6650 = vsub.f32 %v6645, %v6649
        %v6651 = vmul.f32 %v6650, %v6650
        %v6652 = vsel %vm3627, %v6651, 0.0
        %6653 = vadd.xlane.f32.xlu0 %v6652
        %v6654 = vpop.xlane.xlu0 %6653
        %v6655 = vmul.f32 %v6654, %v1327
        %v6656 = vadd.f32 %v6655, 1e-05
        %v6657 = vrsqrt.pop %v6656
        %v6658 = vmul.f32 %v6650, %v6657
        %v6659 = vld [vmem:[%s3 + $0x4b] sm:$0x1]
        %v6660 = vmul.f32 %v6658, %v6659
        %v6661 = vld [vmem:[%s3 + $0x4c] sm:$0x1]
        %v6662 = vadd.f32 %v6660, %v6661
        %s6663 = scalar_lea.vmem [#allocation7], 2880
        %v6664 = vld [vmem:[%s6663] sm:$0xff]
        %v6665 = vld [vmem:[%s6663 + $0x8] sm:$0xff]
        %v6666 = vld [vmem:[%s6663 + $0x10] sm:$0xff]
        %v6667 = vld [vmem:[%s6663 + $0x18] sm:$0xff]
        %v6668 = vld [vmem:[%s6663 + $0x20] sm:$0xff]
        %v6669 = vld [vmem:[%s6663 + $0x28] sm:$0xff]
        %v6670 = vld [vmem:[%s6663 + $0x30] sm:$0xff]
        %v6671 = vld [vmem:[%s6663 + $0x38] sm:$0xff]
        %v6672 = vpack.c.bf16 %v6665, %v6664
        %v6673 = vpack.c.bf16 %v6667, %v6666
        %v6674 = vpack.c.bf16 %v6669, %v6668
        %v6675 = vpack.c.bf16 %v6671, %v6670
        %v6676 = vpack.c.bf16 %v6662, %v6662
        %v6677 = vld [vmem:[%s3 + $0x47] sm:$0x1]
        %v6679 = vsel %vm281, %v6676, 0
        %6681 = vmatprep.subr.bf16.mxu0 0
        %6682 = vmatpush1.bf16.msra.mxu0 %v6672
        %6683 = vmatprep.subr.bf16.mxu0 0
        %6684 = vmatpush1.bf16.msra.mxu0 %v6673
        %6685 = vmatprep.subr.bf16.mxu0 0
        %6686 = vmatpush1.bf16.msra.mxu0 %v6674
        %6687 = vmatprep.subr.bf16.mxu0 0
        %6688 = vmatpush1.bf16.msra.mxu0 %v6675
        %6689 = vmatprep.subr.bf16.mxu0 0
        %6690 = vmatpush1.bf16.msra.mxu0 0
        %6691 = vmatprep.subr.bf16.mxu0 0
        %6692 = vmatpush1.bf16.msra.mxu0 0
        %6693 = vmatprep.subr.bf16.mxu0 0
        %6694 = vmatpush1.bf16.msra.mxu0 0
        %6695 = vmatprep.subr.bf16.mxu0 0
        %6696 = vmatpush1.bf16.msra.mxu0 0
        %6697 = vmatprep.subr.bf16.mxu0 0
        %6698 = vmatpush1.bf16.msra.mxu0 0
        %6699 = vmatprep.subr.bf16.mxu0 0
        %6700 = vmatpush1.bf16.msra.mxu0 0
        %6701 = vmatprep.subr.bf16.mxu0 0
        %6702 = vmatpush1.bf16.msra.mxu0 0
        %6703 = vmatprep.subr.bf16.mxu0 0
        %6704 = vmatpush1.bf16.msra.mxu0 0
        %6705 = vmatprep.subr.bf16.mxu0 0
        %6706 = vmatpush1.bf16.msra.mxu0 0
        %6707 = vmatprep.subr.bf16.mxu0 0
        %6708 = vmatpush1.bf16.msra.mxu0 0
        %6709 = vmatprep.subr.bf16.mxu0 0
        %6710 = vmatpush1.bf16.msra.mxu0 0
        %6711 = vmatprep.subr.bf16.mxu0 0
        %6712 = vmatpush1.bf16.msra.mxu0 0
        %6713 = vmatprep.mubr.bf16.mxu0 0
        %6714 = vmatmul.mubr.bf16.gmra.mrb[0].mxu0 %v6679
        %v6715 = vpop.f32.mrb[0].mxu0
        %v6716 = vadd.f32 %v6677, %v6715
        %v6717 = vpop.f32.mrb[0].mxu0
        %v6718 = vpop.f32.mrb[0].mxu0
        %v6719 = vpop.f32.mrb[0].mxu0
        %6720 = vdwg.mxu0
        %v6721 = vmax.f32 %v6716, 0.0
        %s6722 = scalar_lea.vmem [#allocation7], 2944
        %v6723 = vld [vmem:[%s6722] sm:$0xff]
        %v6724 = vld [vmem:[%s6722 + $0x8] sm:$0xff]
        %v6725 = vld [vmem:[%s6722 + $0x10] sm:$0xff]
        %v6726 = vld [vmem:[%s6722 + $0x18] sm:$0xff]
        %v6727 = vld [vmem:[%s6722 + $0x20] sm:$0xff]
        %v6728 = vld [vmem:[%s6722 + $0x28] sm:$0xff]
        %v6729 = vld [vmem:[%s6722 + $0x30] sm:$0xff]
        %v6730 = vld [vmem:[%s6722 + $0x38] sm:$0xff]
        %v6731 = vpack.c.bf16 %v6724, %v6723
        %v6732 = vpack.c.bf16 %v6726, %v6725
        %v6733 = vpack.c.bf16 %v6728, %v6727
        %v6734 = vpack.c.bf16 %v6730, %v6729
        %v6735 = vpack.c.bf16 %v6721, %v6721
        %v6736 = vld [vmem:[%s3 + $0x48] sm:$0x1]
        %v6738 = vsel %vm281, %v6735, 0
        %6740 = vmatprep.subr.bf16.mxu0 0
        %6741 = vmatpush1.bf16.msra.mxu0 %v6731
        %6742 = vmatprep.subr.bf16.mxu0 0
        %6743 = vmatpush1.bf16.msra.mxu0 %v6732
        %6744 = vmatprep.subr.bf16.mxu0 0
        %6745 = vmatpush1.bf16.msra.mxu0 %v6733
        %6746 = vmatprep.subr.bf16.mxu0 0
        %6747 = vmatpush1.bf16.msra.mxu0 %v6734
        %6748 = vmatprep.subr.bf16.mxu0 0
        %6749 = vmatpush1.bf16.msra.mxu0 0
        %6750 = vmatprep.subr.bf16.mxu0 0
        %6751 = vmatpush1.bf16.msra.mxu0 0
        %6752 = vmatprep.subr.bf16.mxu0 0
        %6753 = vmatpush1.bf16.msra.mxu0 0
        %6754 = vmatprep.subr.bf16.mxu0 0
        %6755 = vmatpush1.bf16.msra.mxu0 0
        %6756 = vmatprep.subr.bf16.mxu0 0
        %6757 = vmatpush1.bf16.msra.mxu0 0
        %6758 = vmatprep.subr.bf16.mxu0 0
        %6759 = vmatpush1.bf16.msra.mxu0 0
        %6760 = vmatprep.subr.bf16.mxu0 0
        %6761 = vmatpush1.bf16.msra.mxu0 0
        %6762 = vmatprep.subr.bf16.mxu0 0
        %6763 = vmatpush1.bf16.msra.mxu0 0
        %6764 = vmatprep.subr.bf16.mxu0 0
        %6765 = vmatpush1.bf16.msra.mxu0 0
        %6766 = vmatprep.subr.bf16.mxu0 0
        %6767 = vmatpush1.bf16.msra.mxu0 0
        %6768 = vmatprep.subr.bf16.mxu0 0
        %6769 = vmatpush1.bf16.msra.mxu0 0
        %6770 = vmatprep.subr.bf16.mxu0 0
        %6771 = vmatpush1.bf16.msra.mxu0 0
        %6772 = vmatprep.mubr.bf16.mxu0 0
        %6773 = vmatmul.mubr.bf16.gmra.mrb[0].mxu0 %v6738
        %v6774 = vpop.f32.mrb[0].mxu0
        %v6775 = vadd.f32 %v6736, %v6774
        %v6776 = vpop.f32.mrb[0].mxu0
        %v6777 = vpop.f32.mrb[0].mxu0
        %v6778 = vpop.f32.mrb[0].mxu0
        %6779 = vdwg.mxu0
        %v6780 = vadd.f32 %v6662, %v6775
        %v6781 = vsel %vm3627, %v6780, 0.0
        %6782 = vadd.xlane.f32.xlu0 %v6781
        %v6783 = vpop.xlane.xlu0 %6782
        %v6784 = vmul.f32 %v6783, %v1327
        %v6785 = vsub.f32 %v6780, %v6784
        %v6786 = vmul.f32 %v6785, %v6785
        %v6787 = vsel %vm3627, %v6786, 0.0
        %6788 = vadd.xlane.f32.xlu0 %v6787
        %v6789 = vpop.xlane.xlu0 %6788
        %v6790 = vmul.f32 %v6789, %v1327
        %v6791 = vadd.f32 %v6790, 1e-05
        %v6792 = vrsqrt.pop %v6791
        %v6793 = vmul.f32 %v6785, %v6792
        %v6794 = vld [vmem:[%s3 + $0x4d] sm:$0x1]
        %v6795 = vmul.f32 %v6793, %v6794
        %v6796 = vld [vmem:[%s3 + $0x4e] sm:$0x1]
        %v6797 = vadd.f32 %v6795, %v6796
        %v6798 = vsel %vm3627, %v6797, 0.0
        %6799 = vadd.xlane.f32.xlu0 %v6798
        %v6800 = vpop.xlane.xlu0 %6799
        %v6801 = vmul.f32 %v6800, %v1327
        %v6802 = vsub.f32 %v6797, %v6801
        %v6803 = vmul.f32 %v6802, %v6802
        %v6804 = vsel %vm3627, %v6803, 0.0
        %6805 = vadd.xlane.f32.xlu0 %v6804
        %v6806 = vpop.xlane.xlu0 %6805
        %v6807 = vmul.f32 %v6806, %v1327
        %v6808 = vadd.f32 %v6807, 1e-05
        %v6809 = vrsqrt.pop %v6808
        %v6810 = vmul.f32 %v6802, %v6809
        %v6811 = vld [vmem:[%s3 + $0x4f] sm:$0x1]
        %v6812 = vmul.f32 %v6810, %v6811
        %v6813 = vld [vmem:[%s3 + $0x50] sm:$0x1]
        %v6814 = vadd.f32 %v6812, %v6813
        %s6815 = scalar_lea.vmem [#allocation7], 256
        %v6816 = vld [vmem:[%s6815] sm:$0xff]
        %v6817 = vld [vmem:[%s6815 + $0x8] sm:$0xff]
        %v6818 = vld [vmem:[%s6815 + $0x10] sm:$0xff]
        %v6819 = vld [vmem:[%s6815 + $0x18] sm:$0xff]
        %v6820 = vld [vmem:[%s6815 + $0x20] sm:$0xff]
        %v6821 = vld [vmem:[%s6815 + $0x28] sm:$0xff]
        %v6822 = vld [vmem:[%s6815 + $0x30] sm:$0xff]
        %v6823 = vld [vmem:[%s6815 + $0x38] sm:$0xff]
        %v6824 = vpack.c.bf16 %v6817, %v6816
        %v6825 = vpack.c.bf16 %v6819, %v6818
        %v6826 = vpack.c.bf16 %v6821, %v6820
        %v6827 = vpack.c.bf16 %v6823, %v6822
        %v6828 = vpack.c.bf16 %v6814, %v6814
        %v6829 = vld [vmem:[%s3 + $0x4] sm:$0x1]
        %v6831 = vsel %vm281, %v6828, 0
        %6833 = vmatprep.subr.bf16.mxu0 0
        %6834 = vmatpush1.bf16.msra.mxu0 %v6824
        %6835 = vmatprep.subr.bf16.mxu0 0
        %6836 = vmatpush1.bf16.msra.mxu0 %v6825
        %6837 = vmatprep.subr.bf16.mxu0 0
        %6838 = vmatpush1.bf16.msra.mxu0 %v6826
        %6839 = vmatprep.subr.bf16.mxu0 0
        %6840 = vmatpush1.bf16.msra.mxu0 %v6827
        %6841 = vmatprep.subr.bf16.mxu0 0
        %6842 = vmatpush1.bf16.msra.mxu0 0
        %6843 = vmatprep.subr.bf16.mxu0 0
        %6844 = vmatpush1.bf16.msra.mxu0 0
        %6845 = vmatprep.subr.bf16.mxu0 0
        %6846 = vmatpush1.bf16.msra.mxu0 0
        %6847 = vmatprep.subr.bf16.mxu0 0
        %6848 = vmatpush1.bf16.msra.mxu0 0
        %6849 = vmatprep.subr.bf16.mxu0 0
        %6850 = vmatpush1.bf16.msra.mxu0 0
        %6851 = vmatprep.subr.bf16.mxu0 0
        %6852 = vmatpush1.bf16.msra.mxu0 0
        %6853 = vmatprep.subr.bf16.mxu0 0
        %6854 = vmatpush1.bf16.msra.mxu0 0
        %6855 = vmatprep.subr.bf16.mxu0 0
        %6856 = vmatpush1.bf16.msra.mxu0 0
        %6857 = vmatprep.subr.bf16.mxu0 0
        %6858 = vmatpush1.bf16.msra.mxu0 0
        %6859 = vmatprep.subr.bf16.mxu0 0
        %6860 = vmatpush1.bf16.msra.mxu0 0
        %6861 = vmatprep.subr.bf16.mxu0 0
        %6862 = vmatpush1.bf16.msra.mxu0 0
        %6863 = vmatprep.subr.bf16.mxu0 0
        %6864 = vmatpush1.bf16.msra.mxu0 0
        %6865 = vmatprep.mubr.bf16.mxu0 0
        %6866 = vmatmul.mubr.bf16.gmra.mrb[0].mxu0 %v6831
        %v6867 = vpop.f32.mrb[0].mxu0
        %v6868 = vadd.f32 %v6829, %v6867
        %v6869 = vpop.f32.mrb[0].mxu0
        %v6870 = vpop.f32.mrb[0].mxu0
        %v6871 = vpop.f32.mrb[0].mxu0
        %6872 = vdwg.mxu0
        %v6873 = vmax.f32 %v6868, 0.0
        %6874 = vst.msk [vmem:[%s259] sm:$0x1] %vm3627, %v6873
        %s6875 = sand.u32 %s126, 1
        %s6876 = scalar_lea.sflag [#allocation4], %s6875
        %s6877 = sand.u32 %s126, 1
        %s6878 = scalar_lea.vmem [#allocation8], %s6877
        // Predicated region
        $region49: #{tpu_custom_call.1} parent=35 // pred_check
          %p6879 = pneg %p136
        $region50: #{tpu_custom_call.1} parent=35 // pred_check_branch
          %6881 = sbr.rel (%p6879) target = $region52
        $region51: #{tpu_custom_call.1} parent=35 // pred_region
          %s6883 = ssub.s32 16, 16
          %6884 = vsyncadd %s6876, %s6883
          %s6885 = smul.addr %s24, 16
          %s6886 = scalar_lea.hbm %s4, %s6885
          %s6888 = sshll.u32 %s6878, 4
          %s6889 = int_to_ptr.vmem [resolvable:$true] %s6888
          %6891 = dma.vmem_to_hbm [thread:$0]  %s6889, 16, %s6886, %s6876
        $region52: #{tpu_custom_call.1} parent=35 // pred_fallthru
          _
      $region36: #{tpu_custom_call.1} parent=5 // pred_fallthru
        _
      %p6892 = scmp.le.s32.totalorder 2, %s19
      // Predicated region
      $region53: #{tpu_custom_call.1} parent=5 // pred_check
        %p6893 = pneg %p6892
      $region54: #{tpu_custom_call.1} parent=5 // pred_check_branch
        %6895 = sbr.rel (%p6893) target = $region56
      $region55: #{tpu_custom_call.1} parent=5 // pred_region
        %s6896 = ssub.s32 %s19, 2
        // Predicated region
        $region57: #{tpu_custom_call.1} parent=55 // pred_check
          %p6897 = pneg %p142
        $region58: #{tpu_custom_call.1} parent=55 // pred_check_branch
          %6899 = sbr.rel (%p6897) target = $region60
        $region59: #{tpu_custom_call.1} parent=55 // pred_region
          %s6900 = sand.u32 %s127, 1
          %s6901 = scalar_lea.sflag [#allocation4], %s6900
          %s6902 = sand.u32 %s127, 1
          %s6903 = scalar_lea.vmem [#allocation8], %s6902
          %6904 = dma.done %s6901, 16
        $region60: #{tpu_custom_call.1} parent=55 // pred_fallthru
          _
      $region56: #{tpu_custom_call.1} parent=5 // pred_fallthru
        _
    $region6: #{tpu_custom_call.1} parent=1 // loop_footer
      %s23 = sadd.s32 1, %s19
    $region7: #{tpu_custom_call.1} parent=1 // loop_footer_branch
      %18 = sbr.rel target = $region3
    $region8: #{tpu_custom_call.1} parent=1 // loop_exit
      _
    %6905 = vsyncpa [#allocation3], 1
    %s6906 = scalar_lea.sflag [#allocation3], 1
    %6907 = vsyncpa %s6906, 1
    %6908 = vsyncpa [#allocation6], 1
    %s6909 = scalar_lea.sflag [#allocation6], 1
    %6910 = vsyncpa %s6909, 1
    %6911 = vsyncpa [#allocation4], 1
    %s6912 = scalar_lea.sflag [#allocation4], 1
    %6913 = vsyncpa %s6912, 1

</llo_original>
